<compile_context>
chip_gen: v6e
topology: v6e:2x2x1
jax: 0.10.0
libtpu: 0.0.40
codegen_flags: <defaults>
</compile_context>

<pallas_src>
import jax
import jax.numpy as jnp
from jax.experimental import pallas as pl
from jax.experimental.pallas import tpu as pltpu


def _t_cdc_kernel(x_ref, w_ref, o_ref, x27_ref):
    # x_ref  : (T+2, H+2, W+2, Cin)  zero-padded input, one batch element (resident
    #                                across T-tiles: index_map constant in tt)
    # w_ref  : (27*Cin, Cout_pad)    all 27 taps flattened (resident, constant index_map)
    # o_ref  : (Tt*H*W, Cout_pad)    lane-dense output block for this T-tile
    # x27_ref: (Tt*H*W, 27*Cin)      scratch: fully unrolled tap slab (fat-K matmul LHS)
    Tp, Hp, Wp, Cin = x_ref.shape
    H, W = Hp - 2, Wp - 2
    rows, _ = x27_ref.shape
    Tt = rows // (H * W)

    tt = pl.program_id(1)
    t0 = pl.multiple_of(tt * Tt, Tt)

    # Pack ALL 27 taps of this T-tile into the slab.  Both sides are ref slices, so
    # the full padded block is never materialized in vregs before slicing.
    #   x27[((t*H)+h)*W+w, ((kt*3+kh)*3+kw)*Cin + c] = x_pad[t0+t+kt, h+kh, w+kw, c]
    for kt in range(3):
        for kh in range(3):
            for kw in range(3):
                j = ((kt * 3 + kh) * 3 + kw) * Cin
                win = x_ref[pl.ds(t0 + kt, Tt), kh:kh + H, kw:kw + W, :]
                x27_ref[:, j:j + Cin] = win.reshape(Tt * H * W, Cin)

    # ONE fat-K matmul per grid step: (Tt*H*W, 27*Cin) @ (27*Cin, Cout_pad) with f32
    # accumulation inside the MXU; single cast + lane-dense store (no VMEM acc RMW).
    o_ref[...] = jnp.dot(x27_ref[...], w_ref[...],
                         preferred_element_type=jnp.float32).astype(o_ref.dtype)


def _pick_t_tile(T, H, W, Cin, Cout_pad, comp_isz, out_isz, budget=44 << 20):
    """Largest divisor of T whose block+scratch VMEM footprint fits under `budget`
    (44 MiB keeps headroom under v7x's 64 MiB physical VMEM)."""
    def need(tt):
        return (2 * (T + 2) * (H + 2) * (W + 2) * Cin * comp_isz   # resident input (x2 buf)
                + 2 * 27 * Cin * Cout_pad * comp_isz               # resident weights
                + 2 * tt * H * W * Cout_pad * out_isz              # output double-buffer
                + tt * H * W * 27 * Cin * comp_isz)                # x27 scratch

    candidates = [tt for tt in range(1, T + 1)
                  if T % tt == 0 and (tt == T or (tt * H * W) % 8 == 0)]
    fitting = [tt for tt in candidates if need(tt) <= budget]
    return max(fitting) if fitting else min(candidates)


def t_cdc(x, w, theta=0.7, compute_dtype=jnp.bfloat16, t_tile=None):
    """x: (N, T, H, W, Cin) channels-last; w: (3, 3, 3, Cin, Cout) = (kt, kh, kw, Cin, Cout)."""
    N, T, H, W, Cin = x.shape
    assert w.shape[:4] == (3, 3, 3, Cin), w.shape
    Cout = w.shape[-1]
    # Lane-dense output stores.  For tiny Cout this inflates output HBM bytes by
    # Cout_pad/Cout (accepted / documented); MXU cost is unchanged.
    Cout_pad = ((Cout + 127) // 128) * 128

    comp_isz = jnp.dtype(compute_dtype).itemsize
    out_isz = jnp.dtype(x.dtype).itemsize
    if t_tile is None:
        t_tile = _pick_t_tile(T, H, W, Cin, Cout_pad, comp_isz, out_isz)
    assert T % t_tile == 0, (T, t_tile)
    assert t_tile == T or (t_tile * H * W) % 8 == 0, (t_tile, H, W)
    n_tt = T // t_tile

    # ---- weight prep (free XLA glue; fold in f32 *before* the low-precision cast) ----
    w32 = w.astype(jnp.float32)
    kdiff = w32[0].sum(axis=(0, 1)) + w32[2].sum(axis=(0, 1))            # (Cin, Cout)
    w_eff = w32.at[1, 1, 1].add(-jnp.float32(theta) * kdiff)             # exact CDC fold
    w_eff = jnp.pad(w_eff, ((0, 0),) * 4 + ((0, Cout_pad - Cout),))
    # (kt, kh, kw, Cin, Cout_pad) -> (27*Cin, Cout_pad); row order matches the x27 pack.
    w27 = w_eff.reshape(27 * Cin, Cout_pad).astype(compute_dtype)

    # ---- input prep: zero pad=1 on (T, H, W) ----
    x_pad = jnp.pad(x, ((0, 0), (1, 1), (1, 1), (1, 1), (0, 0))).astype(compute_dtype)

    # Scoped-VMEM budget sized from the actual footprint, with headroom; the defaults
    # (16/32 MiB) are far below what the resident blocks need at realistic shapes.
    need = (2 * (T + 2) * (H + 2) * (W + 2) * Cin * comp_isz
            + 2 * 27 * Cin * Cout_pad * comp_isz
            + 2 * t_tile * H * W * Cout_pad * out_isz
            + t_tile * H * W * 27 * Cin * comp_isz)
    vmem_limit = int(min(max(need * 3 // 2 + (2 << 20), 16 << 20), 120 << 20))

    out_flat = pl.pallas_call(
        _t_cdc_kernel,
        out_shape=jax.ShapeDtypeStruct((N, T * H * W, Cout_pad), x.dtype),
        grid_spec=pltpu.PrefetchScalarGridSpec(
            num_scalar_prefetch=0,
            grid=(N, n_tt),  # batch x T-tile, both parallel (feeds both v7x TCs at N=1)
            in_specs=[
                pl.BlockSpec((pl.Squeezed(), T + 2, H + 2, W + 2, Cin),
                             lambda n, tt: (n, 0, 0, 0, 0)),      # resident per batch
                pl.BlockSpec((27 * Cin, Cout_pad),
                             lambda n, tt: (0, 0)),               # resident weight slab
            ],
            out_specs=pl.BlockSpec((pl.Squeezed(), t_tile * H * W, Cout_pad),
                                   lambda n, tt: (n, tt, 0)),
            scratch_shapes=[
                pltpu.VMEM((t_tile * H * W, 27 * Cin), compute_dtype),
            ],
        ),
        compiler_params=pltpu.CompilerParams(
            dimension_semantics=("parallel", "parallel"),
            vmem_limit_bytes=vmem_limit),
    )(x_pad, w27)

    # Drop the Cout padding and restore (N, T, H, W, Cout) — XLA glue.
    return out_flat[:, :, :Cout].reshape(N, T, H, W, Cout)


def _t_cdc_reference(x, w, theta):
    """Pure-JAX reference (unfolded formulation, f32, HIGHEST precision)."""
    out_normal = jax.lax.conv_general_dilated(
        x, w, window_strides=(1, 1, 1),
        padding=((1, 1), (1, 1), (1, 1)),
        dimension_numbers=("NDHWC", "DHWIO", "NDHWC"),
        precision=jax.lax.Precision.HIGHEST)
    kdiff = w[0].sum(axis=(0, 1)) + w[2].sum(axis=(0, 1))  # (Cin, Cout)
    out_diff = jnp.einsum("nthwc,cd->nthwd", x, kdiff,
                          precision=jax.lax.Precision.HIGHEST)
    return out_normal - theta * out_diff


if __name__ == "__main__":
    key = jax.random.PRNGKey(0)
    kx, kw_key = jax.random.split(key)

    # Small shapes consistent with the module: Conv3d(in=4, out=8, k=3, pad=1)
    N, Cin, Cout, T, H, W = 2, 4, 8, 6, 8, 8
    theta = 0.7

    # Deterministic synthetic parameters / inputs (PyTorch-convention shapes)
    x_ncdhw = jax.random.normal(kx, (N, Cin, T, H, W), jnp.float32)               # NCDHW
    w_oidhw = jax.random.normal(kw_key, (Cout, Cin, 3, 3, 3), jnp.float32) * 0.1  # OIDHW

    # Transpose to the kernel layout (glue)
    x = jnp.transpose(x_ncdhw, (0, 2, 3, 4, 1))   # (N, T, H, W, Cin)
    w = jnp.transpose(w_oidhw, (2, 3, 4, 1, 0))   # (kt, kh, kw, Cin, Cout)

    ref = _t_cdc_reference(x, w, theta)

    # f32-operand run, auto T-tile (single tile at this size): validates conv structure
    # plus the exact CDC weight fold.
    out_f32 = jax.block_until_ready(t_cdc(x, w, theta, compute_dtype=jnp.float32))
    assert out_f32.shape == (N, T, H, W, Cout)
    err32 = jnp.max(jnp.abs(out_f32 - ref))
    assert jnp.allclose(out_f32, ref, atol=2e-2, rtol=2e-2), f"f32 max err = {err32}"

    # Default bf16-operand run with explicit T-tiling (exercises the halo'd T-tile path,
    # 2 tiles of t_tile=3), f32 accumulation.
    out_bf = jax.block_until_ready(t_cdc(x, w, theta, t_tile=3))
    assert out_bf.shape == (N, T, H, W, Cout)
    errbf = jnp.max(jnp.abs(out_bf - ref))
    assert jnp.allclose(out_bf, ref, atol=3e-2, rtol=3e-2), f"bf16 max err = {errbf}"

    print("KERNEL_OK")
</pallas_src>

<mosaic_0001>
module attributes {stable_mosaic.version = 11 : i64} {
  func.func @_t_cdc_kernel(%arg0: i32, %arg1: i32, %arg2: memref<1x8x10x10x4xf32, #tpu.memory_space<vmem>>, %arg3: memref<108x128xf32, #tpu.memory_space<vmem>>, %arg4: memref<1x384x128xf32, #tpu.memory_space<vmem>>, %arg5: memref<384x108xf32, #tpu.memory_space<vmem>>) attributes {dimension_semantics = [#tpu.dimension_semantics<parallel>, #tpu.dimension_semantics<parallel>], iteration_bounds = array<i64: 2, 1>, scalar_prefetch = 0 : i64, scratch_operands = 1 : i64, tpu.core_type = #tpu.core_type<tc>, window_params = [{transform_indices = @transform_0, window_bounds = array<i64: 1, 8, 10, 10, 4>}, {pipeline_mode = #tpu.pipeline_mode<synchronous>, transform_indices = @transform_1, window_bounds = array<i64: 108, 128>}, {transform_indices = @transform_2, window_bounds = array<i64: 1, 384, 128>}]} {
    %c6_i32 = arith.constant 6 : i32
    %0 = arith.muli %arg1, %c6_i32 : i32
    %1 = tpu.assume_multiple %0, 6 : i32
    %c0_i32 = arith.constant 0 : i32
    %2 = arith.addi %1, %c0_i32 : i32
    %c0 = arith.constant 0 : index
    %3 = arith.index_cast %2 : i32 to index
    %c0_0 = arith.constant 0 : index
    %c0_1 = arith.constant 0 : index
    %c0_2 = arith.constant 0 : index
    %4 = vector.load %arg2[%c0, %3, %c0_0, %c0_1, %c0_2] : memref<1x8x10x10x4xf32, #tpu.memory_space<vmem>>, vector<1x6x8x8x4xf32>
    %5 = vector.shape_cast %4 : vector<1x6x8x8x4xf32> to vector<6x8x8x4xf32>
    %6 = vector.shape_cast %5 : vector<6x8x8x4xf32> to vector<384x4xf32>
    %c0_3 = arith.constant 0 : index
    %c0_4 = arith.constant 0 : index
    %7 = vector.load %arg5[%c0_3, %c0_4] : memref<384x108xf32, #tpu.memory_space<vmem>>, vector<384x4xf32>
    tpu.vector_store %arg5[%c0_3, %c0_4], %6 {strides = array<i32>} : memref<384x108xf32, #tpu.memory_space<vmem>>, vector<384x4xf32>,
    %c0_i32_5 = arith.constant 0 : i32
    %8 = arith.addi %1, %c0_i32_5 : i32
    %c0_6 = arith.constant 0 : index
    %9 = arith.index_cast %8 : i32 to index
    %c0_7 = arith.constant 0 : index
    %c1 = arith.constant 1 : index
    %c0_8 = arith.constant 0 : index
    %10 = vector.load %arg2[%c0_6, %9, %c0_7, %c1, %c0_8] : memref<1x8x10x10x4xf32, #tpu.memory_space<vmem>>, vector<1x6x8x8x4xf32>
    %11 = vector.shape_cast %10 : vector<1x6x8x8x4xf32> to vector<6x8x8x4xf32>
    %12 = vector.shape_cast %11 : vector<6x8x8x4xf32> to vector<384x4xf32>
    %c0_9 = arith.constant 0 : index
    %c4 = arith.constant 4 : index
    %13 = vector.load %arg5[%c0_9, %c4] : memref<384x108xf32, #tpu.memory_space<vmem>>, vector<384x4xf32>
    tpu.vector_store %arg5[%c0_9, %c4], %12 {strides = array<i32>} : memref<384x108xf32, #tpu.memory_space<vmem>>, vector<384x4xf32>,
    %c0_i32_10 = arith.constant 0 : i32
    %14 = arith.addi %1, %c0_i32_10 : i32
    %c0_11 = arith.constant 0 : index
    %15 = arith.index_cast %14 : i32 to index
    %c0_12 = arith.constant 0 : index
    %c2 = arith.constant 2 : index
    %c0_13 = arith.constant 0 : index
    %16 = vector.load %arg2[%c0_11, %15, %c0_12, %c2, %c0_13] : memref<1x8x10x10x4xf32, #tpu.memory_space<vmem>>, vector<1x6x8x8x4xf32>
    %17 = vector.shape_cast %16 : vector<1x6x8x8x4xf32> to vector<6x8x8x4xf32>
    %18 = vector.shape_cast %17 : vector<6x8x8x4xf32> to vector<384x4xf32>
    %c0_14 = arith.constant 0 : index
    %c8 = arith.constant 8 : index
    %19 = vector.load %arg5[%c0_14, %c8] : memref<384x108xf32, #tpu.memory_space<vmem>>, vector<384x4xf32>
    tpu.vector_store %arg5[%c0_14, %c8], %18 {strides = array<i32>} : memref<384x108xf32, #tpu.memory_space<vmem>>, vector<384x4xf32>,
    %c0_i32_15 = arith.constant 0 : i32
    %20 = arith.addi %1, %c0_i32_15 : i32
    %c0_16 = arith.constant 0 : index
    %21 = arith.index_cast %20 : i32 to index
    %c1_17 = arith.constant 1 : index
    %c0_18 = arith.constant 0 : index
    %c0_19 = arith.constant 0 : index
    %22 = vector.load %arg2[%c0_16, %21, %c1_17, %c0_18, %c0_19] : memref<1x8x10x10x4xf32, #tpu.memory_space<vmem>>, vector<1x6x8x8x4xf32>
    %23 = vector.shape_cast %22 : vector<1x6x8x8x4xf32> to vector<6x8x8x4xf32>
    %24 = vector.shape_cast %23 : vector<6x8x8x4xf32> to vector<384x4xf32>
    %c0_20 = arith.constant 0 : index
    %c12 = arith.constant 12 : index
    %25 = vector.load %arg5[%c0_20, %c12] : memref<384x108xf32, #tpu.memory_space<vmem>>, vector<384x4xf32>
    tpu.vector_store %arg5[%c0_20, %c12], %24 {strides = array<i32>} : memref<384x108xf32, #tpu.memory_space<vmem>>, vector<384x4xf32>,
    %c0_i32_21 = arith.constant 0 : i32
    %26 = arith.addi %1, %c0_i32_21 : i32
    %c0_22 = arith.constant 0 : index
    %27 = arith.index_cast %26 : i32 to index
    %c1_23 = arith.constant 1 : index
    %c1_24 = arith.constant 1 : index
    %c0_25 = arith.constant 0 : index
    %28 = vector.load %arg2[%c0_22, %27, %c1_23, %c1_24, %c0_25] : memref<1x8x10x10x4xf32, #tpu.memory_space<vmem>>, vector<1x6x8x8x4xf32>
    %29 = vector.shape_cast %28 : vector<1x6x8x8x4xf32> to vector<6x8x8x4xf32>
    %30 = vector.shape_cast %29 : vector<6x8x8x4xf32> to vector<384x4xf32>
    %c0_26 = arith.constant 0 : index
    %c16 = arith.constant 16 : index
    %31 = vector.load %arg5[%c0_26, %c16] : memref<384x108xf32, #tpu.memory_space<vmem>>, vector<384x4xf32>
    tpu.vector_store %arg5[%c0_26, %c16], %30 {strides = array<i32>} : memref<384x108xf32, #tpu.memory_space<vmem>>, vector<384x4xf32>,
    %c0_i32_27 = arith.constant 0 : i32
    %32 = arith.addi %1, %c0_i32_27 : i32
    %c0_28 = arith.constant 0 : index
    %33 = arith.index_cast %32 : i32 to index
    %c1_29 = arith.constant 1 : index
    %c2_30 = arith.constant 2 : index
    %c0_31 = arith.constant 0 : index
    %34 = vector.load %arg2[%c0_28, %33, %c1_29, %c2_30, %c0_31] : memref<1x8x10x10x4xf32, #tpu.memory_space<vmem>>, vector<1x6x8x8x4xf32>
    %35 = vector.shape_cast %34 : vector<1x6x8x8x4xf32> to vector<6x8x8x4xf32>
    %36 = vector.shape_cast %35 : vector<6x8x8x4xf32> to vector<384x4xf32>
    %c0_32 = arith.constant 0 : index
    %c20 = arith.constant 20 : index
    %37 = vector.load %arg5[%c0_32, %c20] : memref<384x108xf32, #tpu.memory_space<vmem>>, vector<384x4xf32>
    tpu.vector_store %arg5[%c0_32, %c20], %36 {strides = array<i32>} : memref<384x108xf32, #tpu.memory_space<vmem>>, vector<384x4xf32>,
    %c0_i32_33 = arith.constant 0 : i32
    %38 = arith.addi %1, %c0_i32_33 : i32
    %c0_34 = arith.constant 0 : index
    %39 = arith.index_cast %38 : i32 to index
    %c2_35 = arith.constant 2 : index
    %c0_36 = arith.constant 0 : index
    %c0_37 = arith.constant 0 : index
    %40 = vector.load %arg2[%c0_34, %39, %c2_35, %c0_36, %c0_37] : memref<1x8x10x10x4xf32, #tpu.memory_space<vmem>>, vector<1x6x8x8x4xf32>
    %41 = vector.shape_cast %40 : vector<1x6x8x8x4xf32> to vector<6x8x8x4xf32>
    %42 = vector.shape_cast %41 : vector<6x8x8x4xf32> to vector<384x4xf32>
    %c0_38 = arith.constant 0 : index
    %c24 = arith.constant 24 : index
    %43 = vector.load %arg5[%c0_38, %c24] : memref<384x108xf32, #tpu.memory_space<vmem>>, vector<384x4xf32>
    tpu.vector_store %arg5[%c0_38, %c24], %42 {strides = array<i32>} : memref<384x108xf32, #tpu.memory_space<vmem>>, vector<384x4xf32>,
    %c0_i32_39 = arith.constant 0 : i32
    %44 = arith.addi %1, %c0_i32_39 : i32
    %c0_40 = arith.constant 0 : index
    %45 = arith.index_cast %44 : i32 to index
    %c2_41 = arith.constant 2 : index
    %c1_42 = arith.constant 1 : index
    %c0_43 = arith.constant 0 : index
    %46 = vector.load %arg2[%c0_40, %45, %c2_41, %c1_42, %c0_43] : memref<1x8x10x10x4xf32, #tpu.memory_space<vmem>>, vector<1x6x8x8x4xf32>
    %47 = vector.shape_cast %46 : vector<1x6x8x8x4xf32> to vector<6x8x8x4xf32>
    %48 = vector.shape_cast %47 : vector<6x8x8x4xf32> to vector<384x4xf32>
    %c0_44 = arith.constant 0 : index
    %c28 = arith.constant 28 : index
    %49 = vector.load %arg5[%c0_44, %c28] : memref<384x108xf32, #tpu.memory_space<vmem>>, vector<384x4xf32>
    tpu.vector_store %arg5[%c0_44, %c28], %48 {strides = array<i32>} : memref<384x108xf32, #tpu.memory_space<vmem>>, vector<384x4xf32>,
    %c0_i32_45 = arith.constant 0 : i32
    %50 = arith.addi %1, %c0_i32_45 : i32
    %c0_46 = arith.constant 0 : index
    %51 = arith.index_cast %50 : i32 to index
    %c2_47 = arith.constant 2 : index
    %c2_48 = arith.constant 2 : index
    %c0_49 = arith.constant 0 : index
    %52 = vector.load %arg2[%c0_46, %51, %c2_47, %c2_48, %c0_49] : memref<1x8x10x10x4xf32, #tpu.memory_space<vmem>>, vector<1x6x8x8x4xf32>
    %53 = vector.shape_cast %52 : vector<1x6x8x8x4xf32> to vector<6x8x8x4xf32>
    %54 = vector.shape_cast %53 : vector<6x8x8x4xf32> to vector<384x4xf32>
    %c0_50 = arith.constant 0 : index
    %c32 = arith.constant 32 : index
    %55 = vector.load %arg5[%c0_50, %c32] : memref<384x108xf32, #tpu.memory_space<vmem>>, vector<384x4xf32>
    tpu.vector_store %arg5[%c0_50, %c32], %54 {strides = array<i32>} : memref<384x108xf32, #tpu.memory_space<vmem>>, vector<384x4xf32>,
    %c1_i32 = arith.constant 1 : i32
    %56 = arith.addi %1, %c1_i32 : i32
    %c0_51 = arith.constant 0 : index
    %57 = arith.index_cast %56 : i32 to index
    %c0_52 = arith.constant 0 : index
    %c0_53 = arith.constant 0 : index
    %c0_54 = arith.constant 0 : index
    %58 = vector.load %arg2[%c0_51, %57, %c0_52, %c0_53, %c0_54] : memref<1x8x10x10x4xf32, #tpu.memory_space<vmem>>, vector<1x6x8x8x4xf32>
    %59 = vector.shape_cast %58 : vector<1x6x8x8x4xf32> to vector<6x8x8x4xf32>
    %60 = vector.shape_cast %59 : vector<6x8x8x4xf32> to vector<384x4xf32>
    %c0_55 = arith.constant 0 : index
    %c36 = arith.constant 36 : index
    %61 = vector.load %arg5[%c0_55, %c36] : memref<384x108xf32, #tpu.memory_space<vmem>>, vector<384x4xf32>
    tpu.vector_store %arg5[%c0_55, %c36], %60 {strides = array<i32>} : memref<384x108xf32, #tpu.memory_space<vmem>>, vector<384x4xf32>,
    %c1_i32_56 = arith.constant 1 : i32
    %62 = arith.addi %1, %c1_i32_56 : i32
    %c0_57 = arith.constant 0 : index
    %63 = arith.index_cast %62 : i32 to index
    %c0_58 = arith.constant 0 : index
    %c1_59 = arith.constant 1 : index
    %c0_60 = arith.constant 0 : index
    %64 = vector.load %arg2[%c0_57, %63, %c0_58, %c1_59, %c0_60] : memref<1x8x10x10x4xf32, #tpu.memory_space<vmem>>, vector<1x6x8x8x4xf32>
    %65 = vector.shape_cast %64 : vector<1x6x8x8x4xf32> to vector<6x8x8x4xf32>
    %66 = vector.shape_cast %65 : vector<6x8x8x4xf32> to vector<384x4xf32>
    %c0_61 = arith.constant 0 : index
    %c40 = arith.constant 40 : index
    %67 = vector.load %arg5[%c0_61, %c40] : memref<384x108xf32, #tpu.memory_space<vmem>>, vector<384x4xf32>
    tpu.vector_store %arg5[%c0_61, %c40], %66 {strides = array<i32>} : memref<384x108xf32, #tpu.memory_space<vmem>>, vector<384x4xf32>,
    %c1_i32_62 = arith.constant 1 : i32
    %68 = arith.addi %1, %c1_i32_62 : i32
    %c0_63 = arith.constant 0 : index
    %69 = arith.index_cast %68 : i32 to index
    %c0_64 = arith.constant 0 : index
    %c2_65 = arith.constant 2 : index
    %c0_66 = arith.constant 0 : index
    %70 = vector.load %arg2[%c0_63, %69, %c0_64, %c2_65, %c0_66] : memref<1x8x10x10x4xf32, #tpu.memory_space<vmem>>, vector<1x6x8x8x4xf32>
    %71 = vector.shape_cast %70 : vector<1x6x8x8x4xf32> to vector<6x8x8x4xf32>
    %72 = vector.shape_cast %71 : vector<6x8x8x4xf32> to vector<384x4xf32>
    %c0_67 = arith.constant 0 : index
    %c44 = arith.constant 44 : index
    %73 = vector.load %arg5[%c0_67, %c44] : memref<384x108xf32, #tpu.memory_space<vmem>>, vector<384x4xf32>
    tpu.vector_store %arg5[%c0_67, %c44], %72 {strides = array<i32>} : memref<384x108xf32, #tpu.memory_space<vmem>>, vector<384x4xf32>,
    %c1_i32_68 = arith.constant 1 : i32
    %74 = arith.addi %1, %c1_i32_68 : i32
    %c0_69 = arith.constant 0 : index
    %75 = arith.index_cast %74 : i32 to index
    %c1_70 = arith.constant 1 : index
    %c0_71 = arith.constant 0 : index
    %c0_72 = arith.constant 0 : index
    %76 = vector.load %arg2[%c0_69, %75, %c1_70, %c0_71, %c0_72] : memref<1x8x10x10x4xf32, #tpu.memory_space<vmem>>, vector<1x6x8x8x4xf32>
    %77 = vector.shape_cast %76 : vector<1x6x8x8x4xf32> to vector<6x8x8x4xf32>
    %78 = vector.shape_cast %77 : vector<6x8x8x4xf32> to vector<384x4xf32>
    %c0_73 = arith.constant 0 : index
    %c48 = arith.constant 48 : index
    %79 = vector.load %arg5[%c0_73, %c48] : memref<384x108xf32, #tpu.memory_space<vmem>>, vector<384x4xf32>
    tpu.vector_store %arg5[%c0_73, %c48], %78 {strides = array<i32>} : memref<384x108xf32, #tpu.memory_space<vmem>>, vector<384x4xf32>,
    %c1_i32_74 = arith.constant 1 : i32
    %80 = arith.addi %1, %c1_i32_74 : i32
    %c0_75 = arith.constant 0 : index
    %81 = arith.index_cast %80 : i32 to index
    %c1_76 = arith.constant 1 : index
    %c1_77 = arith.constant 1 : index
    %c0_78 = arith.constant 0 : index
    %82 = vector.load %arg2[%c0_75, %81, %c1_76, %c1_77, %c0_78] : memref<1x8x10x10x4xf32, #tpu.memory_space<vmem>>, vector<1x6x8x8x4xf32>
    %83 = vector.shape_cast %82 : vector<1x6x8x8x4xf32> to vector<6x8x8x4xf32>
    %84 = vector.shape_cast %83 : vector<6x8x8x4xf32> to vector<384x4xf32>
    %c0_79 = arith.constant 0 : index
    %c52 = arith.constant 52 : index
    %85 = vector.load %arg5[%c0_79, %c52] : memref<384x108xf32, #tpu.memory_space<vmem>>, vector<384x4xf32>
    tpu.vector_store %arg5[%c0_79, %c52], %84 {strides = array<i32>} : memref<384x108xf32, #tpu.memory_space<vmem>>, vector<384x4xf32>,
    %c1_i32_80 = arith.constant 1 : i32
    %86 = arith.addi %1, %c1_i32_80 : i32
    %c0_81 = arith.constant 0 : index
    %87 = arith.index_cast %86 : i32 to index
    %c1_82 = arith.constant 1 : index
    %c2_83 = arith.constant 2 : index
    %c0_84 = arith.constant 0 : index
    %88 = vector.load %arg2[%c0_81, %87, %c1_82, %c2_83, %c0_84] : memref<1x8x10x10x4xf32, #tpu.memory_space<vmem>>, vector<1x6x8x8x4xf32>
    %89 = vector.shape_cast %88 : vector<1x6x8x8x4xf32> to vector<6x8x8x4xf32>
    %90 = vector.shape_cast %89 : vector<6x8x8x4xf32> to vector<384x4xf32>
    %c0_85 = arith.constant 0 : index
    %c56 = arith.constant 56 : index
    %91 = vector.load %arg5[%c0_85, %c56] : memref<384x108xf32, #tpu.memory_space<vmem>>, vector<384x4xf32>
    tpu.vector_store %arg5[%c0_85, %c56], %90 {strides = array<i32>} : memref<384x108xf32, #tpu.memory_space<vmem>>, vector<384x4xf32>,
    %c1_i32_86 = arith.constant 1 : i32
    %92 = arith.addi %1, %c1_i32_86 : i32
    %c0_87 = arith.constant 0 : index
    %93 = arith.index_cast %92 : i32 to index
    %c2_88 = arith.constant 2 : index
    %c0_89 = arith.constant 0 : index
    %c0_90 = arith.constant 0 : index
    %94 = vector.load %arg2[%c0_87, %93, %c2_88, %c0_89, %c0_90] : memref<1x8x10x10x4xf32, #tpu.memory_space<vmem>>, vector<1x6x8x8x4xf32>
    %95 = vector.shape_cast %94 : vector<1x6x8x8x4xf32> to vector<6x8x8x4xf32>
    %96 = vector.shape_cast %95 : vector<6x8x8x4xf32> to vector<384x4xf32>
    %c0_91 = arith.constant 0 : index
    %c60 = arith.constant 60 : index
    %97 = vector.load %arg5[%c0_91, %c60] : memref<384x108xf32, #tpu.memory_space<vmem>>, vector<384x4xf32>
    tpu.vector_store %arg5[%c0_91, %c60], %96 {strides = array<i32>} : memref<384x108xf32, #tpu.memory_space<vmem>>, vector<384x4xf32>,
    %c1_i32_92 = arith.constant 1 : i32
    %98 = arith.addi %1, %c1_i32_92 : i32
    %c0_93 = arith.constant 0 : index
    %99 = arith.index_cast %98 : i32 to index
    %c2_94 = arith.constant 2 : index
    %c1_95 = arith.constant 1 : index
    %c0_96 = arith.constant 0 : index
    %100 = vector.load %arg2[%c0_93, %99, %c2_94, %c1_95, %c0_96] : memref<1x8x10x10x4xf32, #tpu.memory_space<vmem>>, vector<1x6x8x8x4xf32>
    %101 = vector.shape_cast %100 : vector<1x6x8x8x4xf32> to vector<6x8x8x4xf32>
    %102 = vector.shape_cast %101 : vector<6x8x8x4xf32> to vector<384x4xf32>
    %c0_97 = arith.constant 0 : index
    %c64 = arith.constant 64 : index
    %103 = vector.load %arg5[%c0_97, %c64] : memref<384x108xf32, #tpu.memory_space<vmem>>, vector<384x4xf32>
    tpu.vector_store %arg5[%c0_97, %c64], %102 {strides = array<i32>} : memref<384x108xf32, #tpu.memory_space<vmem>>, vector<384x4xf32>,
    %c1_i32_98 = arith.constant 1 : i32
    %104 = arith.addi %1, %c1_i32_98 : i32
    %c0_99 = arith.constant 0 : index
    %105 = arith.index_cast %104 : i32 to index
    %c2_100 = arith.constant 2 : index
    %c2_101 = arith.constant 2 : index
    %c0_102 = arith.constant 0 : index
    %106 = vector.load %arg2[%c0_99, %105, %c2_100, %c2_101, %c0_102] : memref<1x8x10x10x4xf32, #tpu.memory_space<vmem>>, vector<1x6x8x8x4xf32>
    %107 = vector.shape_cast %106 : vector<1x6x8x8x4xf32> to vector<6x8x8x4xf32>
    %108 = vector.shape_cast %107 : vector<6x8x8x4xf32> to vector<384x4xf32>
    %c0_103 = arith.constant 0 : index
    %c68 = arith.constant 68 : index
    %109 = vector.load %arg5[%c0_103, %c68] : memref<384x108xf32, #tpu.memory_space<vmem>>, vector<384x4xf32>
    tpu.vector_store %arg5[%c0_103, %c68], %108 {strides = array<i32>} : memref<384x108xf32, #tpu.memory_space<vmem>>, vector<384x4xf32>,
    %c2_i32 = arith.constant 2 : i32
    %110 = arith.addi %1, %c2_i32 : i32
    %c0_104 = arith.constant 0 : index
    %111 = arith.index_cast %110 : i32 to index
    %c0_105 = arith.constant 0 : index
    %c0_106 = arith.constant 0 : index
    %c0_107 = arith.constant 0 : index
    %112 = vector.load %arg2[%c0_104, %111, %c0_105, %c0_106, %c0_107] : memref<1x8x10x10x4xf32, #tpu.memory_space<vmem>>, vector<1x6x8x8x4xf32>
    %113 = vector.shape_cast %112 : vector<1x6x8x8x4xf32> to vector<6x8x8x4xf32>
    %114 = vector.shape_cast %113 : vector<6x8x8x4xf32> to vector<384x4xf32>
    %c0_108 = arith.constant 0 : index
    %c72 = arith.constant 72 : index
    %115 = vector.load %arg5[%c0_108, %c72] : memref<384x108xf32, #tpu.memory_space<vmem>>, vector<384x4xf32>
    tpu.vector_store %arg5[%c0_108, %c72], %114 {strides = array<i32>} : memref<384x108xf32, #tpu.memory_space<vmem>>, vector<384x4xf32>,
    %c2_i32_109 = arith.constant 2 : i32
    %116 = arith.addi %1, %c2_i32_109 : i32
    %c0_110 = arith.constant 0 : index
    %117 = arith.index_cast %116 : i32 to index
    %c0_111 = arith.constant 0 : index
    %c1_112 = arith.constant 1 : index
    %c0_113 = arith.constant 0 : index
    %118 = vector.load %arg2[%c0_110, %117, %c0_111, %c1_112, %c0_113] : memref<1x8x10x10x4xf32, #tpu.memory_space<vmem>>, vector<1x6x8x8x4xf32>
    %119 = vector.shape_cast %118 : vector<1x6x8x8x4xf32> to vector<6x8x8x4xf32>
    %120 = vector.shape_cast %119 : vector<6x8x8x4xf32> to vector<384x4xf32>
    %c0_114 = arith.constant 0 : index
    %c76 = arith.constant 76 : index
    %121 = vector.load %arg5[%c0_114, %c76] : memref<384x108xf32, #tpu.memory_space<vmem>>, vector<384x4xf32>
    tpu.vector_store %arg5[%c0_114, %c76], %120 {strides = array<i32>} : memref<384x108xf32, #tpu.memory_space<vmem>>, vector<384x4xf32>,
    %c2_i32_115 = arith.constant 2 : i32
    %122 = arith.addi %1, %c2_i32_115 : i32
    %c0_116 = arith.constant 0 : index
    %123 = arith.index_cast %122 : i32 to index
    %c0_117 = arith.constant 0 : index
    %c2_118 = arith.constant 2 : index
    %c0_119 = arith.constant 0 : index
    %124 = vector.load %arg2[%c0_116, %123, %c0_117, %c2_118, %c0_119] : memref<1x8x10x10x4xf32, #tpu.memory_space<vmem>>, vector<1x6x8x8x4xf32>
    %125 = vector.shape_cast %124 : vector<1x6x8x8x4xf32> to vector<6x8x8x4xf32>
    %126 = vector.shape_cast %125 : vector<6x8x8x4xf32> to vector<384x4xf32>
    %c0_120 = arith.constant 0 : index
    %c80 = arith.constant 80 : index
    %127 = vector.load %arg5[%c0_120, %c80] : memref<384x108xf32, #tpu.memory_space<vmem>>, vector<384x4xf32>
    tpu.vector_store %arg5[%c0_120, %c80], %126 {strides = array<i32>} : memref<384x108xf32, #tpu.memory_space<vmem>>, vector<384x4xf32>,
    %c2_i32_121 = arith.constant 2 : i32
    %128 = arith.addi %1, %c2_i32_121 : i32
    %c0_122 = arith.constant 0 : index
    %129 = arith.index_cast %128 : i32 to index
    %c1_123 = arith.constant 1 : index
    %c0_124 = arith.constant 0 : index
    %c0_125 = arith.constant 0 : index
    %130 = vector.load %arg2[%c0_122, %129, %c1_123, %c0_124, %c0_125] : memref<1x8x10x10x4xf32, #tpu.memory_space<vmem>>, vector<1x6x8x8x4xf32>
    %131 = vector.shape_cast %130 : vector<1x6x8x8x4xf32> to vector<6x8x8x4xf32>
    %132 = vector.shape_cast %131 : vector<6x8x8x4xf32> to vector<384x4xf32>
    %c0_126 = arith.constant 0 : index
    %c84 = arith.constant 84 : index
    %133 = vector.load %arg5[%c0_126, %c84] : memref<384x108xf32, #tpu.memory_space<vmem>>, vector<384x4xf32>
    tpu.vector_store %arg5[%c0_126, %c84], %132 {strides = array<i32>} : memref<384x108xf32, #tpu.memory_space<vmem>>, vector<384x4xf32>,
    %c2_i32_127 = arith.constant 2 : i32
    %134 = arith.addi %1, %c2_i32_127 : i32
    %c0_128 = arith.constant 0 : index
    %135 = arith.index_cast %134 : i32 to index
    %c1_129 = arith.constant 1 : index
    %c1_130 = arith.constant 1 : index
    %c0_131 = arith.constant 0 : index
    %136 = vector.load %arg2[%c0_128, %135, %c1_129, %c1_130, %c0_131] : memref<1x8x10x10x4xf32, #tpu.memory_space<vmem>>, vector<1x6x8x8x4xf32>
    %137 = vector.shape_cast %136 : vector<1x6x8x8x4xf32> to vector<6x8x8x4xf32>
    %138 = vector.shape_cast %137 : vector<6x8x8x4xf32> to vector<384x4xf32>
    %c0_132 = arith.constant 0 : index
    %c88 = arith.constant 88 : index
    %139 = vector.load %arg5[%c0_132, %c88] : memref<384x108xf32, #tpu.memory_space<vmem>>, vector<384x4xf32>
    tpu.vector_store %arg5[%c0_132, %c88], %138 {strides = array<i32>} : memref<384x108xf32, #tpu.memory_space<vmem>>, vector<384x4xf32>,
    %c2_i32_133 = arith.constant 2 : i32
    %140 = arith.addi %1, %c2_i32_133 : i32
    %c0_134 = arith.constant 0 : index
    %141 = arith.index_cast %140 : i32 to index
    %c1_135 = arith.constant 1 : index
    %c2_136 = arith.constant 2 : index
    %c0_137 = arith.constant 0 : index
    %142 = vector.load %arg2[%c0_134, %141, %c1_135, %c2_136, %c0_137] : memref<1x8x10x10x4xf32, #tpu.memory_space<vmem>>, vector<1x6x8x8x4xf32>
    %143 = vector.shape_cast %142 : vector<1x6x8x8x4xf32> to vector<6x8x8x4xf32>
    %144 = vector.shape_cast %143 : vector<6x8x8x4xf32> to vector<384x4xf32>
    %c0_138 = arith.constant 0 : index
    %c92 = arith.constant 92 : index
    %145 = vector.load %arg5[%c0_138, %c92] : memref<384x108xf32, #tpu.memory_space<vmem>>, vector<384x4xf32>
    tpu.vector_store %arg5[%c0_138, %c92], %144 {strides = array<i32>} : memref<384x108xf32, #tpu.memory_space<vmem>>, vector<384x4xf32>,
    %c2_i32_139 = arith.constant 2 : i32
    %146 = arith.addi %1, %c2_i32_139 : i32
    %c0_140 = arith.constant 0 : index
    %147 = arith.index_cast %146 : i32 to index
    %c2_141 = arith.constant 2 : index
    %c0_142 = arith.constant 0 : index
    %c0_143 = arith.constant 0 : index
    %148 = vector.load %arg2[%c0_140, %147, %c2_141, %c0_142, %c0_143] : memref<1x8x10x10x4xf32, #tpu.memory_space<vmem>>, vector<1x6x8x8x4xf32>
    %149 = vector.shape_cast %148 : vector<1x6x8x8x4xf32> to vector<6x8x8x4xf32>
    %150 = vector.shape_cast %149 : vector<6x8x8x4xf32> to vector<384x4xf32>
    %c0_144 = arith.constant 0 : index
    %c96 = arith.constant 96 : index
    %151 = vector.load %arg5[%c0_144, %c96] : memref<384x108xf32, #tpu.memory_space<vmem>>, vector<384x4xf32>
    tpu.vector_store %arg5[%c0_144, %c96], %150 {strides = array<i32>} : memref<384x108xf32, #tpu.memory_space<vmem>>, vector<384x4xf32>,
    %c2_i32_145 = arith.constant 2 : i32
    %152 = arith.addi %1, %c2_i32_145 : i32
    %c0_146 = arith.constant 0 : index
    %153 = arith.index_cast %152 : i32 to index
    %c2_147 = arith.constant 2 : index
    %c1_148 = arith.constant 1 : index
    %c0_149 = arith.constant 0 : index
    %154 = vector.load %arg2[%c0_146, %153, %c2_147, %c1_148, %c0_149] : memref<1x8x10x10x4xf32, #tpu.memory_space<vmem>>, vector<1x6x8x8x4xf32>
    %155 = vector.shape_cast %154 : vector<1x6x8x8x4xf32> to vector<6x8x8x4xf32>
    %156 = vector.shape_cast %155 : vector<6x8x8x4xf32> to vector<384x4xf32>
    %c0_150 = arith.constant 0 : index
    %c100 = arith.constant 100 : index
    %157 = vector.load %arg5[%c0_150, %c100] : memref<384x108xf32, #tpu.memory_space<vmem>>, vector<384x4xf32>
    tpu.vector_store %arg5[%c0_150, %c100], %156 {strides = array<i32>} : memref<384x108xf32, #tpu.memory_space<vmem>>, vector<384x4xf32>,
    %c2_i32_151 = arith.constant 2 : i32
    %158 = arith.addi %1, %c2_i32_151 : i32
    %c0_152 = arith.constant 0 : index
    %159 = arith.index_cast %158 : i32 to index
    %c2_153 = arith.constant 2 : index
    %c2_154 = arith.constant 2 : index
    %c0_155 = arith.constant 0 : index
    %160 = vector.load %arg2[%c0_152, %159, %c2_153, %c2_154, %c0_155] : memref<1x8x10x10x4xf32, #tpu.memory_space<vmem>>, vector<1x6x8x8x4xf32>
    %161 = vector.shape_cast %160 : vector<1x6x8x8x4xf32> to vector<6x8x8x4xf32>
    %162 = vector.shape_cast %161 : vector<6x8x8x4xf32> to vector<384x4xf32>
    %c0_156 = arith.constant 0 : index
    %c104 = arith.constant 104 : index
    %163 = vector.load %arg5[%c0_156, %c104] : memref<384x108xf32, #tpu.memory_space<vmem>>, vector<384x4xf32>
    tpu.vector_store %arg5[%c0_156, %c104], %162 {strides = array<i32>} : memref<384x108xf32, #tpu.memory_space<vmem>>, vector<384x4xf32>,
    %c0_157 = arith.constant 0 : index
    %c0_158 = arith.constant 0 : index
    %164 = vector.load %arg5[%c0_157, %c0_158] : memref<384x108xf32, #tpu.memory_space<vmem>>, vector<384x108xf32>
    %c0_159 = arith.constant 0 : index
    %c0_160 = arith.constant 0 : index
    %165 = vector.load %arg3[%c0_159, %c0_160] : memref<108x128xf32, #tpu.memory_space<vmem>>, vector<108x128xf32>
    %cst = arith.constant dense<0.000000e+00> : vector<384x128xf32>
    %166 = tpu.matmul %164, %165, %cst {dimension_numbers = #tpu.dot_dimension_numbers<[1], [0], [0], [1], [0, 0, 1, 1], [], []>} : vector<384x108xf32>, vector<108x128xf32>, vector<384x128xf32> -> vector<384x128xf32>
    %c0_161 = arith.constant 0 : index
    %c0_162 = arith.constant 0 : index
    %c0_163 = arith.constant 0 : index
    %167 = vector.load %arg4[%c0_161, %c0_162, %c0_163] : memref<1x384x128xf32, #tpu.memory_space<vmem>>, vector<1x384x128xf32>
    %168 = vector.shape_cast %167 : vector<1x384x128xf32> to vector<384x128xf32>
    %169 = vector.shape_cast %166 : vector<384x128xf32> to vector<1x384x128xf32>
    tpu.vector_store %arg4[%c0_161, %c0_162, %c0_163], %169 {strides = array<i32>} : memref<1x384x128xf32, #tpu.memory_space<vmem>>, vector<1x384x128xf32>,
    return
  }
  func.func @transform_0(%arg0: i32, %arg1: i32) -> (i32, i32, i32, i32, i32) {
    %c0_i32 = arith.constant 0 : i32
    %c0_i32_0 = arith.constant 0 : i32
    %c0_i32_1 = arith.constant 0 : i32
    %c0_i32_2 = arith.constant 0 : i32
    %c0_i32_3 = arith.constant 0 : i32
    return %arg0, %c0_i32, %c0_i32_0, %c0_i32_1, %c0_i32_2 : i32, i32, i32, i32, i32
  }
  func.func @transform_1(%arg0: i32, %arg1: i32) -> (i32, i32) {
    %c0_i32 = arith.constant 0 : i32
    %c0_i32_0 = arith.constant 0 : i32
    %c0_i32_1 = arith.constant 0 : i32
    return %c0_i32, %c0_i32_0 : i32, i32
  }
  func.func @transform_2(%arg0: i32, %arg1: i32) -> (i32, i32, i32) {
    %c0_i32 = arith.constant 0 : i32
    %c0_i32_0 = arith.constant 0 : i32
    return %arg0, %arg1, %c0_i32 : i32, i32, i32
  }
}

</mosaic_0001>

<llo_original>
// kernel: tpu_custom_call.1
$region0: #{tpu_custom_call.1}
  #allocation0 [shape = 'u32[]', space=smem, size = 0x4, offset = 0x4, fixed_abs, tag = 'smem constant byte address 0x4 - core index']
  #allocation1 [shape = 'u32[144,128]{1,0:T(1,128)}', space=vmem, size = 0x12000, scoped, tag = 'internal scratch']
  #allocation2 [shape = 'f32[384,108]{1,0:T(8,128)}', space=vmem, size = 0x30000, scoped, tag = 'scratch operand']
  %s0 = inlined_call_operand.vmem [shape: f32[2,8,10,10,4], index: 0, kind: input, shape index: {}]
  %s1 = inlined_call_operand.vmem [shape: f32[108,128], index: 1, kind: input, shape index: {}]
  %s2 = inlined_call_operand.hbm [shape: f32[2,384,128], index: 2, kind: output, shape index: {}]
  %s3 = sld [smem:[#allocation0]]
  $region41: #{tpu_custom_call.1} parent=0
    _
  %s5 = ssub.s32 1, %s3
  %s6 = scalar_select 0, %s5, %s3
  $region1: #{tpu_custom_call.1} parent=0
    #allocation3 [shape = 'u8[393216]{0}', space=vmem, size = 0x60000, scoped, tag = 'output window, operand 0']
    #allocation4 [shape = 's32[2]{0}', space=sflag, size = 0x8, scoped, tag = 'scoped memory for tpu_custom_call.1']
    %7 = vsyncpa [#allocation4], 0
    %s8 = scalar_lea.sflag [#allocation4], 1
    %9 = vsyncpa %s8, 0
    loop: start=0, step=1, limit=4
    $region2: #{tpu_custom_call.1} parent=1 // loop_pre_header
      _
    $region3: #{tpu_custom_call.1} parent=1 // loop_header
      %s11 = sphi 0, %s15
      %p12 = scmp.ge.s32.totalorder %s11, 4
      %s18 = sphi 0, %s30
      %s19 = sphi 0, %s26
      %s20 = sphi 0, %s18
      %s21 = sphi 0, %s19
      %s22 = sphi 0, %s20
      %s23 = sphi 0, %s21
      %s33 = sphi 0, %s35
      %s36 = sphi 0, %s33
      %s37 = sphi 0, %s36
      %s53 = sphi 0, %s37
      %s57 = sphi 0, %s57
      %s59 = sphi 0, %s57
      %s60 = sphi 0, %s59
      %s74 = sphi 0, %s60
      %s82 = sphi 0, %s84
      %s85 = sphi 0, %s82
      %s86 = sphi 0, %s85
      %s102 = sphi 0, %s86
    $region4: #{tpu_custom_call.1} parent=1 // loop_header_branch
      %14 = sbr.rel (%p12) target = $region8
    $region5: #{tpu_custom_call.1} parent=1 // loop_body
      %s16 = ssub.s32 %s11, 1
      %s17 = ssub.s32 %s11, 2
      %s24 = sadd.s32 1, %s19
      %p25 = scmp.ge.s32.totalorder %s24, 1
      %s26 = scalar_select %p25, 0, %s24
      %s27 = sadd.s32 1, %s18
      %s28 = scalar_select %p25, %s27, %s18
      %p29 = scmp.ge.s32.totalorder %s28, 2
      %s30 = scalar_select %p29, 0, %s28
      %s31 = ssub.s32 %s18, %s30
      %p32 = scmp.eq.s32.totalorder %s31, 0
      %s34 = sadd.s32 %s33, 1
      %s35 = scalar_select %p32, %s33, %s34
      %p38 = pneg %p32
      %p39 = scmp.eq.s32.totalorder %s11, 1
      %p40 = por %p38, %p39
      %p41 = scmp.ne.s32.totalorder %s33, %s36
      %p42 = scmp.eq.s32.totalorder %s11, 0
      %p43 = por %p41, %p42
      %p44 = scmp.ne.s32.totalorder %s33, %s36
      %p45 = scmp.eq.s32.totalorder %s16, 1
      %p46 = por %p44, %p45
      %p47 = scmp.ne.s32.totalorder %s36, %s37
      %p48 = scmp.eq.s32.totalorder %s16, 0
      %p49 = por %p47, %p48
      %p50 = scmp.ne.s32.totalorder %s36, %s37
      %p51 = scmp.eq.s32.totalorder %s17, 1
      %p52 = por %p50, %p51
      %p54 = scmp.ne.s32.totalorder %s37, %s53
      %p55 = scmp.eq.s32.totalorder %s17, 0
      %p56 = por %p54, %p55
      %s58 = sadd.s32 %s57, 1
      %p61 = scmp.eq.s32.totalorder %s11, 1
      %p62 = scmp.ne.s32.totalorder %s57, %s59
      %p63 = scmp.eq.s32.totalorder %s11, 0
      %p64 = por %p62, %p63
      %p65 = scmp.ne.s32.totalorder %s57, %s59
      %p66 = scmp.eq.s32.totalorder %s16, 1
      %p67 = por %p65, %p66
      %p68 = scmp.ne.s32.totalorder %s59, %s60
      %p69 = scmp.eq.s32.totalorder %s16, 0
      %p70 = por %p68, %p69
      %p71 = scmp.ne.s32.totalorder %s59, %s60
      %p72 = scmp.eq.s32.totalorder %s17, 1
      %p73 = por %p71, %p72
      %p75 = scmp.ne.s32.totalorder %s60, %s74
      %p76 = scmp.eq.s32.totalorder %s17, 0
      %p77 = por %p75, %p76
      %s78 = ssub.s32 %s18, %s30
      %s79 = ssub.s32 %s19, %s26
      %s80 = sor.u32 %s78, %s79
      %p81 = scmp.eq.s32.totalorder %s80, 0
      %s83 = sadd.s32 %s82, 1
      %s84 = scalar_select %p81, %s82, %s83
      %p87 = pneg %p81
      %p88 = scmp.eq.s32.totalorder %s11, 1
      %p89 = por %p87, %p88
      %p90 = scmp.ne.s32.totalorder %s82, %s85
      %p91 = scmp.eq.s32.totalorder %s11, 0
      %p92 = por %p90, %p91
      %p93 = scmp.ne.s32.totalorder %s82, %s85
      %p94 = scmp.eq.s32.totalorder %s16, 1
      %p95 = por %p93, %p94
      %p96 = scmp.ne.s32.totalorder %s85, %s86
      %p97 = scmp.eq.s32.totalorder %s16, 0
      %p98 = por %p96, %p97
      %p99 = scmp.ne.s32.totalorder %s85, %s86
      %p100 = scmp.eq.s32.totalorder %s17, 1
      %p101 = por %p99, %p100
      %p103 = scmp.ne.s32.totalorder %s86, %s102
      %p104 = scmp.eq.s32.totalorder %s17, 0
      %p105 = por %p103, %p104
      %p106 = scmp.le.s32.totalorder 1, %s11
      %p107 = scmp.lt.s32.totalorder %s11, 3
      %p108 = pnand %p106, %p107
      %p109 = pneg %p108
      // Predicated region
      $region9: #{tpu_custom_call.1} parent=5 // pred_check
        _
      $region10: #{tpu_custom_call.1} parent=5 // pred_check_branch
        %111 = sbr.rel (%p108) target = $region12
      $region11: #{tpu_custom_call.1} parent=5 // pred_region
        %s112 = ssub.s32 %s11, 1
        // Predicated region
        $region13: #{tpu_custom_call.1} parent=11 // pred_check
          %p113 = pneg %p70
        $region14: #{tpu_custom_call.1} parent=11 // pred_check_branch
          %115 = sbr.rel (%p113) target = $region16
        $region15: #{tpu_custom_call.1} parent=11 // pred_region
          _
        $region16: #{tpu_custom_call.1} parent=11 // pred_fallthru
          _
      $region12: #{tpu_custom_call.1} parent=5 // pred_fallthru
        _
      %p116 = scmp.lt.s32.totalorder %s11, 2
      // Predicated region
      $region17: #{tpu_custom_call.1} parent=5 // pred_check
        %p117 = pneg %p116
      $region18: #{tpu_custom_call.1} parent=5 // pred_check_branch
        %119 = sbr.rel (%p117) target = $region20
      $region19: #{tpu_custom_call.1} parent=5 // pred_region
        // Predicated region
        $region21: #{tpu_custom_call.1} parent=19 // pred_check
          %p120 = pneg %p43
        $region22: #{tpu_custom_call.1} parent=19 // pred_check_branch
          %122 = sbr.rel (%p120) target = $region24
        $region23: #{tpu_custom_call.1} parent=19 // pred_region
          %p123 = scmp.lt.s32.totalorder %s18, 1
          %s124 = scalar_select %p123, %s18, 1
          %s125 = smul.addr %s124, 160
          %s126 = smul.addr %s125, 8
          %s127 = scalar_lea.vmem %s0, %s126
        $region24: #{tpu_custom_call.1} parent=19 // pred_fallthru
          _
      $region20: #{tpu_custom_call.1} parent=5 // pred_fallthru
        _
      %p128 = scmp.le.s32.totalorder 1, %s11
      %p129 = scmp.lt.s32.totalorder %s11, 3
      %p130 = pnand %p128, %p129
      %p131 = pneg %p130
      // Predicated region
      $region25: #{tpu_custom_call.1} parent=5 // pred_check
        _
      $region26: #{tpu_custom_call.1} parent=5 // pred_check_branch
        %133 = sbr.rel (%p130) target = $region28
      $region27: #{tpu_custom_call.1} parent=5 // pred_region
        %s134 = ssub.s32 %s11, 1
        %p135 = scmp.lt.s32.totalorder %s20, 1
        %s136 = scalar_select %p135, %s20, 1
        %s137 = smul.addr %s136, 160
        %s138 = smul.addr %s137, 8
        %s139 = scalar_lea.vmem %s0, %s138
        %p140 = pneg %p49
        %p141 = pneg %p46
        %p142 = pneg %p70
        %p143 = pneg %p67
        %p144 = pneg %p98
        %p145 = pneg %p95
        %s146 = sand.u32 %s85, 1
        %s147 = scalar_lea.sflag [#allocation4], %s146
        %s148 = sand.u32 %s85, 1
        %s149 = smul.addr %s148, 384
        %s150 = scalar_lea.vmem [#allocation3], %s149
        %p151 = scmp.lt.s32.totalorder %s20, 1
        %s152 = scalar_select %p151, %s20, 1
        %s153 = smul.addr %s152, 160
        %s154 = smul.addr %s153, 8
        %s155 = scalar_lea.vmem %s0, %s154
        %s156 = smul.u32 48, %s21
        %s157 = smul.u32 %s21, 6
        %s158 = smul.u32 %s157, 160
        %s159 = scalar_lea.vmem %s155, %s158
        %v160 = vld [vmem:[%s159] sm:$0xff]
        %v161 = vld [vmem:[%s159 + $0x10] sm:$0xff]
        %v162 = vld [vmem:[%s159 + $0x20] sm:$0xff]
        %v163 = vld [vmem:[%s159 + $0x30] sm:$0xff]
        %v164 = vld [vmem:[%s159 + $0x40] sm:$0xff]
        %v165 = vld [vmem:[%s159 + $0x50] sm:$0xff]
        %v166 = vld [vmem:[%s159 + $0x60] sm:$0xff]
        %v167 = vld [vmem:[%s159 + $0x70] sm:$0xff]
        %v168 = vld [vmem:[%s159 + $0xa0] sm:$0xff]
        %v169 = vld [vmem:[%s159 + $0xb0] sm:$0xff]
        %v170 = vld [vmem:[%s159 + $0xc0] sm:$0xff]
        %v171 = vld [vmem:[%s159 + $0xd0] sm:$0xff]
        %v172 = vld [vmem:[%s159 + $0xe0] sm:$0xff]
        %v173 = vld [vmem:[%s159 + $0xf0] sm:$0xff]
        %v174 = vld [vmem:[%s159 + $0x100] sm:$0xff]
        %v175 = vld [vmem:[%s159 + $0x110] sm:$0xff]
        %v176 = vld [vmem:[%s159 + $0x140] sm:$0xff]
        %v177 = vld [vmem:[%s159 + $0x150] sm:$0xff]
        %v178 = vld [vmem:[%s159 + $0x160] sm:$0xff]
        %v179 = vld [vmem:[%s159 + $0x170] sm:$0xff]
        %v180 = vld [vmem:[%s159 + $0x180] sm:$0xff]
        %v181 = vld [vmem:[%s159 + $0x190] sm:$0xff]
        %v182 = vld [vmem:[%s159 + $0x1a0] sm:$0xff]
        %v183 = vld [vmem:[%s159 + $0x1b0] sm:$0xff]
        %v184 = vld [vmem:[%s159 + $0x1e0] sm:$0xff]
        %v185 = vld [vmem:[%s159 + $0x1f0] sm:$0xff]
        %v186 = vld [vmem:[%s159 + $0x200] sm:$0xff]
        %v187 = vld [vmem:[%s159 + $0x210] sm:$0xff]
        %v188 = vld [vmem:[%s159 + $0x220] sm:$0xff]
        %v189 = vld [vmem:[%s159 + $0x230] sm:$0xff]
        %v190 = vld [vmem:[%s159 + $0x240] sm:$0xff]
        %v191 = vld [vmem:[%s159 + $0x250] sm:$0xff]
        %v192 = vld [vmem:[%s159 + $0x280] sm:$0xff]
        %v193 = vld [vmem:[%s159 + $0x290] sm:$0xff]
        %v194 = vld [vmem:[%s159 + $0x2a0] sm:$0xff]
        %v195 = vld [vmem:[%s159 + $0x2b0] sm:$0xff]
        %v196 = vld [vmem:[%s159 + $0x2c0] sm:$0xff]
        %v197 = vld [vmem:[%s159 + $0x2d0] sm:$0xff]
        %v198 = vld [vmem:[%s159 + $0x2e0] sm:$0xff]
        %v199 = vld [vmem:[%s159 + $0x2f0] sm:$0xff]
        %v200 = vld [vmem:[%s159 + $0x320] sm:$0xff]
        %v201 = vld [vmem:[%s159 + $0x330] sm:$0xff]
        %v202 = vld [vmem:[%s159 + $0x340] sm:$0xff]
        %v203 = vld [vmem:[%s159 + $0x350] sm:$0xff]
        %v204 = vld [vmem:[%s159 + $0x360] sm:$0xff]
        %v205 = vld [vmem:[%s159 + $0x370] sm:$0xff]
        %v206 = vld [vmem:[%s159 + $0x380] sm:$0xff]
        %v207 = vld [vmem:[%s159 + $0x390] sm:$0xff]
        %vm208 = vcmask 31744
        %209 = vst.msk [vmem:[#allocation2] sm:$0xff] %vm208, %v160
        %210 = vst.msk [vmem:[#allocation2 + $0x8] sm:$0xff] %vm208, %v161
        %211 = vst.msk [vmem:[#allocation2 + $0x10] sm:$0xff] %vm208, %v162
        %212 = vst.msk [vmem:[#allocation2 + $0x18] sm:$0xff] %vm208, %v163
        %213 = vst.msk [vmem:[#allocation2 + $0x20] sm:$0xff] %vm208, %v164
        %214 = vst.msk [vmem:[#allocation2 + $0x28] sm:$0xff] %vm208, %v165
        %215 = vst.msk [vmem:[#allocation2 + $0x30] sm:$0xff] %vm208, %v166
        %216 = vst.msk [vmem:[#allocation2 + $0x38] sm:$0xff] %vm208, %v167
        %217 = vst.msk [vmem:[#allocation2 + $0x40] sm:$0xff] %vm208, %v168
        %218 = vst.msk [vmem:[#allocation2 + $0x48] sm:$0xff] %vm208, %v169
        %219 = vst.msk [vmem:[#allocation2 + $0x50] sm:$0xff] %vm208, %v170
        %220 = vst.msk [vmem:[#allocation2 + $0x58] sm:$0xff] %vm208, %v171
        %221 = vst.msk [vmem:[#allocation2 + $0x60] sm:$0xff] %vm208, %v172
        %222 = vst.msk [vmem:[#allocation2 + $0x68] sm:$0xff] %vm208, %v173
        %223 = vst.msk [vmem:[#allocation2 + $0x70] sm:$0xff] %vm208, %v174
        %224 = vst.msk [vmem:[#allocation2 + $0x78] sm:$0xff] %vm208, %v175
        %225 = vst.msk [vmem:[#allocation2 + $0x80] sm:$0xff] %vm208, %v176
        %226 = vst.msk [vmem:[#allocation2 + $0x88] sm:$0xff] %vm208, %v177
        %227 = vst.msk [vmem:[#allocation2 + $0x90] sm:$0xff] %vm208, %v178
        %228 = vst.msk [vmem:[#allocation2 + $0x98] sm:$0xff] %vm208, %v179
        %229 = vst.msk [vmem:[#allocation2 + $0xa0] sm:$0xff] %vm208, %v180
        %230 = vst.msk [vmem:[#allocation2 + $0xa8] sm:$0xff] %vm208, %v181
        %231 = vst.msk [vmem:[#allocation2 + $0xb0] sm:$0xff] %vm208, %v182
        %232 = vst.msk [vmem:[#allocation2 + $0xb8] sm:$0xff] %vm208, %v183
        %233 = vst.msk [vmem:[#allocation2 + $0xc0] sm:$0xff] %vm208, %v184
        %234 = vst.msk [vmem:[#allocation2 + $0xc8] sm:$0xff] %vm208, %v185
        %235 = vst.msk [vmem:[#allocation2 + $0xd0] sm:$0xff] %vm208, %v186
        %236 = vst.msk [vmem:[#allocation2 + $0xd8] sm:$0xff] %vm208, %v187
        %237 = vst.msk [vmem:[#allocation2 + $0xe0] sm:$0xff] %vm208, %v188
        %238 = vst.msk [vmem:[#allocation2 + $0xe8] sm:$0xff] %vm208, %v189
        %239 = vst.msk [vmem:[#allocation2 + $0xf0] sm:$0xff] %vm208, %v190
        %240 = vst.msk [vmem:[#allocation2 + $0xf8] sm:$0xff] %vm208, %v191
        %241 = vst.msk [vmem:[#allocation2 + $0x100] sm:$0xff] %vm208, %v192
        %242 = vst.msk [vmem:[#allocation2 + $0x108] sm:$0xff] %vm208, %v193
        %243 = vst.msk [vmem:[#allocation2 + $0x110] sm:$0xff] %vm208, %v194
        %244 = vst.msk [vmem:[#allocation2 + $0x118] sm:$0xff] %vm208, %v195
        %245 = vst.msk [vmem:[#allocation2 + $0x120] sm:$0xff] %vm208, %v196
        %246 = vst.msk [vmem:[#allocation2 + $0x128] sm:$0xff] %vm208, %v197
        %247 = vst.msk [vmem:[#allocation2 + $0x130] sm:$0xff] %vm208, %v198
        %248 = vst.msk [vmem:[#allocation2 + $0x138] sm:$0xff] %vm208, %v199
        %249 = vst.msk [vmem:[#allocation2 + $0x140] sm:$0xff] %vm208, %v200
        %250 = vst.msk [vmem:[#allocation2 + $0x148] sm:$0xff] %vm208, %v201
        %251 = vst.msk [vmem:[#allocation2 + $0x150] sm:$0xff] %vm208, %v202
        %252 = vst.msk [vmem:[#allocation2 + $0x158] sm:$0xff] %vm208, %v203
        %253 = vst.msk [vmem:[#allocation2 + $0x160] sm:$0xff] %vm208, %v204
        %254 = vst.msk [vmem:[#allocation2 + $0x168] sm:$0xff] %vm208, %v205
        %255 = vst.msk [vmem:[#allocation2 + $0x170] sm:$0xff] %vm208, %v206
        %256 = vst.msk [vmem:[#allocation2 + $0x178] sm:$0xff] %vm208, %v207
        %v257 = vld [vmem:[%s159 + $0x1] sm:$0xff]
        %v258 = vld [vmem:[%s159 + $0x11] sm:$0xff]
        %v259 = vld [vmem:[%s159 + $0x21] sm:$0xff]
        %v260 = vld [vmem:[%s159 + $0x31] sm:$0xff]
        %v261 = vld [vmem:[%s159 + $0x41] sm:$0xff]
        %v262 = vld [vmem:[%s159 + $0x51] sm:$0xff]
        %v263 = vld [vmem:[%s159 + $0x61] sm:$0xff]
        %v264 = vld [vmem:[%s159 + $0x71] sm:$0xff]
        %v265 = vld [vmem:[%s159 + $0xa1] sm:$0xff]
        %v266 = vld [vmem:[%s159 + $0xb1] sm:$0xff]
        %v267 = vld [vmem:[%s159 + $0xc1] sm:$0xff]
        %v268 = vld [vmem:[%s159 + $0xd1] sm:$0xff]
        %v269 = vld [vmem:[%s159 + $0xe1] sm:$0xff]
        %v270 = vld [vmem:[%s159 + $0xf1] sm:$0xff]
        %v271 = vld [vmem:[%s159 + $0x101] sm:$0xff]
        %v272 = vld [vmem:[%s159 + $0x111] sm:$0xff]
        %v273 = vld [vmem:[%s159 + $0x141] sm:$0xff]
        %v274 = vld [vmem:[%s159 + $0x151] sm:$0xff]
        %v275 = vld [vmem:[%s159 + $0x161] sm:$0xff]
        %v276 = vld [vmem:[%s159 + $0x171] sm:$0xff]
        %v277 = vld [vmem:[%s159 + $0x181] sm:$0xff]
        %v278 = vld [vmem:[%s159 + $0x191] sm:$0xff]
        %v279 = vld [vmem:[%s159 + $0x1a1] sm:$0xff]
        %v280 = vld [vmem:[%s159 + $0x1b1] sm:$0xff]
        %v281 = vld [vmem:[%s159 + $0x1e1] sm:$0xff]
        %v282 = vld [vmem:[%s159 + $0x1f1] sm:$0xff]
        %v283 = vld [vmem:[%s159 + $0x201] sm:$0xff]
        %v284 = vld [vmem:[%s159 + $0x211] sm:$0xff]
        %v285 = vld [vmem:[%s159 + $0x221] sm:$0xff]
        %v286 = vld [vmem:[%s159 + $0x231] sm:$0xff]
        %v287 = vld [vmem:[%s159 + $0x241] sm:$0xff]
        %v288 = vld [vmem:[%s159 + $0x251] sm:$0xff]
        %v289 = vld [vmem:[%s159 + $0x281] sm:$0xff]
        %v290 = vld [vmem:[%s159 + $0x291] sm:$0xff]
        %v291 = vld [vmem:[%s159 + $0x2a1] sm:$0xff]
        %v292 = vld [vmem:[%s159 + $0x2b1] sm:$0xff]
        %v293 = vld [vmem:[%s159 + $0x2c1] sm:$0xff]
        %v294 = vld [vmem:[%s159 + $0x2d1] sm:$0xff]
        %v295 = vld [vmem:[%s159 + $0x2e1] sm:$0xff]
        %v296 = vld [vmem:[%s159 + $0x2f1] sm:$0xff]
        %v297 = vld [vmem:[%s159 + $0x321] sm:$0xff]
        %v298 = vld [vmem:[%s159 + $0x331] sm:$0xff]
        %v299 = vld [vmem:[%s159 + $0x341] sm:$0xff]
        %v300 = vld [vmem:[%s159 + $0x351] sm:$0xff]
        %v301 = vld [vmem:[%s159 + $0x361] sm:$0xff]
        %v302 = vld [vmem:[%s159 + $0x371] sm:$0xff]
        %v303 = vld [vmem:[%s159 + $0x381] sm:$0xff]
        %v304 = vld [vmem:[%s159 + $0x391] sm:$0xff]
        %353 = vrot.lane.b32.xlu0 %v257, 4
        %v354 = vpop.permute.xlu0 %353
        %355 = vrot.lane.b32.xlu0 %v258, 4
        %v356 = vpop.permute.xlu0 %355
        %357 = vrot.lane.b32.xlu0 %v259, 4
        %v358 = vpop.permute.xlu0 %357
        %359 = vrot.lane.b32.xlu0 %v260, 4
        %v360 = vpop.permute.xlu0 %359
        %361 = vrot.lane.b32.xlu0 %v261, 4
        %v362 = vpop.permute.xlu0 %361
        %363 = vrot.lane.b32.xlu0 %v262, 4
        %v364 = vpop.permute.xlu0 %363
        %365 = vrot.lane.b32.xlu0 %v263, 4
        %v366 = vpop.permute.xlu0 %365
        %367 = vrot.lane.b32.xlu0 %v264, 4
        %v368 = vpop.permute.xlu0 %367
        %369 = vrot.lane.b32.xlu0 %v265, 4
        %v370 = vpop.permute.xlu0 %369
        %371 = vrot.lane.b32.xlu0 %v266, 4
        %v372 = vpop.permute.xlu0 %371
        %373 = vrot.lane.b32.xlu0 %v267, 4
        %v374 = vpop.permute.xlu0 %373
        %375 = vrot.lane.b32.xlu0 %v268, 4
        %v376 = vpop.permute.xlu0 %375
        %377 = vrot.lane.b32.xlu0 %v269, 4
        %v378 = vpop.permute.xlu0 %377
        %379 = vrot.lane.b32.xlu0 %v270, 4
        %v380 = vpop.permute.xlu0 %379
        %381 = vrot.lane.b32.xlu0 %v271, 4
        %v382 = vpop.permute.xlu0 %381
        %383 = vrot.lane.b32.xlu0 %v272, 4
        %v384 = vpop.permute.xlu0 %383
        %385 = vrot.lane.b32.xlu0 %v273, 4
        %v386 = vpop.permute.xlu0 %385
        %387 = vrot.lane.b32.xlu0 %v274, 4
        %v388 = vpop.permute.xlu0 %387
        %389 = vrot.lane.b32.xlu0 %v275, 4
        %v390 = vpop.permute.xlu0 %389
        %391 = vrot.lane.b32.xlu0 %v276, 4
        %v392 = vpop.permute.xlu0 %391
        %393 = vrot.lane.b32.xlu0 %v277, 4
        %v394 = vpop.permute.xlu0 %393
        %395 = vrot.lane.b32.xlu0 %v278, 4
        %v396 = vpop.permute.xlu0 %395
        %397 = vrot.lane.b32.xlu0 %v279, 4
        %v398 = vpop.permute.xlu0 %397
        %399 = vrot.lane.b32.xlu0 %v280, 4
        %v400 = vpop.permute.xlu0 %399
        %401 = vrot.lane.b32.xlu0 %v281, 4
        %v402 = vpop.permute.xlu0 %401
        %403 = vrot.lane.b32.xlu0 %v282, 4
        %v404 = vpop.permute.xlu0 %403
        %405 = vrot.lane.b32.xlu0 %v283, 4
        %v406 = vpop.permute.xlu0 %405
        %407 = vrot.lane.b32.xlu0 %v284, 4
        %v408 = vpop.permute.xlu0 %407
        %409 = vrot.lane.b32.xlu0 %v285, 4
        %v410 = vpop.permute.xlu0 %409
        %411 = vrot.lane.b32.xlu0 %v286, 4
        %v412 = vpop.permute.xlu0 %411
        %413 = vrot.lane.b32.xlu0 %v287, 4
        %v414 = vpop.permute.xlu0 %413
        %415 = vrot.lane.b32.xlu0 %v288, 4
        %v416 = vpop.permute.xlu0 %415
        %417 = vrot.lane.b32.xlu0 %v289, 4
        %v418 = vpop.permute.xlu0 %417
        %419 = vrot.lane.b32.xlu0 %v290, 4
        %v420 = vpop.permute.xlu0 %419
        %421 = vrot.lane.b32.xlu0 %v291, 4
        %v422 = vpop.permute.xlu0 %421
        %423 = vrot.lane.b32.xlu0 %v292, 4
        %v424 = vpop.permute.xlu0 %423
        %425 = vrot.lane.b32.xlu0 %v293, 4
        %v426 = vpop.permute.xlu0 %425
        %427 = vrot.lane.b32.xlu0 %v294, 4
        %v428 = vpop.permute.xlu0 %427
        %429 = vrot.lane.b32.xlu0 %v295, 4
        %v430 = vpop.permute.xlu0 %429
        %431 = vrot.lane.b32.xlu0 %v296, 4
        %v432 = vpop.permute.xlu0 %431
        %433 = vrot.lane.b32.xlu0 %v297, 4
        %v434 = vpop.permute.xlu0 %433
        %435 = vrot.lane.b32.xlu0 %v298, 4
        %v436 = vpop.permute.xlu0 %435
        %437 = vrot.lane.b32.xlu0 %v299, 4
        %v438 = vpop.permute.xlu0 %437
        %439 = vrot.lane.b32.xlu0 %v300, 4
        %v440 = vpop.permute.xlu0 %439
        %441 = vrot.lane.b32.xlu0 %v301, 4
        %v442 = vpop.permute.xlu0 %441
        %443 = vrot.lane.b32.xlu0 %v302, 4
        %v444 = vpop.permute.xlu0 %443
        %445 = vrot.lane.b32.xlu0 %v303, 4
        %v446 = vpop.permute.xlu0 %445
        %447 = vrot.lane.b32.xlu0 %v304, 4
        %v448 = vpop.permute.xlu0 %447
        %vm497 = vcmask 64544
        %498 = vst.msk [vmem:[#allocation2] sm:$0xff] %vm497, %v354
        %499 = vst.msk [vmem:[#allocation2 + $0x8] sm:$0xff] %vm497, %v356
        %500 = vst.msk [vmem:[#allocation2 + $0x10] sm:$0xff] %vm497, %v358
        %501 = vst.msk [vmem:[#allocation2 + $0x18] sm:$0xff] %vm497, %v360
        %502 = vst.msk [vmem:[#allocation2 + $0x20] sm:$0xff] %vm497, %v362
        %503 = vst.msk [vmem:[#allocation2 + $0x28] sm:$0xff] %vm497, %v364
        %504 = vst.msk [vmem:[#allocation2 + $0x30] sm:$0xff] %vm497, %v366
        %505 = vst.msk [vmem:[#allocation2 + $0x38] sm:$0xff] %vm497, %v368
        %506 = vst.msk [vmem:[#allocation2 + $0x40] sm:$0xff] %vm497, %v370
        %507 = vst.msk [vmem:[#allocation2 + $0x48] sm:$0xff] %vm497, %v372
        %508 = vst.msk [vmem:[#allocation2 + $0x50] sm:$0xff] %vm497, %v374
        %509 = vst.msk [vmem:[#allocation2 + $0x58] sm:$0xff] %vm497, %v376
        %510 = vst.msk [vmem:[#allocation2 + $0x60] sm:$0xff] %vm497, %v378
        %511 = vst.msk [vmem:[#allocation2 + $0x68] sm:$0xff] %vm497, %v380
        %512 = vst.msk [vmem:[#allocation2 + $0x70] sm:$0xff] %vm497, %v382
        %513 = vst.msk [vmem:[#allocation2 + $0x78] sm:$0xff] %vm497, %v384
        %514 = vst.msk [vmem:[#allocation2 + $0x80] sm:$0xff] %vm497, %v386
        %515 = vst.msk [vmem:[#allocation2 + $0x88] sm:$0xff] %vm497, %v388
        %516 = vst.msk [vmem:[#allocation2 + $0x90] sm:$0xff] %vm497, %v390
        %517 = vst.msk [vmem:[#allocation2 + $0x98] sm:$0xff] %vm497, %v392
        %518 = vst.msk [vmem:[#allocation2 + $0xa0] sm:$0xff] %vm497, %v394
        %519 = vst.msk [vmem:[#allocation2 + $0xa8] sm:$0xff] %vm497, %v396
        %520 = vst.msk [vmem:[#allocation2 + $0xb0] sm:$0xff] %vm497, %v398
        %521 = vst.msk [vmem:[#allocation2 + $0xb8] sm:$0xff] %vm497, %v400
        %522 = vst.msk [vmem:[#allocation2 + $0xc0] sm:$0xff] %vm497, %v402
        %523 = vst.msk [vmem:[#allocation2 + $0xc8] sm:$0xff] %vm497, %v404
        %524 = vst.msk [vmem:[#allocation2 + $0xd0] sm:$0xff] %vm497, %v406
        %525 = vst.msk [vmem:[#allocation2 + $0xd8] sm:$0xff] %vm497, %v408
        %526 = vst.msk [vmem:[#allocation2 + $0xe0] sm:$0xff] %vm497, %v410
        %527 = vst.msk [vmem:[#allocation2 + $0xe8] sm:$0xff] %vm497, %v412
        %528 = vst.msk [vmem:[#allocation2 + $0xf0] sm:$0xff] %vm497, %v414
        %529 = vst.msk [vmem:[#allocation2 + $0xf8] sm:$0xff] %vm497, %v416
        %530 = vst.msk [vmem:[#allocation2 + $0x100] sm:$0xff] %vm497, %v418
        %531 = vst.msk [vmem:[#allocation2 + $0x108] sm:$0xff] %vm497, %v420
        %532 = vst.msk [vmem:[#allocation2 + $0x110] sm:$0xff] %vm497, %v422
        %533 = vst.msk [vmem:[#allocation2 + $0x118] sm:$0xff] %vm497, %v424
        %534 = vst.msk [vmem:[#allocation2 + $0x120] sm:$0xff] %vm497, %v426
        %535 = vst.msk [vmem:[#allocation2 + $0x128] sm:$0xff] %vm497, %v428
        %536 = vst.msk [vmem:[#allocation2 + $0x130] sm:$0xff] %vm497, %v430
        %537 = vst.msk [vmem:[#allocation2 + $0x138] sm:$0xff] %vm497, %v432
        %538 = vst.msk [vmem:[#allocation2 + $0x140] sm:$0xff] %vm497, %v434
        %539 = vst.msk [vmem:[#allocation2 + $0x148] sm:$0xff] %vm497, %v436
        %540 = vst.msk [vmem:[#allocation2 + $0x150] sm:$0xff] %vm497, %v438
        %541 = vst.msk [vmem:[#allocation2 + $0x158] sm:$0xff] %vm497, %v440
        %542 = vst.msk [vmem:[#allocation2 + $0x160] sm:$0xff] %vm497, %v442
        %543 = vst.msk [vmem:[#allocation2 + $0x168] sm:$0xff] %vm497, %v444
        %544 = vst.msk [vmem:[#allocation2 + $0x170] sm:$0xff] %vm497, %v446
        %545 = vst.msk [vmem:[#allocation2 + $0x178] sm:$0xff] %vm497, %v448
        %v546 = vld [vmem:[%s159 + $0x2] sm:$0xff]
        %v547 = vld [vmem:[%s159 + $0x12] sm:$0xff]
        %v548 = vld [vmem:[%s159 + $0x22] sm:$0xff]
        %v549 = vld [vmem:[%s159 + $0x32] sm:$0xff]
        %v550 = vld [vmem:[%s159 + $0x42] sm:$0xff]
        %v551 = vld [vmem:[%s159 + $0x52] sm:$0xff]
        %v552 = vld [vmem:[%s159 + $0x62] sm:$0xff]
        %v553 = vld [vmem:[%s159 + $0x72] sm:$0xff]
        %v554 = vld [vmem:[%s159 + $0xa2] sm:$0xff]
        %v555 = vld [vmem:[%s159 + $0xb2] sm:$0xff]
        %v556 = vld [vmem:[%s159 + $0xc2] sm:$0xff]
        %v557 = vld [vmem:[%s159 + $0xd2] sm:$0xff]
        %v558 = vld [vmem:[%s159 + $0xe2] sm:$0xff]
        %v559 = vld [vmem:[%s159 + $0xf2] sm:$0xff]
        %v560 = vld [vmem:[%s159 + $0x102] sm:$0xff]
        %v561 = vld [vmem:[%s159 + $0x112] sm:$0xff]
        %v562 = vld [vmem:[%s159 + $0x142] sm:$0xff]
        %v563 = vld [vmem:[%s159 + $0x152] sm:$0xff]
        %v564 = vld [vmem:[%s159 + $0x162] sm:$0xff]
        %v565 = vld [vmem:[%s159 + $0x172] sm:$0xff]
        %v566 = vld [vmem:[%s159 + $0x182] sm:$0xff]
        %v567 = vld [vmem:[%s159 + $0x192] sm:$0xff]
        %v568 = vld [vmem:[%s159 + $0x1a2] sm:$0xff]
        %v569 = vld [vmem:[%s159 + $0x1b2] sm:$0xff]
        %v570 = vld [vmem:[%s159 + $0x1e2] sm:$0xff]
        %v571 = vld [vmem:[%s159 + $0x1f2] sm:$0xff]
        %v572 = vld [vmem:[%s159 + $0x202] sm:$0xff]
        %v573 = vld [vmem:[%s159 + $0x212] sm:$0xff]
        %v574 = vld [vmem:[%s159 + $0x222] sm:$0xff]
        %v575 = vld [vmem:[%s159 + $0x232] sm:$0xff]
        %v576 = vld [vmem:[%s159 + $0x242] sm:$0xff]
        %v577 = vld [vmem:[%s159 + $0x252] sm:$0xff]
        %v578 = vld [vmem:[%s159 + $0x282] sm:$0xff]
        %v579 = vld [vmem:[%s159 + $0x292] sm:$0xff]
        %v580 = vld [vmem:[%s159 + $0x2a2] sm:$0xff]
        %v581 = vld [vmem:[%s159 + $0x2b2] sm:$0xff]
        %v582 = vld [vmem:[%s159 + $0x2c2] sm:$0xff]
        %v583 = vld [vmem:[%s159 + $0x2d2] sm:$0xff]
        %v584 = vld [vmem:[%s159 + $0x2e2] sm:$0xff]
        %v585 = vld [vmem:[%s159 + $0x2f2] sm:$0xff]
        %v586 = vld [vmem:[%s159 + $0x322] sm:$0xff]
        %v587 = vld [vmem:[%s159 + $0x332] sm:$0xff]
        %v588 = vld [vmem:[%s159 + $0x342] sm:$0xff]
        %v589 = vld [vmem:[%s159 + $0x352] sm:$0xff]
        %v590 = vld [vmem:[%s159 + $0x362] sm:$0xff]
        %v591 = vld [vmem:[%s159 + $0x372] sm:$0xff]
        %v592 = vld [vmem:[%s159 + $0x382] sm:$0xff]
        %v593 = vld [vmem:[%s159 + $0x392] sm:$0xff]
        %642 = vrot.lane.b32.xlu0 %v546, 8
        %v643 = vpop.permute.xlu0 %642
        %644 = vrot.lane.b32.xlu0 %v547, 8
        %v645 = vpop.permute.xlu0 %644
        %646 = vrot.lane.b32.xlu0 %v548, 8
        %v647 = vpop.permute.xlu0 %646
        %648 = vrot.lane.b32.xlu0 %v549, 8
        %v649 = vpop.permute.xlu0 %648
        %650 = vrot.lane.b32.xlu0 %v550, 8
        %v651 = vpop.permute.xlu0 %650
        %652 = vrot.lane.b32.xlu0 %v551, 8
        %v653 = vpop.permute.xlu0 %652
        %654 = vrot.lane.b32.xlu0 %v552, 8
        %v655 = vpop.permute.xlu0 %654
        %656 = vrot.lane.b32.xlu0 %v553, 8
        %v657 = vpop.permute.xlu0 %656
        %658 = vrot.lane.b32.xlu0 %v554, 8
        %v659 = vpop.permute.xlu0 %658
        %660 = vrot.lane.b32.xlu0 %v555, 8
        %v661 = vpop.permute.xlu0 %660
        %662 = vrot.lane.b32.xlu0 %v556, 8
        %v663 = vpop.permute.xlu0 %662
        %664 = vrot.lane.b32.xlu0 %v557, 8
        %v665 = vpop.permute.xlu0 %664
        %666 = vrot.lane.b32.xlu0 %v558, 8
        %v667 = vpop.permute.xlu0 %666
        %668 = vrot.lane.b32.xlu0 %v559, 8
        %v669 = vpop.permute.xlu0 %668
        %670 = vrot.lane.b32.xlu0 %v560, 8
        %v671 = vpop.permute.xlu0 %670
        %672 = vrot.lane.b32.xlu0 %v561, 8
        %v673 = vpop.permute.xlu0 %672
        %674 = vrot.lane.b32.xlu0 %v562, 8
        %v675 = vpop.permute.xlu0 %674
        %676 = vrot.lane.b32.xlu0 %v563, 8
        %v677 = vpop.permute.xlu0 %676
        %678 = vrot.lane.b32.xlu0 %v564, 8
        %v679 = vpop.permute.xlu0 %678
        %680 = vrot.lane.b32.xlu0 %v565, 8
        %v681 = vpop.permute.xlu0 %680
        %682 = vrot.lane.b32.xlu0 %v566, 8
        %v683 = vpop.permute.xlu0 %682
        %684 = vrot.lane.b32.xlu0 %v567, 8
        %v685 = vpop.permute.xlu0 %684
        %686 = vrot.lane.b32.xlu0 %v568, 8
        %v687 = vpop.permute.xlu0 %686
        %688 = vrot.lane.b32.xlu0 %v569, 8
        %v689 = vpop.permute.xlu0 %688
        %690 = vrot.lane.b32.xlu0 %v570, 8
        %v691 = vpop.permute.xlu0 %690
        %692 = vrot.lane.b32.xlu0 %v571, 8
        %v693 = vpop.permute.xlu0 %692
        %694 = vrot.lane.b32.xlu0 %v572, 8
        %v695 = vpop.permute.xlu0 %694
        %696 = vrot.lane.b32.xlu0 %v573, 8
        %v697 = vpop.permute.xlu0 %696
        %698 = vrot.lane.b32.xlu0 %v574, 8
        %v699 = vpop.permute.xlu0 %698
        %700 = vrot.lane.b32.xlu0 %v575, 8
        %v701 = vpop.permute.xlu0 %700
        %702 = vrot.lane.b32.xlu0 %v576, 8
        %v703 = vpop.permute.xlu0 %702
        %704 = vrot.lane.b32.xlu0 %v577, 8
        %v705 = vpop.permute.xlu0 %704
        %706 = vrot.lane.b32.xlu0 %v578, 8
        %v707 = vpop.permute.xlu0 %706
        %708 = vrot.lane.b32.xlu0 %v579, 8
        %v709 = vpop.permute.xlu0 %708
        %710 = vrot.lane.b32.xlu0 %v580, 8
        %v711 = vpop.permute.xlu0 %710
        %712 = vrot.lane.b32.xlu0 %v581, 8
        %v713 = vpop.permute.xlu0 %712
        %714 = vrot.lane.b32.xlu0 %v582, 8
        %v715 = vpop.permute.xlu0 %714
        %716 = vrot.lane.b32.xlu0 %v583, 8
        %v717 = vpop.permute.xlu0 %716
        %718 = vrot.lane.b32.xlu0 %v584, 8
        %v719 = vpop.permute.xlu0 %718
        %720 = vrot.lane.b32.xlu0 %v585, 8
        %v721 = vpop.permute.xlu0 %720
        %722 = vrot.lane.b32.xlu0 %v586, 8
        %v723 = vpop.permute.xlu0 %722
        %724 = vrot.lane.b32.xlu0 %v587, 8
        %v725 = vpop.permute.xlu0 %724
        %726 = vrot.lane.b32.xlu0 %v588, 8
        %v727 = vpop.permute.xlu0 %726
        %728 = vrot.lane.b32.xlu0 %v589, 8
        %v729 = vpop.permute.xlu0 %728
        %730 = vrot.lane.b32.xlu0 %v590, 8
        %v731 = vpop.permute.xlu0 %730
        %732 = vrot.lane.b32.xlu0 %v591, 8
        %v733 = vpop.permute.xlu0 %732
        %734 = vrot.lane.b32.xlu0 %v592, 8
        %v735 = vpop.permute.xlu0 %734
        %736 = vrot.lane.b32.xlu0 %v593, 8
        %v737 = vpop.permute.xlu0 %736
        %vm786 = vcmask 97344
        %787 = vst.msk [vmem:[#allocation2] sm:$0xff] %vm786, %v643
        %788 = vst.msk [vmem:[#allocation2 + $0x8] sm:$0xff] %vm786, %v645
        %789 = vst.msk [vmem:[#allocation2 + $0x10] sm:$0xff] %vm786, %v647
        %790 = vst.msk [vmem:[#allocation2 + $0x18] sm:$0xff] %vm786, %v649
        %791 = vst.msk [vmem:[#allocation2 + $0x20] sm:$0xff] %vm786, %v651
        %792 = vst.msk [vmem:[#allocation2 + $0x28] sm:$0xff] %vm786, %v653
        %793 = vst.msk [vmem:[#allocation2 + $0x30] sm:$0xff] %vm786, %v655
        %794 = vst.msk [vmem:[#allocation2 + $0x38] sm:$0xff] %vm786, %v657
        %795 = vst.msk [vmem:[#allocation2 + $0x40] sm:$0xff] %vm786, %v659
        %796 = vst.msk [vmem:[#allocation2 + $0x48] sm:$0xff] %vm786, %v661
        %797 = vst.msk [vmem:[#allocation2 + $0x50] sm:$0xff] %vm786, %v663
        %798 = vst.msk [vmem:[#allocation2 + $0x58] sm:$0xff] %vm786, %v665
        %799 = vst.msk [vmem:[#allocation2 + $0x60] sm:$0xff] %vm786, %v667
        %800 = vst.msk [vmem:[#allocation2 + $0x68] sm:$0xff] %vm786, %v669
        %801 = vst.msk [vmem:[#allocation2 + $0x70] sm:$0xff] %vm786, %v671
        %802 = vst.msk [vmem:[#allocation2 + $0x78] sm:$0xff] %vm786, %v673
        %803 = vst.msk [vmem:[#allocation2 + $0x80] sm:$0xff] %vm786, %v675
        %804 = vst.msk [vmem:[#allocation2 + $0x88] sm:$0xff] %vm786, %v677
        %805 = vst.msk [vmem:[#allocation2 + $0x90] sm:$0xff] %vm786, %v679
        %806 = vst.msk [vmem:[#allocation2 + $0x98] sm:$0xff] %vm786, %v681
        %807 = vst.msk [vmem:[#allocation2 + $0xa0] sm:$0xff] %vm786, %v683
        %808 = vst.msk [vmem:[#allocation2 + $0xa8] sm:$0xff] %vm786, %v685
        %809 = vst.msk [vmem:[#allocation2 + $0xb0] sm:$0xff] %vm786, %v687
        %810 = vst.msk [vmem:[#allocation2 + $0xb8] sm:$0xff] %vm786, %v689
        %811 = vst.msk [vmem:[#allocation2 + $0xc0] sm:$0xff] %vm786, %v691
        %812 = vst.msk [vmem:[#allocation2 + $0xc8] sm:$0xff] %vm786, %v693
        %813 = vst.msk [vmem:[#allocation2 + $0xd0] sm:$0xff] %vm786, %v695
        %814 = vst.msk [vmem:[#allocation2 + $0xd8] sm:$0xff] %vm786, %v697
        %815 = vst.msk [vmem:[#allocation2 + $0xe0] sm:$0xff] %vm786, %v699
        %816 = vst.msk [vmem:[#allocation2 + $0xe8] sm:$0xff] %vm786, %v701
        %817 = vst.msk [vmem:[#allocation2 + $0xf0] sm:$0xff] %vm786, %v703
        %818 = vst.msk [vmem:[#allocation2 + $0xf8] sm:$0xff] %vm786, %v705
        %819 = vst.msk [vmem:[#allocation2 + $0x100] sm:$0xff] %vm786, %v707
        %820 = vst.msk [vmem:[#allocation2 + $0x108] sm:$0xff] %vm786, %v709
        %821 = vst.msk [vmem:[#allocation2 + $0x110] sm:$0xff] %vm786, %v711
        %822 = vst.msk [vmem:[#allocation2 + $0x118] sm:$0xff] %vm786, %v713
        %823 = vst.msk [vmem:[#allocation2 + $0x120] sm:$0xff] %vm786, %v715
        %824 = vst.msk [vmem:[#allocation2 + $0x128] sm:$0xff] %vm786, %v717
        %825 = vst.msk [vmem:[#allocation2 + $0x130] sm:$0xff] %vm786, %v719
        %826 = vst.msk [vmem:[#allocation2 + $0x138] sm:$0xff] %vm786, %v721
        %827 = vst.msk [vmem:[#allocation2 + $0x140] sm:$0xff] %vm786, %v723
        %828 = vst.msk [vmem:[#allocation2 + $0x148] sm:$0xff] %vm786, %v725
        %829 = vst.msk [vmem:[#allocation2 + $0x150] sm:$0xff] %vm786, %v727
        %830 = vst.msk [vmem:[#allocation2 + $0x158] sm:$0xff] %vm786, %v729
        %831 = vst.msk [vmem:[#allocation2 + $0x160] sm:$0xff] %vm786, %v731
        %832 = vst.msk [vmem:[#allocation2 + $0x168] sm:$0xff] %vm786, %v733
        %833 = vst.msk [vmem:[#allocation2 + $0x170] sm:$0xff] %vm786, %v735
        %834 = vst.msk [vmem:[#allocation2 + $0x178] sm:$0xff] %vm786, %v737
        %s835 = sadd.s32 16, %s158
        %s836 = scalar_lea.vmem %s155, %s835
        %v837 = vld [vmem:[%s836] sm:$0xff]
        %v838 = vld [vmem:[%s836 + $0x10] sm:$0xff]
        %v839 = vld [vmem:[%s836 + $0x20] sm:$0xff]
        %v840 = vld [vmem:[%s836 + $0x30] sm:$0xff]
        %v841 = vld [vmem:[%s836 + $0x40] sm:$0xff]
        %v842 = vld [vmem:[%s836 + $0x50] sm:$0xff]
        %v843 = vld [vmem:[%s836 + $0x60] sm:$0xff]
        %v844 = vld [vmem:[%s836 + $0x70] sm:$0xff]
        %v845 = vld [vmem:[%s836 + $0xa0] sm:$0xff]
        %v846 = vld [vmem:[%s836 + $0xb0] sm:$0xff]
        %v847 = vld [vmem:[%s836 + $0xc0] sm:$0xff]
        %v848 = vld [vmem:[%s836 + $0xd0] sm:$0xff]
        %v849 = vld [vmem:[%s836 + $0xe0] sm:$0xff]
        %v850 = vld [vmem:[%s836 + $0xf0] sm:$0xff]
        %v851 = vld [vmem:[%s836 + $0x100] sm:$0xff]
        %v852 = vld [vmem:[%s836 + $0x110] sm:$0xff]
        %v853 = vld [vmem:[%s836 + $0x140] sm:$0xff]
        %v854 = vld [vmem:[%s836 + $0x150] sm:$0xff]
        %v855 = vld [vmem:[%s836 + $0x160] sm:$0xff]
        %v856 = vld [vmem:[%s836 + $0x170] sm:$0xff]
        %v857 = vld [vmem:[%s836 + $0x180] sm:$0xff]
        %v858 = vld [vmem:[%s836 + $0x190] sm:$0xff]
        %v859 = vld [vmem:[%s836 + $0x1a0] sm:$0xff]
        %v860 = vld [vmem:[%s836 + $0x1b0] sm:$0xff]
        %v861 = vld [vmem:[%s836 + $0x1e0] sm:$0xff]
        %v862 = vld [vmem:[%s836 + $0x1f0] sm:$0xff]
        %v863 = vld [vmem:[%s836 + $0x200] sm:$0xff]
        %v864 = vld [vmem:[%s836 + $0x210] sm:$0xff]
        %v865 = vld [vmem:[%s836 + $0x220] sm:$0xff]
        %v866 = vld [vmem:[%s836 + $0x230] sm:$0xff]
        %v867 = vld [vmem:[%s836 + $0x240] sm:$0xff]
        %v868 = vld [vmem:[%s836 + $0x250] sm:$0xff]
        %v869 = vld [vmem:[%s836 + $0x280] sm:$0xff]
        %v870 = vld [vmem:[%s836 + $0x290] sm:$0xff]
        %v871 = vld [vmem:[%s836 + $0x2a0] sm:$0xff]
        %v872 = vld [vmem:[%s836 + $0x2b0] sm:$0xff]
        %v873 = vld [vmem:[%s836 + $0x2c0] sm:$0xff]
        %v874 = vld [vmem:[%s836 + $0x2d0] sm:$0xff]
        %v875 = vld [vmem:[%s836 + $0x2e0] sm:$0xff]
        %v876 = vld [vmem:[%s836 + $0x2f0] sm:$0xff]
        %v877 = vld [vmem:[%s836 + $0x320] sm:$0xff]
        %v878 = vld [vmem:[%s836 + $0x330] sm:$0xff]
        %v879 = vld [vmem:[%s836 + $0x340] sm:$0xff]
        %v880 = vld [vmem:[%s836 + $0x350] sm:$0xff]
        %v881 = vld [vmem:[%s836 + $0x360] sm:$0xff]
        %v882 = vld [vmem:[%s836 + $0x370] sm:$0xff]
        %v883 = vld [vmem:[%s836 + $0x380] sm:$0xff]
        %v884 = vld [vmem:[%s836 + $0x390] sm:$0xff]
        %933 = vrot.lane.b32.xlu0 %v837, 12
        %v934 = vpop.permute.xlu0 %933
        %935 = vrot.lane.b32.xlu0 %v838, 12
        %v936 = vpop.permute.xlu0 %935
        %937 = vrot.lane.b32.xlu0 %v839, 12
        %v938 = vpop.permute.xlu0 %937
        %939 = vrot.lane.b32.xlu0 %v840, 12
        %v940 = vpop.permute.xlu0 %939
        %941 = vrot.lane.b32.xlu0 %v841, 12
        %v942 = vpop.permute.xlu0 %941
        %943 = vrot.lane.b32.xlu0 %v842, 12
        %v944 = vpop.permute.xlu0 %943
        %945 = vrot.lane.b32.xlu0 %v843, 12
        %v946 = vpop.permute.xlu0 %945
        %947 = vrot.lane.b32.xlu0 %v844, 12
        %v948 = vpop.permute.xlu0 %947
        %949 = vrot.lane.b32.xlu0 %v845, 12
        %v950 = vpop.permute.xlu0 %949
        %951 = vrot.lane.b32.xlu0 %v846, 12
        %v952 = vpop.permute.xlu0 %951
        %953 = vrot.lane.b32.xlu0 %v847, 12
        %v954 = vpop.permute.xlu0 %953
        %955 = vrot.lane.b32.xlu0 %v848, 12
        %v956 = vpop.permute.xlu0 %955
        %957 = vrot.lane.b32.xlu0 %v849, 12
        %v958 = vpop.permute.xlu0 %957
        %959 = vrot.lane.b32.xlu0 %v850, 12
        %v960 = vpop.permute.xlu0 %959
        %961 = vrot.lane.b32.xlu0 %v851, 12
        %v962 = vpop.permute.xlu0 %961
        %963 = vrot.lane.b32.xlu0 %v852, 12
        %v964 = vpop.permute.xlu0 %963
        %965 = vrot.lane.b32.xlu0 %v853, 12
        %v966 = vpop.permute.xlu0 %965
        %967 = vrot.lane.b32.xlu0 %v854, 12
        %v968 = vpop.permute.xlu0 %967
        %969 = vrot.lane.b32.xlu0 %v855, 12
        %v970 = vpop.permute.xlu0 %969
        %971 = vrot.lane.b32.xlu0 %v856, 12
        %v972 = vpop.permute.xlu0 %971
        %973 = vrot.lane.b32.xlu0 %v857, 12
        %v974 = vpop.permute.xlu0 %973
        %975 = vrot.lane.b32.xlu0 %v858, 12
        %v976 = vpop.permute.xlu0 %975
        %977 = vrot.lane.b32.xlu0 %v859, 12
        %v978 = vpop.permute.xlu0 %977
        %979 = vrot.lane.b32.xlu0 %v860, 12
        %v980 = vpop.permute.xlu0 %979
        %981 = vrot.lane.b32.xlu0 %v861, 12
        %v982 = vpop.permute.xlu0 %981
        %983 = vrot.lane.b32.xlu0 %v862, 12
        %v984 = vpop.permute.xlu0 %983
        %985 = vrot.lane.b32.xlu0 %v863, 12
        %v986 = vpop.permute.xlu0 %985
        %987 = vrot.lane.b32.xlu0 %v864, 12
        %v988 = vpop.permute.xlu0 %987
        %989 = vrot.lane.b32.xlu0 %v865, 12
        %v990 = vpop.permute.xlu0 %989
        %991 = vrot.lane.b32.xlu0 %v866, 12
        %v992 = vpop.permute.xlu0 %991
        %993 = vrot.lane.b32.xlu0 %v867, 12
        %v994 = vpop.permute.xlu0 %993
        %995 = vrot.lane.b32.xlu0 %v868, 12
        %v996 = vpop.permute.xlu0 %995
        %997 = vrot.lane.b32.xlu0 %v869, 12
        %v998 = vpop.permute.xlu0 %997
        %999 = vrot.lane.b32.xlu0 %v870, 12
        %v1000 = vpop.permute.xlu0 %999
        %1001 = vrot.lane.b32.xlu0 %v871, 12
        %v1002 = vpop.permute.xlu0 %1001
        %1003 = vrot.lane.b32.xlu0 %v872, 12
        %v1004 = vpop.permute.xlu0 %1003
        %1005 = vrot.lane.b32.xlu0 %v873, 12
        %v1006 = vpop.permute.xlu0 %1005
        %1007 = vrot.lane.b32.xlu0 %v874, 12
        %v1008 = vpop.permute.xlu0 %1007
        %1009 = vrot.lane.b32.xlu0 %v875, 12
        %v1010 = vpop.permute.xlu0 %1009
        %1011 = vrot.lane.b32.xlu0 %v876, 12
        %v1012 = vpop.permute.xlu0 %1011
        %1013 = vrot.lane.b32.xlu0 %v877, 12
        %v1014 = vpop.permute.xlu0 %1013
        %1015 = vrot.lane.b32.xlu0 %v878, 12
        %v1016 = vpop.permute.xlu0 %1015
        %1017 = vrot.lane.b32.xlu0 %v879, 12
        %v1018 = vpop.permute.xlu0 %1017
        %1019 = vrot.lane.b32.xlu0 %v880, 12
        %v1020 = vpop.permute.xlu0 %1019
        %1021 = vrot.lane.b32.xlu0 %v881, 12
        %v1022 = vpop.permute.xlu0 %1021
        %1023 = vrot.lane.b32.xlu0 %v882, 12
        %v1024 = vpop.permute.xlu0 %1023
        %1025 = vrot.lane.b32.xlu0 %v883, 12
        %v1026 = vpop.permute.xlu0 %1025
        %1027 = vrot.lane.b32.xlu0 %v884, 12
        %v1028 = vpop.permute.xlu0 %1027
        %vm1077 = vcmask 130144
        %1078 = vst.msk [vmem:[#allocation2] sm:$0xff] %vm1077, %v934
        %1079 = vst.msk [vmem:[#allocation2 + $0x8] sm:$0xff] %vm1077, %v936
        %1080 = vst.msk [vmem:[#allocation2 + $0x10] sm:$0xff] %vm1077, %v938
        %1081 = vst.msk [vmem:[#allocation2 + $0x18] sm:$0xff] %vm1077, %v940
        %1082 = vst.msk [vmem:[#allocation2 + $0x20] sm:$0xff] %vm1077, %v942
        %1083 = vst.msk [vmem:[#allocation2 + $0x28] sm:$0xff] %vm1077, %v944
        %1084 = vst.msk [vmem:[#allocation2 + $0x30] sm:$0xff] %vm1077, %v946
        %1085 = vst.msk [vmem:[#allocation2 + $0x38] sm:$0xff] %vm1077, %v948
        %1086 = vst.msk [vmem:[#allocation2 + $0x40] sm:$0xff] %vm1077, %v950
        %1087 = vst.msk [vmem:[#allocation2 + $0x48] sm:$0xff] %vm1077, %v952
        %1088 = vst.msk [vmem:[#allocation2 + $0x50] sm:$0xff] %vm1077, %v954
        %1089 = vst.msk [vmem:[#allocation2 + $0x58] sm:$0xff] %vm1077, %v956
        %1090 = vst.msk [vmem:[#allocation2 + $0x60] sm:$0xff] %vm1077, %v958
        %1091 = vst.msk [vmem:[#allocation2 + $0x68] sm:$0xff] %vm1077, %v960
        %1092 = vst.msk [vmem:[#allocation2 + $0x70] sm:$0xff] %vm1077, %v962
        %1093 = vst.msk [vmem:[#allocation2 + $0x78] sm:$0xff] %vm1077, %v964
        %1094 = vst.msk [vmem:[#allocation2 + $0x80] sm:$0xff] %vm1077, %v966
        %1095 = vst.msk [vmem:[#allocation2 + $0x88] sm:$0xff] %vm1077, %v968
        %1096 = vst.msk [vmem:[#allocation2 + $0x90] sm:$0xff] %vm1077, %v970
        %1097 = vst.msk [vmem:[#allocation2 + $0x98] sm:$0xff] %vm1077, %v972
        %1098 = vst.msk [vmem:[#allocation2 + $0xa0] sm:$0xff] %vm1077, %v974
        %1099 = vst.msk [vmem:[#allocation2 + $0xa8] sm:$0xff] %vm1077, %v976
        %1100 = vst.msk [vmem:[#allocation2 + $0xb0] sm:$0xff] %vm1077, %v978
        %1101 = vst.msk [vmem:[#allocation2 + $0xb8] sm:$0xff] %vm1077, %v980
        %1102 = vst.msk [vmem:[#allocation2 + $0xc0] sm:$0xff] %vm1077, %v982
        %1103 = vst.msk [vmem:[#allocation2 + $0xc8] sm:$0xff] %vm1077, %v984
        %1104 = vst.msk [vmem:[#allocation2 + $0xd0] sm:$0xff] %vm1077, %v986
        %1105 = vst.msk [vmem:[#allocation2 + $0xd8] sm:$0xff] %vm1077, %v988
        %1106 = vst.msk [vmem:[#allocation2 + $0xe0] sm:$0xff] %vm1077, %v990
        %1107 = vst.msk [vmem:[#allocation2 + $0xe8] sm:$0xff] %vm1077, %v992
        %1108 = vst.msk [vmem:[#allocation2 + $0xf0] sm:$0xff] %vm1077, %v994
        %1109 = vst.msk [vmem:[#allocation2 + $0xf8] sm:$0xff] %vm1077, %v996
        %1110 = vst.msk [vmem:[#allocation2 + $0x100] sm:$0xff] %vm1077, %v998
        %1111 = vst.msk [vmem:[#allocation2 + $0x108] sm:$0xff] %vm1077, %v1000
        %1112 = vst.msk [vmem:[#allocation2 + $0x110] sm:$0xff] %vm1077, %v1002
        %1113 = vst.msk [vmem:[#allocation2 + $0x118] sm:$0xff] %vm1077, %v1004
        %1114 = vst.msk [vmem:[#allocation2 + $0x120] sm:$0xff] %vm1077, %v1006
        %1115 = vst.msk [vmem:[#allocation2 + $0x128] sm:$0xff] %vm1077, %v1008
        %1116 = vst.msk [vmem:[#allocation2 + $0x130] sm:$0xff] %vm1077, %v1010
        %1117 = vst.msk [vmem:[#allocation2 + $0x138] sm:$0xff] %vm1077, %v1012
        %1118 = vst.msk [vmem:[#allocation2 + $0x140] sm:$0xff] %vm1077, %v1014
        %1119 = vst.msk [vmem:[#allocation2 + $0x148] sm:$0xff] %vm1077, %v1016
        %1120 = vst.msk [vmem:[#allocation2 + $0x150] sm:$0xff] %vm1077, %v1018
        %1121 = vst.msk [vmem:[#allocation2 + $0x158] sm:$0xff] %vm1077, %v1020
        %1122 = vst.msk [vmem:[#allocation2 + $0x160] sm:$0xff] %vm1077, %v1022
        %1123 = vst.msk [vmem:[#allocation2 + $0x168] sm:$0xff] %vm1077, %v1024
        %1124 = vst.msk [vmem:[#allocation2 + $0x170] sm:$0xff] %vm1077, %v1026
        %1125 = vst.msk [vmem:[#allocation2 + $0x178] sm:$0xff] %vm1077, %v1028
        %v1126 = vld [vmem:[%s836 + $0x1] sm:$0xff]
        %v1127 = vld [vmem:[%s836 + $0x11] sm:$0xff]
        %v1128 = vld [vmem:[%s836 + $0x21] sm:$0xff]
        %v1129 = vld [vmem:[%s836 + $0x31] sm:$0xff]
        %v1130 = vld [vmem:[%s836 + $0x41] sm:$0xff]
        %v1131 = vld [vmem:[%s836 + $0x51] sm:$0xff]
        %v1132 = vld [vmem:[%s836 + $0x61] sm:$0xff]
        %v1133 = vld [vmem:[%s836 + $0x71] sm:$0xff]
        %v1134 = vld [vmem:[%s836 + $0xa1] sm:$0xff]
        %v1135 = vld [vmem:[%s836 + $0xb1] sm:$0xff]
        %v1136 = vld [vmem:[%s836 + $0xc1] sm:$0xff]
        %v1137 = vld [vmem:[%s836 + $0xd1] sm:$0xff]
        %v1138 = vld [vmem:[%s836 + $0xe1] sm:$0xff]
        %v1139 = vld [vmem:[%s836 + $0xf1] sm:$0xff]
        %v1140 = vld [vmem:[%s836 + $0x101] sm:$0xff]
        %v1141 = vld [vmem:[%s836 + $0x111] sm:$0xff]
        %v1142 = vld [vmem:[%s836 + $0x141] sm:$0xff]
        %v1143 = vld [vmem:[%s836 + $0x151] sm:$0xff]
        %v1144 = vld [vmem:[%s836 + $0x161] sm:$0xff]
        %v1145 = vld [vmem:[%s836 + $0x171] sm:$0xff]
        %v1146 = vld [vmem:[%s836 + $0x181] sm:$0xff]
        %v1147 = vld [vmem:[%s836 + $0x191] sm:$0xff]
        %v1148 = vld [vmem:[%s836 + $0x1a1] sm:$0xff]
        %v1149 = vld [vmem:[%s836 + $0x1b1] sm:$0xff]
        %v1150 = vld [vmem:[%s836 + $0x1e1] sm:$0xff]
        %v1151 = vld [vmem:[%s836 + $0x1f1] sm:$0xff]
        %v1152 = vld [vmem:[%s836 + $0x201] sm:$0xff]
        %v1153 = vld [vmem:[%s836 + $0x211] sm:$0xff]
        %v1154 = vld [vmem:[%s836 + $0x221] sm:$0xff]
        %v1155 = vld [vmem:[%s836 + $0x231] sm:$0xff]
        %v1156 = vld [vmem:[%s836 + $0x241] sm:$0xff]
        %v1157 = vld [vmem:[%s836 + $0x251] sm:$0xff]
        %v1158 = vld [vmem:[%s836 + $0x281] sm:$0xff]
        %v1159 = vld [vmem:[%s836 + $0x291] sm:$0xff]
        %v1160 = vld [vmem:[%s836 + $0x2a1] sm:$0xff]
        %v1161 = vld [vmem:[%s836 + $0x2b1] sm:$0xff]
        %v1162 = vld [vmem:[%s836 + $0x2c1] sm:$0xff]
        %v1163 = vld [vmem:[%s836 + $0x2d1] sm:$0xff]
        %v1164 = vld [vmem:[%s836 + $0x2e1] sm:$0xff]
        %v1165 = vld [vmem:[%s836 + $0x2f1] sm:$0xff]
        %v1166 = vld [vmem:[%s836 + $0x321] sm:$0xff]
        %v1167 = vld [vmem:[%s836 + $0x331] sm:$0xff]
        %v1168 = vld [vmem:[%s836 + $0x341] sm:$0xff]
        %v1169 = vld [vmem:[%s836 + $0x351] sm:$0xff]
        %v1170 = vld [vmem:[%s836 + $0x361] sm:$0xff]
        %v1171 = vld [vmem:[%s836 + $0x371] sm:$0xff]
        %v1172 = vld [vmem:[%s836 + $0x381] sm:$0xff]
        %v1173 = vld [vmem:[%s836 + $0x391] sm:$0xff]
        %1222 = vrot.lane.b32.xlu0 %v1126, 16
        %v1223 = vpop.permute.xlu0 %1222
        %1224 = vrot.lane.b32.xlu0 %v1127, 16
        %v1225 = vpop.permute.xlu0 %1224
        %1226 = vrot.lane.b32.xlu0 %v1128, 16
        %v1227 = vpop.permute.xlu0 %1226
        %1228 = vrot.lane.b32.xlu0 %v1129, 16
        %v1229 = vpop.permute.xlu0 %1228
        %1230 = vrot.lane.b32.xlu0 %v1130, 16
        %v1231 = vpop.permute.xlu0 %1230
        %1232 = vrot.lane.b32.xlu0 %v1131, 16
        %v1233 = vpop.permute.xlu0 %1232
        %1234 = vrot.lane.b32.xlu0 %v1132, 16
        %v1235 = vpop.permute.xlu0 %1234
        %1236 = vrot.lane.b32.xlu0 %v1133, 16
        %v1237 = vpop.permute.xlu0 %1236
        %1238 = vrot.lane.b32.xlu0 %v1134, 16
        %v1239 = vpop.permute.xlu0 %1238
        %1240 = vrot.lane.b32.xlu0 %v1135, 16
        %v1241 = vpop.permute.xlu0 %1240
        %1242 = vrot.lane.b32.xlu0 %v1136, 16
        %v1243 = vpop.permute.xlu0 %1242
        %1244 = vrot.lane.b32.xlu0 %v1137, 16
        %v1245 = vpop.permute.xlu0 %1244
        %1246 = vrot.lane.b32.xlu0 %v1138, 16
        %v1247 = vpop.permute.xlu0 %1246
        %1248 = vrot.lane.b32.xlu0 %v1139, 16
        %v1249 = vpop.permute.xlu0 %1248
        %1250 = vrot.lane.b32.xlu0 %v1140, 16
        %v1251 = vpop.permute.xlu0 %1250
        %1252 = vrot.lane.b32.xlu0 %v1141, 16
        %v1253 = vpop.permute.xlu0 %1252
        %1254 = vrot.lane.b32.xlu0 %v1142, 16
        %v1255 = vpop.permute.xlu0 %1254
        %1256 = vrot.lane.b32.xlu0 %v1143, 16
        %v1257 = vpop.permute.xlu0 %1256
        %1258 = vrot.lane.b32.xlu0 %v1144, 16
        %v1259 = vpop.permute.xlu0 %1258
        %1260 = vrot.lane.b32.xlu0 %v1145, 16
        %v1261 = vpop.permute.xlu0 %1260
        %1262 = vrot.lane.b32.xlu0 %v1146, 16
        %v1263 = vpop.permute.xlu0 %1262
        %1264 = vrot.lane.b32.xlu0 %v1147, 16
        %v1265 = vpop.permute.xlu0 %1264
        %1266 = vrot.lane.b32.xlu0 %v1148, 16
        %v1267 = vpop.permute.xlu0 %1266
        %1268 = vrot.lane.b32.xlu0 %v1149, 16
        %v1269 = vpop.permute.xlu0 %1268
        %1270 = vrot.lane.b32.xlu0 %v1150, 16
        %v1271 = vpop.permute.xlu0 %1270
        %1272 = vrot.lane.b32.xlu0 %v1151, 16
        %v1273 = vpop.permute.xlu0 %1272
        %1274 = vrot.lane.b32.xlu0 %v1152, 16
        %v1275 = vpop.permute.xlu0 %1274
        %1276 = vrot.lane.b32.xlu0 %v1153, 16
        %v1277 = vpop.permute.xlu0 %1276
        %1278 = vrot.lane.b32.xlu0 %v1154, 16
        %v1279 = vpop.permute.xlu0 %1278
        %1280 = vrot.lane.b32.xlu0 %v1155, 16
        %v1281 = vpop.permute.xlu0 %1280
        %1282 = vrot.lane.b32.xlu0 %v1156, 16
        %v1283 = vpop.permute.xlu0 %1282
        %1284 = vrot.lane.b32.xlu0 %v1157, 16
        %v1285 = vpop.permute.xlu0 %1284
        %1286 = vrot.lane.b32.xlu0 %v1158, 16
        %v1287 = vpop.permute.xlu0 %1286
        %1288 = vrot.lane.b32.xlu0 %v1159, 16
        %v1289 = vpop.permute.xlu0 %1288
        %1290 = vrot.lane.b32.xlu0 %v1160, 16
        %v1291 = vpop.permute.xlu0 %1290
        %1292 = vrot.lane.b32.xlu0 %v1161, 16
        %v1293 = vpop.permute.xlu0 %1292
        %1294 = vrot.lane.b32.xlu0 %v1162, 16
        %v1295 = vpop.permute.xlu0 %1294
        %1296 = vrot.lane.b32.xlu0 %v1163, 16
        %v1297 = vpop.permute.xlu0 %1296
        %1298 = vrot.lane.b32.xlu0 %v1164, 16
        %v1299 = vpop.permute.xlu0 %1298
        %1300 = vrot.lane.b32.xlu0 %v1165, 16
        %v1301 = vpop.permute.xlu0 %1300
        %1302 = vrot.lane.b32.xlu0 %v1166, 16
        %v1303 = vpop.permute.xlu0 %1302
        %1304 = vrot.lane.b32.xlu0 %v1167, 16
        %v1305 = vpop.permute.xlu0 %1304
        %1306 = vrot.lane.b32.xlu0 %v1168, 16
        %v1307 = vpop.permute.xlu0 %1306
        %1308 = vrot.lane.b32.xlu0 %v1169, 16
        %v1309 = vpop.permute.xlu0 %1308
        %1310 = vrot.lane.b32.xlu0 %v1170, 16
        %v1311 = vpop.permute.xlu0 %1310
        %1312 = vrot.lane.b32.xlu0 %v1171, 16
        %v1313 = vpop.permute.xlu0 %1312
        %1314 = vrot.lane.b32.xlu0 %v1172, 16
        %v1315 = vpop.permute.xlu0 %1314
        %1316 = vrot.lane.b32.xlu0 %v1173, 16
        %v1317 = vpop.permute.xlu0 %1316
        %vm1366 = vcmask 162944
        %1367 = vst.msk [vmem:[#allocation2] sm:$0xff] %vm1366, %v1223
        %1368 = vst.msk [vmem:[#allocation2 + $0x8] sm:$0xff] %vm1366, %v1225
        %1369 = vst.msk [vmem:[#allocation2 + $0x10] sm:$0xff] %vm1366, %v1227
        %1370 = vst.msk [vmem:[#allocation2 + $0x18] sm:$0xff] %vm1366, %v1229
        %1371 = vst.msk [vmem:[#allocation2 + $0x20] sm:$0xff] %vm1366, %v1231
        %1372 = vst.msk [vmem:[#allocation2 + $0x28] sm:$0xff] %vm1366, %v1233
        %1373 = vst.msk [vmem:[#allocation2 + $0x30] sm:$0xff] %vm1366, %v1235
        %1374 = vst.msk [vmem:[#allocation2 + $0x38] sm:$0xff] %vm1366, %v1237
        %1375 = vst.msk [vmem:[#allocation2 + $0x40] sm:$0xff] %vm1366, %v1239
        %1376 = vst.msk [vmem:[#allocation2 + $0x48] sm:$0xff] %vm1366, %v1241
        %1377 = vst.msk [vmem:[#allocation2 + $0x50] sm:$0xff] %vm1366, %v1243
        %1378 = vst.msk [vmem:[#allocation2 + $0x58] sm:$0xff] %vm1366, %v1245
        %1379 = vst.msk [vmem:[#allocation2 + $0x60] sm:$0xff] %vm1366, %v1247
        %1380 = vst.msk [vmem:[#allocation2 + $0x68] sm:$0xff] %vm1366, %v1249
        %1381 = vst.msk [vmem:[#allocation2 + $0x70] sm:$0xff] %vm1366, %v1251
        %1382 = vst.msk [vmem:[#allocation2 + $0x78] sm:$0xff] %vm1366, %v1253
        %1383 = vst.msk [vmem:[#allocation2 + $0x80] sm:$0xff] %vm1366, %v1255
        %1384 = vst.msk [vmem:[#allocation2 + $0x88] sm:$0xff] %vm1366, %v1257
        %1385 = vst.msk [vmem:[#allocation2 + $0x90] sm:$0xff] %vm1366, %v1259
        %1386 = vst.msk [vmem:[#allocation2 + $0x98] sm:$0xff] %vm1366, %v1261
        %1387 = vst.msk [vmem:[#allocation2 + $0xa0] sm:$0xff] %vm1366, %v1263
        %1388 = vst.msk [vmem:[#allocation2 + $0xa8] sm:$0xff] %vm1366, %v1265
        %1389 = vst.msk [vmem:[#allocation2 + $0xb0] sm:$0xff] %vm1366, %v1267
        %1390 = vst.msk [vmem:[#allocation2 + $0xb8] sm:$0xff] %vm1366, %v1269
        %1391 = vst.msk [vmem:[#allocation2 + $0xc0] sm:$0xff] %vm1366, %v1271
        %1392 = vst.msk [vmem:[#allocation2 + $0xc8] sm:$0xff] %vm1366, %v1273
        %1393 = vst.msk [vmem:[#allocation2 + $0xd0] sm:$0xff] %vm1366, %v1275
        %1394 = vst.msk [vmem:[#allocation2 + $0xd8] sm:$0xff] %vm1366, %v1277
        %1395 = vst.msk [vmem:[#allocation2 + $0xe0] sm:$0xff] %vm1366, %v1279
        %1396 = vst.msk [vmem:[#allocation2 + $0xe8] sm:$0xff] %vm1366, %v1281
        %1397 = vst.msk [vmem:[#allocation2 + $0xf0] sm:$0xff] %vm1366, %v1283
        %1398 = vst.msk [vmem:[#allocation2 + $0xf8] sm:$0xff] %vm1366, %v1285
        %1399 = vst.msk [vmem:[#allocation2 + $0x100] sm:$0xff] %vm1366, %v1287
        %1400 = vst.msk [vmem:[#allocation2 + $0x108] sm:$0xff] %vm1366, %v1289
        %1401 = vst.msk [vmem:[#allocation2 + $0x110] sm:$0xff] %vm1366, %v1291
        %1402 = vst.msk [vmem:[#allocation2 + $0x118] sm:$0xff] %vm1366, %v1293
        %1403 = vst.msk [vmem:[#allocation2 + $0x120] sm:$0xff] %vm1366, %v1295
        %1404 = vst.msk [vmem:[#allocation2 + $0x128] sm:$0xff] %vm1366, %v1297
        %1405 = vst.msk [vmem:[#allocation2 + $0x130] sm:$0xff] %vm1366, %v1299
        %1406 = vst.msk [vmem:[#allocation2 + $0x138] sm:$0xff] %vm1366, %v1301
        %1407 = vst.msk [vmem:[#allocation2 + $0x140] sm:$0xff] %vm1366, %v1303
        %1408 = vst.msk [vmem:[#allocation2 + $0x148] sm:$0xff] %vm1366, %v1305
        %1409 = vst.msk [vmem:[#allocation2 + $0x150] sm:$0xff] %vm1366, %v1307
        %1410 = vst.msk [vmem:[#allocation2 + $0x158] sm:$0xff] %vm1366, %v1309
        %1411 = vst.msk [vmem:[#allocation2 + $0x160] sm:$0xff] %vm1366, %v1311
        %1412 = vst.msk [vmem:[#allocation2 + $0x168] sm:$0xff] %vm1366, %v1313
        %1413 = vst.msk [vmem:[#allocation2 + $0x170] sm:$0xff] %vm1366, %v1315
        %1414 = vst.msk [vmem:[#allocation2 + $0x178] sm:$0xff] %vm1366, %v1317
        %v1415 = vld [vmem:[%s836 + $0x2] sm:$0xff]
        %v1416 = vld [vmem:[%s836 + $0x12] sm:$0xff]
        %v1417 = vld [vmem:[%s836 + $0x22] sm:$0xff]
        %v1418 = vld [vmem:[%s836 + $0x32] sm:$0xff]
        %v1419 = vld [vmem:[%s836 + $0x42] sm:$0xff]
        %v1420 = vld [vmem:[%s836 + $0x52] sm:$0xff]
        %v1421 = vld [vmem:[%s836 + $0x62] sm:$0xff]
        %v1422 = vld [vmem:[%s836 + $0x72] sm:$0xff]
        %v1423 = vld [vmem:[%s836 + $0xa2] sm:$0xff]
        %v1424 = vld [vmem:[%s836 + $0xb2] sm:$0xff]
        %v1425 = vld [vmem:[%s836 + $0xc2] sm:$0xff]
        %v1426 = vld [vmem:[%s836 + $0xd2] sm:$0xff]
        %v1427 = vld [vmem:[%s836 + $0xe2] sm:$0xff]
        %v1428 = vld [vmem:[%s836 + $0xf2] sm:$0xff]
        %v1429 = vld [vmem:[%s836 + $0x102] sm:$0xff]
        %v1430 = vld [vmem:[%s836 + $0x112] sm:$0xff]
        %v1431 = vld [vmem:[%s836 + $0x142] sm:$0xff]
        %v1432 = vld [vmem:[%s836 + $0x152] sm:$0xff]
        %v1433 = vld [vmem:[%s836 + $0x162] sm:$0xff]
        %v1434 = vld [vmem:[%s836 + $0x172] sm:$0xff]
        %v1435 = vld [vmem:[%s836 + $0x182] sm:$0xff]
        %v1436 = vld [vmem:[%s836 + $0x192] sm:$0xff]
        %v1437 = vld [vmem:[%s836 + $0x1a2] sm:$0xff]
        %v1438 = vld [vmem:[%s836 + $0x1b2] sm:$0xff]
        %v1439 = vld [vmem:[%s836 + $0x1e2] sm:$0xff]
        %v1440 = vld [vmem:[%s836 + $0x1f2] sm:$0xff]
        %v1441 = vld [vmem:[%s836 + $0x202] sm:$0xff]
        %v1442 = vld [vmem:[%s836 + $0x212] sm:$0xff]
        %v1443 = vld [vmem:[%s836 + $0x222] sm:$0xff]
        %v1444 = vld [vmem:[%s836 + $0x232] sm:$0xff]
        %v1445 = vld [vmem:[%s836 + $0x242] sm:$0xff]
        %v1446 = vld [vmem:[%s836 + $0x252] sm:$0xff]
        %v1447 = vld [vmem:[%s836 + $0x282] sm:$0xff]
        %v1448 = vld [vmem:[%s836 + $0x292] sm:$0xff]
        %v1449 = vld [vmem:[%s836 + $0x2a2] sm:$0xff]
        %v1450 = vld [vmem:[%s836 + $0x2b2] sm:$0xff]
        %v1451 = vld [vmem:[%s836 + $0x2c2] sm:$0xff]
        %v1452 = vld [vmem:[%s836 + $0x2d2] sm:$0xff]
        %v1453 = vld [vmem:[%s836 + $0x2e2] sm:$0xff]
        %v1454 = vld [vmem:[%s836 + $0x2f2] sm:$0xff]
        %v1455 = vld [vmem:[%s836 + $0x322] sm:$0xff]
        %v1456 = vld [vmem:[%s836 + $0x332] sm:$0xff]
        %v1457 = vld [vmem:[%s836 + $0x342] sm:$0xff]
        %v1458 = vld [vmem:[%s836 + $0x352] sm:$0xff]
        %v1459 = vld [vmem:[%s836 + $0x362] sm:$0xff]
        %v1460 = vld [vmem:[%s836 + $0x372] sm:$0xff]
        %v1461 = vld [vmem:[%s836 + $0x382] sm:$0xff]
        %v1462 = vld [vmem:[%s836 + $0x392] sm:$0xff]
        %1511 = vrot.lane.b32.xlu0 %v1415, 20
        %v1512 = vpop.permute.xlu0 %1511
        %1513 = vrot.lane.b32.xlu0 %v1416, 20
        %v1514 = vpop.permute.xlu0 %1513
        %1515 = vrot.lane.b32.xlu0 %v1417, 20
        %v1516 = vpop.permute.xlu0 %1515
        %1517 = vrot.lane.b32.xlu0 %v1418, 20
        %v1518 = vpop.permute.xlu0 %1517
        %1519 = vrot.lane.b32.xlu0 %v1419, 20
        %v1520 = vpop.permute.xlu0 %1519
        %1521 = vrot.lane.b32.xlu0 %v1420, 20
        %v1522 = vpop.permute.xlu0 %1521
        %1523 = vrot.lane.b32.xlu0 %v1421, 20
        %v1524 = vpop.permute.xlu0 %1523
        %1525 = vrot.lane.b32.xlu0 %v1422, 20
        %v1526 = vpop.permute.xlu0 %1525
        %1527 = vrot.lane.b32.xlu0 %v1423, 20
        %v1528 = vpop.permute.xlu0 %1527
        %1529 = vrot.lane.b32.xlu0 %v1424, 20
        %v1530 = vpop.permute.xlu0 %1529
        %1531 = vrot.lane.b32.xlu0 %v1425, 20
        %v1532 = vpop.permute.xlu0 %1531
        %1533 = vrot.lane.b32.xlu0 %v1426, 20
        %v1534 = vpop.permute.xlu0 %1533
        %1535 = vrot.lane.b32.xlu0 %v1427, 20
        %v1536 = vpop.permute.xlu0 %1535
        %1537 = vrot.lane.b32.xlu0 %v1428, 20
        %v1538 = vpop.permute.xlu0 %1537
        %1539 = vrot.lane.b32.xlu0 %v1429, 20
        %v1540 = vpop.permute.xlu0 %1539
        %1541 = vrot.lane.b32.xlu0 %v1430, 20
        %v1542 = vpop.permute.xlu0 %1541
        %1543 = vrot.lane.b32.xlu0 %v1431, 20
        %v1544 = vpop.permute.xlu0 %1543
        %1545 = vrot.lane.b32.xlu0 %v1432, 20
        %v1546 = vpop.permute.xlu0 %1545
        %1547 = vrot.lane.b32.xlu0 %v1433, 20
        %v1548 = vpop.permute.xlu0 %1547
        %1549 = vrot.lane.b32.xlu0 %v1434, 20
        %v1550 = vpop.permute.xlu0 %1549
        %1551 = vrot.lane.b32.xlu0 %v1435, 20
        %v1552 = vpop.permute.xlu0 %1551
        %1553 = vrot.lane.b32.xlu0 %v1436, 20
        %v1554 = vpop.permute.xlu0 %1553
        %1555 = vrot.lane.b32.xlu0 %v1437, 20
        %v1556 = vpop.permute.xlu0 %1555
        %1557 = vrot.lane.b32.xlu0 %v1438, 20
        %v1558 = vpop.permute.xlu0 %1557
        %1559 = vrot.lane.b32.xlu0 %v1439, 20
        %v1560 = vpop.permute.xlu0 %1559
        %1561 = vrot.lane.b32.xlu0 %v1440, 20
        %v1562 = vpop.permute.xlu0 %1561
        %1563 = vrot.lane.b32.xlu0 %v1441, 20
        %v1564 = vpop.permute.xlu0 %1563
        %1565 = vrot.lane.b32.xlu0 %v1442, 20
        %v1566 = vpop.permute.xlu0 %1565
        %1567 = vrot.lane.b32.xlu0 %v1443, 20
        %v1568 = vpop.permute.xlu0 %1567
        %1569 = vrot.lane.b32.xlu0 %v1444, 20
        %v1570 = vpop.permute.xlu0 %1569
        %1571 = vrot.lane.b32.xlu0 %v1445, 20
        %v1572 = vpop.permute.xlu0 %1571
        %1573 = vrot.lane.b32.xlu0 %v1446, 20
        %v1574 = vpop.permute.xlu0 %1573
        %1575 = vrot.lane.b32.xlu0 %v1447, 20
        %v1576 = vpop.permute.xlu0 %1575
        %1577 = vrot.lane.b32.xlu0 %v1448, 20
        %v1578 = vpop.permute.xlu0 %1577
        %1579 = vrot.lane.b32.xlu0 %v1449, 20
        %v1580 = vpop.permute.xlu0 %1579
        %1581 = vrot.lane.b32.xlu0 %v1450, 20
        %v1582 = vpop.permute.xlu0 %1581
        %1583 = vrot.lane.b32.xlu0 %v1451, 20
        %v1584 = vpop.permute.xlu0 %1583
        %1585 = vrot.lane.b32.xlu0 %v1452, 20
        %v1586 = vpop.permute.xlu0 %1585
        %1587 = vrot.lane.b32.xlu0 %v1453, 20
        %v1588 = vpop.permute.xlu0 %1587
        %1589 = vrot.lane.b32.xlu0 %v1454, 20
        %v1590 = vpop.permute.xlu0 %1589
        %1591 = vrot.lane.b32.xlu0 %v1455, 20
        %v1592 = vpop.permute.xlu0 %1591
        %1593 = vrot.lane.b32.xlu0 %v1456, 20
        %v1594 = vpop.permute.xlu0 %1593
        %1595 = vrot.lane.b32.xlu0 %v1457, 20
        %v1596 = vpop.permute.xlu0 %1595
        %1597 = vrot.lane.b32.xlu0 %v1458, 20
        %v1598 = vpop.permute.xlu0 %1597
        %1599 = vrot.lane.b32.xlu0 %v1459, 20
        %v1600 = vpop.permute.xlu0 %1599
        %1601 = vrot.lane.b32.xlu0 %v1460, 20
        %v1602 = vpop.permute.xlu0 %1601
        %1603 = vrot.lane.b32.xlu0 %v1461, 20
        %v1604 = vpop.permute.xlu0 %1603
        %1605 = vrot.lane.b32.xlu0 %v1462, 20
        %v1606 = vpop.permute.xlu0 %1605
        %vm1655 = vcmask 195744
        %1656 = vst.msk [vmem:[#allocation2] sm:$0xff] %vm1655, %v1512
        %1657 = vst.msk [vmem:[#allocation2 + $0x8] sm:$0xff] %vm1655, %v1514
        %1658 = vst.msk [vmem:[#allocation2 + $0x10] sm:$0xff] %vm1655, %v1516
        %1659 = vst.msk [vmem:[#allocation2 + $0x18] sm:$0xff] %vm1655, %v1518
        %1660 = vst.msk [vmem:[#allocation2 + $0x20] sm:$0xff] %vm1655, %v1520
        %1661 = vst.msk [vmem:[#allocation2 + $0x28] sm:$0xff] %vm1655, %v1522
        %1662 = vst.msk [vmem:[#allocation2 + $0x30] sm:$0xff] %vm1655, %v1524
        %1663 = vst.msk [vmem:[#allocation2 + $0x38] sm:$0xff] %vm1655, %v1526
        %1664 = vst.msk [vmem:[#allocation2 + $0x40] sm:$0xff] %vm1655, %v1528
        %1665 = vst.msk [vmem:[#allocation2 + $0x48] sm:$0xff] %vm1655, %v1530
        %1666 = vst.msk [vmem:[#allocation2 + $0x50] sm:$0xff] %vm1655, %v1532
        %1667 = vst.msk [vmem:[#allocation2 + $0x58] sm:$0xff] %vm1655, %v1534
        %1668 = vst.msk [vmem:[#allocation2 + $0x60] sm:$0xff] %vm1655, %v1536
        %1669 = vst.msk [vmem:[#allocation2 + $0x68] sm:$0xff] %vm1655, %v1538
        %1670 = vst.msk [vmem:[#allocation2 + $0x70] sm:$0xff] %vm1655, %v1540
        %1671 = vst.msk [vmem:[#allocation2 + $0x78] sm:$0xff] %vm1655, %v1542
        %1672 = vst.msk [vmem:[#allocation2 + $0x80] sm:$0xff] %vm1655, %v1544
        %1673 = vst.msk [vmem:[#allocation2 + $0x88] sm:$0xff] %vm1655, %v1546
        %1674 = vst.msk [vmem:[#allocation2 + $0x90] sm:$0xff] %vm1655, %v1548
        %1675 = vst.msk [vmem:[#allocation2 + $0x98] sm:$0xff] %vm1655, %v1550
        %1676 = vst.msk [vmem:[#allocation2 + $0xa0] sm:$0xff] %vm1655, %v1552
        %1677 = vst.msk [vmem:[#allocation2 + $0xa8] sm:$0xff] %vm1655, %v1554
        %1678 = vst.msk [vmem:[#allocation2 + $0xb0] sm:$0xff] %vm1655, %v1556
        %1679 = vst.msk [vmem:[#allocation2 + $0xb8] sm:$0xff] %vm1655, %v1558
        %1680 = vst.msk [vmem:[#allocation2 + $0xc0] sm:$0xff] %vm1655, %v1560
        %1681 = vst.msk [vmem:[#allocation2 + $0xc8] sm:$0xff] %vm1655, %v1562
        %1682 = vst.msk [vmem:[#allocation2 + $0xd0] sm:$0xff] %vm1655, %v1564
        %1683 = vst.msk [vmem:[#allocation2 + $0xd8] sm:$0xff] %vm1655, %v1566
        %1684 = vst.msk [vmem:[#allocation2 + $0xe0] sm:$0xff] %vm1655, %v1568
        %1685 = vst.msk [vmem:[#allocation2 + $0xe8] sm:$0xff] %vm1655, %v1570
        %1686 = vst.msk [vmem:[#allocation2 + $0xf0] sm:$0xff] %vm1655, %v1572
        %1687 = vst.msk [vmem:[#allocation2 + $0xf8] sm:$0xff] %vm1655, %v1574
        %1688 = vst.msk [vmem:[#allocation2 + $0x100] sm:$0xff] %vm1655, %v1576
        %1689 = vst.msk [vmem:[#allocation2 + $0x108] sm:$0xff] %vm1655, %v1578
        %1690 = vst.msk [vmem:[#allocation2 + $0x110] sm:$0xff] %vm1655, %v1580
        %1691 = vst.msk [vmem:[#allocation2 + $0x118] sm:$0xff] %vm1655, %v1582
        %1692 = vst.msk [vmem:[#allocation2 + $0x120] sm:$0xff] %vm1655, %v1584
        %1693 = vst.msk [vmem:[#allocation2 + $0x128] sm:$0xff] %vm1655, %v1586
        %1694 = vst.msk [vmem:[#allocation2 + $0x130] sm:$0xff] %vm1655, %v1588
        %1695 = vst.msk [vmem:[#allocation2 + $0x138] sm:$0xff] %vm1655, %v1590
        %1696 = vst.msk [vmem:[#allocation2 + $0x140] sm:$0xff] %vm1655, %v1592
        %1697 = vst.msk [vmem:[#allocation2 + $0x148] sm:$0xff] %vm1655, %v1594
        %1698 = vst.msk [vmem:[#allocation2 + $0x150] sm:$0xff] %vm1655, %v1596
        %1699 = vst.msk [vmem:[#allocation2 + $0x158] sm:$0xff] %vm1655, %v1598
        %1700 = vst.msk [vmem:[#allocation2 + $0x160] sm:$0xff] %vm1655, %v1600
        %1701 = vst.msk [vmem:[#allocation2 + $0x168] sm:$0xff] %vm1655, %v1602
        %1702 = vst.msk [vmem:[#allocation2 + $0x170] sm:$0xff] %vm1655, %v1604
        %1703 = vst.msk [vmem:[#allocation2 + $0x178] sm:$0xff] %vm1655, %v1606
        %s1704 = sadd.s32 32, %s158
        %s1705 = scalar_lea.vmem %s155, %s1704
        %v1706 = vld [vmem:[%s1705] sm:$0xff]
        %v1707 = vld [vmem:[%s1705 + $0x10] sm:$0xff]
        %v1708 = vld [vmem:[%s1705 + $0x20] sm:$0xff]
        %v1709 = vld [vmem:[%s1705 + $0x30] sm:$0xff]
        %v1710 = vld [vmem:[%s1705 + $0x40] sm:$0xff]
        %v1711 = vld [vmem:[%s1705 + $0x50] sm:$0xff]
        %v1712 = vld [vmem:[%s1705 + $0x60] sm:$0xff]
        %v1713 = vld [vmem:[%s1705 + $0x70] sm:$0xff]
        %v1714 = vld [vmem:[%s1705 + $0xa0] sm:$0xff]
        %v1715 = vld [vmem:[%s1705 + $0xb0] sm:$0xff]
        %v1716 = vld [vmem:[%s1705 + $0xc0] sm:$0xff]
        %v1717 = vld [vmem:[%s1705 + $0xd0] sm:$0xff]
        %v1718 = vld [vmem:[%s1705 + $0xe0] sm:$0xff]
        %v1719 = vld [vmem:[%s1705 + $0xf0] sm:$0xff]
        %v1720 = vld [vmem:[%s1705 + $0x100] sm:$0xff]
        %v1721 = vld [vmem:[%s1705 + $0x110] sm:$0xff]
        %v1722 = vld [vmem:[%s1705 + $0x140] sm:$0xff]
        %v1723 = vld [vmem:[%s1705 + $0x150] sm:$0xff]
        %v1724 = vld [vmem:[%s1705 + $0x160] sm:$0xff]
        %v1725 = vld [vmem:[%s1705 + $0x170] sm:$0xff]
        %v1726 = vld [vmem:[%s1705 + $0x180] sm:$0xff]
        %v1727 = vld [vmem:[%s1705 + $0x190] sm:$0xff]
        %v1728 = vld [vmem:[%s1705 + $0x1a0] sm:$0xff]
        %v1729 = vld [vmem:[%s1705 + $0x1b0] sm:$0xff]
        %v1730 = vld [vmem:[%s1705 + $0x1e0] sm:$0xff]
        %v1731 = vld [vmem:[%s1705 + $0x1f0] sm:$0xff]
        %v1732 = vld [vmem:[%s1705 + $0x200] sm:$0xff]
        %v1733 = vld [vmem:[%s1705 + $0x210] sm:$0xff]
        %v1734 = vld [vmem:[%s1705 + $0x220] sm:$0xff]
        %v1735 = vld [vmem:[%s1705 + $0x230] sm:$0xff]
        %v1736 = vld [vmem:[%s1705 + $0x240] sm:$0xff]
        %v1737 = vld [vmem:[%s1705 + $0x250] sm:$0xff]
        %v1738 = vld [vmem:[%s1705 + $0x280] sm:$0xff]
        %v1739 = vld [vmem:[%s1705 + $0x290] sm:$0xff]
        %v1740 = vld [vmem:[%s1705 + $0x2a0] sm:$0xff]
        %v1741 = vld [vmem:[%s1705 + $0x2b0] sm:$0xff]
        %v1742 = vld [vmem:[%s1705 + $0x2c0] sm:$0xff]
        %v1743 = vld [vmem:[%s1705 + $0x2d0] sm:$0xff]
        %v1744 = vld [vmem:[%s1705 + $0x2e0] sm:$0xff]
        %v1745 = vld [vmem:[%s1705 + $0x2f0] sm:$0xff]
        %v1746 = vld [vmem:[%s1705 + $0x320] sm:$0xff]
        %v1747 = vld [vmem:[%s1705 + $0x330] sm:$0xff]
        %v1748 = vld [vmem:[%s1705 + $0x340] sm:$0xff]
        %v1749 = vld [vmem:[%s1705 + $0x350] sm:$0xff]
        %v1750 = vld [vmem:[%s1705 + $0x360] sm:$0xff]
        %v1751 = vld [vmem:[%s1705 + $0x370] sm:$0xff]
        %v1752 = vld [vmem:[%s1705 + $0x380] sm:$0xff]
        %v1753 = vld [vmem:[%s1705 + $0x390] sm:$0xff]
        %1802 = vrot.lane.b32.xlu0 %v1706, 24
        %v1803 = vpop.permute.xlu0 %1802
        %1804 = vrot.lane.b32.xlu0 %v1707, 24
        %v1805 = vpop.permute.xlu0 %1804
        %1806 = vrot.lane.b32.xlu0 %v1708, 24
        %v1807 = vpop.permute.xlu0 %1806
        %1808 = vrot.lane.b32.xlu0 %v1709, 24
        %v1809 = vpop.permute.xlu0 %1808
        %1810 = vrot.lane.b32.xlu0 %v1710, 24
        %v1811 = vpop.permute.xlu0 %1810
        %1812 = vrot.lane.b32.xlu0 %v1711, 24
        %v1813 = vpop.permute.xlu0 %1812
        %1814 = vrot.lane.b32.xlu0 %v1712, 24
        %v1815 = vpop.permute.xlu0 %1814
        %1816 = vrot.lane.b32.xlu0 %v1713, 24
        %v1817 = vpop.permute.xlu0 %1816
        %1818 = vrot.lane.b32.xlu0 %v1714, 24
        %v1819 = vpop.permute.xlu0 %1818
        %1820 = vrot.lane.b32.xlu0 %v1715, 24
        %v1821 = vpop.permute.xlu0 %1820
        %1822 = vrot.lane.b32.xlu0 %v1716, 24
        %v1823 = vpop.permute.xlu0 %1822
        %1824 = vrot.lane.b32.xlu0 %v1717, 24
        %v1825 = vpop.permute.xlu0 %1824
        %1826 = vrot.lane.b32.xlu0 %v1718, 24
        %v1827 = vpop.permute.xlu0 %1826
        %1828 = vrot.lane.b32.xlu0 %v1719, 24
        %v1829 = vpop.permute.xlu0 %1828
        %1830 = vrot.lane.b32.xlu0 %v1720, 24
        %v1831 = vpop.permute.xlu0 %1830
        %1832 = vrot.lane.b32.xlu0 %v1721, 24
        %v1833 = vpop.permute.xlu0 %1832
        %1834 = vrot.lane.b32.xlu0 %v1722, 24
        %v1835 = vpop.permute.xlu0 %1834
        %1836 = vrot.lane.b32.xlu0 %v1723, 24
        %v1837 = vpop.permute.xlu0 %1836
        %1838 = vrot.lane.b32.xlu0 %v1724, 24
        %v1839 = vpop.permute.xlu0 %1838
        %1840 = vrot.lane.b32.xlu0 %v1725, 24
        %v1841 = vpop.permute.xlu0 %1840
        %1842 = vrot.lane.b32.xlu0 %v1726, 24
        %v1843 = vpop.permute.xlu0 %1842
        %1844 = vrot.lane.b32.xlu0 %v1727, 24
        %v1845 = vpop.permute.xlu0 %1844
        %1846 = vrot.lane.b32.xlu0 %v1728, 24
        %v1847 = vpop.permute.xlu0 %1846
        %1848 = vrot.lane.b32.xlu0 %v1729, 24
        %v1849 = vpop.permute.xlu0 %1848
        %1850 = vrot.lane.b32.xlu0 %v1730, 24
        %v1851 = vpop.permute.xlu0 %1850
        %1852 = vrot.lane.b32.xlu0 %v1731, 24
        %v1853 = vpop.permute.xlu0 %1852
        %1854 = vrot.lane.b32.xlu0 %v1732, 24
        %v1855 = vpop.permute.xlu0 %1854
        %1856 = vrot.lane.b32.xlu0 %v1733, 24
        %v1857 = vpop.permute.xlu0 %1856
        %1858 = vrot.lane.b32.xlu0 %v1734, 24
        %v1859 = vpop.permute.xlu0 %1858
        %1860 = vrot.lane.b32.xlu0 %v1735, 24
        %v1861 = vpop.permute.xlu0 %1860
        %1862 = vrot.lane.b32.xlu0 %v1736, 24
        %v1863 = vpop.permute.xlu0 %1862
        %1864 = vrot.lane.b32.xlu0 %v1737, 24
        %v1865 = vpop.permute.xlu0 %1864
        %1866 = vrot.lane.b32.xlu0 %v1738, 24
        %v1867 = vpop.permute.xlu0 %1866
        %1868 = vrot.lane.b32.xlu0 %v1739, 24
        %v1869 = vpop.permute.xlu0 %1868
        %1870 = vrot.lane.b32.xlu0 %v1740, 24
        %v1871 = vpop.permute.xlu0 %1870
        %1872 = vrot.lane.b32.xlu0 %v1741, 24
        %v1873 = vpop.permute.xlu0 %1872
        %1874 = vrot.lane.b32.xlu0 %v1742, 24
        %v1875 = vpop.permute.xlu0 %1874
        %1876 = vrot.lane.b32.xlu0 %v1743, 24
        %v1877 = vpop.permute.xlu0 %1876
        %1878 = vrot.lane.b32.xlu0 %v1744, 24
        %v1879 = vpop.permute.xlu0 %1878
        %1880 = vrot.lane.b32.xlu0 %v1745, 24
        %v1881 = vpop.permute.xlu0 %1880
        %1882 = vrot.lane.b32.xlu0 %v1746, 24
        %v1883 = vpop.permute.xlu0 %1882
        %1884 = vrot.lane.b32.xlu0 %v1747, 24
        %v1885 = vpop.permute.xlu0 %1884
        %1886 = vrot.lane.b32.xlu0 %v1748, 24
        %v1887 = vpop.permute.xlu0 %1886
        %1888 = vrot.lane.b32.xlu0 %v1749, 24
        %v1889 = vpop.permute.xlu0 %1888
        %1890 = vrot.lane.b32.xlu0 %v1750, 24
        %v1891 = vpop.permute.xlu0 %1890
        %1892 = vrot.lane.b32.xlu0 %v1751, 24
        %v1893 = vpop.permute.xlu0 %1892
        %1894 = vrot.lane.b32.xlu0 %v1752, 24
        %v1895 = vpop.permute.xlu0 %1894
        %1896 = vrot.lane.b32.xlu0 %v1753, 24
        %v1897 = vpop.permute.xlu0 %1896
        %vm1946 = vcmask 228544
        %1947 = vst.msk [vmem:[#allocation2] sm:$0xff] %vm1946, %v1803
        %1948 = vst.msk [vmem:[#allocation2 + $0x8] sm:$0xff] %vm1946, %v1805
        %1949 = vst.msk [vmem:[#allocation2 + $0x10] sm:$0xff] %vm1946, %v1807
        %1950 = vst.msk [vmem:[#allocation2 + $0x18] sm:$0xff] %vm1946, %v1809
        %1951 = vst.msk [vmem:[#allocation2 + $0x20] sm:$0xff] %vm1946, %v1811
        %1952 = vst.msk [vmem:[#allocation2 + $0x28] sm:$0xff] %vm1946, %v1813
        %1953 = vst.msk [vmem:[#allocation2 + $0x30] sm:$0xff] %vm1946, %v1815
        %1954 = vst.msk [vmem:[#allocation2 + $0x38] sm:$0xff] %vm1946, %v1817
        %1955 = vst.msk [vmem:[#allocation2 + $0x40] sm:$0xff] %vm1946, %v1819
        %1956 = vst.msk [vmem:[#allocation2 + $0x48] sm:$0xff] %vm1946, %v1821
        %1957 = vst.msk [vmem:[#allocation2 + $0x50] sm:$0xff] %vm1946, %v1823
        %1958 = vst.msk [vmem:[#allocation2 + $0x58] sm:$0xff] %vm1946, %v1825
        %1959 = vst.msk [vmem:[#allocation2 + $0x60] sm:$0xff] %vm1946, %v1827
        %1960 = vst.msk [vmem:[#allocation2 + $0x68] sm:$0xff] %vm1946, %v1829
        %1961 = vst.msk [vmem:[#allocation2 + $0x70] sm:$0xff] %vm1946, %v1831
        %1962 = vst.msk [vmem:[#allocation2 + $0x78] sm:$0xff] %vm1946, %v1833
        %1963 = vst.msk [vmem:[#allocation2 + $0x80] sm:$0xff] %vm1946, %v1835
        %1964 = vst.msk [vmem:[#allocation2 + $0x88] sm:$0xff] %vm1946, %v1837
        %1965 = vst.msk [vmem:[#allocation2 + $0x90] sm:$0xff] %vm1946, %v1839
        %1966 = vst.msk [vmem:[#allocation2 + $0x98] sm:$0xff] %vm1946, %v1841
        %1967 = vst.msk [vmem:[#allocation2 + $0xa0] sm:$0xff] %vm1946, %v1843
        %1968 = vst.msk [vmem:[#allocation2 + $0xa8] sm:$0xff] %vm1946, %v1845
        %1969 = vst.msk [vmem:[#allocation2 + $0xb0] sm:$0xff] %vm1946, %v1847
        %1970 = vst.msk [vmem:[#allocation2 + $0xb8] sm:$0xff] %vm1946, %v1849
        %1971 = vst.msk [vmem:[#allocation2 + $0xc0] sm:$0xff] %vm1946, %v1851
        %1972 = vst.msk [vmem:[#allocation2 + $0xc8] sm:$0xff] %vm1946, %v1853
        %1973 = vst.msk [vmem:[#allocation2 + $0xd0] sm:$0xff] %vm1946, %v1855
        %1974 = vst.msk [vmem:[#allocation2 + $0xd8] sm:$0xff] %vm1946, %v1857
        %1975 = vst.msk [vmem:[#allocation2 + $0xe0] sm:$0xff] %vm1946, %v1859
        %1976 = vst.msk [vmem:[#allocation2 + $0xe8] sm:$0xff] %vm1946, %v1861
        %1977 = vst.msk [vmem:[#allocation2 + $0xf0] sm:$0xff] %vm1946, %v1863
        %1978 = vst.msk [vmem:[#allocation2 + $0xf8] sm:$0xff] %vm1946, %v1865
        %1979 = vst.msk [vmem:[#allocation2 + $0x100] sm:$0xff] %vm1946, %v1867
        %1980 = vst.msk [vmem:[#allocation2 + $0x108] sm:$0xff] %vm1946, %v1869
        %1981 = vst.msk [vmem:[#allocation2 + $0x110] sm:$0xff] %vm1946, %v1871
        %1982 = vst.msk [vmem:[#allocation2 + $0x118] sm:$0xff] %vm1946, %v1873
        %1983 = vst.msk [vmem:[#allocation2 + $0x120] sm:$0xff] %vm1946, %v1875
        %1984 = vst.msk [vmem:[#allocation2 + $0x128] sm:$0xff] %vm1946, %v1877
        %1985 = vst.msk [vmem:[#allocation2 + $0x130] sm:$0xff] %vm1946, %v1879
        %1986 = vst.msk [vmem:[#allocation2 + $0x138] sm:$0xff] %vm1946, %v1881
        %1987 = vst.msk [vmem:[#allocation2 + $0x140] sm:$0xff] %vm1946, %v1883
        %1988 = vst.msk [vmem:[#allocation2 + $0x148] sm:$0xff] %vm1946, %v1885
        %1989 = vst.msk [vmem:[#allocation2 + $0x150] sm:$0xff] %vm1946, %v1887
        %1990 = vst.msk [vmem:[#allocation2 + $0x158] sm:$0xff] %vm1946, %v1889
        %1991 = vst.msk [vmem:[#allocation2 + $0x160] sm:$0xff] %vm1946, %v1891
        %1992 = vst.msk [vmem:[#allocation2 + $0x168] sm:$0xff] %vm1946, %v1893
        %1993 = vst.msk [vmem:[#allocation2 + $0x170] sm:$0xff] %vm1946, %v1895
        %1994 = vst.msk [vmem:[#allocation2 + $0x178] sm:$0xff] %vm1946, %v1897
        %v1995 = vld [vmem:[%s1705 + $0x1] sm:$0xff]
        %v1996 = vld [vmem:[%s1705 + $0x11] sm:$0xff]
        %v1997 = vld [vmem:[%s1705 + $0x21] sm:$0xff]
        %v1998 = vld [vmem:[%s1705 + $0x31] sm:$0xff]
        %v1999 = vld [vmem:[%s1705 + $0x41] sm:$0xff]
        %v2000 = vld [vmem:[%s1705 + $0x51] sm:$0xff]
        %v2001 = vld [vmem:[%s1705 + $0x61] sm:$0xff]
        %v2002 = vld [vmem:[%s1705 + $0x71] sm:$0xff]
        %v2003 = vld [vmem:[%s1705 + $0xa1] sm:$0xff]
        %v2004 = vld [vmem:[%s1705 + $0xb1] sm:$0xff]
        %v2005 = vld [vmem:[%s1705 + $0xc1] sm:$0xff]
        %v2006 = vld [vmem:[%s1705 + $0xd1] sm:$0xff]
        %v2007 = vld [vmem:[%s1705 + $0xe1] sm:$0xff]
        %v2008 = vld [vmem:[%s1705 + $0xf1] sm:$0xff]
        %v2009 = vld [vmem:[%s1705 + $0x101] sm:$0xff]
        %v2010 = vld [vmem:[%s1705 + $0x111] sm:$0xff]
        %v2011 = vld [vmem:[%s1705 + $0x141] sm:$0xff]
        %v2012 = vld [vmem:[%s1705 + $0x151] sm:$0xff]
        %v2013 = vld [vmem:[%s1705 + $0x161] sm:$0xff]
        %v2014 = vld [vmem:[%s1705 + $0x171] sm:$0xff]
        %v2015 = vld [vmem:[%s1705 + $0x181] sm:$0xff]
        %v2016 = vld [vmem:[%s1705 + $0x191] sm:$0xff]
        %v2017 = vld [vmem:[%s1705 + $0x1a1] sm:$0xff]
        %v2018 = vld [vmem:[%s1705 + $0x1b1] sm:$0xff]
        %v2019 = vld [vmem:[%s1705 + $0x1e1] sm:$0xff]
        %v2020 = vld [vmem:[%s1705 + $0x1f1] sm:$0xff]
        %v2021 = vld [vmem:[%s1705 + $0x201] sm:$0xff]
        %v2022 = vld [vmem:[%s1705 + $0x211] sm:$0xff]
        %v2023 = vld [vmem:[%s1705 + $0x221] sm:$0xff]
        %v2024 = vld [vmem:[%s1705 + $0x231] sm:$0xff]
        %v2025 = vld [vmem:[%s1705 + $0x241] sm:$0xff]
        %v2026 = vld [vmem:[%s1705 + $0x251] sm:$0xff]
        %v2027 = vld [vmem:[%s1705 + $0x281] sm:$0xff]
        %v2028 = vld [vmem:[%s1705 + $0x291] sm:$0xff]
        %v2029 = vld [vmem:[%s1705 + $0x2a1] sm:$0xff]
        %v2030 = vld [vmem:[%s1705 + $0x2b1] sm:$0xff]
        %v2031 = vld [vmem:[%s1705 + $0x2c1] sm:$0xff]
        %v2032 = vld [vmem:[%s1705 + $0x2d1] sm:$0xff]
        %v2033 = vld [vmem:[%s1705 + $0x2e1] sm:$0xff]
        %v2034 = vld [vmem:[%s1705 + $0x2f1] sm:$0xff]
        %v2035 = vld [vmem:[%s1705 + $0x321] sm:$0xff]
        %v2036 = vld [vmem:[%s1705 + $0x331] sm:$0xff]
        %v2037 = vld [vmem:[%s1705 + $0x341] sm:$0xff]
        %v2038 = vld [vmem:[%s1705 + $0x351] sm:$0xff]
        %v2039 = vld [vmem:[%s1705 + $0x361] sm:$0xff]
        %v2040 = vld [vmem:[%s1705 + $0x371] sm:$0xff]
        %v2041 = vld [vmem:[%s1705 + $0x381] sm:$0xff]
        %v2042 = vld [vmem:[%s1705 + $0x391] sm:$0xff]
        %2091 = vrot.lane.b32.xlu0 %v1995, 28
        %v2092 = vpop.permute.xlu0 %2091
        %2093 = vrot.lane.b32.xlu0 %v1996, 28
        %v2094 = vpop.permute.xlu0 %2093
        %2095 = vrot.lane.b32.xlu0 %v1997, 28
        %v2096 = vpop.permute.xlu0 %2095
        %2097 = vrot.lane.b32.xlu0 %v1998, 28
        %v2098 = vpop.permute.xlu0 %2097
        %2099 = vrot.lane.b32.xlu0 %v1999, 28
        %v2100 = vpop.permute.xlu0 %2099
        %2101 = vrot.lane.b32.xlu0 %v2000, 28
        %v2102 = vpop.permute.xlu0 %2101
        %2103 = vrot.lane.b32.xlu0 %v2001, 28
        %v2104 = vpop.permute.xlu0 %2103
        %2105 = vrot.lane.b32.xlu0 %v2002, 28
        %v2106 = vpop.permute.xlu0 %2105
        %2107 = vrot.lane.b32.xlu0 %v2003, 28
        %v2108 = vpop.permute.xlu0 %2107
        %2109 = vrot.lane.b32.xlu0 %v2004, 28
        %v2110 = vpop.permute.xlu0 %2109
        %2111 = vrot.lane.b32.xlu0 %v2005, 28
        %v2112 = vpop.permute.xlu0 %2111
        %2113 = vrot.lane.b32.xlu0 %v2006, 28
        %v2114 = vpop.permute.xlu0 %2113
        %2115 = vrot.lane.b32.xlu0 %v2007, 28
        %v2116 = vpop.permute.xlu0 %2115
        %2117 = vrot.lane.b32.xlu0 %v2008, 28
        %v2118 = vpop.permute.xlu0 %2117
        %2119 = vrot.lane.b32.xlu0 %v2009, 28
        %v2120 = vpop.permute.xlu0 %2119
        %2121 = vrot.lane.b32.xlu0 %v2010, 28
        %v2122 = vpop.permute.xlu0 %2121
        %2123 = vrot.lane.b32.xlu0 %v2011, 28
        %v2124 = vpop.permute.xlu0 %2123
        %2125 = vrot.lane.b32.xlu0 %v2012, 28
        %v2126 = vpop.permute.xlu0 %2125
        %2127 = vrot.lane.b32.xlu0 %v2013, 28
        %v2128 = vpop.permute.xlu0 %2127
        %2129 = vrot.lane.b32.xlu0 %v2014, 28
        %v2130 = vpop.permute.xlu0 %2129
        %2131 = vrot.lane.b32.xlu0 %v2015, 28
        %v2132 = vpop.permute.xlu0 %2131
        %2133 = vrot.lane.b32.xlu0 %v2016, 28
        %v2134 = vpop.permute.xlu0 %2133
        %2135 = vrot.lane.b32.xlu0 %v2017, 28
        %v2136 = vpop.permute.xlu0 %2135
        %2137 = vrot.lane.b32.xlu0 %v2018, 28
        %v2138 = vpop.permute.xlu0 %2137
        %2139 = vrot.lane.b32.xlu0 %v2019, 28
        %v2140 = vpop.permute.xlu0 %2139
        %2141 = vrot.lane.b32.xlu0 %v2020, 28
        %v2142 = vpop.permute.xlu0 %2141
        %2143 = vrot.lane.b32.xlu0 %v2021, 28
        %v2144 = vpop.permute.xlu0 %2143
        %2145 = vrot.lane.b32.xlu0 %v2022, 28
        %v2146 = vpop.permute.xlu0 %2145
        %2147 = vrot.lane.b32.xlu0 %v2023, 28
        %v2148 = vpop.permute.xlu0 %2147
        %2149 = vrot.lane.b32.xlu0 %v2024, 28
        %v2150 = vpop.permute.xlu0 %2149
        %2151 = vrot.lane.b32.xlu0 %v2025, 28
        %v2152 = vpop.permute.xlu0 %2151
        %2153 = vrot.lane.b32.xlu0 %v2026, 28
        %v2154 = vpop.permute.xlu0 %2153
        %2155 = vrot.lane.b32.xlu0 %v2027, 28
        %v2156 = vpop.permute.xlu0 %2155
        %2157 = vrot.lane.b32.xlu0 %v2028, 28
        %v2158 = vpop.permute.xlu0 %2157
        %2159 = vrot.lane.b32.xlu0 %v2029, 28
        %v2160 = vpop.permute.xlu0 %2159
        %2161 = vrot.lane.b32.xlu0 %v2030, 28
        %v2162 = vpop.permute.xlu0 %2161
        %2163 = vrot.lane.b32.xlu0 %v2031, 28
        %v2164 = vpop.permute.xlu0 %2163
        %2165 = vrot.lane.b32.xlu0 %v2032, 28
        %v2166 = vpop.permute.xlu0 %2165
        %2167 = vrot.lane.b32.xlu0 %v2033, 28
        %v2168 = vpop.permute.xlu0 %2167
        %2169 = vrot.lane.b32.xlu0 %v2034, 28
        %v2170 = vpop.permute.xlu0 %2169
        %2171 = vrot.lane.b32.xlu0 %v2035, 28
        %v2172 = vpop.permute.xlu0 %2171
        %2173 = vrot.lane.b32.xlu0 %v2036, 28
        %v2174 = vpop.permute.xlu0 %2173
        %2175 = vrot.lane.b32.xlu0 %v2037, 28
        %v2176 = vpop.permute.xlu0 %2175
        %2177 = vrot.lane.b32.xlu0 %v2038, 28
        %v2178 = vpop.permute.xlu0 %2177
        %2179 = vrot.lane.b32.xlu0 %v2039, 28
        %v2180 = vpop.permute.xlu0 %2179
        %2181 = vrot.lane.b32.xlu0 %v2040, 28
        %v2182 = vpop.permute.xlu0 %2181
        %2183 = vrot.lane.b32.xlu0 %v2041, 28
        %v2184 = vpop.permute.xlu0 %2183
        %2185 = vrot.lane.b32.xlu0 %v2042, 28
        %v2186 = vpop.permute.xlu0 %2185
        %vm2235 = vcmask 261344
        %2236 = vst.msk [vmem:[#allocation2] sm:$0xff] %vm2235, %v2092
        %2237 = vst.msk [vmem:[#allocation2 + $0x8] sm:$0xff] %vm2235, %v2094
        %2238 = vst.msk [vmem:[#allocation2 + $0x10] sm:$0xff] %vm2235, %v2096
        %2239 = vst.msk [vmem:[#allocation2 + $0x18] sm:$0xff] %vm2235, %v2098
        %2240 = vst.msk [vmem:[#allocation2 + $0x20] sm:$0xff] %vm2235, %v2100
        %2241 = vst.msk [vmem:[#allocation2 + $0x28] sm:$0xff] %vm2235, %v2102
        %2242 = vst.msk [vmem:[#allocation2 + $0x30] sm:$0xff] %vm2235, %v2104
        %2243 = vst.msk [vmem:[#allocation2 + $0x38] sm:$0xff] %vm2235, %v2106
        %2244 = vst.msk [vmem:[#allocation2 + $0x40] sm:$0xff] %vm2235, %v2108
        %2245 = vst.msk [vmem:[#allocation2 + $0x48] sm:$0xff] %vm2235, %v2110
        %2246 = vst.msk [vmem:[#allocation2 + $0x50] sm:$0xff] %vm2235, %v2112
        %2247 = vst.msk [vmem:[#allocation2 + $0x58] sm:$0xff] %vm2235, %v2114
        %2248 = vst.msk [vmem:[#allocation2 + $0x60] sm:$0xff] %vm2235, %v2116
        %2249 = vst.msk [vmem:[#allocation2 + $0x68] sm:$0xff] %vm2235, %v2118
        %2250 = vst.msk [vmem:[#allocation2 + $0x70] sm:$0xff] %vm2235, %v2120
        %2251 = vst.msk [vmem:[#allocation2 + $0x78] sm:$0xff] %vm2235, %v2122
        %2252 = vst.msk [vmem:[#allocation2 + $0x80] sm:$0xff] %vm2235, %v2124
        %2253 = vst.msk [vmem:[#allocation2 + $0x88] sm:$0xff] %vm2235, %v2126
        %2254 = vst.msk [vmem:[#allocation2 + $0x90] sm:$0xff] %vm2235, %v2128
        %2255 = vst.msk [vmem:[#allocation2 + $0x98] sm:$0xff] %vm2235, %v2130
        %2256 = vst.msk [vmem:[#allocation2 + $0xa0] sm:$0xff] %vm2235, %v2132
        %2257 = vst.msk [vmem:[#allocation2 + $0xa8] sm:$0xff] %vm2235, %v2134
        %2258 = vst.msk [vmem:[#allocation2 + $0xb0] sm:$0xff] %vm2235, %v2136
        %2259 = vst.msk [vmem:[#allocation2 + $0xb8] sm:$0xff] %vm2235, %v2138
        %2260 = vst.msk [vmem:[#allocation2 + $0xc0] sm:$0xff] %vm2235, %v2140
        %2261 = vst.msk [vmem:[#allocation2 + $0xc8] sm:$0xff] %vm2235, %v2142
        %2262 = vst.msk [vmem:[#allocation2 + $0xd0] sm:$0xff] %vm2235, %v2144
        %2263 = vst.msk [vmem:[#allocation2 + $0xd8] sm:$0xff] %vm2235, %v2146
        %2264 = vst.msk [vmem:[#allocation2 + $0xe0] sm:$0xff] %vm2235, %v2148
        %2265 = vst.msk [vmem:[#allocation2 + $0xe8] sm:$0xff] %vm2235, %v2150
        %2266 = vst.msk [vmem:[#allocation2 + $0xf0] sm:$0xff] %vm2235, %v2152
        %2267 = vst.msk [vmem:[#allocation2 + $0xf8] sm:$0xff] %vm2235, %v2154
        %2268 = vst.msk [vmem:[#allocation2 + $0x100] sm:$0xff] %vm2235, %v2156
        %2269 = vst.msk [vmem:[#allocation2 + $0x108] sm:$0xff] %vm2235, %v2158
        %2270 = vst.msk [vmem:[#allocation2 + $0x110] sm:$0xff] %vm2235, %v2160
        %2271 = vst.msk [vmem:[#allocation2 + $0x118] sm:$0xff] %vm2235, %v2162
        %2272 = vst.msk [vmem:[#allocation2 + $0x120] sm:$0xff] %vm2235, %v2164
        %2273 = vst.msk [vmem:[#allocation2 + $0x128] sm:$0xff] %vm2235, %v2166
        %2274 = vst.msk [vmem:[#allocation2 + $0x130] sm:$0xff] %vm2235, %v2168
        %2275 = vst.msk [vmem:[#allocation2 + $0x138] sm:$0xff] %vm2235, %v2170
        %2276 = vst.msk [vmem:[#allocation2 + $0x140] sm:$0xff] %vm2235, %v2172
        %2277 = vst.msk [vmem:[#allocation2 + $0x148] sm:$0xff] %vm2235, %v2174
        %2278 = vst.msk [vmem:[#allocation2 + $0x150] sm:$0xff] %vm2235, %v2176
        %2279 = vst.msk [vmem:[#allocation2 + $0x158] sm:$0xff] %vm2235, %v2178
        %2280 = vst.msk [vmem:[#allocation2 + $0x160] sm:$0xff] %vm2235, %v2180
        %2281 = vst.msk [vmem:[#allocation2 + $0x168] sm:$0xff] %vm2235, %v2182
        %2282 = vst.msk [vmem:[#allocation2 + $0x170] sm:$0xff] %vm2235, %v2184
        %2283 = vst.msk [vmem:[#allocation2 + $0x178] sm:$0xff] %vm2235, %v2186
        %v2284 = vld [vmem:[%s1705 + $0x2] sm:$0xff]
        %v2285 = vld [vmem:[%s1705 + $0x12] sm:$0xff]
        %v2286 = vld [vmem:[%s1705 + $0x22] sm:$0xff]
        %v2287 = vld [vmem:[%s1705 + $0x32] sm:$0xff]
        %v2288 = vld [vmem:[%s1705 + $0x42] sm:$0xff]
        %v2289 = vld [vmem:[%s1705 + $0x52] sm:$0xff]
        %v2290 = vld [vmem:[%s1705 + $0x62] sm:$0xff]
        %v2291 = vld [vmem:[%s1705 + $0x72] sm:$0xff]
        %v2292 = vld [vmem:[%s1705 + $0xa2] sm:$0xff]
        %v2293 = vld [vmem:[%s1705 + $0xb2] sm:$0xff]
        %v2294 = vld [vmem:[%s1705 + $0xc2] sm:$0xff]
        %v2295 = vld [vmem:[%s1705 + $0xd2] sm:$0xff]
        %v2296 = vld [vmem:[%s1705 + $0xe2] sm:$0xff]
        %v2297 = vld [vmem:[%s1705 + $0xf2] sm:$0xff]
        %v2298 = vld [vmem:[%s1705 + $0x102] sm:$0xff]
        %v2299 = vld [vmem:[%s1705 + $0x112] sm:$0xff]
        %v2300 = vld [vmem:[%s1705 + $0x142] sm:$0xff]
        %v2301 = vld [vmem:[%s1705 + $0x152] sm:$0xff]
        %v2302 = vld [vmem:[%s1705 + $0x162] sm:$0xff]
        %v2303 = vld [vmem:[%s1705 + $0x172] sm:$0xff]
        %v2304 = vld [vmem:[%s1705 + $0x182] sm:$0xff]
        %v2305 = vld [vmem:[%s1705 + $0x192] sm:$0xff]
        %v2306 = vld [vmem:[%s1705 + $0x1a2] sm:$0xff]
        %v2307 = vld [vmem:[%s1705 + $0x1b2] sm:$0xff]
        %v2308 = vld [vmem:[%s1705 + $0x1e2] sm:$0xff]
        %v2309 = vld [vmem:[%s1705 + $0x1f2] sm:$0xff]
        %v2310 = vld [vmem:[%s1705 + $0x202] sm:$0xff]
        %v2311 = vld [vmem:[%s1705 + $0x212] sm:$0xff]
        %v2312 = vld [vmem:[%s1705 + $0x222] sm:$0xff]
        %v2313 = vld [vmem:[%s1705 + $0x232] sm:$0xff]
        %v2314 = vld [vmem:[%s1705 + $0x242] sm:$0xff]
        %v2315 = vld [vmem:[%s1705 + $0x252] sm:$0xff]
        %v2316 = vld [vmem:[%s1705 + $0x282] sm:$0xff]
        %v2317 = vld [vmem:[%s1705 + $0x292] sm:$0xff]
        %v2318 = vld [vmem:[%s1705 + $0x2a2] sm:$0xff]
        %v2319 = vld [vmem:[%s1705 + $0x2b2] sm:$0xff]
        %v2320 = vld [vmem:[%s1705 + $0x2c2] sm:$0xff]
        %v2321 = vld [vmem:[%s1705 + $0x2d2] sm:$0xff]
        %v2322 = vld [vmem:[%s1705 + $0x2e2] sm:$0xff]
        %v2323 = vld [vmem:[%s1705 + $0x2f2] sm:$0xff]
        %v2324 = vld [vmem:[%s1705 + $0x322] sm:$0xff]
        %v2325 = vld [vmem:[%s1705 + $0x332] sm:$0xff]
        %v2326 = vld [vmem:[%s1705 + $0x342] sm:$0xff]
        %v2327 = vld [vmem:[%s1705 + $0x352] sm:$0xff]
        %v2328 = vld [vmem:[%s1705 + $0x362] sm:$0xff]
        %v2329 = vld [vmem:[%s1705 + $0x372] sm:$0xff]
        %v2330 = vld [vmem:[%s1705 + $0x382] sm:$0xff]
        %v2331 = vld [vmem:[%s1705 + $0x392] sm:$0xff]
        %2380 = vrot.lane.b32.xlu0 %v2284, 32
        %v2381 = vpop.permute.xlu0 %2380
        %2382 = vrot.lane.b32.xlu0 %v2285, 32
        %v2383 = vpop.permute.xlu0 %2382
        %2384 = vrot.lane.b32.xlu0 %v2286, 32
        %v2385 = vpop.permute.xlu0 %2384
        %2386 = vrot.lane.b32.xlu0 %v2287, 32
        %v2387 = vpop.permute.xlu0 %2386
        %2388 = vrot.lane.b32.xlu0 %v2288, 32
        %v2389 = vpop.permute.xlu0 %2388
        %2390 = vrot.lane.b32.xlu0 %v2289, 32
        %v2391 = vpop.permute.xlu0 %2390
        %2392 = vrot.lane.b32.xlu0 %v2290, 32
        %v2393 = vpop.permute.xlu0 %2392
        %2394 = vrot.lane.b32.xlu0 %v2291, 32
        %v2395 = vpop.permute.xlu0 %2394
        %2396 = vrot.lane.b32.xlu0 %v2292, 32
        %v2397 = vpop.permute.xlu0 %2396
        %2398 = vrot.lane.b32.xlu0 %v2293, 32
        %v2399 = vpop.permute.xlu0 %2398
        %2400 = vrot.lane.b32.xlu0 %v2294, 32
        %v2401 = vpop.permute.xlu0 %2400
        %2402 = vrot.lane.b32.xlu0 %v2295, 32
        %v2403 = vpop.permute.xlu0 %2402
        %2404 = vrot.lane.b32.xlu0 %v2296, 32
        %v2405 = vpop.permute.xlu0 %2404
        %2406 = vrot.lane.b32.xlu0 %v2297, 32
        %v2407 = vpop.permute.xlu0 %2406
        %2408 = vrot.lane.b32.xlu0 %v2298, 32
        %v2409 = vpop.permute.xlu0 %2408
        %2410 = vrot.lane.b32.xlu0 %v2299, 32
        %v2411 = vpop.permute.xlu0 %2410
        %2412 = vrot.lane.b32.xlu0 %v2300, 32
        %v2413 = vpop.permute.xlu0 %2412
        %2414 = vrot.lane.b32.xlu0 %v2301, 32
        %v2415 = vpop.permute.xlu0 %2414
        %2416 = vrot.lane.b32.xlu0 %v2302, 32
        %v2417 = vpop.permute.xlu0 %2416
        %2418 = vrot.lane.b32.xlu0 %v2303, 32
        %v2419 = vpop.permute.xlu0 %2418
        %2420 = vrot.lane.b32.xlu0 %v2304, 32
        %v2421 = vpop.permute.xlu0 %2420
        %2422 = vrot.lane.b32.xlu0 %v2305, 32
        %v2423 = vpop.permute.xlu0 %2422
        %2424 = vrot.lane.b32.xlu0 %v2306, 32
        %v2425 = vpop.permute.xlu0 %2424
        %2426 = vrot.lane.b32.xlu0 %v2307, 32
        %v2427 = vpop.permute.xlu0 %2426
        %2428 = vrot.lane.b32.xlu0 %v2308, 32
        %v2429 = vpop.permute.xlu0 %2428
        %2430 = vrot.lane.b32.xlu0 %v2309, 32
        %v2431 = vpop.permute.xlu0 %2430
        %2432 = vrot.lane.b32.xlu0 %v2310, 32
        %v2433 = vpop.permute.xlu0 %2432
        %2434 = vrot.lane.b32.xlu0 %v2311, 32
        %v2435 = vpop.permute.xlu0 %2434
        %2436 = vrot.lane.b32.xlu0 %v2312, 32
        %v2437 = vpop.permute.xlu0 %2436
        %2438 = vrot.lane.b32.xlu0 %v2313, 32
        %v2439 = vpop.permute.xlu0 %2438
        %2440 = vrot.lane.b32.xlu0 %v2314, 32
        %v2441 = vpop.permute.xlu0 %2440
        %2442 = vrot.lane.b32.xlu0 %v2315, 32
        %v2443 = vpop.permute.xlu0 %2442
        %2444 = vrot.lane.b32.xlu0 %v2316, 32
        %v2445 = vpop.permute.xlu0 %2444
        %2446 = vrot.lane.b32.xlu0 %v2317, 32
        %v2447 = vpop.permute.xlu0 %2446
        %2448 = vrot.lane.b32.xlu0 %v2318, 32
        %v2449 = vpop.permute.xlu0 %2448
        %2450 = vrot.lane.b32.xlu0 %v2319, 32
        %v2451 = vpop.permute.xlu0 %2450
        %2452 = vrot.lane.b32.xlu0 %v2320, 32
        %v2453 = vpop.permute.xlu0 %2452
        %2454 = vrot.lane.b32.xlu0 %v2321, 32
        %v2455 = vpop.permute.xlu0 %2454
        %2456 = vrot.lane.b32.xlu0 %v2322, 32
        %v2457 = vpop.permute.xlu0 %2456
        %2458 = vrot.lane.b32.xlu0 %v2323, 32
        %v2459 = vpop.permute.xlu0 %2458
        %2460 = vrot.lane.b32.xlu0 %v2324, 32
        %v2461 = vpop.permute.xlu0 %2460
        %2462 = vrot.lane.b32.xlu0 %v2325, 32
        %v2463 = vpop.permute.xlu0 %2462
        %2464 = vrot.lane.b32.xlu0 %v2326, 32
        %v2465 = vpop.permute.xlu0 %2464
        %2466 = vrot.lane.b32.xlu0 %v2327, 32
        %v2467 = vpop.permute.xlu0 %2466
        %2468 = vrot.lane.b32.xlu0 %v2328, 32
        %v2469 = vpop.permute.xlu0 %2468
        %2470 = vrot.lane.b32.xlu0 %v2329, 32
        %v2471 = vpop.permute.xlu0 %2470
        %2472 = vrot.lane.b32.xlu0 %v2330, 32
        %v2473 = vpop.permute.xlu0 %2472
        %2474 = vrot.lane.b32.xlu0 %v2331, 32
        %v2475 = vpop.permute.xlu0 %2474
        %vm2524 = vcmask 294144
        %2525 = vst.msk [vmem:[#allocation2] sm:$0xff] %vm2524, %v2381
        %2526 = vst.msk [vmem:[#allocation2 + $0x8] sm:$0xff] %vm2524, %v2383
        %2527 = vst.msk [vmem:[#allocation2 + $0x10] sm:$0xff] %vm2524, %v2385
        %2528 = vst.msk [vmem:[#allocation2 + $0x18] sm:$0xff] %vm2524, %v2387
        %2529 = vst.msk [vmem:[#allocation2 + $0x20] sm:$0xff] %vm2524, %v2389
        %2530 = vst.msk [vmem:[#allocation2 + $0x28] sm:$0xff] %vm2524, %v2391
        %2531 = vst.msk [vmem:[#allocation2 + $0x30] sm:$0xff] %vm2524, %v2393
        %2532 = vst.msk [vmem:[#allocation2 + $0x38] sm:$0xff] %vm2524, %v2395
        %2533 = vst.msk [vmem:[#allocation2 + $0x40] sm:$0xff] %vm2524, %v2397
        %2534 = vst.msk [vmem:[#allocation2 + $0x48] sm:$0xff] %vm2524, %v2399
        %2535 = vst.msk [vmem:[#allocation2 + $0x50] sm:$0xff] %vm2524, %v2401
        %2536 = vst.msk [vmem:[#allocation2 + $0x58] sm:$0xff] %vm2524, %v2403
        %2537 = vst.msk [vmem:[#allocation2 + $0x60] sm:$0xff] %vm2524, %v2405
        %2538 = vst.msk [vmem:[#allocation2 + $0x68] sm:$0xff] %vm2524, %v2407
        %2539 = vst.msk [vmem:[#allocation2 + $0x70] sm:$0xff] %vm2524, %v2409
        %2540 = vst.msk [vmem:[#allocation2 + $0x78] sm:$0xff] %vm2524, %v2411
        %2541 = vst.msk [vmem:[#allocation2 + $0x80] sm:$0xff] %vm2524, %v2413
        %2542 = vst.msk [vmem:[#allocation2 + $0x88] sm:$0xff] %vm2524, %v2415
        %2543 = vst.msk [vmem:[#allocation2 + $0x90] sm:$0xff] %vm2524, %v2417
        %2544 = vst.msk [vmem:[#allocation2 + $0x98] sm:$0xff] %vm2524, %v2419
        %2545 = vst.msk [vmem:[#allocation2 + $0xa0] sm:$0xff] %vm2524, %v2421
        %2546 = vst.msk [vmem:[#allocation2 + $0xa8] sm:$0xff] %vm2524, %v2423
        %2547 = vst.msk [vmem:[#allocation2 + $0xb0] sm:$0xff] %vm2524, %v2425
        %2548 = vst.msk [vmem:[#allocation2 + $0xb8] sm:$0xff] %vm2524, %v2427
        %2549 = vst.msk [vmem:[#allocation2 + $0xc0] sm:$0xff] %vm2524, %v2429
        %2550 = vst.msk [vmem:[#allocation2 + $0xc8] sm:$0xff] %vm2524, %v2431
        %2551 = vst.msk [vmem:[#allocation2 + $0xd0] sm:$0xff] %vm2524, %v2433
        %2552 = vst.msk [vmem:[#allocation2 + $0xd8] sm:$0xff] %vm2524, %v2435
        %2553 = vst.msk [vmem:[#allocation2 + $0xe0] sm:$0xff] %vm2524, %v2437
        %2554 = vst.msk [vmem:[#allocation2 + $0xe8] sm:$0xff] %vm2524, %v2439
        %2555 = vst.msk [vmem:[#allocation2 + $0xf0] sm:$0xff] %vm2524, %v2441
        %2556 = vst.msk [vmem:[#allocation2 + $0xf8] sm:$0xff] %vm2524, %v2443
        %2557 = vst.msk [vmem:[#allocation2 + $0x100] sm:$0xff] %vm2524, %v2445
        %2558 = vst.msk [vmem:[#allocation2 + $0x108] sm:$0xff] %vm2524, %v2447
        %2559 = vst.msk [vmem:[#allocation2 + $0x110] sm:$0xff] %vm2524, %v2449
        %2560 = vst.msk [vmem:[#allocation2 + $0x118] sm:$0xff] %vm2524, %v2451
        %2561 = vst.msk [vmem:[#allocation2 + $0x120] sm:$0xff] %vm2524, %v2453
        %2562 = vst.msk [vmem:[#allocation2 + $0x128] sm:$0xff] %vm2524, %v2455
        %2563 = vst.msk [vmem:[#allocation2 + $0x130] sm:$0xff] %vm2524, %v2457
        %2564 = vst.msk [vmem:[#allocation2 + $0x138] sm:$0xff] %vm2524, %v2459
        %2565 = vst.msk [vmem:[#allocation2 + $0x140] sm:$0xff] %vm2524, %v2461
        %2566 = vst.msk [vmem:[#allocation2 + $0x148] sm:$0xff] %vm2524, %v2463
        %2567 = vst.msk [vmem:[#allocation2 + $0x150] sm:$0xff] %vm2524, %v2465
        %2568 = vst.msk [vmem:[#allocation2 + $0x158] sm:$0xff] %vm2524, %v2467
        %2569 = vst.msk [vmem:[#allocation2 + $0x160] sm:$0xff] %vm2524, %v2469
        %2570 = vst.msk [vmem:[#allocation2 + $0x168] sm:$0xff] %vm2524, %v2471
        %2571 = vst.msk [vmem:[#allocation2 + $0x170] sm:$0xff] %vm2524, %v2473
        %2572 = vst.msk [vmem:[#allocation2 + $0x178] sm:$0xff] %vm2524, %v2475
        %s2573 = sadd.s32 %s157, 1
        %s2574 = smul.u32 %s2573, 160
        %s2575 = scalar_lea.vmem %s155, %s2574
        %v2576 = vld [vmem:[%s2575] sm:$0xff]
        %v2577 = vld [vmem:[%s2575 + $0x10] sm:$0xff]
        %v2578 = vld [vmem:[%s2575 + $0x20] sm:$0xff]
        %v2579 = vld [vmem:[%s2575 + $0x30] sm:$0xff]
        %v2580 = vld [vmem:[%s2575 + $0x40] sm:$0xff]
        %v2581 = vld [vmem:[%s2575 + $0x50] sm:$0xff]
        %v2582 = vld [vmem:[%s2575 + $0x60] sm:$0xff]
        %v2583 = vld [vmem:[%s2575 + $0x70] sm:$0xff]
        %v2584 = vld [vmem:[%s2575 + $0xa0] sm:$0xff]
        %v2585 = vld [vmem:[%s2575 + $0xb0] sm:$0xff]
        %v2586 = vld [vmem:[%s2575 + $0xc0] sm:$0xff]
        %v2587 = vld [vmem:[%s2575 + $0xd0] sm:$0xff]
        %v2588 = vld [vmem:[%s2575 + $0xe0] sm:$0xff]
        %v2589 = vld [vmem:[%s2575 + $0xf0] sm:$0xff]
        %v2590 = vld [vmem:[%s2575 + $0x100] sm:$0xff]
        %v2591 = vld [vmem:[%s2575 + $0x110] sm:$0xff]
        %v2592 = vld [vmem:[%s2575 + $0x140] sm:$0xff]
        %v2593 = vld [vmem:[%s2575 + $0x150] sm:$0xff]
        %v2594 = vld [vmem:[%s2575 + $0x160] sm:$0xff]
        %v2595 = vld [vmem:[%s2575 + $0x170] sm:$0xff]
        %v2596 = vld [vmem:[%s2575 + $0x180] sm:$0xff]
        %v2597 = vld [vmem:[%s2575 + $0x190] sm:$0xff]
        %v2598 = vld [vmem:[%s2575 + $0x1a0] sm:$0xff]
        %v2599 = vld [vmem:[%s2575 + $0x1b0] sm:$0xff]
        %v2600 = vld [vmem:[%s2575 + $0x1e0] sm:$0xff]
        %v2601 = vld [vmem:[%s2575 + $0x1f0] sm:$0xff]
        %v2602 = vld [vmem:[%s2575 + $0x200] sm:$0xff]
        %v2603 = vld [vmem:[%s2575 + $0x210] sm:$0xff]
        %v2604 = vld [vmem:[%s2575 + $0x220] sm:$0xff]
        %v2605 = vld [vmem:[%s2575 + $0x230] sm:$0xff]
        %v2606 = vld [vmem:[%s2575 + $0x240] sm:$0xff]
        %v2607 = vld [vmem:[%s2575 + $0x250] sm:$0xff]
        %v2608 = vld [vmem:[%s2575 + $0x280] sm:$0xff]
        %v2609 = vld [vmem:[%s2575 + $0x290] sm:$0xff]
        %v2610 = vld [vmem:[%s2575 + $0x2a0] sm:$0xff]
        %v2611 = vld [vmem:[%s2575 + $0x2b0] sm:$0xff]
        %v2612 = vld [vmem:[%s2575 + $0x2c0] sm:$0xff]
        %v2613 = vld [vmem:[%s2575 + $0x2d0] sm:$0xff]
        %v2614 = vld [vmem:[%s2575 + $0x2e0] sm:$0xff]
        %v2615 = vld [vmem:[%s2575 + $0x2f0] sm:$0xff]
        %v2616 = vld [vmem:[%s2575 + $0x320] sm:$0xff]
        %v2617 = vld [vmem:[%s2575 + $0x330] sm:$0xff]
        %v2618 = vld [vmem:[%s2575 + $0x340] sm:$0xff]
        %v2619 = vld [vmem:[%s2575 + $0x350] sm:$0xff]
        %v2620 = vld [vmem:[%s2575 + $0x360] sm:$0xff]
        %v2621 = vld [vmem:[%s2575 + $0x370] sm:$0xff]
        %v2622 = vld [vmem:[%s2575 + $0x380] sm:$0xff]
        %v2623 = vld [vmem:[%s2575 + $0x390] sm:$0xff]
        %2672 = vrot.lane.b32.xlu0 %v2576, 36
        %v2673 = vpop.permute.xlu0 %2672
        %2674 = vrot.lane.b32.xlu0 %v2577, 36
        %v2675 = vpop.permute.xlu0 %2674
        %2676 = vrot.lane.b32.xlu0 %v2578, 36
        %v2677 = vpop.permute.xlu0 %2676
        %2678 = vrot.lane.b32.xlu0 %v2579, 36
        %v2679 = vpop.permute.xlu0 %2678
        %2680 = vrot.lane.b32.xlu0 %v2580, 36
        %v2681 = vpop.permute.xlu0 %2680
        %2682 = vrot.lane.b32.xlu0 %v2581, 36
        %v2683 = vpop.permute.xlu0 %2682
        %2684 = vrot.lane.b32.xlu0 %v2582, 36
        %v2685 = vpop.permute.xlu0 %2684
        %2686 = vrot.lane.b32.xlu0 %v2583, 36
        %v2687 = vpop.permute.xlu0 %2686
        %2688 = vrot.lane.b32.xlu0 %v2584, 36
        %v2689 = vpop.permute.xlu0 %2688
        %2690 = vrot.lane.b32.xlu0 %v2585, 36
        %v2691 = vpop.permute.xlu0 %2690
        %2692 = vrot.lane.b32.xlu0 %v2586, 36
        %v2693 = vpop.permute.xlu0 %2692
        %2694 = vrot.lane.b32.xlu0 %v2587, 36
        %v2695 = vpop.permute.xlu0 %2694
        %2696 = vrot.lane.b32.xlu0 %v2588, 36
        %v2697 = vpop.permute.xlu0 %2696
        %2698 = vrot.lane.b32.xlu0 %v2589, 36
        %v2699 = vpop.permute.xlu0 %2698
        %2700 = vrot.lane.b32.xlu0 %v2590, 36
        %v2701 = vpop.permute.xlu0 %2700
        %2702 = vrot.lane.b32.xlu0 %v2591, 36
        %v2703 = vpop.permute.xlu0 %2702
        %2704 = vrot.lane.b32.xlu0 %v2592, 36
        %v2705 = vpop.permute.xlu0 %2704
        %2706 = vrot.lane.b32.xlu0 %v2593, 36
        %v2707 = vpop.permute.xlu0 %2706
        %2708 = vrot.lane.b32.xlu0 %v2594, 36
        %v2709 = vpop.permute.xlu0 %2708
        %2710 = vrot.lane.b32.xlu0 %v2595, 36
        %v2711 = vpop.permute.xlu0 %2710
        %2712 = vrot.lane.b32.xlu0 %v2596, 36
        %v2713 = vpop.permute.xlu0 %2712
        %2714 = vrot.lane.b32.xlu0 %v2597, 36
        %v2715 = vpop.permute.xlu0 %2714
        %2716 = vrot.lane.b32.xlu0 %v2598, 36
        %v2717 = vpop.permute.xlu0 %2716
        %2718 = vrot.lane.b32.xlu0 %v2599, 36
        %v2719 = vpop.permute.xlu0 %2718
        %2720 = vrot.lane.b32.xlu0 %v2600, 36
        %v2721 = vpop.permute.xlu0 %2720
        %2722 = vrot.lane.b32.xlu0 %v2601, 36
        %v2723 = vpop.permute.xlu0 %2722
        %2724 = vrot.lane.b32.xlu0 %v2602, 36
        %v2725 = vpop.permute.xlu0 %2724
        %2726 = vrot.lane.b32.xlu0 %v2603, 36
        %v2727 = vpop.permute.xlu0 %2726
        %2728 = vrot.lane.b32.xlu0 %v2604, 36
        %v2729 = vpop.permute.xlu0 %2728
        %2730 = vrot.lane.b32.xlu0 %v2605, 36
        %v2731 = vpop.permute.xlu0 %2730
        %2732 = vrot.lane.b32.xlu0 %v2606, 36
        %v2733 = vpop.permute.xlu0 %2732
        %2734 = vrot.lane.b32.xlu0 %v2607, 36
        %v2735 = vpop.permute.xlu0 %2734
        %2736 = vrot.lane.b32.xlu0 %v2608, 36
        %v2737 = vpop.permute.xlu0 %2736
        %2738 = vrot.lane.b32.xlu0 %v2609, 36
        %v2739 = vpop.permute.xlu0 %2738
        %2740 = vrot.lane.b32.xlu0 %v2610, 36
        %v2741 = vpop.permute.xlu0 %2740
        %2742 = vrot.lane.b32.xlu0 %v2611, 36
        %v2743 = vpop.permute.xlu0 %2742
        %2744 = vrot.lane.b32.xlu0 %v2612, 36
        %v2745 = vpop.permute.xlu0 %2744
        %2746 = vrot.lane.b32.xlu0 %v2613, 36
        %v2747 = vpop.permute.xlu0 %2746
        %2748 = vrot.lane.b32.xlu0 %v2614, 36
        %v2749 = vpop.permute.xlu0 %2748
        %2750 = vrot.lane.b32.xlu0 %v2615, 36
        %v2751 = vpop.permute.xlu0 %2750
        %2752 = vrot.lane.b32.xlu0 %v2616, 36
        %v2753 = vpop.permute.xlu0 %2752
        %2754 = vrot.lane.b32.xlu0 %v2617, 36
        %v2755 = vpop.permute.xlu0 %2754
        %2756 = vrot.lane.b32.xlu0 %v2618, 36
        %v2757 = vpop.permute.xlu0 %2756
        %2758 = vrot.lane.b32.xlu0 %v2619, 36
        %v2759 = vpop.permute.xlu0 %2758
        %2760 = vrot.lane.b32.xlu0 %v2620, 36
        %v2761 = vpop.permute.xlu0 %2760
        %2762 = vrot.lane.b32.xlu0 %v2621, 36
        %v2763 = vpop.permute.xlu0 %2762
        %2764 = vrot.lane.b32.xlu0 %v2622, 36
        %v2765 = vpop.permute.xlu0 %2764
        %2766 = vrot.lane.b32.xlu0 %v2623, 36
        %v2767 = vpop.permute.xlu0 %2766
        %vm2816 = vcmask 326944
        %2817 = vst.msk [vmem:[#allocation2] sm:$0xff] %vm2816, %v2673
        %2818 = vst.msk [vmem:[#allocation2 + $0x8] sm:$0xff] %vm2816, %v2675
        %2819 = vst.msk [vmem:[#allocation2 + $0x10] sm:$0xff] %vm2816, %v2677
        %2820 = vst.msk [vmem:[#allocation2 + $0x18] sm:$0xff] %vm2816, %v2679
        %2821 = vst.msk [vmem:[#allocation2 + $0x20] sm:$0xff] %vm2816, %v2681
        %2822 = vst.msk [vmem:[#allocation2 + $0x28] sm:$0xff] %vm2816, %v2683
        %2823 = vst.msk [vmem:[#allocation2 + $0x30] sm:$0xff] %vm2816, %v2685
        %2824 = vst.msk [vmem:[#allocation2 + $0x38] sm:$0xff] %vm2816, %v2687
        %2825 = vst.msk [vmem:[#allocation2 + $0x40] sm:$0xff] %vm2816, %v2689
        %2826 = vst.msk [vmem:[#allocation2 + $0x48] sm:$0xff] %vm2816, %v2691
        %2827 = vst.msk [vmem:[#allocation2 + $0x50] sm:$0xff] %vm2816, %v2693
        %2828 = vst.msk [vmem:[#allocation2 + $0x58] sm:$0xff] %vm2816, %v2695
        %2829 = vst.msk [vmem:[#allocation2 + $0x60] sm:$0xff] %vm2816, %v2697
        %2830 = vst.msk [vmem:[#allocation2 + $0x68] sm:$0xff] %vm2816, %v2699
        %2831 = vst.msk [vmem:[#allocation2 + $0x70] sm:$0xff] %vm2816, %v2701
        %2832 = vst.msk [vmem:[#allocation2 + $0x78] sm:$0xff] %vm2816, %v2703
        %2833 = vst.msk [vmem:[#allocation2 + $0x80] sm:$0xff] %vm2816, %v2705
        %2834 = vst.msk [vmem:[#allocation2 + $0x88] sm:$0xff] %vm2816, %v2707
        %2835 = vst.msk [vmem:[#allocation2 + $0x90] sm:$0xff] %vm2816, %v2709
        %2836 = vst.msk [vmem:[#allocation2 + $0x98] sm:$0xff] %vm2816, %v2711
        %2837 = vst.msk [vmem:[#allocation2 + $0xa0] sm:$0xff] %vm2816, %v2713
        %2838 = vst.msk [vmem:[#allocation2 + $0xa8] sm:$0xff] %vm2816, %v2715
        %2839 = vst.msk [vmem:[#allocation2 + $0xb0] sm:$0xff] %vm2816, %v2717
        %2840 = vst.msk [vmem:[#allocation2 + $0xb8] sm:$0xff] %vm2816, %v2719
        %2841 = vst.msk [vmem:[#allocation2 + $0xc0] sm:$0xff] %vm2816, %v2721
        %2842 = vst.msk [vmem:[#allocation2 + $0xc8] sm:$0xff] %vm2816, %v2723
        %2843 = vst.msk [vmem:[#allocation2 + $0xd0] sm:$0xff] %vm2816, %v2725
        %2844 = vst.msk [vmem:[#allocation2 + $0xd8] sm:$0xff] %vm2816, %v2727
        %2845 = vst.msk [vmem:[#allocation2 + $0xe0] sm:$0xff] %vm2816, %v2729
        %2846 = vst.msk [vmem:[#allocation2 + $0xe8] sm:$0xff] %vm2816, %v2731
        %2847 = vst.msk [vmem:[#allocation2 + $0xf0] sm:$0xff] %vm2816, %v2733
        %2848 = vst.msk [vmem:[#allocation2 + $0xf8] sm:$0xff] %vm2816, %v2735
        %2849 = vst.msk [vmem:[#allocation2 + $0x100] sm:$0xff] %vm2816, %v2737
        %2850 = vst.msk [vmem:[#allocation2 + $0x108] sm:$0xff] %vm2816, %v2739
        %2851 = vst.msk [vmem:[#allocation2 + $0x110] sm:$0xff] %vm2816, %v2741
        %2852 = vst.msk [vmem:[#allocation2 + $0x118] sm:$0xff] %vm2816, %v2743
        %2853 = vst.msk [vmem:[#allocation2 + $0x120] sm:$0xff] %vm2816, %v2745
        %2854 = vst.msk [vmem:[#allocation2 + $0x128] sm:$0xff] %vm2816, %v2747
        %2855 = vst.msk [vmem:[#allocation2 + $0x130] sm:$0xff] %vm2816, %v2749
        %2856 = vst.msk [vmem:[#allocation2 + $0x138] sm:$0xff] %vm2816, %v2751
        %2857 = vst.msk [vmem:[#allocation2 + $0x140] sm:$0xff] %vm2816, %v2753
        %2858 = vst.msk [vmem:[#allocation2 + $0x148] sm:$0xff] %vm2816, %v2755
        %2859 = vst.msk [vmem:[#allocation2 + $0x150] sm:$0xff] %vm2816, %v2757
        %2860 = vst.msk [vmem:[#allocation2 + $0x158] sm:$0xff] %vm2816, %v2759
        %2861 = vst.msk [vmem:[#allocation2 + $0x160] sm:$0xff] %vm2816, %v2761
        %2862 = vst.msk [vmem:[#allocation2 + $0x168] sm:$0xff] %vm2816, %v2763
        %2863 = vst.msk [vmem:[#allocation2 + $0x170] sm:$0xff] %vm2816, %v2765
        %2864 = vst.msk [vmem:[#allocation2 + $0x178] sm:$0xff] %vm2816, %v2767
        %v2865 = vld [vmem:[%s2575 + $0x1] sm:$0xff]
        %v2866 = vld [vmem:[%s2575 + $0x11] sm:$0xff]
        %v2867 = vld [vmem:[%s2575 + $0x21] sm:$0xff]
        %v2868 = vld [vmem:[%s2575 + $0x31] sm:$0xff]
        %v2869 = vld [vmem:[%s2575 + $0x41] sm:$0xff]
        %v2870 = vld [vmem:[%s2575 + $0x51] sm:$0xff]
        %v2871 = vld [vmem:[%s2575 + $0x61] sm:$0xff]
        %v2872 = vld [vmem:[%s2575 + $0x71] sm:$0xff]
        %v2873 = vld [vmem:[%s2575 + $0xa1] sm:$0xff]
        %v2874 = vld [vmem:[%s2575 + $0xb1] sm:$0xff]
        %v2875 = vld [vmem:[%s2575 + $0xc1] sm:$0xff]
        %v2876 = vld [vmem:[%s2575 + $0xd1] sm:$0xff]
        %v2877 = vld [vmem:[%s2575 + $0xe1] sm:$0xff]
        %v2878 = vld [vmem:[%s2575 + $0xf1] sm:$0xff]
        %v2879 = vld [vmem:[%s2575 + $0x101] sm:$0xff]
        %v2880 = vld [vmem:[%s2575 + $0x111] sm:$0xff]
        %v2881 = vld [vmem:[%s2575 + $0x141] sm:$0xff]
        %v2882 = vld [vmem:[%s2575 + $0x151] sm:$0xff]
        %v2883 = vld [vmem:[%s2575 + $0x161] sm:$0xff]
        %v2884 = vld [vmem:[%s2575 + $0x171] sm:$0xff]
        %v2885 = vld [vmem:[%s2575 + $0x181] sm:$0xff]
        %v2886 = vld [vmem:[%s2575 + $0x191] sm:$0xff]
        %v2887 = vld [vmem:[%s2575 + $0x1a1] sm:$0xff]
        %v2888 = vld [vmem:[%s2575 + $0x1b1] sm:$0xff]
        %v2889 = vld [vmem:[%s2575 + $0x1e1] sm:$0xff]
        %v2890 = vld [vmem:[%s2575 + $0x1f1] sm:$0xff]
        %v2891 = vld [vmem:[%s2575 + $0x201] sm:$0xff]
        %v2892 = vld [vmem:[%s2575 + $0x211] sm:$0xff]
        %v2893 = vld [vmem:[%s2575 + $0x221] sm:$0xff]
        %v2894 = vld [vmem:[%s2575 + $0x231] sm:$0xff]
        %v2895 = vld [vmem:[%s2575 + $0x241] sm:$0xff]
        %v2896 = vld [vmem:[%s2575 + $0x251] sm:$0xff]
        %v2897 = vld [vmem:[%s2575 + $0x281] sm:$0xff]
        %v2898 = vld [vmem:[%s2575 + $0x291] sm:$0xff]
        %v2899 = vld [vmem:[%s2575 + $0x2a1] sm:$0xff]
        %v2900 = vld [vmem:[%s2575 + $0x2b1] sm:$0xff]
        %v2901 = vld [vmem:[%s2575 + $0x2c1] sm:$0xff]
        %v2902 = vld [vmem:[%s2575 + $0x2d1] sm:$0xff]
        %v2903 = vld [vmem:[%s2575 + $0x2e1] sm:$0xff]
        %v2904 = vld [vmem:[%s2575 + $0x2f1] sm:$0xff]
        %v2905 = vld [vmem:[%s2575 + $0x321] sm:$0xff]
        %v2906 = vld [vmem:[%s2575 + $0x331] sm:$0xff]
        %v2907 = vld [vmem:[%s2575 + $0x341] sm:$0xff]
        %v2908 = vld [vmem:[%s2575 + $0x351] sm:$0xff]
        %v2909 = vld [vmem:[%s2575 + $0x361] sm:$0xff]
        %v2910 = vld [vmem:[%s2575 + $0x371] sm:$0xff]
        %v2911 = vld [vmem:[%s2575 + $0x381] sm:$0xff]
        %v2912 = vld [vmem:[%s2575 + $0x391] sm:$0xff]
        %2961 = vrot.lane.b32.xlu0 %v2865, 40
        %v2962 = vpop.permute.xlu0 %2961
        %2963 = vrot.lane.b32.xlu0 %v2866, 40
        %v2964 = vpop.permute.xlu0 %2963
        %2965 = vrot.lane.b32.xlu0 %v2867, 40
        %v2966 = vpop.permute.xlu0 %2965
        %2967 = vrot.lane.b32.xlu0 %v2868, 40
        %v2968 = vpop.permute.xlu0 %2967
        %2969 = vrot.lane.b32.xlu0 %v2869, 40
        %v2970 = vpop.permute.xlu0 %2969
        %2971 = vrot.lane.b32.xlu0 %v2870, 40
        %v2972 = vpop.permute.xlu0 %2971
        %2973 = vrot.lane.b32.xlu0 %v2871, 40
        %v2974 = vpop.permute.xlu0 %2973
        %2975 = vrot.lane.b32.xlu0 %v2872, 40
        %v2976 = vpop.permute.xlu0 %2975
        %2977 = vrot.lane.b32.xlu0 %v2873, 40
        %v2978 = vpop.permute.xlu0 %2977
        %2979 = vrot.lane.b32.xlu0 %v2874, 40
        %v2980 = vpop.permute.xlu0 %2979
        %2981 = vrot.lane.b32.xlu0 %v2875, 40
        %v2982 = vpop.permute.xlu0 %2981
        %2983 = vrot.lane.b32.xlu0 %v2876, 40
        %v2984 = vpop.permute.xlu0 %2983
        %2985 = vrot.lane.b32.xlu0 %v2877, 40
        %v2986 = vpop.permute.xlu0 %2985
        %2987 = vrot.lane.b32.xlu0 %v2878, 40
        %v2988 = vpop.permute.xlu0 %2987
        %2989 = vrot.lane.b32.xlu0 %v2879, 40
        %v2990 = vpop.permute.xlu0 %2989
        %2991 = vrot.lane.b32.xlu0 %v2880, 40
        %v2992 = vpop.permute.xlu0 %2991
        %2993 = vrot.lane.b32.xlu0 %v2881, 40
        %v2994 = vpop.permute.xlu0 %2993
        %2995 = vrot.lane.b32.xlu0 %v2882, 40
        %v2996 = vpop.permute.xlu0 %2995
        %2997 = vrot.lane.b32.xlu0 %v2883, 40
        %v2998 = vpop.permute.xlu0 %2997
        %2999 = vrot.lane.b32.xlu0 %v2884, 40
        %v3000 = vpop.permute.xlu0 %2999
        %3001 = vrot.lane.b32.xlu0 %v2885, 40
        %v3002 = vpop.permute.xlu0 %3001
        %3003 = vrot.lane.b32.xlu0 %v2886, 40
        %v3004 = vpop.permute.xlu0 %3003
        %3005 = vrot.lane.b32.xlu0 %v2887, 40
        %v3006 = vpop.permute.xlu0 %3005
        %3007 = vrot.lane.b32.xlu0 %v2888, 40
        %v3008 = vpop.permute.xlu0 %3007
        %3009 = vrot.lane.b32.xlu0 %v2889, 40
        %v3010 = vpop.permute.xlu0 %3009
        %3011 = vrot.lane.b32.xlu0 %v2890, 40
        %v3012 = vpop.permute.xlu0 %3011
        %3013 = vrot.lane.b32.xlu0 %v2891, 40
        %v3014 = vpop.permute.xlu0 %3013
        %3015 = vrot.lane.b32.xlu0 %v2892, 40
        %v3016 = vpop.permute.xlu0 %3015
        %3017 = vrot.lane.b32.xlu0 %v2893, 40
        %v3018 = vpop.permute.xlu0 %3017
        %3019 = vrot.lane.b32.xlu0 %v2894, 40
        %v3020 = vpop.permute.xlu0 %3019
        %3021 = vrot.lane.b32.xlu0 %v2895, 40
        %v3022 = vpop.permute.xlu0 %3021
        %3023 = vrot.lane.b32.xlu0 %v2896, 40
        %v3024 = vpop.permute.xlu0 %3023
        %3025 = vrot.lane.b32.xlu0 %v2897, 40
        %v3026 = vpop.permute.xlu0 %3025
        %3027 = vrot.lane.b32.xlu0 %v2898, 40
        %v3028 = vpop.permute.xlu0 %3027
        %3029 = vrot.lane.b32.xlu0 %v2899, 40
        %v3030 = vpop.permute.xlu0 %3029
        %3031 = vrot.lane.b32.xlu0 %v2900, 40
        %v3032 = vpop.permute.xlu0 %3031
        %3033 = vrot.lane.b32.xlu0 %v2901, 40
        %v3034 = vpop.permute.xlu0 %3033
        %3035 = vrot.lane.b32.xlu0 %v2902, 40
        %v3036 = vpop.permute.xlu0 %3035
        %3037 = vrot.lane.b32.xlu0 %v2903, 40
        %v3038 = vpop.permute.xlu0 %3037
        %3039 = vrot.lane.b32.xlu0 %v2904, 40
        %v3040 = vpop.permute.xlu0 %3039
        %3041 = vrot.lane.b32.xlu0 %v2905, 40
        %v3042 = vpop.permute.xlu0 %3041
        %3043 = vrot.lane.b32.xlu0 %v2906, 40
        %v3044 = vpop.permute.xlu0 %3043
        %3045 = vrot.lane.b32.xlu0 %v2907, 40
        %v3046 = vpop.permute.xlu0 %3045
        %3047 = vrot.lane.b32.xlu0 %v2908, 40
        %v3048 = vpop.permute.xlu0 %3047
        %3049 = vrot.lane.b32.xlu0 %v2909, 40
        %v3050 = vpop.permute.xlu0 %3049
        %3051 = vrot.lane.b32.xlu0 %v2910, 40
        %v3052 = vpop.permute.xlu0 %3051
        %3053 = vrot.lane.b32.xlu0 %v2911, 40
        %v3054 = vpop.permute.xlu0 %3053
        %3055 = vrot.lane.b32.xlu0 %v2912, 40
        %v3056 = vpop.permute.xlu0 %3055
        %vm3105 = vcmask 359744
        %3106 = vst.msk [vmem:[#allocation2] sm:$0xff] %vm3105, %v2962
        %3107 = vst.msk [vmem:[#allocation2 + $0x8] sm:$0xff] %vm3105, %v2964
        %3108 = vst.msk [vmem:[#allocation2 + $0x10] sm:$0xff] %vm3105, %v2966
        %3109 = vst.msk [vmem:[#allocation2 + $0x18] sm:$0xff] %vm3105, %v2968
        %3110 = vst.msk [vmem:[#allocation2 + $0x20] sm:$0xff] %vm3105, %v2970
        %3111 = vst.msk [vmem:[#allocation2 + $0x28] sm:$0xff] %vm3105, %v2972
        %3112 = vst.msk [vmem:[#allocation2 + $0x30] sm:$0xff] %vm3105, %v2974
        %3113 = vst.msk [vmem:[#allocation2 + $0x38] sm:$0xff] %vm3105, %v2976
        %3114 = vst.msk [vmem:[#allocation2 + $0x40] sm:$0xff] %vm3105, %v2978
        %3115 = vst.msk [vmem:[#allocation2 + $0x48] sm:$0xff] %vm3105, %v2980
        %3116 = vst.msk [vmem:[#allocation2 + $0x50] sm:$0xff] %vm3105, %v2982
        %3117 = vst.msk [vmem:[#allocation2 + $0x58] sm:$0xff] %vm3105, %v2984
        %3118 = vst.msk [vmem:[#allocation2 + $0x60] sm:$0xff] %vm3105, %v2986
        %3119 = vst.msk [vmem:[#allocation2 + $0x68] sm:$0xff] %vm3105, %v2988
        %3120 = vst.msk [vmem:[#allocation2 + $0x70] sm:$0xff] %vm3105, %v2990
        %3121 = vst.msk [vmem:[#allocation2 + $0x78] sm:$0xff] %vm3105, %v2992
        %3122 = vst.msk [vmem:[#allocation2 + $0x80] sm:$0xff] %vm3105, %v2994
        %3123 = vst.msk [vmem:[#allocation2 + $0x88] sm:$0xff] %vm3105, %v2996
        %3124 = vst.msk [vmem:[#allocation2 + $0x90] sm:$0xff] %vm3105, %v2998
        %3125 = vst.msk [vmem:[#allocation2 + $0x98] sm:$0xff] %vm3105, %v3000
        %3126 = vst.msk [vmem:[#allocation2 + $0xa0] sm:$0xff] %vm3105, %v3002
        %3127 = vst.msk [vmem:[#allocation2 + $0xa8] sm:$0xff] %vm3105, %v3004
        %3128 = vst.msk [vmem:[#allocation2 + $0xb0] sm:$0xff] %vm3105, %v3006
        %3129 = vst.msk [vmem:[#allocation2 + $0xb8] sm:$0xff] %vm3105, %v3008
        %3130 = vst.msk [vmem:[#allocation2 + $0xc0] sm:$0xff] %vm3105, %v3010
        %3131 = vst.msk [vmem:[#allocation2 + $0xc8] sm:$0xff] %vm3105, %v3012
        %3132 = vst.msk [vmem:[#allocation2 + $0xd0] sm:$0xff] %vm3105, %v3014
        %3133 = vst.msk [vmem:[#allocation2 + $0xd8] sm:$0xff] %vm3105, %v3016
        %3134 = vst.msk [vmem:[#allocation2 + $0xe0] sm:$0xff] %vm3105, %v3018
        %3135 = vst.msk [vmem:[#allocation2 + $0xe8] sm:$0xff] %vm3105, %v3020
        %3136 = vst.msk [vmem:[#allocation2 + $0xf0] sm:$0xff] %vm3105, %v3022
        %3137 = vst.msk [vmem:[#allocation2 + $0xf8] sm:$0xff] %vm3105, %v3024
        %3138 = vst.msk [vmem:[#allocation2 + $0x100] sm:$0xff] %vm3105, %v3026
        %3139 = vst.msk [vmem:[#allocation2 + $0x108] sm:$0xff] %vm3105, %v3028
        %3140 = vst.msk [vmem:[#allocation2 + $0x110] sm:$0xff] %vm3105, %v3030
        %3141 = vst.msk [vmem:[#allocation2 + $0x118] sm:$0xff] %vm3105, %v3032
        %3142 = vst.msk [vmem:[#allocation2 + $0x120] sm:$0xff] %vm3105, %v3034
        %3143 = vst.msk [vmem:[#allocation2 + $0x128] sm:$0xff] %vm3105, %v3036
        %3144 = vst.msk [vmem:[#allocation2 + $0x130] sm:$0xff] %vm3105, %v3038
        %3145 = vst.msk [vmem:[#allocation2 + $0x138] sm:$0xff] %vm3105, %v3040
        %3146 = vst.msk [vmem:[#allocation2 + $0x140] sm:$0xff] %vm3105, %v3042
        %3147 = vst.msk [vmem:[#allocation2 + $0x148] sm:$0xff] %vm3105, %v3044
        %3148 = vst.msk [vmem:[#allocation2 + $0x150] sm:$0xff] %vm3105, %v3046
        %3149 = vst.msk [vmem:[#allocation2 + $0x158] sm:$0xff] %vm3105, %v3048
        %3150 = vst.msk [vmem:[#allocation2 + $0x160] sm:$0xff] %vm3105, %v3050
        %3151 = vst.msk [vmem:[#allocation2 + $0x168] sm:$0xff] %vm3105, %v3052
        %3152 = vst.msk [vmem:[#allocation2 + $0x170] sm:$0xff] %vm3105, %v3054
        %3153 = vst.msk [vmem:[#allocation2 + $0x178] sm:$0xff] %vm3105, %v3056
        %v3154 = vld [vmem:[%s2575 + $0x2] sm:$0xff]
        %v3155 = vld [vmem:[%s2575 + $0x12] sm:$0xff]
        %v3156 = vld [vmem:[%s2575 + $0x22] sm:$0xff]
        %v3157 = vld [vmem:[%s2575 + $0x32] sm:$0xff]
        %v3158 = vld [vmem:[%s2575 + $0x42] sm:$0xff]
        %v3159 = vld [vmem:[%s2575 + $0x52] sm:$0xff]
        %v3160 = vld [vmem:[%s2575 + $0x62] sm:$0xff]
        %v3161 = vld [vmem:[%s2575 + $0x72] sm:$0xff]
        %v3162 = vld [vmem:[%s2575 + $0xa2] sm:$0xff]
        %v3163 = vld [vmem:[%s2575 + $0xb2] sm:$0xff]
        %v3164 = vld [vmem:[%s2575 + $0xc2] sm:$0xff]
        %v3165 = vld [vmem:[%s2575 + $0xd2] sm:$0xff]
        %v3166 = vld [vmem:[%s2575 + $0xe2] sm:$0xff]
        %v3167 = vld [vmem:[%s2575 + $0xf2] sm:$0xff]
        %v3168 = vld [vmem:[%s2575 + $0x102] sm:$0xff]
        %v3169 = vld [vmem:[%s2575 + $0x112] sm:$0xff]
        %v3170 = vld [vmem:[%s2575 + $0x142] sm:$0xff]
        %v3171 = vld [vmem:[%s2575 + $0x152] sm:$0xff]
        %v3172 = vld [vmem:[%s2575 + $0x162] sm:$0xff]
        %v3173 = vld [vmem:[%s2575 + $0x172] sm:$0xff]
        %v3174 = vld [vmem:[%s2575 + $0x182] sm:$0xff]
        %v3175 = vld [vmem:[%s2575 + $0x192] sm:$0xff]
        %v3176 = vld [vmem:[%s2575 + $0x1a2] sm:$0xff]
        %v3177 = vld [vmem:[%s2575 + $0x1b2] sm:$0xff]
        %v3178 = vld [vmem:[%s2575 + $0x1e2] sm:$0xff]
        %v3179 = vld [vmem:[%s2575 + $0x1f2] sm:$0xff]
        %v3180 = vld [vmem:[%s2575 + $0x202] sm:$0xff]
        %v3181 = vld [vmem:[%s2575 + $0x212] sm:$0xff]
        %v3182 = vld [vmem:[%s2575 + $0x222] sm:$0xff]
        %v3183 = vld [vmem:[%s2575 + $0x232] sm:$0xff]
        %v3184 = vld [vmem:[%s2575 + $0x242] sm:$0xff]
        %v3185 = vld [vmem:[%s2575 + $0x252] sm:$0xff]
        %v3186 = vld [vmem:[%s2575 + $0x282] sm:$0xff]
        %v3187 = vld [vmem:[%s2575 + $0x292] sm:$0xff]
        %v3188 = vld [vmem:[%s2575 + $0x2a2] sm:$0xff]
        %v3189 = vld [vmem:[%s2575 + $0x2b2] sm:$0xff]
        %v3190 = vld [vmem:[%s2575 + $0x2c2] sm:$0xff]
        %v3191 = vld [vmem:[%s2575 + $0x2d2] sm:$0xff]
        %v3192 = vld [vmem:[%s2575 + $0x2e2] sm:$0xff]
        %v3193 = vld [vmem:[%s2575 + $0x2f2] sm:$0xff]
        %v3194 = vld [vmem:[%s2575 + $0x322] sm:$0xff]
        %v3195 = vld [vmem:[%s2575 + $0x332] sm:$0xff]
        %v3196 = vld [vmem:[%s2575 + $0x342] sm:$0xff]
        %v3197 = vld [vmem:[%s2575 + $0x352] sm:$0xff]
        %v3198 = vld [vmem:[%s2575 + $0x362] sm:$0xff]
        %v3199 = vld [vmem:[%s2575 + $0x372] sm:$0xff]
        %v3200 = vld [vmem:[%s2575 + $0x382] sm:$0xff]
        %v3201 = vld [vmem:[%s2575 + $0x392] sm:$0xff]
        %3250 = vrot.lane.b32.xlu0 %v3154, 44
        %v3251 = vpop.permute.xlu0 %3250
        %3252 = vrot.lane.b32.xlu0 %v3155, 44
        %v3253 = vpop.permute.xlu0 %3252
        %3254 = vrot.lane.b32.xlu0 %v3156, 44
        %v3255 = vpop.permute.xlu0 %3254
        %3256 = vrot.lane.b32.xlu0 %v3157, 44
        %v3257 = vpop.permute.xlu0 %3256
        %3258 = vrot.lane.b32.xlu0 %v3158, 44
        %v3259 = vpop.permute.xlu0 %3258
        %3260 = vrot.lane.b32.xlu0 %v3159, 44
        %v3261 = vpop.permute.xlu0 %3260
        %3262 = vrot.lane.b32.xlu0 %v3160, 44
        %v3263 = vpop.permute.xlu0 %3262
        %3264 = vrot.lane.b32.xlu0 %v3161, 44
        %v3265 = vpop.permute.xlu0 %3264
        %3266 = vrot.lane.b32.xlu0 %v3162, 44
        %v3267 = vpop.permute.xlu0 %3266
        %3268 = vrot.lane.b32.xlu0 %v3163, 44
        %v3269 = vpop.permute.xlu0 %3268
        %3270 = vrot.lane.b32.xlu0 %v3164, 44
        %v3271 = vpop.permute.xlu0 %3270
        %3272 = vrot.lane.b32.xlu0 %v3165, 44
        %v3273 = vpop.permute.xlu0 %3272
        %3274 = vrot.lane.b32.xlu0 %v3166, 44
        %v3275 = vpop.permute.xlu0 %3274
        %3276 = vrot.lane.b32.xlu0 %v3167, 44
        %v3277 = vpop.permute.xlu0 %3276
        %3278 = vrot.lane.b32.xlu0 %v3168, 44
        %v3279 = vpop.permute.xlu0 %3278
        %3280 = vrot.lane.b32.xlu0 %v3169, 44
        %v3281 = vpop.permute.xlu0 %3280
        %3282 = vrot.lane.b32.xlu0 %v3170, 44
        %v3283 = vpop.permute.xlu0 %3282
        %3284 = vrot.lane.b32.xlu0 %v3171, 44
        %v3285 = vpop.permute.xlu0 %3284
        %3286 = vrot.lane.b32.xlu0 %v3172, 44
        %v3287 = vpop.permute.xlu0 %3286
        %3288 = vrot.lane.b32.xlu0 %v3173, 44
        %v3289 = vpop.permute.xlu0 %3288
        %3290 = vrot.lane.b32.xlu0 %v3174, 44
        %v3291 = vpop.permute.xlu0 %3290
        %3292 = vrot.lane.b32.xlu0 %v3175, 44
        %v3293 = vpop.permute.xlu0 %3292
        %3294 = vrot.lane.b32.xlu0 %v3176, 44
        %v3295 = vpop.permute.xlu0 %3294
        %3296 = vrot.lane.b32.xlu0 %v3177, 44
        %v3297 = vpop.permute.xlu0 %3296
        %3298 = vrot.lane.b32.xlu0 %v3178, 44
        %v3299 = vpop.permute.xlu0 %3298
        %3300 = vrot.lane.b32.xlu0 %v3179, 44
        %v3301 = vpop.permute.xlu0 %3300
        %3302 = vrot.lane.b32.xlu0 %v3180, 44
        %v3303 = vpop.permute.xlu0 %3302
        %3304 = vrot.lane.b32.xlu0 %v3181, 44
        %v3305 = vpop.permute.xlu0 %3304
        %3306 = vrot.lane.b32.xlu0 %v3182, 44
        %v3307 = vpop.permute.xlu0 %3306
        %3308 = vrot.lane.b32.xlu0 %v3183, 44
        %v3309 = vpop.permute.xlu0 %3308
        %3310 = vrot.lane.b32.xlu0 %v3184, 44
        %v3311 = vpop.permute.xlu0 %3310
        %3312 = vrot.lane.b32.xlu0 %v3185, 44
        %v3313 = vpop.permute.xlu0 %3312
        %3314 = vrot.lane.b32.xlu0 %v3186, 44
        %v3315 = vpop.permute.xlu0 %3314
        %3316 = vrot.lane.b32.xlu0 %v3187, 44
        %v3317 = vpop.permute.xlu0 %3316
        %3318 = vrot.lane.b32.xlu0 %v3188, 44
        %v3319 = vpop.permute.xlu0 %3318
        %3320 = vrot.lane.b32.xlu0 %v3189, 44
        %v3321 = vpop.permute.xlu0 %3320
        %3322 = vrot.lane.b32.xlu0 %v3190, 44
        %v3323 = vpop.permute.xlu0 %3322
        %3324 = vrot.lane.b32.xlu0 %v3191, 44
        %v3325 = vpop.permute.xlu0 %3324
        %3326 = vrot.lane.b32.xlu0 %v3192, 44
        %v3327 = vpop.permute.xlu0 %3326
        %3328 = vrot.lane.b32.xlu0 %v3193, 44
        %v3329 = vpop.permute.xlu0 %3328
        %3330 = vrot.lane.b32.xlu0 %v3194, 44
        %v3331 = vpop.permute.xlu0 %3330
        %3332 = vrot.lane.b32.xlu0 %v3195, 44
        %v3333 = vpop.permute.xlu0 %3332
        %3334 = vrot.lane.b32.xlu0 %v3196, 44
        %v3335 = vpop.permute.xlu0 %3334
        %3336 = vrot.lane.b32.xlu0 %v3197, 44
        %v3337 = vpop.permute.xlu0 %3336
        %3338 = vrot.lane.b32.xlu0 %v3198, 44
        %v3339 = vpop.permute.xlu0 %3338
        %3340 = vrot.lane.b32.xlu0 %v3199, 44
        %v3341 = vpop.permute.xlu0 %3340
        %3342 = vrot.lane.b32.xlu0 %v3200, 44
        %v3343 = vpop.permute.xlu0 %3342
        %3344 = vrot.lane.b32.xlu0 %v3201, 44
        %v3345 = vpop.permute.xlu0 %3344
        %vm3394 = vcmask 392544
        %3395 = vst.msk [vmem:[#allocation2] sm:$0xff] %vm3394, %v3251
        %3396 = vst.msk [vmem:[#allocation2 + $0x8] sm:$0xff] %vm3394, %v3253
        %3397 = vst.msk [vmem:[#allocation2 + $0x10] sm:$0xff] %vm3394, %v3255
        %3398 = vst.msk [vmem:[#allocation2 + $0x18] sm:$0xff] %vm3394, %v3257
        %3399 = vst.msk [vmem:[#allocation2 + $0x20] sm:$0xff] %vm3394, %v3259
        %3400 = vst.msk [vmem:[#allocation2 + $0x28] sm:$0xff] %vm3394, %v3261
        %3401 = vst.msk [vmem:[#allocation2 + $0x30] sm:$0xff] %vm3394, %v3263
        %3402 = vst.msk [vmem:[#allocation2 + $0x38] sm:$0xff] %vm3394, %v3265
        %3403 = vst.msk [vmem:[#allocation2 + $0x40] sm:$0xff] %vm3394, %v3267
        %3404 = vst.msk [vmem:[#allocation2 + $0x48] sm:$0xff] %vm3394, %v3269
        %3405 = vst.msk [vmem:[#allocation2 + $0x50] sm:$0xff] %vm3394, %v3271
        %3406 = vst.msk [vmem:[#allocation2 + $0x58] sm:$0xff] %vm3394, %v3273
        %3407 = vst.msk [vmem:[#allocation2 + $0x60] sm:$0xff] %vm3394, %v3275
        %3408 = vst.msk [vmem:[#allocation2 + $0x68] sm:$0xff] %vm3394, %v3277
        %3409 = vst.msk [vmem:[#allocation2 + $0x70] sm:$0xff] %vm3394, %v3279
        %3410 = vst.msk [vmem:[#allocation2 + $0x78] sm:$0xff] %vm3394, %v3281
        %3411 = vst.msk [vmem:[#allocation2 + $0x80] sm:$0xff] %vm3394, %v3283
        %3412 = vst.msk [vmem:[#allocation2 + $0x88] sm:$0xff] %vm3394, %v3285
        %3413 = vst.msk [vmem:[#allocation2 + $0x90] sm:$0xff] %vm3394, %v3287
        %3414 = vst.msk [vmem:[#allocation2 + $0x98] sm:$0xff] %vm3394, %v3289
        %3415 = vst.msk [vmem:[#allocation2 + $0xa0] sm:$0xff] %vm3394, %v3291
        %3416 = vst.msk [vmem:[#allocation2 + $0xa8] sm:$0xff] %vm3394, %v3293
        %3417 = vst.msk [vmem:[#allocation2 + $0xb0] sm:$0xff] %vm3394, %v3295
        %3418 = vst.msk [vmem:[#allocation2 + $0xb8] sm:$0xff] %vm3394, %v3297
        %3419 = vst.msk [vmem:[#allocation2 + $0xc0] sm:$0xff] %vm3394, %v3299
        %3420 = vst.msk [vmem:[#allocation2 + $0xc8] sm:$0xff] %vm3394, %v3301
        %3421 = vst.msk [vmem:[#allocation2 + $0xd0] sm:$0xff] %vm3394, %v3303
        %3422 = vst.msk [vmem:[#allocation2 + $0xd8] sm:$0xff] %vm3394, %v3305
        %3423 = vst.msk [vmem:[#allocation2 + $0xe0] sm:$0xff] %vm3394, %v3307
        %3424 = vst.msk [vmem:[#allocation2 + $0xe8] sm:$0xff] %vm3394, %v3309
        %3425 = vst.msk [vmem:[#allocation2 + $0xf0] sm:$0xff] %vm3394, %v3311
        %3426 = vst.msk [vmem:[#allocation2 + $0xf8] sm:$0xff] %vm3394, %v3313
        %3427 = vst.msk [vmem:[#allocation2 + $0x100] sm:$0xff] %vm3394, %v3315
        %3428 = vst.msk [vmem:[#allocation2 + $0x108] sm:$0xff] %vm3394, %v3317
        %3429 = vst.msk [vmem:[#allocation2 + $0x110] sm:$0xff] %vm3394, %v3319
        %3430 = vst.msk [vmem:[#allocation2 + $0x118] sm:$0xff] %vm3394, %v3321
        %3431 = vst.msk [vmem:[#allocation2 + $0x120] sm:$0xff] %vm3394, %v3323
        %3432 = vst.msk [vmem:[#allocation2 + $0x128] sm:$0xff] %vm3394, %v3325
        %3433 = vst.msk [vmem:[#allocation2 + $0x130] sm:$0xff] %vm3394, %v3327
        %3434 = vst.msk [vmem:[#allocation2 + $0x138] sm:$0xff] %vm3394, %v3329
        %3435 = vst.msk [vmem:[#allocation2 + $0x140] sm:$0xff] %vm3394, %v3331
        %3436 = vst.msk [vmem:[#allocation2 + $0x148] sm:$0xff] %vm3394, %v3333
        %3437 = vst.msk [vmem:[#allocation2 + $0x150] sm:$0xff] %vm3394, %v3335
        %3438 = vst.msk [vmem:[#allocation2 + $0x158] sm:$0xff] %vm3394, %v3337
        %3439 = vst.msk [vmem:[#allocation2 + $0x160] sm:$0xff] %vm3394, %v3339
        %3440 = vst.msk [vmem:[#allocation2 + $0x168] sm:$0xff] %vm3394, %v3341
        %3441 = vst.msk [vmem:[#allocation2 + $0x170] sm:$0xff] %vm3394, %v3343
        %3442 = vst.msk [vmem:[#allocation2 + $0x178] sm:$0xff] %vm3394, %v3345
        %s3443 = sadd.s32 16, %s2574
        %s3444 = scalar_lea.vmem %s155, %s3443
        %v3445 = vld [vmem:[%s3444] sm:$0xff]
        %v3446 = vld [vmem:[%s3444 + $0x10] sm:$0xff]
        %v3447 = vld [vmem:[%s3444 + $0x20] sm:$0xff]
        %v3448 = vld [vmem:[%s3444 + $0x30] sm:$0xff]
        %v3449 = vld [vmem:[%s3444 + $0x40] sm:$0xff]
        %v3450 = vld [vmem:[%s3444 + $0x50] sm:$0xff]
        %v3451 = vld [vmem:[%s3444 + $0x60] sm:$0xff]
        %v3452 = vld [vmem:[%s3444 + $0x70] sm:$0xff]
        %v3453 = vld [vmem:[%s3444 + $0xa0] sm:$0xff]
        %v3454 = vld [vmem:[%s3444 + $0xb0] sm:$0xff]
        %v3455 = vld [vmem:[%s3444 + $0xc0] sm:$0xff]
        %v3456 = vld [vmem:[%s3444 + $0xd0] sm:$0xff]
        %v3457 = vld [vmem:[%s3444 + $0xe0] sm:$0xff]
        %v3458 = vld [vmem:[%s3444 + $0xf0] sm:$0xff]
        %v3459 = vld [vmem:[%s3444 + $0x100] sm:$0xff]
        %v3460 = vld [vmem:[%s3444 + $0x110] sm:$0xff]
        %v3461 = vld [vmem:[%s3444 + $0x140] sm:$0xff]
        %v3462 = vld [vmem:[%s3444 + $0x150] sm:$0xff]
        %v3463 = vld [vmem:[%s3444 + $0x160] sm:$0xff]
        %v3464 = vld [vmem:[%s3444 + $0x170] sm:$0xff]
        %v3465 = vld [vmem:[%s3444 + $0x180] sm:$0xff]
        %v3466 = vld [vmem:[%s3444 + $0x190] sm:$0xff]
        %v3467 = vld [vmem:[%s3444 + $0x1a0] sm:$0xff]
        %v3468 = vld [vmem:[%s3444 + $0x1b0] sm:$0xff]
        %v3469 = vld [vmem:[%s3444 + $0x1e0] sm:$0xff]
        %v3470 = vld [vmem:[%s3444 + $0x1f0] sm:$0xff]
        %v3471 = vld [vmem:[%s3444 + $0x200] sm:$0xff]
        %v3472 = vld [vmem:[%s3444 + $0x210] sm:$0xff]
        %v3473 = vld [vmem:[%s3444 + $0x220] sm:$0xff]
        %v3474 = vld [vmem:[%s3444 + $0x230] sm:$0xff]
        %v3475 = vld [vmem:[%s3444 + $0x240] sm:$0xff]
        %v3476 = vld [vmem:[%s3444 + $0x250] sm:$0xff]
        %v3477 = vld [vmem:[%s3444 + $0x280] sm:$0xff]
        %v3478 = vld [vmem:[%s3444 + $0x290] sm:$0xff]
        %v3479 = vld [vmem:[%s3444 + $0x2a0] sm:$0xff]
        %v3480 = vld [vmem:[%s3444 + $0x2b0] sm:$0xff]
        %v3481 = vld [vmem:[%s3444 + $0x2c0] sm:$0xff]
        %v3482 = vld [vmem:[%s3444 + $0x2d0] sm:$0xff]
        %v3483 = vld [vmem:[%s3444 + $0x2e0] sm:$0xff]
        %v3484 = vld [vmem:[%s3444 + $0x2f0] sm:$0xff]
        %v3485 = vld [vmem:[%s3444 + $0x320] sm:$0xff]
        %v3486 = vld [vmem:[%s3444 + $0x330] sm:$0xff]
        %v3487 = vld [vmem:[%s3444 + $0x340] sm:$0xff]
        %v3488 = vld [vmem:[%s3444 + $0x350] sm:$0xff]
        %v3489 = vld [vmem:[%s3444 + $0x360] sm:$0xff]
        %v3490 = vld [vmem:[%s3444 + $0x370] sm:$0xff]
        %v3491 = vld [vmem:[%s3444 + $0x380] sm:$0xff]
        %v3492 = vld [vmem:[%s3444 + $0x390] sm:$0xff]
        %3541 = vrot.lane.b32.xlu0 %v3445, 48
        %v3542 = vpop.permute.xlu0 %3541
        %3543 = vrot.lane.b32.xlu0 %v3446, 48
        %v3544 = vpop.permute.xlu0 %3543
        %3545 = vrot.lane.b32.xlu0 %v3447, 48
        %v3546 = vpop.permute.xlu0 %3545
        %3547 = vrot.lane.b32.xlu0 %v3448, 48
        %v3548 = vpop.permute.xlu0 %3547
        %3549 = vrot.lane.b32.xlu0 %v3449, 48
        %v3550 = vpop.permute.xlu0 %3549
        %3551 = vrot.lane.b32.xlu0 %v3450, 48
        %v3552 = vpop.permute.xlu0 %3551
        %3553 = vrot.lane.b32.xlu0 %v3451, 48
        %v3554 = vpop.permute.xlu0 %3553
        %3555 = vrot.lane.b32.xlu0 %v3452, 48
        %v3556 = vpop.permute.xlu0 %3555
        %3557 = vrot.lane.b32.xlu0 %v3453, 48
        %v3558 = vpop.permute.xlu0 %3557
        %3559 = vrot.lane.b32.xlu0 %v3454, 48
        %v3560 = vpop.permute.xlu0 %3559
        %3561 = vrot.lane.b32.xlu0 %v3455, 48
        %v3562 = vpop.permute.xlu0 %3561
        %3563 = vrot.lane.b32.xlu0 %v3456, 48
        %v3564 = vpop.permute.xlu0 %3563
        %3565 = vrot.lane.b32.xlu0 %v3457, 48
        %v3566 = vpop.permute.xlu0 %3565
        %3567 = vrot.lane.b32.xlu0 %v3458, 48
        %v3568 = vpop.permute.xlu0 %3567
        %3569 = vrot.lane.b32.xlu0 %v3459, 48
        %v3570 = vpop.permute.xlu0 %3569
        %3571 = vrot.lane.b32.xlu0 %v3460, 48
        %v3572 = vpop.permute.xlu0 %3571
        %3573 = vrot.lane.b32.xlu0 %v3461, 48
        %v3574 = vpop.permute.xlu0 %3573
        %3575 = vrot.lane.b32.xlu0 %v3462, 48
        %v3576 = vpop.permute.xlu0 %3575
        %3577 = vrot.lane.b32.xlu0 %v3463, 48
        %v3578 = vpop.permute.xlu0 %3577
        %3579 = vrot.lane.b32.xlu0 %v3464, 48
        %v3580 = vpop.permute.xlu0 %3579
        %3581 = vrot.lane.b32.xlu0 %v3465, 48
        %v3582 = vpop.permute.xlu0 %3581
        %3583 = vrot.lane.b32.xlu0 %v3466, 48
        %v3584 = vpop.permute.xlu0 %3583
        %3585 = vrot.lane.b32.xlu0 %v3467, 48
        %v3586 = vpop.permute.xlu0 %3585
        %3587 = vrot.lane.b32.xlu0 %v3468, 48
        %v3588 = vpop.permute.xlu0 %3587
        %3589 = vrot.lane.b32.xlu0 %v3469, 48
        %v3590 = vpop.permute.xlu0 %3589
        %3591 = vrot.lane.b32.xlu0 %v3470, 48
        %v3592 = vpop.permute.xlu0 %3591
        %3593 = vrot.lane.b32.xlu0 %v3471, 48
        %v3594 = vpop.permute.xlu0 %3593
        %3595 = vrot.lane.b32.xlu0 %v3472, 48
        %v3596 = vpop.permute.xlu0 %3595
        %3597 = vrot.lane.b32.xlu0 %v3473, 48
        %v3598 = vpop.permute.xlu0 %3597
        %3599 = vrot.lane.b32.xlu0 %v3474, 48
        %v3600 = vpop.permute.xlu0 %3599
        %3601 = vrot.lane.b32.xlu0 %v3475, 48
        %v3602 = vpop.permute.xlu0 %3601
        %3603 = vrot.lane.b32.xlu0 %v3476, 48
        %v3604 = vpop.permute.xlu0 %3603
        %3605 = vrot.lane.b32.xlu0 %v3477, 48
        %v3606 = vpop.permute.xlu0 %3605
        %3607 = vrot.lane.b32.xlu0 %v3478, 48
        %v3608 = vpop.permute.xlu0 %3607
        %3609 = vrot.lane.b32.xlu0 %v3479, 48
        %v3610 = vpop.permute.xlu0 %3609
        %3611 = vrot.lane.b32.xlu0 %v3480, 48
        %v3612 = vpop.permute.xlu0 %3611
        %3613 = vrot.lane.b32.xlu0 %v3481, 48
        %v3614 = vpop.permute.xlu0 %3613
        %3615 = vrot.lane.b32.xlu0 %v3482, 48
        %v3616 = vpop.permute.xlu0 %3615
        %3617 = vrot.lane.b32.xlu0 %v3483, 48
        %v3618 = vpop.permute.xlu0 %3617
        %3619 = vrot.lane.b32.xlu0 %v3484, 48
        %v3620 = vpop.permute.xlu0 %3619
        %3621 = vrot.lane.b32.xlu0 %v3485, 48
        %v3622 = vpop.permute.xlu0 %3621
        %3623 = vrot.lane.b32.xlu0 %v3486, 48
        %v3624 = vpop.permute.xlu0 %3623
        %3625 = vrot.lane.b32.xlu0 %v3487, 48
        %v3626 = vpop.permute.xlu0 %3625
        %3627 = vrot.lane.b32.xlu0 %v3488, 48
        %v3628 = vpop.permute.xlu0 %3627
        %3629 = vrot.lane.b32.xlu0 %v3489, 48
        %v3630 = vpop.permute.xlu0 %3629
        %3631 = vrot.lane.b32.xlu0 %v3490, 48
        %v3632 = vpop.permute.xlu0 %3631
        %3633 = vrot.lane.b32.xlu0 %v3491, 48
        %v3634 = vpop.permute.xlu0 %3633
        %3635 = vrot.lane.b32.xlu0 %v3492, 48
        %v3636 = vpop.permute.xlu0 %3635
        %vm3685 = vcmask 425344
        %3686 = vst.msk [vmem:[#allocation2] sm:$0xff] %vm3685, %v3542
        %3687 = vst.msk [vmem:[#allocation2 + $0x8] sm:$0xff] %vm3685, %v3544
        %3688 = vst.msk [vmem:[#allocation2 + $0x10] sm:$0xff] %vm3685, %v3546
        %3689 = vst.msk [vmem:[#allocation2 + $0x18] sm:$0xff] %vm3685, %v3548
        %3690 = vst.msk [vmem:[#allocation2 + $0x20] sm:$0xff] %vm3685, %v3550
        %3691 = vst.msk [vmem:[#allocation2 + $0x28] sm:$0xff] %vm3685, %v3552
        %3692 = vst.msk [vmem:[#allocation2 + $0x30] sm:$0xff] %vm3685, %v3554
        %3693 = vst.msk [vmem:[#allocation2 + $0x38] sm:$0xff] %vm3685, %v3556
        %3694 = vst.msk [vmem:[#allocation2 + $0x40] sm:$0xff] %vm3685, %v3558
        %3695 = vst.msk [vmem:[#allocation2 + $0x48] sm:$0xff] %vm3685, %v3560
        %3696 = vst.msk [vmem:[#allocation2 + $0x50] sm:$0xff] %vm3685, %v3562
        %3697 = vst.msk [vmem:[#allocation2 + $0x58] sm:$0xff] %vm3685, %v3564
        %3698 = vst.msk [vmem:[#allocation2 + $0x60] sm:$0xff] %vm3685, %v3566
        %3699 = vst.msk [vmem:[#allocation2 + $0x68] sm:$0xff] %vm3685, %v3568
        %3700 = vst.msk [vmem:[#allocation2 + $0x70] sm:$0xff] %vm3685, %v3570
        %3701 = vst.msk [vmem:[#allocation2 + $0x78] sm:$0xff] %vm3685, %v3572
        %3702 = vst.msk [vmem:[#allocation2 + $0x80] sm:$0xff] %vm3685, %v3574
        %3703 = vst.msk [vmem:[#allocation2 + $0x88] sm:$0xff] %vm3685, %v3576
        %3704 = vst.msk [vmem:[#allocation2 + $0x90] sm:$0xff] %vm3685, %v3578
        %3705 = vst.msk [vmem:[#allocation2 + $0x98] sm:$0xff] %vm3685, %v3580
        %3706 = vst.msk [vmem:[#allocation2 + $0xa0] sm:$0xff] %vm3685, %v3582
        %3707 = vst.msk [vmem:[#allocation2 + $0xa8] sm:$0xff] %vm3685, %v3584
        %3708 = vst.msk [vmem:[#allocation2 + $0xb0] sm:$0xff] %vm3685, %v3586
        %3709 = vst.msk [vmem:[#allocation2 + $0xb8] sm:$0xff] %vm3685, %v3588
        %3710 = vst.msk [vmem:[#allocation2 + $0xc0] sm:$0xff] %vm3685, %v3590
        %3711 = vst.msk [vmem:[#allocation2 + $0xc8] sm:$0xff] %vm3685, %v3592
        %3712 = vst.msk [vmem:[#allocation2 + $0xd0] sm:$0xff] %vm3685, %v3594
        %3713 = vst.msk [vmem:[#allocation2 + $0xd8] sm:$0xff] %vm3685, %v3596
        %3714 = vst.msk [vmem:[#allocation2 + $0xe0] sm:$0xff] %vm3685, %v3598
        %3715 = vst.msk [vmem:[#allocation2 + $0xe8] sm:$0xff] %vm3685, %v3600
        %3716 = vst.msk [vmem:[#allocation2 + $0xf0] sm:$0xff] %vm3685, %v3602
        %3717 = vst.msk [vmem:[#allocation2 + $0xf8] sm:$0xff] %vm3685, %v3604
        %3718 = vst.msk [vmem:[#allocation2 + $0x100] sm:$0xff] %vm3685, %v3606
        %3719 = vst.msk [vmem:[#allocation2 + $0x108] sm:$0xff] %vm3685, %v3608
        %3720 = vst.msk [vmem:[#allocation2 + $0x110] sm:$0xff] %vm3685, %v3610
        %3721 = vst.msk [vmem:[#allocation2 + $0x118] sm:$0xff] %vm3685, %v3612
        %3722 = vst.msk [vmem:[#allocation2 + $0x120] sm:$0xff] %vm3685, %v3614
        %3723 = vst.msk [vmem:[#allocation2 + $0x128] sm:$0xff] %vm3685, %v3616
        %3724 = vst.msk [vmem:[#allocation2 + $0x130] sm:$0xff] %vm3685, %v3618
        %3725 = vst.msk [vmem:[#allocation2 + $0x138] sm:$0xff] %vm3685, %v3620
        %3726 = vst.msk [vmem:[#allocation2 + $0x140] sm:$0xff] %vm3685, %v3622
        %3727 = vst.msk [vmem:[#allocation2 + $0x148] sm:$0xff] %vm3685, %v3624
        %3728 = vst.msk [vmem:[#allocation2 + $0x150] sm:$0xff] %vm3685, %v3626
        %3729 = vst.msk [vmem:[#allocation2 + $0x158] sm:$0xff] %vm3685, %v3628
        %3730 = vst.msk [vmem:[#allocation2 + $0x160] sm:$0xff] %vm3685, %v3630
        %3731 = vst.msk [vmem:[#allocation2 + $0x168] sm:$0xff] %vm3685, %v3632
        %3732 = vst.msk [vmem:[#allocation2 + $0x170] sm:$0xff] %vm3685, %v3634
        %3733 = vst.msk [vmem:[#allocation2 + $0x178] sm:$0xff] %vm3685, %v3636
        %v3734 = vld [vmem:[%s3444 + $0x1] sm:$0xff]
        %v3735 = vld [vmem:[%s3444 + $0x11] sm:$0xff]
        %v3736 = vld [vmem:[%s3444 + $0x21] sm:$0xff]
        %v3737 = vld [vmem:[%s3444 + $0x31] sm:$0xff]
        %v3738 = vld [vmem:[%s3444 + $0x41] sm:$0xff]
        %v3739 = vld [vmem:[%s3444 + $0x51] sm:$0xff]
        %v3740 = vld [vmem:[%s3444 + $0x61] sm:$0xff]
        %v3741 = vld [vmem:[%s3444 + $0x71] sm:$0xff]
        %v3742 = vld [vmem:[%s3444 + $0xa1] sm:$0xff]
        %v3743 = vld [vmem:[%s3444 + $0xb1] sm:$0xff]
        %v3744 = vld [vmem:[%s3444 + $0xc1] sm:$0xff]
        %v3745 = vld [vmem:[%s3444 + $0xd1] sm:$0xff]
        %v3746 = vld [vmem:[%s3444 + $0xe1] sm:$0xff]
        %v3747 = vld [vmem:[%s3444 + $0xf1] sm:$0xff]
        %v3748 = vld [vmem:[%s3444 + $0x101] sm:$0xff]
        %v3749 = vld [vmem:[%s3444 + $0x111] sm:$0xff]
        %v3750 = vld [vmem:[%s3444 + $0x141] sm:$0xff]
        %v3751 = vld [vmem:[%s3444 + $0x151] sm:$0xff]
        %v3752 = vld [vmem:[%s3444 + $0x161] sm:$0xff]
        %v3753 = vld [vmem:[%s3444 + $0x171] sm:$0xff]
        %v3754 = vld [vmem:[%s3444 + $0x181] sm:$0xff]
        %v3755 = vld [vmem:[%s3444 + $0x191] sm:$0xff]
        %v3756 = vld [vmem:[%s3444 + $0x1a1] sm:$0xff]
        %v3757 = vld [vmem:[%s3444 + $0x1b1] sm:$0xff]
        %v3758 = vld [vmem:[%s3444 + $0x1e1] sm:$0xff]
        %v3759 = vld [vmem:[%s3444 + $0x1f1] sm:$0xff]
        %v3760 = vld [vmem:[%s3444 + $0x201] sm:$0xff]
        %v3761 = vld [vmem:[%s3444 + $0x211] sm:$0xff]
        %v3762 = vld [vmem:[%s3444 + $0x221] sm:$0xff]
        %v3763 = vld [vmem:[%s3444 + $0x231] sm:$0xff]
        %v3764 = vld [vmem:[%s3444 + $0x241] sm:$0xff]
        %v3765 = vld [vmem:[%s3444 + $0x251] sm:$0xff]
        %v3766 = vld [vmem:[%s3444 + $0x281] sm:$0xff]
        %v3767 = vld [vmem:[%s3444 + $0x291] sm:$0xff]
        %v3768 = vld [vmem:[%s3444 + $0x2a1] sm:$0xff]
        %v3769 = vld [vmem:[%s3444 + $0x2b1] sm:$0xff]
        %v3770 = vld [vmem:[%s3444 + $0x2c1] sm:$0xff]
        %v3771 = vld [vmem:[%s3444 + $0x2d1] sm:$0xff]
        %v3772 = vld [vmem:[%s3444 + $0x2e1] sm:$0xff]
        %v3773 = vld [vmem:[%s3444 + $0x2f1] sm:$0xff]
        %v3774 = vld [vmem:[%s3444 + $0x321] sm:$0xff]
        %v3775 = vld [vmem:[%s3444 + $0x331] sm:$0xff]
        %v3776 = vld [vmem:[%s3444 + $0x341] sm:$0xff]
        %v3777 = vld [vmem:[%s3444 + $0x351] sm:$0xff]
        %v3778 = vld [vmem:[%s3444 + $0x361] sm:$0xff]
        %v3779 = vld [vmem:[%s3444 + $0x371] sm:$0xff]
        %v3780 = vld [vmem:[%s3444 + $0x381] sm:$0xff]
        %v3781 = vld [vmem:[%s3444 + $0x391] sm:$0xff]
        %3830 = vrot.lane.b32.xlu0 %v3734, 52
        %v3831 = vpop.permute.xlu0 %3830
        %3832 = vrot.lane.b32.xlu0 %v3735, 52
        %v3833 = vpop.permute.xlu0 %3832
        %3834 = vrot.lane.b32.xlu0 %v3736, 52
        %v3835 = vpop.permute.xlu0 %3834
        %3836 = vrot.lane.b32.xlu0 %v3737, 52
        %v3837 = vpop.permute.xlu0 %3836
        %3838 = vrot.lane.b32.xlu0 %v3738, 52
        %v3839 = vpop.permute.xlu0 %3838
        %3840 = vrot.lane.b32.xlu0 %v3739, 52
        %v3841 = vpop.permute.xlu0 %3840
        %3842 = vrot.lane.b32.xlu0 %v3740, 52
        %v3843 = vpop.permute.xlu0 %3842
        %3844 = vrot.lane.b32.xlu0 %v3741, 52
        %v3845 = vpop.permute.xlu0 %3844
        %3846 = vrot.lane.b32.xlu0 %v3742, 52
        %v3847 = vpop.permute.xlu0 %3846
        %3848 = vrot.lane.b32.xlu0 %v3743, 52
        %v3849 = vpop.permute.xlu0 %3848
        %3850 = vrot.lane.b32.xlu0 %v3744, 52
        %v3851 = vpop.permute.xlu0 %3850
        %3852 = vrot.lane.b32.xlu0 %v3745, 52
        %v3853 = vpop.permute.xlu0 %3852
        %3854 = vrot.lane.b32.xlu0 %v3746, 52
        %v3855 = vpop.permute.xlu0 %3854
        %3856 = vrot.lane.b32.xlu0 %v3747, 52
        %v3857 = vpop.permute.xlu0 %3856
        %3858 = vrot.lane.b32.xlu0 %v3748, 52
        %v3859 = vpop.permute.xlu0 %3858
        %3860 = vrot.lane.b32.xlu0 %v3749, 52
        %v3861 = vpop.permute.xlu0 %3860
        %3862 = vrot.lane.b32.xlu0 %v3750, 52
        %v3863 = vpop.permute.xlu0 %3862
        %3864 = vrot.lane.b32.xlu0 %v3751, 52
        %v3865 = vpop.permute.xlu0 %3864
        %3866 = vrot.lane.b32.xlu0 %v3752, 52
        %v3867 = vpop.permute.xlu0 %3866
        %3868 = vrot.lane.b32.xlu0 %v3753, 52
        %v3869 = vpop.permute.xlu0 %3868
        %3870 = vrot.lane.b32.xlu0 %v3754, 52
        %v3871 = vpop.permute.xlu0 %3870
        %3872 = vrot.lane.b32.xlu0 %v3755, 52
        %v3873 = vpop.permute.xlu0 %3872
        %3874 = vrot.lane.b32.xlu0 %v3756, 52
        %v3875 = vpop.permute.xlu0 %3874
        %3876 = vrot.lane.b32.xlu0 %v3757, 52
        %v3877 = vpop.permute.xlu0 %3876
        %3878 = vrot.lane.b32.xlu0 %v3758, 52
        %v3879 = vpop.permute.xlu0 %3878
        %3880 = vrot.lane.b32.xlu0 %v3759, 52
        %v3881 = vpop.permute.xlu0 %3880
        %3882 = vrot.lane.b32.xlu0 %v3760, 52
        %v3883 = vpop.permute.xlu0 %3882
        %3884 = vrot.lane.b32.xlu0 %v3761, 52
        %v3885 = vpop.permute.xlu0 %3884
        %3886 = vrot.lane.b32.xlu0 %v3762, 52
        %v3887 = vpop.permute.xlu0 %3886
        %3888 = vrot.lane.b32.xlu0 %v3763, 52
        %v3889 = vpop.permute.xlu0 %3888
        %3890 = vrot.lane.b32.xlu0 %v3764, 52
        %v3891 = vpop.permute.xlu0 %3890
        %3892 = vrot.lane.b32.xlu0 %v3765, 52
        %v3893 = vpop.permute.xlu0 %3892
        %3894 = vrot.lane.b32.xlu0 %v3766, 52
        %v3895 = vpop.permute.xlu0 %3894
        %3896 = vrot.lane.b32.xlu0 %v3767, 52
        %v3897 = vpop.permute.xlu0 %3896
        %3898 = vrot.lane.b32.xlu0 %v3768, 52
        %v3899 = vpop.permute.xlu0 %3898
        %3900 = vrot.lane.b32.xlu0 %v3769, 52
        %v3901 = vpop.permute.xlu0 %3900
        %3902 = vrot.lane.b32.xlu0 %v3770, 52
        %v3903 = vpop.permute.xlu0 %3902
        %3904 = vrot.lane.b32.xlu0 %v3771, 52
        %v3905 = vpop.permute.xlu0 %3904
        %3906 = vrot.lane.b32.xlu0 %v3772, 52
        %v3907 = vpop.permute.xlu0 %3906
        %3908 = vrot.lane.b32.xlu0 %v3773, 52
        %v3909 = vpop.permute.xlu0 %3908
        %3910 = vrot.lane.b32.xlu0 %v3774, 52
        %v3911 = vpop.permute.xlu0 %3910
        %3912 = vrot.lane.b32.xlu0 %v3775, 52
        %v3913 = vpop.permute.xlu0 %3912
        %3914 = vrot.lane.b32.xlu0 %v3776, 52
        %v3915 = vpop.permute.xlu0 %3914
        %3916 = vrot.lane.b32.xlu0 %v3777, 52
        %v3917 = vpop.permute.xlu0 %3916
        %3918 = vrot.lane.b32.xlu0 %v3778, 52
        %v3919 = vpop.permute.xlu0 %3918
        %3920 = vrot.lane.b32.xlu0 %v3779, 52
        %v3921 = vpop.permute.xlu0 %3920
        %3922 = vrot.lane.b32.xlu0 %v3780, 52
        %v3923 = vpop.permute.xlu0 %3922
        %3924 = vrot.lane.b32.xlu0 %v3781, 52
        %v3925 = vpop.permute.xlu0 %3924
        %vm3974 = vcmask 458144
        %3975 = vst.msk [vmem:[#allocation2] sm:$0xff] %vm3974, %v3831
        %3976 = vst.msk [vmem:[#allocation2 + $0x8] sm:$0xff] %vm3974, %v3833
        %3977 = vst.msk [vmem:[#allocation2 + $0x10] sm:$0xff] %vm3974, %v3835
        %3978 = vst.msk [vmem:[#allocation2 + $0x18] sm:$0xff] %vm3974, %v3837
        %3979 = vst.msk [vmem:[#allocation2 + $0x20] sm:$0xff] %vm3974, %v3839
        %3980 = vst.msk [vmem:[#allocation2 + $0x28] sm:$0xff] %vm3974, %v3841
        %3981 = vst.msk [vmem:[#allocation2 + $0x30] sm:$0xff] %vm3974, %v3843
        %3982 = vst.msk [vmem:[#allocation2 + $0x38] sm:$0xff] %vm3974, %v3845
        %3983 = vst.msk [vmem:[#allocation2 + $0x40] sm:$0xff] %vm3974, %v3847
        %3984 = vst.msk [vmem:[#allocation2 + $0x48] sm:$0xff] %vm3974, %v3849
        %3985 = vst.msk [vmem:[#allocation2 + $0x50] sm:$0xff] %vm3974, %v3851
        %3986 = vst.msk [vmem:[#allocation2 + $0x58] sm:$0xff] %vm3974, %v3853
        %3987 = vst.msk [vmem:[#allocation2 + $0x60] sm:$0xff] %vm3974, %v3855
        %3988 = vst.msk [vmem:[#allocation2 + $0x68] sm:$0xff] %vm3974, %v3857
        %3989 = vst.msk [vmem:[#allocation2 + $0x70] sm:$0xff] %vm3974, %v3859
        %3990 = vst.msk [vmem:[#allocation2 + $0x78] sm:$0xff] %vm3974, %v3861
        %3991 = vst.msk [vmem:[#allocation2 + $0x80] sm:$0xff] %vm3974, %v3863
        %3992 = vst.msk [vmem:[#allocation2 + $0x88] sm:$0xff] %vm3974, %v3865
        %3993 = vst.msk [vmem:[#allocation2 + $0x90] sm:$0xff] %vm3974, %v3867
        %3994 = vst.msk [vmem:[#allocation2 + $0x98] sm:$0xff] %vm3974, %v3869
        %3995 = vst.msk [vmem:[#allocation2 + $0xa0] sm:$0xff] %vm3974, %v3871
        %3996 = vst.msk [vmem:[#allocation2 + $0xa8] sm:$0xff] %vm3974, %v3873
        %3997 = vst.msk [vmem:[#allocation2 + $0xb0] sm:$0xff] %vm3974, %v3875
        %3998 = vst.msk [vmem:[#allocation2 + $0xb8] sm:$0xff] %vm3974, %v3877
        %3999 = vst.msk [vmem:[#allocation2 + $0xc0] sm:$0xff] %vm3974, %v3879
        %4000 = vst.msk [vmem:[#allocation2 + $0xc8] sm:$0xff] %vm3974, %v3881
        %4001 = vst.msk [vmem:[#allocation2 + $0xd0] sm:$0xff] %vm3974, %v3883
        %4002 = vst.msk [vmem:[#allocation2 + $0xd8] sm:$0xff] %vm3974, %v3885
        %4003 = vst.msk [vmem:[#allocation2 + $0xe0] sm:$0xff] %vm3974, %v3887
        %4004 = vst.msk [vmem:[#allocation2 + $0xe8] sm:$0xff] %vm3974, %v3889
        %4005 = vst.msk [vmem:[#allocation2 + $0xf0] sm:$0xff] %vm3974, %v3891
        %4006 = vst.msk [vmem:[#allocation2 + $0xf8] sm:$0xff] %vm3974, %v3893
        %4007 = vst.msk [vmem:[#allocation2 + $0x100] sm:$0xff] %vm3974, %v3895
        %4008 = vst.msk [vmem:[#allocation2 + $0x108] sm:$0xff] %vm3974, %v3897
        %4009 = vst.msk [vmem:[#allocation2 + $0x110] sm:$0xff] %vm3974, %v3899
        %4010 = vst.msk [vmem:[#allocation2 + $0x118] sm:$0xff] %vm3974, %v3901
        %4011 = vst.msk [vmem:[#allocation2 + $0x120] sm:$0xff] %vm3974, %v3903
        %4012 = vst.msk [vmem:[#allocation2 + $0x128] sm:$0xff] %vm3974, %v3905
        %4013 = vst.msk [vmem:[#allocation2 + $0x130] sm:$0xff] %vm3974, %v3907
        %4014 = vst.msk [vmem:[#allocation2 + $0x138] sm:$0xff] %vm3974, %v3909
        %4015 = vst.msk [vmem:[#allocation2 + $0x140] sm:$0xff] %vm3974, %v3911
        %4016 = vst.msk [vmem:[#allocation2 + $0x148] sm:$0xff] %vm3974, %v3913
        %4017 = vst.msk [vmem:[#allocation2 + $0x150] sm:$0xff] %vm3974, %v3915
        %4018 = vst.msk [vmem:[#allocation2 + $0x158] sm:$0xff] %vm3974, %v3917
        %4019 = vst.msk [vmem:[#allocation2 + $0x160] sm:$0xff] %vm3974, %v3919
        %4020 = vst.msk [vmem:[#allocation2 + $0x168] sm:$0xff] %vm3974, %v3921
        %4021 = vst.msk [vmem:[#allocation2 + $0x170] sm:$0xff] %vm3974, %v3923
        %4022 = vst.msk [vmem:[#allocation2 + $0x178] sm:$0xff] %vm3974, %v3925
        %v4023 = vld [vmem:[%s3444 + $0x2] sm:$0xff]
        %v4024 = vld [vmem:[%s3444 + $0x12] sm:$0xff]
        %v4025 = vld [vmem:[%s3444 + $0x22] sm:$0xff]
        %v4026 = vld [vmem:[%s3444 + $0x32] sm:$0xff]
        %v4027 = vld [vmem:[%s3444 + $0x42] sm:$0xff]
        %v4028 = vld [vmem:[%s3444 + $0x52] sm:$0xff]
        %v4029 = vld [vmem:[%s3444 + $0x62] sm:$0xff]
        %v4030 = vld [vmem:[%s3444 + $0x72] sm:$0xff]
        %v4031 = vld [vmem:[%s3444 + $0xa2] sm:$0xff]
        %v4032 = vld [vmem:[%s3444 + $0xb2] sm:$0xff]
        %v4033 = vld [vmem:[%s3444 + $0xc2] sm:$0xff]
        %v4034 = vld [vmem:[%s3444 + $0xd2] sm:$0xff]
        %v4035 = vld [vmem:[%s3444 + $0xe2] sm:$0xff]
        %v4036 = vld [vmem:[%s3444 + $0xf2] sm:$0xff]
        %v4037 = vld [vmem:[%s3444 + $0x102] sm:$0xff]
        %v4038 = vld [vmem:[%s3444 + $0x112] sm:$0xff]
        %v4039 = vld [vmem:[%s3444 + $0x142] sm:$0xff]
        %v4040 = vld [vmem:[%s3444 + $0x152] sm:$0xff]
        %v4041 = vld [vmem:[%s3444 + $0x162] sm:$0xff]
        %v4042 = vld [vmem:[%s3444 + $0x172] sm:$0xff]
        %v4043 = vld [vmem:[%s3444 + $0x182] sm:$0xff]
        %v4044 = vld [vmem:[%s3444 + $0x192] sm:$0xff]
        %v4045 = vld [vmem:[%s3444 + $0x1a2] sm:$0xff]
        %v4046 = vld [vmem:[%s3444 + $0x1b2] sm:$0xff]
        %v4047 = vld [vmem:[%s3444 + $0x1e2] sm:$0xff]
        %v4048 = vld [vmem:[%s3444 + $0x1f2] sm:$0xff]
        %v4049 = vld [vmem:[%s3444 + $0x202] sm:$0xff]
        %v4050 = vld [vmem:[%s3444 + $0x212] sm:$0xff]
        %v4051 = vld [vmem:[%s3444 + $0x222] sm:$0xff]
        %v4052 = vld [vmem:[%s3444 + $0x232] sm:$0xff]
        %v4053 = vld [vmem:[%s3444 + $0x242] sm:$0xff]
        %v4054 = vld [vmem:[%s3444 + $0x252] sm:$0xff]
        %v4055 = vld [vmem:[%s3444 + $0x282] sm:$0xff]
        %v4056 = vld [vmem:[%s3444 + $0x292] sm:$0xff]
        %v4057 = vld [vmem:[%s3444 + $0x2a2] sm:$0xff]
        %v4058 = vld [vmem:[%s3444 + $0x2b2] sm:$0xff]
        %v4059 = vld [vmem:[%s3444 + $0x2c2] sm:$0xff]
        %v4060 = vld [vmem:[%s3444 + $0x2d2] sm:$0xff]
        %v4061 = vld [vmem:[%s3444 + $0x2e2] sm:$0xff]
        %v4062 = vld [vmem:[%s3444 + $0x2f2] sm:$0xff]
        %v4063 = vld [vmem:[%s3444 + $0x322] sm:$0xff]
        %v4064 = vld [vmem:[%s3444 + $0x332] sm:$0xff]
        %v4065 = vld [vmem:[%s3444 + $0x342] sm:$0xff]
        %v4066 = vld [vmem:[%s3444 + $0x352] sm:$0xff]
        %v4067 = vld [vmem:[%s3444 + $0x362] sm:$0xff]
        %v4068 = vld [vmem:[%s3444 + $0x372] sm:$0xff]
        %v4069 = vld [vmem:[%s3444 + $0x382] sm:$0xff]
        %v4070 = vld [vmem:[%s3444 + $0x392] sm:$0xff]
        %4119 = vrot.lane.b32.xlu0 %v4023, 56
        %v4120 = vpop.permute.xlu0 %4119
        %4121 = vrot.lane.b32.xlu0 %v4024, 56
        %v4122 = vpop.permute.xlu0 %4121
        %4123 = vrot.lane.b32.xlu0 %v4025, 56
        %v4124 = vpop.permute.xlu0 %4123
        %4125 = vrot.lane.b32.xlu0 %v4026, 56
        %v4126 = vpop.permute.xlu0 %4125
        %4127 = vrot.lane.b32.xlu0 %v4027, 56
        %v4128 = vpop.permute.xlu0 %4127
        %4129 = vrot.lane.b32.xlu0 %v4028, 56
        %v4130 = vpop.permute.xlu0 %4129
        %4131 = vrot.lane.b32.xlu0 %v4029, 56
        %v4132 = vpop.permute.xlu0 %4131
        %4133 = vrot.lane.b32.xlu0 %v4030, 56
        %v4134 = vpop.permute.xlu0 %4133
        %4135 = vrot.lane.b32.xlu0 %v4031, 56
        %v4136 = vpop.permute.xlu0 %4135
        %4137 = vrot.lane.b32.xlu0 %v4032, 56
        %v4138 = vpop.permute.xlu0 %4137
        %4139 = vrot.lane.b32.xlu0 %v4033, 56
        %v4140 = vpop.permute.xlu0 %4139
        %4141 = vrot.lane.b32.xlu0 %v4034, 56
        %v4142 = vpop.permute.xlu0 %4141
        %4143 = vrot.lane.b32.xlu0 %v4035, 56
        %v4144 = vpop.permute.xlu0 %4143
        %4145 = vrot.lane.b32.xlu0 %v4036, 56
        %v4146 = vpop.permute.xlu0 %4145
        %4147 = vrot.lane.b32.xlu0 %v4037, 56
        %v4148 = vpop.permute.xlu0 %4147
        %4149 = vrot.lane.b32.xlu0 %v4038, 56
        %v4150 = vpop.permute.xlu0 %4149
        %4151 = vrot.lane.b32.xlu0 %v4039, 56
        %v4152 = vpop.permute.xlu0 %4151
        %4153 = vrot.lane.b32.xlu0 %v4040, 56
        %v4154 = vpop.permute.xlu0 %4153
        %4155 = vrot.lane.b32.xlu0 %v4041, 56
        %v4156 = vpop.permute.xlu0 %4155
        %4157 = vrot.lane.b32.xlu0 %v4042, 56
        %v4158 = vpop.permute.xlu0 %4157
        %4159 = vrot.lane.b32.xlu0 %v4043, 56
        %v4160 = vpop.permute.xlu0 %4159
        %4161 = vrot.lane.b32.xlu0 %v4044, 56
        %v4162 = vpop.permute.xlu0 %4161
        %4163 = vrot.lane.b32.xlu0 %v4045, 56
        %v4164 = vpop.permute.xlu0 %4163
        %4165 = vrot.lane.b32.xlu0 %v4046, 56
        %v4166 = vpop.permute.xlu0 %4165
        %4167 = vrot.lane.b32.xlu0 %v4047, 56
        %v4168 = vpop.permute.xlu0 %4167
        %4169 = vrot.lane.b32.xlu0 %v4048, 56
        %v4170 = vpop.permute.xlu0 %4169
        %4171 = vrot.lane.b32.xlu0 %v4049, 56
        %v4172 = vpop.permute.xlu0 %4171
        %4173 = vrot.lane.b32.xlu0 %v4050, 56
        %v4174 = vpop.permute.xlu0 %4173
        %4175 = vrot.lane.b32.xlu0 %v4051, 56
        %v4176 = vpop.permute.xlu0 %4175
        %4177 = vrot.lane.b32.xlu0 %v4052, 56
        %v4178 = vpop.permute.xlu0 %4177
        %4179 = vrot.lane.b32.xlu0 %v4053, 56
        %v4180 = vpop.permute.xlu0 %4179
        %4181 = vrot.lane.b32.xlu0 %v4054, 56
        %v4182 = vpop.permute.xlu0 %4181
        %4183 = vrot.lane.b32.xlu0 %v4055, 56
        %v4184 = vpop.permute.xlu0 %4183
        %4185 = vrot.lane.b32.xlu0 %v4056, 56
        %v4186 = vpop.permute.xlu0 %4185
        %4187 = vrot.lane.b32.xlu0 %v4057, 56
        %v4188 = vpop.permute.xlu0 %4187
        %4189 = vrot.lane.b32.xlu0 %v4058, 56
        %v4190 = vpop.permute.xlu0 %4189
        %4191 = vrot.lane.b32.xlu0 %v4059, 56
        %v4192 = vpop.permute.xlu0 %4191
        %4193 = vrot.lane.b32.xlu0 %v4060, 56
        %v4194 = vpop.permute.xlu0 %4193
        %4195 = vrot.lane.b32.xlu0 %v4061, 56
        %v4196 = vpop.permute.xlu0 %4195
        %4197 = vrot.lane.b32.xlu0 %v4062, 56
        %v4198 = vpop.permute.xlu0 %4197
        %4199 = vrot.lane.b32.xlu0 %v4063, 56
        %v4200 = vpop.permute.xlu0 %4199
        %4201 = vrot.lane.b32.xlu0 %v4064, 56
        %v4202 = vpop.permute.xlu0 %4201
        %4203 = vrot.lane.b32.xlu0 %v4065, 56
        %v4204 = vpop.permute.xlu0 %4203
        %4205 = vrot.lane.b32.xlu0 %v4066, 56
        %v4206 = vpop.permute.xlu0 %4205
        %4207 = vrot.lane.b32.xlu0 %v4067, 56
        %v4208 = vpop.permute.xlu0 %4207
        %4209 = vrot.lane.b32.xlu0 %v4068, 56
        %v4210 = vpop.permute.xlu0 %4209
        %4211 = vrot.lane.b32.xlu0 %v4069, 56
        %v4212 = vpop.permute.xlu0 %4211
        %4213 = vrot.lane.b32.xlu0 %v4070, 56
        %v4214 = vpop.permute.xlu0 %4213
        %vm4263 = vcmask 490944
        %4264 = vst.msk [vmem:[#allocation2] sm:$0xff] %vm4263, %v4120
        %4265 = vst.msk [vmem:[#allocation2 + $0x8] sm:$0xff] %vm4263, %v4122
        %4266 = vst.msk [vmem:[#allocation2 + $0x10] sm:$0xff] %vm4263, %v4124
        %4267 = vst.msk [vmem:[#allocation2 + $0x18] sm:$0xff] %vm4263, %v4126
        %4268 = vst.msk [vmem:[#allocation2 + $0x20] sm:$0xff] %vm4263, %v4128
        %4269 = vst.msk [vmem:[#allocation2 + $0x28] sm:$0xff] %vm4263, %v4130
        %4270 = vst.msk [vmem:[#allocation2 + $0x30] sm:$0xff] %vm4263, %v4132
        %4271 = vst.msk [vmem:[#allocation2 + $0x38] sm:$0xff] %vm4263, %v4134
        %4272 = vst.msk [vmem:[#allocation2 + $0x40] sm:$0xff] %vm4263, %v4136
        %4273 = vst.msk [vmem:[#allocation2 + $0x48] sm:$0xff] %vm4263, %v4138
        %4274 = vst.msk [vmem:[#allocation2 + $0x50] sm:$0xff] %vm4263, %v4140
        %4275 = vst.msk [vmem:[#allocation2 + $0x58] sm:$0xff] %vm4263, %v4142
        %4276 = vst.msk [vmem:[#allocation2 + $0x60] sm:$0xff] %vm4263, %v4144
        %4277 = vst.msk [vmem:[#allocation2 + $0x68] sm:$0xff] %vm4263, %v4146
        %4278 = vst.msk [vmem:[#allocation2 + $0x70] sm:$0xff] %vm4263, %v4148
        %4279 = vst.msk [vmem:[#allocation2 + $0x78] sm:$0xff] %vm4263, %v4150
        %4280 = vst.msk [vmem:[#allocation2 + $0x80] sm:$0xff] %vm4263, %v4152
        %4281 = vst.msk [vmem:[#allocation2 + $0x88] sm:$0xff] %vm4263, %v4154
        %4282 = vst.msk [vmem:[#allocation2 + $0x90] sm:$0xff] %vm4263, %v4156
        %4283 = vst.msk [vmem:[#allocation2 + $0x98] sm:$0xff] %vm4263, %v4158
        %4284 = vst.msk [vmem:[#allocation2 + $0xa0] sm:$0xff] %vm4263, %v4160
        %4285 = vst.msk [vmem:[#allocation2 + $0xa8] sm:$0xff] %vm4263, %v4162
        %4286 = vst.msk [vmem:[#allocation2 + $0xb0] sm:$0xff] %vm4263, %v4164
        %4287 = vst.msk [vmem:[#allocation2 + $0xb8] sm:$0xff] %vm4263, %v4166
        %4288 = vst.msk [vmem:[#allocation2 + $0xc0] sm:$0xff] %vm4263, %v4168
        %4289 = vst.msk [vmem:[#allocation2 + $0xc8] sm:$0xff] %vm4263, %v4170
        %4290 = vst.msk [vmem:[#allocation2 + $0xd0] sm:$0xff] %vm4263, %v4172
        %4291 = vst.msk [vmem:[#allocation2 + $0xd8] sm:$0xff] %vm4263, %v4174
        %4292 = vst.msk [vmem:[#allocation2 + $0xe0] sm:$0xff] %vm4263, %v4176
        %4293 = vst.msk [vmem:[#allocation2 + $0xe8] sm:$0xff] %vm4263, %v4178
        %4294 = vst.msk [vmem:[#allocation2 + $0xf0] sm:$0xff] %vm4263, %v4180
        %4295 = vst.msk [vmem:[#allocation2 + $0xf8] sm:$0xff] %vm4263, %v4182
        %4296 = vst.msk [vmem:[#allocation2 + $0x100] sm:$0xff] %vm4263, %v4184
        %4297 = vst.msk [vmem:[#allocation2 + $0x108] sm:$0xff] %vm4263, %v4186
        %4298 = vst.msk [vmem:[#allocation2 + $0x110] sm:$0xff] %vm4263, %v4188
        %4299 = vst.msk [vmem:[#allocation2 + $0x118] sm:$0xff] %vm4263, %v4190
        %4300 = vst.msk [vmem:[#allocation2 + $0x120] sm:$0xff] %vm4263, %v4192
        %4301 = vst.msk [vmem:[#allocation2 + $0x128] sm:$0xff] %vm4263, %v4194
        %4302 = vst.msk [vmem:[#allocation2 + $0x130] sm:$0xff] %vm4263, %v4196
        %4303 = vst.msk [vmem:[#allocation2 + $0x138] sm:$0xff] %vm4263, %v4198
        %4304 = vst.msk [vmem:[#allocation2 + $0x140] sm:$0xff] %vm4263, %v4200
        %4305 = vst.msk [vmem:[#allocation2 + $0x148] sm:$0xff] %vm4263, %v4202
        %4306 = vst.msk [vmem:[#allocation2 + $0x150] sm:$0xff] %vm4263, %v4204
        %4307 = vst.msk [vmem:[#allocation2 + $0x158] sm:$0xff] %vm4263, %v4206
        %4308 = vst.msk [vmem:[#allocation2 + $0x160] sm:$0xff] %vm4263, %v4208
        %4309 = vst.msk [vmem:[#allocation2 + $0x168] sm:$0xff] %vm4263, %v4210
        %4310 = vst.msk [vmem:[#allocation2 + $0x170] sm:$0xff] %vm4263, %v4212
        %4311 = vst.msk [vmem:[#allocation2 + $0x178] sm:$0xff] %vm4263, %v4214
        %s4312 = sadd.s32 32, %s2574
        %s4313 = scalar_lea.vmem %s155, %s4312
        %v4314 = vld [vmem:[%s4313] sm:$0xff]
        %v4315 = vld [vmem:[%s4313 + $0x10] sm:$0xff]
        %v4316 = vld [vmem:[%s4313 + $0x20] sm:$0xff]
        %v4317 = vld [vmem:[%s4313 + $0x30] sm:$0xff]
        %v4318 = vld [vmem:[%s4313 + $0x40] sm:$0xff]
        %v4319 = vld [vmem:[%s4313 + $0x50] sm:$0xff]
        %v4320 = vld [vmem:[%s4313 + $0x60] sm:$0xff]
        %v4321 = vld [vmem:[%s4313 + $0x70] sm:$0xff]
        %v4322 = vld [vmem:[%s4313 + $0xa0] sm:$0xff]
        %v4323 = vld [vmem:[%s4313 + $0xb0] sm:$0xff]
        %v4324 = vld [vmem:[%s4313 + $0xc0] sm:$0xff]
        %v4325 = vld [vmem:[%s4313 + $0xd0] sm:$0xff]
        %v4326 = vld [vmem:[%s4313 + $0xe0] sm:$0xff]
        %v4327 = vld [vmem:[%s4313 + $0xf0] sm:$0xff]
        %v4328 = vld [vmem:[%s4313 + $0x100] sm:$0xff]
        %v4329 = vld [vmem:[%s4313 + $0x110] sm:$0xff]
        %v4330 = vld [vmem:[%s4313 + $0x140] sm:$0xff]
        %v4331 = vld [vmem:[%s4313 + $0x150] sm:$0xff]
        %v4332 = vld [vmem:[%s4313 + $0x160] sm:$0xff]
        %v4333 = vld [vmem:[%s4313 + $0x170] sm:$0xff]
        %v4334 = vld [vmem:[%s4313 + $0x180] sm:$0xff]
        %v4335 = vld [vmem:[%s4313 + $0x190] sm:$0xff]
        %v4336 = vld [vmem:[%s4313 + $0x1a0] sm:$0xff]
        %v4337 = vld [vmem:[%s4313 + $0x1b0] sm:$0xff]
        %v4338 = vld [vmem:[%s4313 + $0x1e0] sm:$0xff]
        %v4339 = vld [vmem:[%s4313 + $0x1f0] sm:$0xff]
        %v4340 = vld [vmem:[%s4313 + $0x200] sm:$0xff]
        %v4341 = vld [vmem:[%s4313 + $0x210] sm:$0xff]
        %v4342 = vld [vmem:[%s4313 + $0x220] sm:$0xff]
        %v4343 = vld [vmem:[%s4313 + $0x230] sm:$0xff]
        %v4344 = vld [vmem:[%s4313 + $0x240] sm:$0xff]
        %v4345 = vld [vmem:[%s4313 + $0x250] sm:$0xff]
        %v4346 = vld [vmem:[%s4313 + $0x280] sm:$0xff]
        %v4347 = vld [vmem:[%s4313 + $0x290] sm:$0xff]
        %v4348 = vld [vmem:[%s4313 + $0x2a0] sm:$0xff]
        %v4349 = vld [vmem:[%s4313 + $0x2b0] sm:$0xff]
        %v4350 = vld [vmem:[%s4313 + $0x2c0] sm:$0xff]
        %v4351 = vld [vmem:[%s4313 + $0x2d0] sm:$0xff]
        %v4352 = vld [vmem:[%s4313 + $0x2e0] sm:$0xff]
        %v4353 = vld [vmem:[%s4313 + $0x2f0] sm:$0xff]
        %v4354 = vld [vmem:[%s4313 + $0x320] sm:$0xff]
        %v4355 = vld [vmem:[%s4313 + $0x330] sm:$0xff]
        %v4356 = vld [vmem:[%s4313 + $0x340] sm:$0xff]
        %v4357 = vld [vmem:[%s4313 + $0x350] sm:$0xff]
        %v4358 = vld [vmem:[%s4313 + $0x360] sm:$0xff]
        %v4359 = vld [vmem:[%s4313 + $0x370] sm:$0xff]
        %v4360 = vld [vmem:[%s4313 + $0x380] sm:$0xff]
        %v4361 = vld [vmem:[%s4313 + $0x390] sm:$0xff]
        %4410 = vrot.lane.b32.xlu0 %v4314, 60
        %v4411 = vpop.permute.xlu0 %4410
        %4412 = vrot.lane.b32.xlu0 %v4315, 60
        %v4413 = vpop.permute.xlu0 %4412
        %4414 = vrot.lane.b32.xlu0 %v4316, 60
        %v4415 = vpop.permute.xlu0 %4414
        %4416 = vrot.lane.b32.xlu0 %v4317, 60
        %v4417 = vpop.permute.xlu0 %4416
        %4418 = vrot.lane.b32.xlu0 %v4318, 60
        %v4419 = vpop.permute.xlu0 %4418
        %4420 = vrot.lane.b32.xlu0 %v4319, 60
        %v4421 = vpop.permute.xlu0 %4420
        %4422 = vrot.lane.b32.xlu0 %v4320, 60
        %v4423 = vpop.permute.xlu0 %4422
        %4424 = vrot.lane.b32.xlu0 %v4321, 60
        %v4425 = vpop.permute.xlu0 %4424
        %4426 = vrot.lane.b32.xlu0 %v4322, 60
        %v4427 = vpop.permute.xlu0 %4426
        %4428 = vrot.lane.b32.xlu0 %v4323, 60
        %v4429 = vpop.permute.xlu0 %4428
        %4430 = vrot.lane.b32.xlu0 %v4324, 60
        %v4431 = vpop.permute.xlu0 %4430
        %4432 = vrot.lane.b32.xlu0 %v4325, 60
        %v4433 = vpop.permute.xlu0 %4432
        %4434 = vrot.lane.b32.xlu0 %v4326, 60
        %v4435 = vpop.permute.xlu0 %4434
        %4436 = vrot.lane.b32.xlu0 %v4327, 60
        %v4437 = vpop.permute.xlu0 %4436
        %4438 = vrot.lane.b32.xlu0 %v4328, 60
        %v4439 = vpop.permute.xlu0 %4438
        %4440 = vrot.lane.b32.xlu0 %v4329, 60
        %v4441 = vpop.permute.xlu0 %4440
        %4442 = vrot.lane.b32.xlu0 %v4330, 60
        %v4443 = vpop.permute.xlu0 %4442
        %4444 = vrot.lane.b32.xlu0 %v4331, 60
        %v4445 = vpop.permute.xlu0 %4444
        %4446 = vrot.lane.b32.xlu0 %v4332, 60
        %v4447 = vpop.permute.xlu0 %4446
        %4448 = vrot.lane.b32.xlu0 %v4333, 60
        %v4449 = vpop.permute.xlu0 %4448
        %4450 = vrot.lane.b32.xlu0 %v4334, 60
        %v4451 = vpop.permute.xlu0 %4450
        %4452 = vrot.lane.b32.xlu0 %v4335, 60
        %v4453 = vpop.permute.xlu0 %4452
        %4454 = vrot.lane.b32.xlu0 %v4336, 60
        %v4455 = vpop.permute.xlu0 %4454
        %4456 = vrot.lane.b32.xlu0 %v4337, 60
        %v4457 = vpop.permute.xlu0 %4456
        %4458 = vrot.lane.b32.xlu0 %v4338, 60
        %v4459 = vpop.permute.xlu0 %4458
        %4460 = vrot.lane.b32.xlu0 %v4339, 60
        %v4461 = vpop.permute.xlu0 %4460
        %4462 = vrot.lane.b32.xlu0 %v4340, 60
        %v4463 = vpop.permute.xlu0 %4462
        %4464 = vrot.lane.b32.xlu0 %v4341, 60
        %v4465 = vpop.permute.xlu0 %4464
        %4466 = vrot.lane.b32.xlu0 %v4342, 60
        %v4467 = vpop.permute.xlu0 %4466
        %4468 = vrot.lane.b32.xlu0 %v4343, 60
        %v4469 = vpop.permute.xlu0 %4468
        %4470 = vrot.lane.b32.xlu0 %v4344, 60
        %v4471 = vpop.permute.xlu0 %4470
        %4472 = vrot.lane.b32.xlu0 %v4345, 60
        %v4473 = vpop.permute.xlu0 %4472
        %4474 = vrot.lane.b32.xlu0 %v4346, 60
        %v4475 = vpop.permute.xlu0 %4474
        %4476 = vrot.lane.b32.xlu0 %v4347, 60
        %v4477 = vpop.permute.xlu0 %4476
        %4478 = vrot.lane.b32.xlu0 %v4348, 60
        %v4479 = vpop.permute.xlu0 %4478
        %4480 = vrot.lane.b32.xlu0 %v4349, 60
        %v4481 = vpop.permute.xlu0 %4480
        %4482 = vrot.lane.b32.xlu0 %v4350, 60
        %v4483 = vpop.permute.xlu0 %4482
        %4484 = vrot.lane.b32.xlu0 %v4351, 60
        %v4485 = vpop.permute.xlu0 %4484
        %4486 = vrot.lane.b32.xlu0 %v4352, 60
        %v4487 = vpop.permute.xlu0 %4486
        %4488 = vrot.lane.b32.xlu0 %v4353, 60
        %v4489 = vpop.permute.xlu0 %4488
        %4490 = vrot.lane.b32.xlu0 %v4354, 60
        %v4491 = vpop.permute.xlu0 %4490
        %4492 = vrot.lane.b32.xlu0 %v4355, 60
        %v4493 = vpop.permute.xlu0 %4492
        %4494 = vrot.lane.b32.xlu0 %v4356, 60
        %v4495 = vpop.permute.xlu0 %4494
        %4496 = vrot.lane.b32.xlu0 %v4357, 60
        %v4497 = vpop.permute.xlu0 %4496
        %4498 = vrot.lane.b32.xlu0 %v4358, 60
        %v4499 = vpop.permute.xlu0 %4498
        %4500 = vrot.lane.b32.xlu0 %v4359, 60
        %v4501 = vpop.permute.xlu0 %4500
        %4502 = vrot.lane.b32.xlu0 %v4360, 60
        %v4503 = vpop.permute.xlu0 %4502
        %4504 = vrot.lane.b32.xlu0 %v4361, 60
        %v4505 = vpop.permute.xlu0 %4504
        %vm4554 = vcmask 523744
        %4555 = vst.msk [vmem:[#allocation2] sm:$0xff] %vm4554, %v4411
        %4556 = vst.msk [vmem:[#allocation2 + $0x8] sm:$0xff] %vm4554, %v4413
        %4557 = vst.msk [vmem:[#allocation2 + $0x10] sm:$0xff] %vm4554, %v4415
        %4558 = vst.msk [vmem:[#allocation2 + $0x18] sm:$0xff] %vm4554, %v4417
        %4559 = vst.msk [vmem:[#allocation2 + $0x20] sm:$0xff] %vm4554, %v4419
        %4560 = vst.msk [vmem:[#allocation2 + $0x28] sm:$0xff] %vm4554, %v4421
        %4561 = vst.msk [vmem:[#allocation2 + $0x30] sm:$0xff] %vm4554, %v4423
        %4562 = vst.msk [vmem:[#allocation2 + $0x38] sm:$0xff] %vm4554, %v4425
        %4563 = vst.msk [vmem:[#allocation2 + $0x40] sm:$0xff] %vm4554, %v4427
        %4564 = vst.msk [vmem:[#allocation2 + $0x48] sm:$0xff] %vm4554, %v4429
        %4565 = vst.msk [vmem:[#allocation2 + $0x50] sm:$0xff] %vm4554, %v4431
        %4566 = vst.msk [vmem:[#allocation2 + $0x58] sm:$0xff] %vm4554, %v4433
        %4567 = vst.msk [vmem:[#allocation2 + $0x60] sm:$0xff] %vm4554, %v4435
        %4568 = vst.msk [vmem:[#allocation2 + $0x68] sm:$0xff] %vm4554, %v4437
        %4569 = vst.msk [vmem:[#allocation2 + $0x70] sm:$0xff] %vm4554, %v4439
        %4570 = vst.msk [vmem:[#allocation2 + $0x78] sm:$0xff] %vm4554, %v4441
        %4571 = vst.msk [vmem:[#allocation2 + $0x80] sm:$0xff] %vm4554, %v4443
        %4572 = vst.msk [vmem:[#allocation2 + $0x88] sm:$0xff] %vm4554, %v4445
        %4573 = vst.msk [vmem:[#allocation2 + $0x90] sm:$0xff] %vm4554, %v4447
        %4574 = vst.msk [vmem:[#allocation2 + $0x98] sm:$0xff] %vm4554, %v4449
        %4575 = vst.msk [vmem:[#allocation2 + $0xa0] sm:$0xff] %vm4554, %v4451
        %4576 = vst.msk [vmem:[#allocation2 + $0xa8] sm:$0xff] %vm4554, %v4453
        %4577 = vst.msk [vmem:[#allocation2 + $0xb0] sm:$0xff] %vm4554, %v4455
        %4578 = vst.msk [vmem:[#allocation2 + $0xb8] sm:$0xff] %vm4554, %v4457
        %4579 = vst.msk [vmem:[#allocation2 + $0xc0] sm:$0xff] %vm4554, %v4459
        %4580 = vst.msk [vmem:[#allocation2 + $0xc8] sm:$0xff] %vm4554, %v4461
        %4581 = vst.msk [vmem:[#allocation2 + $0xd0] sm:$0xff] %vm4554, %v4463
        %4582 = vst.msk [vmem:[#allocation2 + $0xd8] sm:$0xff] %vm4554, %v4465
        %4583 = vst.msk [vmem:[#allocation2 + $0xe0] sm:$0xff] %vm4554, %v4467
        %4584 = vst.msk [vmem:[#allocation2 + $0xe8] sm:$0xff] %vm4554, %v4469
        %4585 = vst.msk [vmem:[#allocation2 + $0xf0] sm:$0xff] %vm4554, %v4471
        %4586 = vst.msk [vmem:[#allocation2 + $0xf8] sm:$0xff] %vm4554, %v4473
        %4587 = vst.msk [vmem:[#allocation2 + $0x100] sm:$0xff] %vm4554, %v4475
        %4588 = vst.msk [vmem:[#allocation2 + $0x108] sm:$0xff] %vm4554, %v4477
        %4589 = vst.msk [vmem:[#allocation2 + $0x110] sm:$0xff] %vm4554, %v4479
        %4590 = vst.msk [vmem:[#allocation2 + $0x118] sm:$0xff] %vm4554, %v4481
        %4591 = vst.msk [vmem:[#allocation2 + $0x120] sm:$0xff] %vm4554, %v4483
        %4592 = vst.msk [vmem:[#allocation2 + $0x128] sm:$0xff] %vm4554, %v4485
        %4593 = vst.msk [vmem:[#allocation2 + $0x130] sm:$0xff] %vm4554, %v4487
        %4594 = vst.msk [vmem:[#allocation2 + $0x138] sm:$0xff] %vm4554, %v4489
        %4595 = vst.msk [vmem:[#allocation2 + $0x140] sm:$0xff] %vm4554, %v4491
        %4596 = vst.msk [vmem:[#allocation2 + $0x148] sm:$0xff] %vm4554, %v4493
        %4597 = vst.msk [vmem:[#allocation2 + $0x150] sm:$0xff] %vm4554, %v4495
        %4598 = vst.msk [vmem:[#allocation2 + $0x158] sm:$0xff] %vm4554, %v4497
        %4599 = vst.msk [vmem:[#allocation2 + $0x160] sm:$0xff] %vm4554, %v4499
        %4600 = vst.msk [vmem:[#allocation2 + $0x168] sm:$0xff] %vm4554, %v4501
        %4601 = vst.msk [vmem:[#allocation2 + $0x170] sm:$0xff] %vm4554, %v4503
        %4602 = vst.msk [vmem:[#allocation2 + $0x178] sm:$0xff] %vm4554, %v4505
        %v4603 = vld [vmem:[%s4313 + $0x1] sm:$0xff]
        %v4604 = vld [vmem:[%s4313 + $0x11] sm:$0xff]
        %v4605 = vld [vmem:[%s4313 + $0x21] sm:$0xff]
        %v4606 = vld [vmem:[%s4313 + $0x31] sm:$0xff]
        %v4607 = vld [vmem:[%s4313 + $0x41] sm:$0xff]
        %v4608 = vld [vmem:[%s4313 + $0x51] sm:$0xff]
        %v4609 = vld [vmem:[%s4313 + $0x61] sm:$0xff]
        %v4610 = vld [vmem:[%s4313 + $0x71] sm:$0xff]
        %v4611 = vld [vmem:[%s4313 + $0xa1] sm:$0xff]
        %v4612 = vld [vmem:[%s4313 + $0xb1] sm:$0xff]
        %v4613 = vld [vmem:[%s4313 + $0xc1] sm:$0xff]
        %v4614 = vld [vmem:[%s4313 + $0xd1] sm:$0xff]
        %v4615 = vld [vmem:[%s4313 + $0xe1] sm:$0xff]
        %v4616 = vld [vmem:[%s4313 + $0xf1] sm:$0xff]
        %v4617 = vld [vmem:[%s4313 + $0x101] sm:$0xff]
        %v4618 = vld [vmem:[%s4313 + $0x111] sm:$0xff]
        %v4619 = vld [vmem:[%s4313 + $0x141] sm:$0xff]
        %v4620 = vld [vmem:[%s4313 + $0x151] sm:$0xff]
        %v4621 = vld [vmem:[%s4313 + $0x161] sm:$0xff]
        %v4622 = vld [vmem:[%s4313 + $0x171] sm:$0xff]
        %v4623 = vld [vmem:[%s4313 + $0x181] sm:$0xff]
        %v4624 = vld [vmem:[%s4313 + $0x191] sm:$0xff]
        %v4625 = vld [vmem:[%s4313 + $0x1a1] sm:$0xff]
        %v4626 = vld [vmem:[%s4313 + $0x1b1] sm:$0xff]
        %v4627 = vld [vmem:[%s4313 + $0x1e1] sm:$0xff]
        %v4628 = vld [vmem:[%s4313 + $0x1f1] sm:$0xff]
        %v4629 = vld [vmem:[%s4313 + $0x201] sm:$0xff]
        %v4630 = vld [vmem:[%s4313 + $0x211] sm:$0xff]
        %v4631 = vld [vmem:[%s4313 + $0x221] sm:$0xff]
        %v4632 = vld [vmem:[%s4313 + $0x231] sm:$0xff]
        %v4633 = vld [vmem:[%s4313 + $0x241] sm:$0xff]
        %v4634 = vld [vmem:[%s4313 + $0x251] sm:$0xff]
        %v4635 = vld [vmem:[%s4313 + $0x281] sm:$0xff]
        %v4636 = vld [vmem:[%s4313 + $0x291] sm:$0xff]
        %v4637 = vld [vmem:[%s4313 + $0x2a1] sm:$0xff]
        %v4638 = vld [vmem:[%s4313 + $0x2b1] sm:$0xff]
        %v4639 = vld [vmem:[%s4313 + $0x2c1] sm:$0xff]
        %v4640 = vld [vmem:[%s4313 + $0x2d1] sm:$0xff]
        %v4641 = vld [vmem:[%s4313 + $0x2e1] sm:$0xff]
        %v4642 = vld [vmem:[%s4313 + $0x2f1] sm:$0xff]
        %v4643 = vld [vmem:[%s4313 + $0x321] sm:$0xff]
        %v4644 = vld [vmem:[%s4313 + $0x331] sm:$0xff]
        %v4645 = vld [vmem:[%s4313 + $0x341] sm:$0xff]
        %v4646 = vld [vmem:[%s4313 + $0x351] sm:$0xff]
        %v4647 = vld [vmem:[%s4313 + $0x361] sm:$0xff]
        %v4648 = vld [vmem:[%s4313 + $0x371] sm:$0xff]
        %v4649 = vld [vmem:[%s4313 + $0x381] sm:$0xff]
        %v4650 = vld [vmem:[%s4313 + $0x391] sm:$0xff]
        %4699 = vrot.lane.b32.xlu0 %v4603, 64
        %v4700 = vpop.permute.xlu0 %4699
        %4701 = vrot.lane.b32.xlu0 %v4604, 64
        %v4702 = vpop.permute.xlu0 %4701
        %4703 = vrot.lane.b32.xlu0 %v4605, 64
        %v4704 = vpop.permute.xlu0 %4703
        %4705 = vrot.lane.b32.xlu0 %v4606, 64
        %v4706 = vpop.permute.xlu0 %4705
        %4707 = vrot.lane.b32.xlu0 %v4607, 64
        %v4708 = vpop.permute.xlu0 %4707
        %4709 = vrot.lane.b32.xlu0 %v4608, 64
        %v4710 = vpop.permute.xlu0 %4709
        %4711 = vrot.lane.b32.xlu0 %v4609, 64
        %v4712 = vpop.permute.xlu0 %4711
        %4713 = vrot.lane.b32.xlu0 %v4610, 64
        %v4714 = vpop.permute.xlu0 %4713
        %4715 = vrot.lane.b32.xlu0 %v4611, 64
        %v4716 = vpop.permute.xlu0 %4715
        %4717 = vrot.lane.b32.xlu0 %v4612, 64
        %v4718 = vpop.permute.xlu0 %4717
        %4719 = vrot.lane.b32.xlu0 %v4613, 64
        %v4720 = vpop.permute.xlu0 %4719
        %4721 = vrot.lane.b32.xlu0 %v4614, 64
        %v4722 = vpop.permute.xlu0 %4721
        %4723 = vrot.lane.b32.xlu0 %v4615, 64
        %v4724 = vpop.permute.xlu0 %4723
        %4725 = vrot.lane.b32.xlu0 %v4616, 64
        %v4726 = vpop.permute.xlu0 %4725
        %4727 = vrot.lane.b32.xlu0 %v4617, 64
        %v4728 = vpop.permute.xlu0 %4727
        %4729 = vrot.lane.b32.xlu0 %v4618, 64
        %v4730 = vpop.permute.xlu0 %4729
        %4731 = vrot.lane.b32.xlu0 %v4619, 64
        %v4732 = vpop.permute.xlu0 %4731
        %4733 = vrot.lane.b32.xlu0 %v4620, 64
        %v4734 = vpop.permute.xlu0 %4733
        %4735 = vrot.lane.b32.xlu0 %v4621, 64
        %v4736 = vpop.permute.xlu0 %4735
        %4737 = vrot.lane.b32.xlu0 %v4622, 64
        %v4738 = vpop.permute.xlu0 %4737
        %4739 = vrot.lane.b32.xlu0 %v4623, 64
        %v4740 = vpop.permute.xlu0 %4739
        %4741 = vrot.lane.b32.xlu0 %v4624, 64
        %v4742 = vpop.permute.xlu0 %4741
        %4743 = vrot.lane.b32.xlu0 %v4625, 64
        %v4744 = vpop.permute.xlu0 %4743
        %4745 = vrot.lane.b32.xlu0 %v4626, 64
        %v4746 = vpop.permute.xlu0 %4745
        %4747 = vrot.lane.b32.xlu0 %v4627, 64
        %v4748 = vpop.permute.xlu0 %4747
        %4749 = vrot.lane.b32.xlu0 %v4628, 64
        %v4750 = vpop.permute.xlu0 %4749
        %4751 = vrot.lane.b32.xlu0 %v4629, 64
        %v4752 = vpop.permute.xlu0 %4751
        %4753 = vrot.lane.b32.xlu0 %v4630, 64
        %v4754 = vpop.permute.xlu0 %4753
        %4755 = vrot.lane.b32.xlu0 %v4631, 64
        %v4756 = vpop.permute.xlu0 %4755
        %4757 = vrot.lane.b32.xlu0 %v4632, 64
        %v4758 = vpop.permute.xlu0 %4757
        %4759 = vrot.lane.b32.xlu0 %v4633, 64
        %v4760 = vpop.permute.xlu0 %4759
        %4761 = vrot.lane.b32.xlu0 %v4634, 64
        %v4762 = vpop.permute.xlu0 %4761
        %4763 = vrot.lane.b32.xlu0 %v4635, 64
        %v4764 = vpop.permute.xlu0 %4763
        %4765 = vrot.lane.b32.xlu0 %v4636, 64
        %v4766 = vpop.permute.xlu0 %4765
        %4767 = vrot.lane.b32.xlu0 %v4637, 64
        %v4768 = vpop.permute.xlu0 %4767
        %4769 = vrot.lane.b32.xlu0 %v4638, 64
        %v4770 = vpop.permute.xlu0 %4769
        %4771 = vrot.lane.b32.xlu0 %v4639, 64
        %v4772 = vpop.permute.xlu0 %4771
        %4773 = vrot.lane.b32.xlu0 %v4640, 64
        %v4774 = vpop.permute.xlu0 %4773
        %4775 = vrot.lane.b32.xlu0 %v4641, 64
        %v4776 = vpop.permute.xlu0 %4775
        %4777 = vrot.lane.b32.xlu0 %v4642, 64
        %v4778 = vpop.permute.xlu0 %4777
        %4779 = vrot.lane.b32.xlu0 %v4643, 64
        %v4780 = vpop.permute.xlu0 %4779
        %4781 = vrot.lane.b32.xlu0 %v4644, 64
        %v4782 = vpop.permute.xlu0 %4781
        %4783 = vrot.lane.b32.xlu0 %v4645, 64
        %v4784 = vpop.permute.xlu0 %4783
        %4785 = vrot.lane.b32.xlu0 %v4646, 64
        %v4786 = vpop.permute.xlu0 %4785
        %4787 = vrot.lane.b32.xlu0 %v4647, 64
        %v4788 = vpop.permute.xlu0 %4787
        %4789 = vrot.lane.b32.xlu0 %v4648, 64
        %v4790 = vpop.permute.xlu0 %4789
        %4791 = vrot.lane.b32.xlu0 %v4649, 64
        %v4792 = vpop.permute.xlu0 %4791
        %4793 = vrot.lane.b32.xlu0 %v4650, 64
        %v4794 = vpop.permute.xlu0 %4793
        %vm4843 = vcmask 556544
        %4844 = vst.msk [vmem:[#allocation2] sm:$0xff] %vm4843, %v4700
        %4845 = vst.msk [vmem:[#allocation2 + $0x8] sm:$0xff] %vm4843, %v4702
        %4846 = vst.msk [vmem:[#allocation2 + $0x10] sm:$0xff] %vm4843, %v4704
        %4847 = vst.msk [vmem:[#allocation2 + $0x18] sm:$0xff] %vm4843, %v4706
        %4848 = vst.msk [vmem:[#allocation2 + $0x20] sm:$0xff] %vm4843, %v4708
        %4849 = vst.msk [vmem:[#allocation2 + $0x28] sm:$0xff] %vm4843, %v4710
        %4850 = vst.msk [vmem:[#allocation2 + $0x30] sm:$0xff] %vm4843, %v4712
        %4851 = vst.msk [vmem:[#allocation2 + $0x38] sm:$0xff] %vm4843, %v4714
        %4852 = vst.msk [vmem:[#allocation2 + $0x40] sm:$0xff] %vm4843, %v4716
        %4853 = vst.msk [vmem:[#allocation2 + $0x48] sm:$0xff] %vm4843, %v4718
        %4854 = vst.msk [vmem:[#allocation2 + $0x50] sm:$0xff] %vm4843, %v4720
        %4855 = vst.msk [vmem:[#allocation2 + $0x58] sm:$0xff] %vm4843, %v4722
        %4856 = vst.msk [vmem:[#allocation2 + $0x60] sm:$0xff] %vm4843, %v4724
        %4857 = vst.msk [vmem:[#allocation2 + $0x68] sm:$0xff] %vm4843, %v4726
        %4858 = vst.msk [vmem:[#allocation2 + $0x70] sm:$0xff] %vm4843, %v4728
        %4859 = vst.msk [vmem:[#allocation2 + $0x78] sm:$0xff] %vm4843, %v4730
        %4860 = vst.msk [vmem:[#allocation2 + $0x80] sm:$0xff] %vm4843, %v4732
        %4861 = vst.msk [vmem:[#allocation2 + $0x88] sm:$0xff] %vm4843, %v4734
        %4862 = vst.msk [vmem:[#allocation2 + $0x90] sm:$0xff] %vm4843, %v4736
        %4863 = vst.msk [vmem:[#allocation2 + $0x98] sm:$0xff] %vm4843, %v4738
        %4864 = vst.msk [vmem:[#allocation2 + $0xa0] sm:$0xff] %vm4843, %v4740
        %4865 = vst.msk [vmem:[#allocation2 + $0xa8] sm:$0xff] %vm4843, %v4742
        %4866 = vst.msk [vmem:[#allocation2 + $0xb0] sm:$0xff] %vm4843, %v4744
        %4867 = vst.msk [vmem:[#allocation2 + $0xb8] sm:$0xff] %vm4843, %v4746
        %4868 = vst.msk [vmem:[#allocation2 + $0xc0] sm:$0xff] %vm4843, %v4748
        %4869 = vst.msk [vmem:[#allocation2 + $0xc8] sm:$0xff] %vm4843, %v4750
        %4870 = vst.msk [vmem:[#allocation2 + $0xd0] sm:$0xff] %vm4843, %v4752
        %4871 = vst.msk [vmem:[#allocation2 + $0xd8] sm:$0xff] %vm4843, %v4754
        %4872 = vst.msk [vmem:[#allocation2 + $0xe0] sm:$0xff] %vm4843, %v4756
        %4873 = vst.msk [vmem:[#allocation2 + $0xe8] sm:$0xff] %vm4843, %v4758
        %4874 = vst.msk [vmem:[#allocation2 + $0xf0] sm:$0xff] %vm4843, %v4760
        %4875 = vst.msk [vmem:[#allocation2 + $0xf8] sm:$0xff] %vm4843, %v4762
        %4876 = vst.msk [vmem:[#allocation2 + $0x100] sm:$0xff] %vm4843, %v4764
        %4877 = vst.msk [vmem:[#allocation2 + $0x108] sm:$0xff] %vm4843, %v4766
        %4878 = vst.msk [vmem:[#allocation2 + $0x110] sm:$0xff] %vm4843, %v4768
        %4879 = vst.msk [vmem:[#allocation2 + $0x118] sm:$0xff] %vm4843, %v4770
        %4880 = vst.msk [vmem:[#allocation2 + $0x120] sm:$0xff] %vm4843, %v4772
        %4881 = vst.msk [vmem:[#allocation2 + $0x128] sm:$0xff] %vm4843, %v4774
        %4882 = vst.msk [vmem:[#allocation2 + $0x130] sm:$0xff] %vm4843, %v4776
        %4883 = vst.msk [vmem:[#allocation2 + $0x138] sm:$0xff] %vm4843, %v4778
        %4884 = vst.msk [vmem:[#allocation2 + $0x140] sm:$0xff] %vm4843, %v4780
        %4885 = vst.msk [vmem:[#allocation2 + $0x148] sm:$0xff] %vm4843, %v4782
        %4886 = vst.msk [vmem:[#allocation2 + $0x150] sm:$0xff] %vm4843, %v4784
        %4887 = vst.msk [vmem:[#allocation2 + $0x158] sm:$0xff] %vm4843, %v4786
        %4888 = vst.msk [vmem:[#allocation2 + $0x160] sm:$0xff] %vm4843, %v4788
        %4889 = vst.msk [vmem:[#allocation2 + $0x168] sm:$0xff] %vm4843, %v4790
        %4890 = vst.msk [vmem:[#allocation2 + $0x170] sm:$0xff] %vm4843, %v4792
        %4891 = vst.msk [vmem:[#allocation2 + $0x178] sm:$0xff] %vm4843, %v4794
        %v4892 = vld [vmem:[%s4313 + $0x2] sm:$0xff]
        %v4893 = vld [vmem:[%s4313 + $0x12] sm:$0xff]
        %v4894 = vld [vmem:[%s4313 + $0x22] sm:$0xff]
        %v4895 = vld [vmem:[%s4313 + $0x32] sm:$0xff]
        %v4896 = vld [vmem:[%s4313 + $0x42] sm:$0xff]
        %v4897 = vld [vmem:[%s4313 + $0x52] sm:$0xff]
        %v4898 = vld [vmem:[%s4313 + $0x62] sm:$0xff]
        %v4899 = vld [vmem:[%s4313 + $0x72] sm:$0xff]
        %v4900 = vld [vmem:[%s4313 + $0xa2] sm:$0xff]
        %v4901 = vld [vmem:[%s4313 + $0xb2] sm:$0xff]
        %v4902 = vld [vmem:[%s4313 + $0xc2] sm:$0xff]
        %v4903 = vld [vmem:[%s4313 + $0xd2] sm:$0xff]
        %v4904 = vld [vmem:[%s4313 + $0xe2] sm:$0xff]
        %v4905 = vld [vmem:[%s4313 + $0xf2] sm:$0xff]
        %v4906 = vld [vmem:[%s4313 + $0x102] sm:$0xff]
        %v4907 = vld [vmem:[%s4313 + $0x112] sm:$0xff]
        %v4908 = vld [vmem:[%s4313 + $0x142] sm:$0xff]
        %v4909 = vld [vmem:[%s4313 + $0x152] sm:$0xff]
        %v4910 = vld [vmem:[%s4313 + $0x162] sm:$0xff]
        %v4911 = vld [vmem:[%s4313 + $0x172] sm:$0xff]
        %v4912 = vld [vmem:[%s4313 + $0x182] sm:$0xff]
        %v4913 = vld [vmem:[%s4313 + $0x192] sm:$0xff]
        %v4914 = vld [vmem:[%s4313 + $0x1a2] sm:$0xff]
        %v4915 = vld [vmem:[%s4313 + $0x1b2] sm:$0xff]
        %v4916 = vld [vmem:[%s4313 + $0x1e2] sm:$0xff]
        %v4917 = vld [vmem:[%s4313 + $0x1f2] sm:$0xff]
        %v4918 = vld [vmem:[%s4313 + $0x202] sm:$0xff]
        %v4919 = vld [vmem:[%s4313 + $0x212] sm:$0xff]
        %v4920 = vld [vmem:[%s4313 + $0x222] sm:$0xff]
        %v4921 = vld [vmem:[%s4313 + $0x232] sm:$0xff]
        %v4922 = vld [vmem:[%s4313 + $0x242] sm:$0xff]
        %v4923 = vld [vmem:[%s4313 + $0x252] sm:$0xff]
        %v4924 = vld [vmem:[%s4313 + $0x282] sm:$0xff]
        %v4925 = vld [vmem:[%s4313 + $0x292] sm:$0xff]
        %v4926 = vld [vmem:[%s4313 + $0x2a2] sm:$0xff]
        %v4927 = vld [vmem:[%s4313 + $0x2b2] sm:$0xff]
        %v4928 = vld [vmem:[%s4313 + $0x2c2] sm:$0xff]
        %v4929 = vld [vmem:[%s4313 + $0x2d2] sm:$0xff]
        %v4930 = vld [vmem:[%s4313 + $0x2e2] sm:$0xff]
        %v4931 = vld [vmem:[%s4313 + $0x2f2] sm:$0xff]
        %v4932 = vld [vmem:[%s4313 + $0x322] sm:$0xff]
        %v4933 = vld [vmem:[%s4313 + $0x332] sm:$0xff]
        %v4934 = vld [vmem:[%s4313 + $0x342] sm:$0xff]
        %v4935 = vld [vmem:[%s4313 + $0x352] sm:$0xff]
        %v4936 = vld [vmem:[%s4313 + $0x362] sm:$0xff]
        %v4937 = vld [vmem:[%s4313 + $0x372] sm:$0xff]
        %v4938 = vld [vmem:[%s4313 + $0x382] sm:$0xff]
        %v4939 = vld [vmem:[%s4313 + $0x392] sm:$0xff]
        %4988 = vrot.lane.b32.xlu0 %v4892, 68
        %v4989 = vpop.permute.xlu0 %4988
        %4990 = vrot.lane.b32.xlu0 %v4893, 68
        %v4991 = vpop.permute.xlu0 %4990
        %4992 = vrot.lane.b32.xlu0 %v4894, 68
        %v4993 = vpop.permute.xlu0 %4992
        %4994 = vrot.lane.b32.xlu0 %v4895, 68
        %v4995 = vpop.permute.xlu0 %4994
        %4996 = vrot.lane.b32.xlu0 %v4896, 68
        %v4997 = vpop.permute.xlu0 %4996
        %4998 = vrot.lane.b32.xlu0 %v4897, 68
        %v4999 = vpop.permute.xlu0 %4998
        %5000 = vrot.lane.b32.xlu0 %v4898, 68
        %v5001 = vpop.permute.xlu0 %5000
        %5002 = vrot.lane.b32.xlu0 %v4899, 68
        %v5003 = vpop.permute.xlu0 %5002
        %5004 = vrot.lane.b32.xlu0 %v4900, 68
        %v5005 = vpop.permute.xlu0 %5004
        %5006 = vrot.lane.b32.xlu0 %v4901, 68
        %v5007 = vpop.permute.xlu0 %5006
        %5008 = vrot.lane.b32.xlu0 %v4902, 68
        %v5009 = vpop.permute.xlu0 %5008
        %5010 = vrot.lane.b32.xlu0 %v4903, 68
        %v5011 = vpop.permute.xlu0 %5010
        %5012 = vrot.lane.b32.xlu0 %v4904, 68
        %v5013 = vpop.permute.xlu0 %5012
        %5014 = vrot.lane.b32.xlu0 %v4905, 68
        %v5015 = vpop.permute.xlu0 %5014
        %5016 = vrot.lane.b32.xlu0 %v4906, 68
        %v5017 = vpop.permute.xlu0 %5016
        %5018 = vrot.lane.b32.xlu0 %v4907, 68
        %v5019 = vpop.permute.xlu0 %5018
        %5020 = vrot.lane.b32.xlu0 %v4908, 68
        %v5021 = vpop.permute.xlu0 %5020
        %5022 = vrot.lane.b32.xlu0 %v4909, 68
        %v5023 = vpop.permute.xlu0 %5022
        %5024 = vrot.lane.b32.xlu0 %v4910, 68
        %v5025 = vpop.permute.xlu0 %5024
        %5026 = vrot.lane.b32.xlu0 %v4911, 68
        %v5027 = vpop.permute.xlu0 %5026
        %5028 = vrot.lane.b32.xlu0 %v4912, 68
        %v5029 = vpop.permute.xlu0 %5028
        %5030 = vrot.lane.b32.xlu0 %v4913, 68
        %v5031 = vpop.permute.xlu0 %5030
        %5032 = vrot.lane.b32.xlu0 %v4914, 68
        %v5033 = vpop.permute.xlu0 %5032
        %5034 = vrot.lane.b32.xlu0 %v4915, 68
        %v5035 = vpop.permute.xlu0 %5034
        %5036 = vrot.lane.b32.xlu0 %v4916, 68
        %v5037 = vpop.permute.xlu0 %5036
        %5038 = vrot.lane.b32.xlu0 %v4917, 68
        %v5039 = vpop.permute.xlu0 %5038
        %5040 = vrot.lane.b32.xlu0 %v4918, 68
        %v5041 = vpop.permute.xlu0 %5040
        %5042 = vrot.lane.b32.xlu0 %v4919, 68
        %v5043 = vpop.permute.xlu0 %5042
        %5044 = vrot.lane.b32.xlu0 %v4920, 68
        %v5045 = vpop.permute.xlu0 %5044
        %5046 = vrot.lane.b32.xlu0 %v4921, 68
        %v5047 = vpop.permute.xlu0 %5046
        %5048 = vrot.lane.b32.xlu0 %v4922, 68
        %v5049 = vpop.permute.xlu0 %5048
        %5050 = vrot.lane.b32.xlu0 %v4923, 68
        %v5051 = vpop.permute.xlu0 %5050
        %5052 = vrot.lane.b32.xlu0 %v4924, 68
        %v5053 = vpop.permute.xlu0 %5052
        %5054 = vrot.lane.b32.xlu0 %v4925, 68
        %v5055 = vpop.permute.xlu0 %5054
        %5056 = vrot.lane.b32.xlu0 %v4926, 68
        %v5057 = vpop.permute.xlu0 %5056
        %5058 = vrot.lane.b32.xlu0 %v4927, 68
        %v5059 = vpop.permute.xlu0 %5058
        %5060 = vrot.lane.b32.xlu0 %v4928, 68
        %v5061 = vpop.permute.xlu0 %5060
        %5062 = vrot.lane.b32.xlu0 %v4929, 68
        %v5063 = vpop.permute.xlu0 %5062
        %5064 = vrot.lane.b32.xlu0 %v4930, 68
        %v5065 = vpop.permute.xlu0 %5064
        %5066 = vrot.lane.b32.xlu0 %v4931, 68
        %v5067 = vpop.permute.xlu0 %5066
        %5068 = vrot.lane.b32.xlu0 %v4932, 68
        %v5069 = vpop.permute.xlu0 %5068
        %5070 = vrot.lane.b32.xlu0 %v4933, 68
        %v5071 = vpop.permute.xlu0 %5070
        %5072 = vrot.lane.b32.xlu0 %v4934, 68
        %v5073 = vpop.permute.xlu0 %5072
        %5074 = vrot.lane.b32.xlu0 %v4935, 68
        %v5075 = vpop.permute.xlu0 %5074
        %5076 = vrot.lane.b32.xlu0 %v4936, 68
        %v5077 = vpop.permute.xlu0 %5076
        %5078 = vrot.lane.b32.xlu0 %v4937, 68
        %v5079 = vpop.permute.xlu0 %5078
        %5080 = vrot.lane.b32.xlu0 %v4938, 68
        %v5081 = vpop.permute.xlu0 %5080
        %5082 = vrot.lane.b32.xlu0 %v4939, 68
        %v5083 = vpop.permute.xlu0 %5082
        %vm5132 = vcmask 589344
        %5133 = vst.msk [vmem:[#allocation2] sm:$0xff] %vm5132, %v4989
        %5134 = vst.msk [vmem:[#allocation2 + $0x8] sm:$0xff] %vm5132, %v4991
        %5135 = vst.msk [vmem:[#allocation2 + $0x10] sm:$0xff] %vm5132, %v4993
        %5136 = vst.msk [vmem:[#allocation2 + $0x18] sm:$0xff] %vm5132, %v4995
        %5137 = vst.msk [vmem:[#allocation2 + $0x20] sm:$0xff] %vm5132, %v4997
        %5138 = vst.msk [vmem:[#allocation2 + $0x28] sm:$0xff] %vm5132, %v4999
        %5139 = vst.msk [vmem:[#allocation2 + $0x30] sm:$0xff] %vm5132, %v5001
        %5140 = vst.msk [vmem:[#allocation2 + $0x38] sm:$0xff] %vm5132, %v5003
        %5141 = vst.msk [vmem:[#allocation2 + $0x40] sm:$0xff] %vm5132, %v5005
        %5142 = vst.msk [vmem:[#allocation2 + $0x48] sm:$0xff] %vm5132, %v5007
        %5143 = vst.msk [vmem:[#allocation2 + $0x50] sm:$0xff] %vm5132, %v5009
        %5144 = vst.msk [vmem:[#allocation2 + $0x58] sm:$0xff] %vm5132, %v5011
        %5145 = vst.msk [vmem:[#allocation2 + $0x60] sm:$0xff] %vm5132, %v5013
        %5146 = vst.msk [vmem:[#allocation2 + $0x68] sm:$0xff] %vm5132, %v5015
        %5147 = vst.msk [vmem:[#allocation2 + $0x70] sm:$0xff] %vm5132, %v5017
        %5148 = vst.msk [vmem:[#allocation2 + $0x78] sm:$0xff] %vm5132, %v5019
        %5149 = vst.msk [vmem:[#allocation2 + $0x80] sm:$0xff] %vm5132, %v5021
        %5150 = vst.msk [vmem:[#allocation2 + $0x88] sm:$0xff] %vm5132, %v5023
        %5151 = vst.msk [vmem:[#allocation2 + $0x90] sm:$0xff] %vm5132, %v5025
        %5152 = vst.msk [vmem:[#allocation2 + $0x98] sm:$0xff] %vm5132, %v5027
        %5153 = vst.msk [vmem:[#allocation2 + $0xa0] sm:$0xff] %vm5132, %v5029
        %5154 = vst.msk [vmem:[#allocation2 + $0xa8] sm:$0xff] %vm5132, %v5031
        %5155 = vst.msk [vmem:[#allocation2 + $0xb0] sm:$0xff] %vm5132, %v5033
        %5156 = vst.msk [vmem:[#allocation2 + $0xb8] sm:$0xff] %vm5132, %v5035
        %5157 = vst.msk [vmem:[#allocation2 + $0xc0] sm:$0xff] %vm5132, %v5037
        %5158 = vst.msk [vmem:[#allocation2 + $0xc8] sm:$0xff] %vm5132, %v5039
        %5159 = vst.msk [vmem:[#allocation2 + $0xd0] sm:$0xff] %vm5132, %v5041
        %5160 = vst.msk [vmem:[#allocation2 + $0xd8] sm:$0xff] %vm5132, %v5043
        %5161 = vst.msk [vmem:[#allocation2 + $0xe0] sm:$0xff] %vm5132, %v5045
        %5162 = vst.msk [vmem:[#allocation2 + $0xe8] sm:$0xff] %vm5132, %v5047
        %5163 = vst.msk [vmem:[#allocation2 + $0xf0] sm:$0xff] %vm5132, %v5049
        %5164 = vst.msk [vmem:[#allocation2 + $0xf8] sm:$0xff] %vm5132, %v5051
        %5165 = vst.msk [vmem:[#allocation2 + $0x100] sm:$0xff] %vm5132, %v5053
        %5166 = vst.msk [vmem:[#allocation2 + $0x108] sm:$0xff] %vm5132, %v5055
        %5167 = vst.msk [vmem:[#allocation2 + $0x110] sm:$0xff] %vm5132, %v5057
        %5168 = vst.msk [vmem:[#allocation2 + $0x118] sm:$0xff] %vm5132, %v5059
        %5169 = vst.msk [vmem:[#allocation2 + $0x120] sm:$0xff] %vm5132, %v5061
        %5170 = vst.msk [vmem:[#allocation2 + $0x128] sm:$0xff] %vm5132, %v5063
        %5171 = vst.msk [vmem:[#allocation2 + $0x130] sm:$0xff] %vm5132, %v5065
        %5172 = vst.msk [vmem:[#allocation2 + $0x138] sm:$0xff] %vm5132, %v5067
        %5173 = vst.msk [vmem:[#allocation2 + $0x140] sm:$0xff] %vm5132, %v5069
        %5174 = vst.msk [vmem:[#allocation2 + $0x148] sm:$0xff] %vm5132, %v5071
        %5175 = vst.msk [vmem:[#allocation2 + $0x150] sm:$0xff] %vm5132, %v5073
        %5176 = vst.msk [vmem:[#allocation2 + $0x158] sm:$0xff] %vm5132, %v5075
        %5177 = vst.msk [vmem:[#allocation2 + $0x160] sm:$0xff] %vm5132, %v5077
        %5178 = vst.msk [vmem:[#allocation2 + $0x168] sm:$0xff] %vm5132, %v5079
        %5179 = vst.msk [vmem:[#allocation2 + $0x170] sm:$0xff] %vm5132, %v5081
        %5180 = vst.msk [vmem:[#allocation2 + $0x178] sm:$0xff] %vm5132, %v5083
        %s5181 = sadd.s32 %s157, 2
        %s5182 = smul.u32 %s5181, 160
        %s5183 = scalar_lea.vmem %s155, %s5182
        %v5184 = vld [vmem:[%s5183] sm:$0xff]
        %v5185 = vld [vmem:[%s5183 + $0x10] sm:$0xff]
        %v5186 = vld [vmem:[%s5183 + $0x20] sm:$0xff]
        %v5187 = vld [vmem:[%s5183 + $0x30] sm:$0xff]
        %v5188 = vld [vmem:[%s5183 + $0x40] sm:$0xff]
        %v5189 = vld [vmem:[%s5183 + $0x50] sm:$0xff]
        %v5190 = vld [vmem:[%s5183 + $0x60] sm:$0xff]
        %v5191 = vld [vmem:[%s5183 + $0x70] sm:$0xff]
        %v5192 = vld [vmem:[%s5183 + $0xa0] sm:$0xff]
        %v5193 = vld [vmem:[%s5183 + $0xb0] sm:$0xff]
        %v5194 = vld [vmem:[%s5183 + $0xc0] sm:$0xff]
        %v5195 = vld [vmem:[%s5183 + $0xd0] sm:$0xff]
        %v5196 = vld [vmem:[%s5183 + $0xe0] sm:$0xff]
        %v5197 = vld [vmem:[%s5183 + $0xf0] sm:$0xff]
        %v5198 = vld [vmem:[%s5183 + $0x100] sm:$0xff]
        %v5199 = vld [vmem:[%s5183 + $0x110] sm:$0xff]
        %v5200 = vld [vmem:[%s5183 + $0x140] sm:$0xff]
        %v5201 = vld [vmem:[%s5183 + $0x150] sm:$0xff]
        %v5202 = vld [vmem:[%s5183 + $0x160] sm:$0xff]
        %v5203 = vld [vmem:[%s5183 + $0x170] sm:$0xff]
        %v5204 = vld [vmem:[%s5183 + $0x180] sm:$0xff]
        %v5205 = vld [vmem:[%s5183 + $0x190] sm:$0xff]
        %v5206 = vld [vmem:[%s5183 + $0x1a0] sm:$0xff]
        %v5207 = vld [vmem:[%s5183 + $0x1b0] sm:$0xff]
        %v5208 = vld [vmem:[%s5183 + $0x1e0] sm:$0xff]
        %v5209 = vld [vmem:[%s5183 + $0x1f0] sm:$0xff]
        %v5210 = vld [vmem:[%s5183 + $0x200] sm:$0xff]
        %v5211 = vld [vmem:[%s5183 + $0x210] sm:$0xff]
        %v5212 = vld [vmem:[%s5183 + $0x220] sm:$0xff]
        %v5213 = vld [vmem:[%s5183 + $0x230] sm:$0xff]
        %v5214 = vld [vmem:[%s5183 + $0x240] sm:$0xff]
        %v5215 = vld [vmem:[%s5183 + $0x250] sm:$0xff]
        %v5216 = vld [vmem:[%s5183 + $0x280] sm:$0xff]
        %v5217 = vld [vmem:[%s5183 + $0x290] sm:$0xff]
        %v5218 = vld [vmem:[%s5183 + $0x2a0] sm:$0xff]
        %v5219 = vld [vmem:[%s5183 + $0x2b0] sm:$0xff]
        %v5220 = vld [vmem:[%s5183 + $0x2c0] sm:$0xff]
        %v5221 = vld [vmem:[%s5183 + $0x2d0] sm:$0xff]
        %v5222 = vld [vmem:[%s5183 + $0x2e0] sm:$0xff]
        %v5223 = vld [vmem:[%s5183 + $0x2f0] sm:$0xff]
        %v5224 = vld [vmem:[%s5183 + $0x320] sm:$0xff]
        %v5225 = vld [vmem:[%s5183 + $0x330] sm:$0xff]
        %v5226 = vld [vmem:[%s5183 + $0x340] sm:$0xff]
        %v5227 = vld [vmem:[%s5183 + $0x350] sm:$0xff]
        %v5228 = vld [vmem:[%s5183 + $0x360] sm:$0xff]
        %v5229 = vld [vmem:[%s5183 + $0x370] sm:$0xff]
        %v5230 = vld [vmem:[%s5183 + $0x380] sm:$0xff]
        %v5231 = vld [vmem:[%s5183 + $0x390] sm:$0xff]
        %5280 = vrot.lane.b32.xlu0 %v5184, 72
        %v5281 = vpop.permute.xlu0 %5280
        %5282 = vrot.lane.b32.xlu0 %v5185, 72
        %v5283 = vpop.permute.xlu0 %5282
        %5284 = vrot.lane.b32.xlu0 %v5186, 72
        %v5285 = vpop.permute.xlu0 %5284
        %5286 = vrot.lane.b32.xlu0 %v5187, 72
        %v5287 = vpop.permute.xlu0 %5286
        %5288 = vrot.lane.b32.xlu0 %v5188, 72
        %v5289 = vpop.permute.xlu0 %5288
        %5290 = vrot.lane.b32.xlu0 %v5189, 72
        %v5291 = vpop.permute.xlu0 %5290
        %5292 = vrot.lane.b32.xlu0 %v5190, 72
        %v5293 = vpop.permute.xlu0 %5292
        %5294 = vrot.lane.b32.xlu0 %v5191, 72
        %v5295 = vpop.permute.xlu0 %5294
        %5296 = vrot.lane.b32.xlu0 %v5192, 72
        %v5297 = vpop.permute.xlu0 %5296
        %5298 = vrot.lane.b32.xlu0 %v5193, 72
        %v5299 = vpop.permute.xlu0 %5298
        %5300 = vrot.lane.b32.xlu0 %v5194, 72
        %v5301 = vpop.permute.xlu0 %5300
        %5302 = vrot.lane.b32.xlu0 %v5195, 72
        %v5303 = vpop.permute.xlu0 %5302
        %5304 = vrot.lane.b32.xlu0 %v5196, 72
        %v5305 = vpop.permute.xlu0 %5304
        %5306 = vrot.lane.b32.xlu0 %v5197, 72
        %v5307 = vpop.permute.xlu0 %5306
        %5308 = vrot.lane.b32.xlu0 %v5198, 72
        %v5309 = vpop.permute.xlu0 %5308
        %5310 = vrot.lane.b32.xlu0 %v5199, 72
        %v5311 = vpop.permute.xlu0 %5310
        %5312 = vrot.lane.b32.xlu0 %v5200, 72
        %v5313 = vpop.permute.xlu0 %5312
        %5314 = vrot.lane.b32.xlu0 %v5201, 72
        %v5315 = vpop.permute.xlu0 %5314
        %5316 = vrot.lane.b32.xlu0 %v5202, 72
        %v5317 = vpop.permute.xlu0 %5316
        %5318 = vrot.lane.b32.xlu0 %v5203, 72
        %v5319 = vpop.permute.xlu0 %5318
        %5320 = vrot.lane.b32.xlu0 %v5204, 72
        %v5321 = vpop.permute.xlu0 %5320
        %5322 = vrot.lane.b32.xlu0 %v5205, 72
        %v5323 = vpop.permute.xlu0 %5322
        %5324 = vrot.lane.b32.xlu0 %v5206, 72
        %v5325 = vpop.permute.xlu0 %5324
        %5326 = vrot.lane.b32.xlu0 %v5207, 72
        %v5327 = vpop.permute.xlu0 %5326
        %5328 = vrot.lane.b32.xlu0 %v5208, 72
        %v5329 = vpop.permute.xlu0 %5328
        %5330 = vrot.lane.b32.xlu0 %v5209, 72
        %v5331 = vpop.permute.xlu0 %5330
        %5332 = vrot.lane.b32.xlu0 %v5210, 72
        %v5333 = vpop.permute.xlu0 %5332
        %5334 = vrot.lane.b32.xlu0 %v5211, 72
        %v5335 = vpop.permute.xlu0 %5334
        %5336 = vrot.lane.b32.xlu0 %v5212, 72
        %v5337 = vpop.permute.xlu0 %5336
        %5338 = vrot.lane.b32.xlu0 %v5213, 72
        %v5339 = vpop.permute.xlu0 %5338
        %5340 = vrot.lane.b32.xlu0 %v5214, 72
        %v5341 = vpop.permute.xlu0 %5340
        %5342 = vrot.lane.b32.xlu0 %v5215, 72
        %v5343 = vpop.permute.xlu0 %5342
        %5344 = vrot.lane.b32.xlu0 %v5216, 72
        %v5345 = vpop.permute.xlu0 %5344
        %5346 = vrot.lane.b32.xlu0 %v5217, 72
        %v5347 = vpop.permute.xlu0 %5346
        %5348 = vrot.lane.b32.xlu0 %v5218, 72
        %v5349 = vpop.permute.xlu0 %5348
        %5350 = vrot.lane.b32.xlu0 %v5219, 72
        %v5351 = vpop.permute.xlu0 %5350
        %5352 = vrot.lane.b32.xlu0 %v5220, 72
        %v5353 = vpop.permute.xlu0 %5352
        %5354 = vrot.lane.b32.xlu0 %v5221, 72
        %v5355 = vpop.permute.xlu0 %5354
        %5356 = vrot.lane.b32.xlu0 %v5222, 72
        %v5357 = vpop.permute.xlu0 %5356
        %5358 = vrot.lane.b32.xlu0 %v5223, 72
        %v5359 = vpop.permute.xlu0 %5358
        %5360 = vrot.lane.b32.xlu0 %v5224, 72
        %v5361 = vpop.permute.xlu0 %5360
        %5362 = vrot.lane.b32.xlu0 %v5225, 72
        %v5363 = vpop.permute.xlu0 %5362
        %5364 = vrot.lane.b32.xlu0 %v5226, 72
        %v5365 = vpop.permute.xlu0 %5364
        %5366 = vrot.lane.b32.xlu0 %v5227, 72
        %v5367 = vpop.permute.xlu0 %5366
        %5368 = vrot.lane.b32.xlu0 %v5228, 72
        %v5369 = vpop.permute.xlu0 %5368
        %5370 = vrot.lane.b32.xlu0 %v5229, 72
        %v5371 = vpop.permute.xlu0 %5370
        %5372 = vrot.lane.b32.xlu0 %v5230, 72
        %v5373 = vpop.permute.xlu0 %5372
        %5374 = vrot.lane.b32.xlu0 %v5231, 72
        %v5375 = vpop.permute.xlu0 %5374
        %vm5424 = vcmask 622144
        %5425 = vst.msk [vmem:[#allocation2] sm:$0xff] %vm5424, %v5281
        %5426 = vst.msk [vmem:[#allocation2 + $0x8] sm:$0xff] %vm5424, %v5283
        %5427 = vst.msk [vmem:[#allocation2 + $0x10] sm:$0xff] %vm5424, %v5285
        %5428 = vst.msk [vmem:[#allocation2 + $0x18] sm:$0xff] %vm5424, %v5287
        %5429 = vst.msk [vmem:[#allocation2 + $0x20] sm:$0xff] %vm5424, %v5289
        %5430 = vst.msk [vmem:[#allocation2 + $0x28] sm:$0xff] %vm5424, %v5291
        %5431 = vst.msk [vmem:[#allocation2 + $0x30] sm:$0xff] %vm5424, %v5293
        %5432 = vst.msk [vmem:[#allocation2 + $0x38] sm:$0xff] %vm5424, %v5295
        %5433 = vst.msk [vmem:[#allocation2 + $0x40] sm:$0xff] %vm5424, %v5297
        %5434 = vst.msk [vmem:[#allocation2 + $0x48] sm:$0xff] %vm5424, %v5299
        %5435 = vst.msk [vmem:[#allocation2 + $0x50] sm:$0xff] %vm5424, %v5301
        %5436 = vst.msk [vmem:[#allocation2 + $0x58] sm:$0xff] %vm5424, %v5303
        %5437 = vst.msk [vmem:[#allocation2 + $0x60] sm:$0xff] %vm5424, %v5305
        %5438 = vst.msk [vmem:[#allocation2 + $0x68] sm:$0xff] %vm5424, %v5307
        %5439 = vst.msk [vmem:[#allocation2 + $0x70] sm:$0xff] %vm5424, %v5309
        %5440 = vst.msk [vmem:[#allocation2 + $0x78] sm:$0xff] %vm5424, %v5311
        %5441 = vst.msk [vmem:[#allocation2 + $0x80] sm:$0xff] %vm5424, %v5313
        %5442 = vst.msk [vmem:[#allocation2 + $0x88] sm:$0xff] %vm5424, %v5315
        %5443 = vst.msk [vmem:[#allocation2 + $0x90] sm:$0xff] %vm5424, %v5317
        %5444 = vst.msk [vmem:[#allocation2 + $0x98] sm:$0xff] %vm5424, %v5319
        %5445 = vst.msk [vmem:[#allocation2 + $0xa0] sm:$0xff] %vm5424, %v5321
        %5446 = vst.msk [vmem:[#allocation2 + $0xa8] sm:$0xff] %vm5424, %v5323
        %5447 = vst.msk [vmem:[#allocation2 + $0xb0] sm:$0xff] %vm5424, %v5325
        %5448 = vst.msk [vmem:[#allocation2 + $0xb8] sm:$0xff] %vm5424, %v5327
        %5449 = vst.msk [vmem:[#allocation2 + $0xc0] sm:$0xff] %vm5424, %v5329
        %5450 = vst.msk [vmem:[#allocation2 + $0xc8] sm:$0xff] %vm5424, %v5331
        %5451 = vst.msk [vmem:[#allocation2 + $0xd0] sm:$0xff] %vm5424, %v5333
        %5452 = vst.msk [vmem:[#allocation2 + $0xd8] sm:$0xff] %vm5424, %v5335
        %5453 = vst.msk [vmem:[#allocation2 + $0xe0] sm:$0xff] %vm5424, %v5337
        %5454 = vst.msk [vmem:[#allocation2 + $0xe8] sm:$0xff] %vm5424, %v5339
        %5455 = vst.msk [vmem:[#allocation2 + $0xf0] sm:$0xff] %vm5424, %v5341
        %5456 = vst.msk [vmem:[#allocation2 + $0xf8] sm:$0xff] %vm5424, %v5343
        %5457 = vst.msk [vmem:[#allocation2 + $0x100] sm:$0xff] %vm5424, %v5345
        %5458 = vst.msk [vmem:[#allocation2 + $0x108] sm:$0xff] %vm5424, %v5347
        %5459 = vst.msk [vmem:[#allocation2 + $0x110] sm:$0xff] %vm5424, %v5349
        %5460 = vst.msk [vmem:[#allocation2 + $0x118] sm:$0xff] %vm5424, %v5351
        %5461 = vst.msk [vmem:[#allocation2 + $0x120] sm:$0xff] %vm5424, %v5353
        %5462 = vst.msk [vmem:[#allocation2 + $0x128] sm:$0xff] %vm5424, %v5355
        %5463 = vst.msk [vmem:[#allocation2 + $0x130] sm:$0xff] %vm5424, %v5357
        %5464 = vst.msk [vmem:[#allocation2 + $0x138] sm:$0xff] %vm5424, %v5359
        %5465 = vst.msk [vmem:[#allocation2 + $0x140] sm:$0xff] %vm5424, %v5361
        %5466 = vst.msk [vmem:[#allocation2 + $0x148] sm:$0xff] %vm5424, %v5363
        %5467 = vst.msk [vmem:[#allocation2 + $0x150] sm:$0xff] %vm5424, %v5365
        %5468 = vst.msk [vmem:[#allocation2 + $0x158] sm:$0xff] %vm5424, %v5367
        %5469 = vst.msk [vmem:[#allocation2 + $0x160] sm:$0xff] %vm5424, %v5369
        %5470 = vst.msk [vmem:[#allocation2 + $0x168] sm:$0xff] %vm5424, %v5371
        %5471 = vst.msk [vmem:[#allocation2 + $0x170] sm:$0xff] %vm5424, %v5373
        %5472 = vst.msk [vmem:[#allocation2 + $0x178] sm:$0xff] %vm5424, %v5375
        %v5473 = vld [vmem:[%s5183 + $0x1] sm:$0xff]
        %v5474 = vld [vmem:[%s5183 + $0x11] sm:$0xff]
        %v5475 = vld [vmem:[%s5183 + $0x21] sm:$0xff]
        %v5476 = vld [vmem:[%s5183 + $0x31] sm:$0xff]
        %v5477 = vld [vmem:[%s5183 + $0x41] sm:$0xff]
        %v5478 = vld [vmem:[%s5183 + $0x51] sm:$0xff]
        %v5479 = vld [vmem:[%s5183 + $0x61] sm:$0xff]
        %v5480 = vld [vmem:[%s5183 + $0x71] sm:$0xff]
        %v5481 = vld [vmem:[%s5183 + $0xa1] sm:$0xff]
        %v5482 = vld [vmem:[%s5183 + $0xb1] sm:$0xff]
        %v5483 = vld [vmem:[%s5183 + $0xc1] sm:$0xff]
        %v5484 = vld [vmem:[%s5183 + $0xd1] sm:$0xff]
        %v5485 = vld [vmem:[%s5183 + $0xe1] sm:$0xff]
        %v5486 = vld [vmem:[%s5183 + $0xf1] sm:$0xff]
        %v5487 = vld [vmem:[%s5183 + $0x101] sm:$0xff]
        %v5488 = vld [vmem:[%s5183 + $0x111] sm:$0xff]
        %v5489 = vld [vmem:[%s5183 + $0x141] sm:$0xff]
        %v5490 = vld [vmem:[%s5183 + $0x151] sm:$0xff]
        %v5491 = vld [vmem:[%s5183 + $0x161] sm:$0xff]
        %v5492 = vld [vmem:[%s5183 + $0x171] sm:$0xff]
        %v5493 = vld [vmem:[%s5183 + $0x181] sm:$0xff]
        %v5494 = vld [vmem:[%s5183 + $0x191] sm:$0xff]
        %v5495 = vld [vmem:[%s5183 + $0x1a1] sm:$0xff]
        %v5496 = vld [vmem:[%s5183 + $0x1b1] sm:$0xff]
        %v5497 = vld [vmem:[%s5183 + $0x1e1] sm:$0xff]
        %v5498 = vld [vmem:[%s5183 + $0x1f1] sm:$0xff]
        %v5499 = vld [vmem:[%s5183 + $0x201] sm:$0xff]
        %v5500 = vld [vmem:[%s5183 + $0x211] sm:$0xff]
        %v5501 = vld [vmem:[%s5183 + $0x221] sm:$0xff]
        %v5502 = vld [vmem:[%s5183 + $0x231] sm:$0xff]
        %v5503 = vld [vmem:[%s5183 + $0x241] sm:$0xff]
        %v5504 = vld [vmem:[%s5183 + $0x251] sm:$0xff]
        %v5505 = vld [vmem:[%s5183 + $0x281] sm:$0xff]
        %v5506 = vld [vmem:[%s5183 + $0x291] sm:$0xff]
        %v5507 = vld [vmem:[%s5183 + $0x2a1] sm:$0xff]
        %v5508 = vld [vmem:[%s5183 + $0x2b1] sm:$0xff]
        %v5509 = vld [vmem:[%s5183 + $0x2c1] sm:$0xff]
        %v5510 = vld [vmem:[%s5183 + $0x2d1] sm:$0xff]
        %v5511 = vld [vmem:[%s5183 + $0x2e1] sm:$0xff]
        %v5512 = vld [vmem:[%s5183 + $0x2f1] sm:$0xff]
        %v5513 = vld [vmem:[%s5183 + $0x321] sm:$0xff]
        %v5514 = vld [vmem:[%s5183 + $0x331] sm:$0xff]
        %v5515 = vld [vmem:[%s5183 + $0x341] sm:$0xff]
        %v5516 = vld [vmem:[%s5183 + $0x351] sm:$0xff]
        %v5517 = vld [vmem:[%s5183 + $0x361] sm:$0xff]
        %v5518 = vld [vmem:[%s5183 + $0x371] sm:$0xff]
        %v5519 = vld [vmem:[%s5183 + $0x381] sm:$0xff]
        %v5520 = vld [vmem:[%s5183 + $0x391] sm:$0xff]
        %5569 = vrot.lane.b32.xlu0 %v5473, 76
        %v5570 = vpop.permute.xlu0 %5569
        %5571 = vrot.lane.b32.xlu0 %v5474, 76
        %v5572 = vpop.permute.xlu0 %5571
        %5573 = vrot.lane.b32.xlu0 %v5475, 76
        %v5574 = vpop.permute.xlu0 %5573
        %5575 = vrot.lane.b32.xlu0 %v5476, 76
        %v5576 = vpop.permute.xlu0 %5575
        %5577 = vrot.lane.b32.xlu0 %v5477, 76
        %v5578 = vpop.permute.xlu0 %5577
        %5579 = vrot.lane.b32.xlu0 %v5478, 76
        %v5580 = vpop.permute.xlu0 %5579
        %5581 = vrot.lane.b32.xlu0 %v5479, 76
        %v5582 = vpop.permute.xlu0 %5581
        %5583 = vrot.lane.b32.xlu0 %v5480, 76
        %v5584 = vpop.permute.xlu0 %5583
        %5585 = vrot.lane.b32.xlu0 %v5481, 76
        %v5586 = vpop.permute.xlu0 %5585
        %5587 = vrot.lane.b32.xlu0 %v5482, 76
        %v5588 = vpop.permute.xlu0 %5587
        %5589 = vrot.lane.b32.xlu0 %v5483, 76
        %v5590 = vpop.permute.xlu0 %5589
        %5591 = vrot.lane.b32.xlu0 %v5484, 76
        %v5592 = vpop.permute.xlu0 %5591
        %5593 = vrot.lane.b32.xlu0 %v5485, 76
        %v5594 = vpop.permute.xlu0 %5593
        %5595 = vrot.lane.b32.xlu0 %v5486, 76
        %v5596 = vpop.permute.xlu0 %5595
        %5597 = vrot.lane.b32.xlu0 %v5487, 76
        %v5598 = vpop.permute.xlu0 %5597
        %5599 = vrot.lane.b32.xlu0 %v5488, 76
        %v5600 = vpop.permute.xlu0 %5599
        %5601 = vrot.lane.b32.xlu0 %v5489, 76
        %v5602 = vpop.permute.xlu0 %5601
        %5603 = vrot.lane.b32.xlu0 %v5490, 76
        %v5604 = vpop.permute.xlu0 %5603
        %5605 = vrot.lane.b32.xlu0 %v5491, 76
        %v5606 = vpop.permute.xlu0 %5605
        %5607 = vrot.lane.b32.xlu0 %v5492, 76
        %v5608 = vpop.permute.xlu0 %5607
        %5609 = vrot.lane.b32.xlu0 %v5493, 76
        %v5610 = vpop.permute.xlu0 %5609
        %5611 = vrot.lane.b32.xlu0 %v5494, 76
        %v5612 = vpop.permute.xlu0 %5611
        %5613 = vrot.lane.b32.xlu0 %v5495, 76
        %v5614 = vpop.permute.xlu0 %5613
        %5615 = vrot.lane.b32.xlu0 %v5496, 76
        %v5616 = vpop.permute.xlu0 %5615
        %5617 = vrot.lane.b32.xlu0 %v5497, 76
        %v5618 = vpop.permute.xlu0 %5617
        %5619 = vrot.lane.b32.xlu0 %v5498, 76
        %v5620 = vpop.permute.xlu0 %5619
        %5621 = vrot.lane.b32.xlu0 %v5499, 76
        %v5622 = vpop.permute.xlu0 %5621
        %5623 = vrot.lane.b32.xlu0 %v5500, 76
        %v5624 = vpop.permute.xlu0 %5623
        %5625 = vrot.lane.b32.xlu0 %v5501, 76
        %v5626 = vpop.permute.xlu0 %5625
        %5627 = vrot.lane.b32.xlu0 %v5502, 76
        %v5628 = vpop.permute.xlu0 %5627
        %5629 = vrot.lane.b32.xlu0 %v5503, 76
        %v5630 = vpop.permute.xlu0 %5629
        %5631 = vrot.lane.b32.xlu0 %v5504, 76
        %v5632 = vpop.permute.xlu0 %5631
        %5633 = vrot.lane.b32.xlu0 %v5505, 76
        %v5634 = vpop.permute.xlu0 %5633
        %5635 = vrot.lane.b32.xlu0 %v5506, 76
        %v5636 = vpop.permute.xlu0 %5635
        %5637 = vrot.lane.b32.xlu0 %v5507, 76
        %v5638 = vpop.permute.xlu0 %5637
        %5639 = vrot.lane.b32.xlu0 %v5508, 76
        %v5640 = vpop.permute.xlu0 %5639
        %5641 = vrot.lane.b32.xlu0 %v5509, 76
        %v5642 = vpop.permute.xlu0 %5641
        %5643 = vrot.lane.b32.xlu0 %v5510, 76
        %v5644 = vpop.permute.xlu0 %5643
        %5645 = vrot.lane.b32.xlu0 %v5511, 76
        %v5646 = vpop.permute.xlu0 %5645
        %5647 = vrot.lane.b32.xlu0 %v5512, 76
        %v5648 = vpop.permute.xlu0 %5647
        %5649 = vrot.lane.b32.xlu0 %v5513, 76
        %v5650 = vpop.permute.xlu0 %5649
        %5651 = vrot.lane.b32.xlu0 %v5514, 76
        %v5652 = vpop.permute.xlu0 %5651
        %5653 = vrot.lane.b32.xlu0 %v5515, 76
        %v5654 = vpop.permute.xlu0 %5653
        %5655 = vrot.lane.b32.xlu0 %v5516, 76
        %v5656 = vpop.permute.xlu0 %5655
        %5657 = vrot.lane.b32.xlu0 %v5517, 76
        %v5658 = vpop.permute.xlu0 %5657
        %5659 = vrot.lane.b32.xlu0 %v5518, 76
        %v5660 = vpop.permute.xlu0 %5659
        %5661 = vrot.lane.b32.xlu0 %v5519, 76
        %v5662 = vpop.permute.xlu0 %5661
        %5663 = vrot.lane.b32.xlu0 %v5520, 76
        %v5664 = vpop.permute.xlu0 %5663
        %vm5713 = vcmask 654944
        %5714 = vst.msk [vmem:[#allocation2] sm:$0xff] %vm5713, %v5570
        %5715 = vst.msk [vmem:[#allocation2 + $0x8] sm:$0xff] %vm5713, %v5572
        %5716 = vst.msk [vmem:[#allocation2 + $0x10] sm:$0xff] %vm5713, %v5574
        %5717 = vst.msk [vmem:[#allocation2 + $0x18] sm:$0xff] %vm5713, %v5576
        %5718 = vst.msk [vmem:[#allocation2 + $0x20] sm:$0xff] %vm5713, %v5578
        %5719 = vst.msk [vmem:[#allocation2 + $0x28] sm:$0xff] %vm5713, %v5580
        %5720 = vst.msk [vmem:[#allocation2 + $0x30] sm:$0xff] %vm5713, %v5582
        %5721 = vst.msk [vmem:[#allocation2 + $0x38] sm:$0xff] %vm5713, %v5584
        %5722 = vst.msk [vmem:[#allocation2 + $0x40] sm:$0xff] %vm5713, %v5586
        %5723 = vst.msk [vmem:[#allocation2 + $0x48] sm:$0xff] %vm5713, %v5588
        %5724 = vst.msk [vmem:[#allocation2 + $0x50] sm:$0xff] %vm5713, %v5590
        %5725 = vst.msk [vmem:[#allocation2 + $0x58] sm:$0xff] %vm5713, %v5592
        %5726 = vst.msk [vmem:[#allocation2 + $0x60] sm:$0xff] %vm5713, %v5594
        %5727 = vst.msk [vmem:[#allocation2 + $0x68] sm:$0xff] %vm5713, %v5596
        %5728 = vst.msk [vmem:[#allocation2 + $0x70] sm:$0xff] %vm5713, %v5598
        %5729 = vst.msk [vmem:[#allocation2 + $0x78] sm:$0xff] %vm5713, %v5600
        %5730 = vst.msk [vmem:[#allocation2 + $0x80] sm:$0xff] %vm5713, %v5602
        %5731 = vst.msk [vmem:[#allocation2 + $0x88] sm:$0xff] %vm5713, %v5604
        %5732 = vst.msk [vmem:[#allocation2 + $0x90] sm:$0xff] %vm5713, %v5606
        %5733 = vst.msk [vmem:[#allocation2 + $0x98] sm:$0xff] %vm5713, %v5608
        %5734 = vst.msk [vmem:[#allocation2 + $0xa0] sm:$0xff] %vm5713, %v5610
        %5735 = vst.msk [vmem:[#allocation2 + $0xa8] sm:$0xff] %vm5713, %v5612
        %5736 = vst.msk [vmem:[#allocation2 + $0xb0] sm:$0xff] %vm5713, %v5614
        %5737 = vst.msk [vmem:[#allocation2 + $0xb8] sm:$0xff] %vm5713, %v5616
        %5738 = vst.msk [vmem:[#allocation2 + $0xc0] sm:$0xff] %vm5713, %v5618
        %5739 = vst.msk [vmem:[#allocation2 + $0xc8] sm:$0xff] %vm5713, %v5620
        %5740 = vst.msk [vmem:[#allocation2 + $0xd0] sm:$0xff] %vm5713, %v5622
        %5741 = vst.msk [vmem:[#allocation2 + $0xd8] sm:$0xff] %vm5713, %v5624
        %5742 = vst.msk [vmem:[#allocation2 + $0xe0] sm:$0xff] %vm5713, %v5626
        %5743 = vst.msk [vmem:[#allocation2 + $0xe8] sm:$0xff] %vm5713, %v5628
        %5744 = vst.msk [vmem:[#allocation2 + $0xf0] sm:$0xff] %vm5713, %v5630
        %5745 = vst.msk [vmem:[#allocation2 + $0xf8] sm:$0xff] %vm5713, %v5632
        %5746 = vst.msk [vmem:[#allocation2 + $0x100] sm:$0xff] %vm5713, %v5634
        %5747 = vst.msk [vmem:[#allocation2 + $0x108] sm:$0xff] %vm5713, %v5636
        %5748 = vst.msk [vmem:[#allocation2 + $0x110] sm:$0xff] %vm5713, %v5638
        %5749 = vst.msk [vmem:[#allocation2 + $0x118] sm:$0xff] %vm5713, %v5640
        %5750 = vst.msk [vmem:[#allocation2 + $0x120] sm:$0xff] %vm5713, %v5642
        %5751 = vst.msk [vmem:[#allocation2 + $0x128] sm:$0xff] %vm5713, %v5644
        %5752 = vst.msk [vmem:[#allocation2 + $0x130] sm:$0xff] %vm5713, %v5646
        %5753 = vst.msk [vmem:[#allocation2 + $0x138] sm:$0xff] %vm5713, %v5648
        %5754 = vst.msk [vmem:[#allocation2 + $0x140] sm:$0xff] %vm5713, %v5650
        %5755 = vst.msk [vmem:[#allocation2 + $0x148] sm:$0xff] %vm5713, %v5652
        %5756 = vst.msk [vmem:[#allocation2 + $0x150] sm:$0xff] %vm5713, %v5654
        %5757 = vst.msk [vmem:[#allocation2 + $0x158] sm:$0xff] %vm5713, %v5656
        %5758 = vst.msk [vmem:[#allocation2 + $0x160] sm:$0xff] %vm5713, %v5658
        %5759 = vst.msk [vmem:[#allocation2 + $0x168] sm:$0xff] %vm5713, %v5660
        %5760 = vst.msk [vmem:[#allocation2 + $0x170] sm:$0xff] %vm5713, %v5662
        %5761 = vst.msk [vmem:[#allocation2 + $0x178] sm:$0xff] %vm5713, %v5664
        %v5762 = vld [vmem:[%s5183 + $0x2] sm:$0xff]
        %v5763 = vld [vmem:[%s5183 + $0x12] sm:$0xff]
        %v5764 = vld [vmem:[%s5183 + $0x22] sm:$0xff]
        %v5765 = vld [vmem:[%s5183 + $0x32] sm:$0xff]
        %v5766 = vld [vmem:[%s5183 + $0x42] sm:$0xff]
        %v5767 = vld [vmem:[%s5183 + $0x52] sm:$0xff]
        %v5768 = vld [vmem:[%s5183 + $0x62] sm:$0xff]
        %v5769 = vld [vmem:[%s5183 + $0x72] sm:$0xff]
        %v5770 = vld [vmem:[%s5183 + $0xa2] sm:$0xff]
        %v5771 = vld [vmem:[%s5183 + $0xb2] sm:$0xff]
        %v5772 = vld [vmem:[%s5183 + $0xc2] sm:$0xff]
        %v5773 = vld [vmem:[%s5183 + $0xd2] sm:$0xff]
        %v5774 = vld [vmem:[%s5183 + $0xe2] sm:$0xff]
        %v5775 = vld [vmem:[%s5183 + $0xf2] sm:$0xff]
        %v5776 = vld [vmem:[%s5183 + $0x102] sm:$0xff]
        %v5777 = vld [vmem:[%s5183 + $0x112] sm:$0xff]
        %v5778 = vld [vmem:[%s5183 + $0x142] sm:$0xff]
        %v5779 = vld [vmem:[%s5183 + $0x152] sm:$0xff]
        %v5780 = vld [vmem:[%s5183 + $0x162] sm:$0xff]
        %v5781 = vld [vmem:[%s5183 + $0x172] sm:$0xff]
        %v5782 = vld [vmem:[%s5183 + $0x182] sm:$0xff]
        %v5783 = vld [vmem:[%s5183 + $0x192] sm:$0xff]
        %v5784 = vld [vmem:[%s5183 + $0x1a2] sm:$0xff]
        %v5785 = vld [vmem:[%s5183 + $0x1b2] sm:$0xff]
        %v5786 = vld [vmem:[%s5183 + $0x1e2] sm:$0xff]
        %v5787 = vld [vmem:[%s5183 + $0x1f2] sm:$0xff]
        %v5788 = vld [vmem:[%s5183 + $0x202] sm:$0xff]
        %v5789 = vld [vmem:[%s5183 + $0x212] sm:$0xff]
        %v5790 = vld [vmem:[%s5183 + $0x222] sm:$0xff]
        %v5791 = vld [vmem:[%s5183 + $0x232] sm:$0xff]
        %v5792 = vld [vmem:[%s5183 + $0x242] sm:$0xff]
        %v5793 = vld [vmem:[%s5183 + $0x252] sm:$0xff]
        %v5794 = vld [vmem:[%s5183 + $0x282] sm:$0xff]
        %v5795 = vld [vmem:[%s5183 + $0x292] sm:$0xff]
        %v5796 = vld [vmem:[%s5183 + $0x2a2] sm:$0xff]
        %v5797 = vld [vmem:[%s5183 + $0x2b2] sm:$0xff]
        %v5798 = vld [vmem:[%s5183 + $0x2c2] sm:$0xff]
        %v5799 = vld [vmem:[%s5183 + $0x2d2] sm:$0xff]
        %v5800 = vld [vmem:[%s5183 + $0x2e2] sm:$0xff]
        %v5801 = vld [vmem:[%s5183 + $0x2f2] sm:$0xff]
        %v5802 = vld [vmem:[%s5183 + $0x322] sm:$0xff]
        %v5803 = vld [vmem:[%s5183 + $0x332] sm:$0xff]
        %v5804 = vld [vmem:[%s5183 + $0x342] sm:$0xff]
        %v5805 = vld [vmem:[%s5183 + $0x352] sm:$0xff]
        %v5806 = vld [vmem:[%s5183 + $0x362] sm:$0xff]
        %v5807 = vld [vmem:[%s5183 + $0x372] sm:$0xff]
        %v5808 = vld [vmem:[%s5183 + $0x382] sm:$0xff]
        %v5809 = vld [vmem:[%s5183 + $0x392] sm:$0xff]
        %5858 = vrot.lane.b32.xlu0 %v5762, 80
        %v5859 = vpop.permute.xlu0 %5858
        %5860 = vrot.lane.b32.xlu0 %v5763, 80
        %v5861 = vpop.permute.xlu0 %5860
        %5862 = vrot.lane.b32.xlu0 %v5764, 80
        %v5863 = vpop.permute.xlu0 %5862
        %5864 = vrot.lane.b32.xlu0 %v5765, 80
        %v5865 = vpop.permute.xlu0 %5864
        %5866 = vrot.lane.b32.xlu0 %v5766, 80
        %v5867 = vpop.permute.xlu0 %5866
        %5868 = vrot.lane.b32.xlu0 %v5767, 80
        %v5869 = vpop.permute.xlu0 %5868
        %5870 = vrot.lane.b32.xlu0 %v5768, 80
        %v5871 = vpop.permute.xlu0 %5870
        %5872 = vrot.lane.b32.xlu0 %v5769, 80
        %v5873 = vpop.permute.xlu0 %5872
        %5874 = vrot.lane.b32.xlu0 %v5770, 80
        %v5875 = vpop.permute.xlu0 %5874
        %5876 = vrot.lane.b32.xlu0 %v5771, 80
        %v5877 = vpop.permute.xlu0 %5876
        %5878 = vrot.lane.b32.xlu0 %v5772, 80
        %v5879 = vpop.permute.xlu0 %5878
        %5880 = vrot.lane.b32.xlu0 %v5773, 80
        %v5881 = vpop.permute.xlu0 %5880
        %5882 = vrot.lane.b32.xlu0 %v5774, 80
        %v5883 = vpop.permute.xlu0 %5882
        %5884 = vrot.lane.b32.xlu0 %v5775, 80
        %v5885 = vpop.permute.xlu0 %5884
        %5886 = vrot.lane.b32.xlu0 %v5776, 80
        %v5887 = vpop.permute.xlu0 %5886
        %5888 = vrot.lane.b32.xlu0 %v5777, 80
        %v5889 = vpop.permute.xlu0 %5888
        %5890 = vrot.lane.b32.xlu0 %v5778, 80
        %v5891 = vpop.permute.xlu0 %5890
        %5892 = vrot.lane.b32.xlu0 %v5779, 80
        %v5893 = vpop.permute.xlu0 %5892
        %5894 = vrot.lane.b32.xlu0 %v5780, 80
        %v5895 = vpop.permute.xlu0 %5894
        %5896 = vrot.lane.b32.xlu0 %v5781, 80
        %v5897 = vpop.permute.xlu0 %5896
        %5898 = vrot.lane.b32.xlu0 %v5782, 80
        %v5899 = vpop.permute.xlu0 %5898
        %5900 = vrot.lane.b32.xlu0 %v5783, 80
        %v5901 = vpop.permute.xlu0 %5900
        %5902 = vrot.lane.b32.xlu0 %v5784, 80
        %v5903 = vpop.permute.xlu0 %5902
        %5904 = vrot.lane.b32.xlu0 %v5785, 80
        %v5905 = vpop.permute.xlu0 %5904
        %5906 = vrot.lane.b32.xlu0 %v5786, 80
        %v5907 = vpop.permute.xlu0 %5906
        %5908 = vrot.lane.b32.xlu0 %v5787, 80
        %v5909 = vpop.permute.xlu0 %5908
        %5910 = vrot.lane.b32.xlu0 %v5788, 80
        %v5911 = vpop.permute.xlu0 %5910
        %5912 = vrot.lane.b32.xlu0 %v5789, 80
        %v5913 = vpop.permute.xlu0 %5912
        %5914 = vrot.lane.b32.xlu0 %v5790, 80
        %v5915 = vpop.permute.xlu0 %5914
        %5916 = vrot.lane.b32.xlu0 %v5791, 80
        %v5917 = vpop.permute.xlu0 %5916
        %5918 = vrot.lane.b32.xlu0 %v5792, 80
        %v5919 = vpop.permute.xlu0 %5918
        %5920 = vrot.lane.b32.xlu0 %v5793, 80
        %v5921 = vpop.permute.xlu0 %5920
        %5922 = vrot.lane.b32.xlu0 %v5794, 80
        %v5923 = vpop.permute.xlu0 %5922
        %5924 = vrot.lane.b32.xlu0 %v5795, 80
        %v5925 = vpop.permute.xlu0 %5924
        %5926 = vrot.lane.b32.xlu0 %v5796, 80
        %v5927 = vpop.permute.xlu0 %5926
        %5928 = vrot.lane.b32.xlu0 %v5797, 80
        %v5929 = vpop.permute.xlu0 %5928
        %5930 = vrot.lane.b32.xlu0 %v5798, 80
        %v5931 = vpop.permute.xlu0 %5930
        %5932 = vrot.lane.b32.xlu0 %v5799, 80
        %v5933 = vpop.permute.xlu0 %5932
        %5934 = vrot.lane.b32.xlu0 %v5800, 80
        %v5935 = vpop.permute.xlu0 %5934
        %5936 = vrot.lane.b32.xlu0 %v5801, 80
        %v5937 = vpop.permute.xlu0 %5936
        %5938 = vrot.lane.b32.xlu0 %v5802, 80
        %v5939 = vpop.permute.xlu0 %5938
        %5940 = vrot.lane.b32.xlu0 %v5803, 80
        %v5941 = vpop.permute.xlu0 %5940
        %5942 = vrot.lane.b32.xlu0 %v5804, 80
        %v5943 = vpop.permute.xlu0 %5942
        %5944 = vrot.lane.b32.xlu0 %v5805, 80
        %v5945 = vpop.permute.xlu0 %5944
        %5946 = vrot.lane.b32.xlu0 %v5806, 80
        %v5947 = vpop.permute.xlu0 %5946
        %5948 = vrot.lane.b32.xlu0 %v5807, 80
        %v5949 = vpop.permute.xlu0 %5948
        %5950 = vrot.lane.b32.xlu0 %v5808, 80
        %v5951 = vpop.permute.xlu0 %5950
        %5952 = vrot.lane.b32.xlu0 %v5809, 80
        %v5953 = vpop.permute.xlu0 %5952
        %vm6002 = vcmask 687744
        %6003 = vst.msk [vmem:[#allocation2] sm:$0xff] %vm6002, %v5859
        %6004 = vst.msk [vmem:[#allocation2 + $0x8] sm:$0xff] %vm6002, %v5861
        %6005 = vst.msk [vmem:[#allocation2 + $0x10] sm:$0xff] %vm6002, %v5863
        %6006 = vst.msk [vmem:[#allocation2 + $0x18] sm:$0xff] %vm6002, %v5865
        %6007 = vst.msk [vmem:[#allocation2 + $0x20] sm:$0xff] %vm6002, %v5867
        %6008 = vst.msk [vmem:[#allocation2 + $0x28] sm:$0xff] %vm6002, %v5869
        %6009 = vst.msk [vmem:[#allocation2 + $0x30] sm:$0xff] %vm6002, %v5871
        %6010 = vst.msk [vmem:[#allocation2 + $0x38] sm:$0xff] %vm6002, %v5873
        %6011 = vst.msk [vmem:[#allocation2 + $0x40] sm:$0xff] %vm6002, %v5875
        %6012 = vst.msk [vmem:[#allocation2 + $0x48] sm:$0xff] %vm6002, %v5877
        %6013 = vst.msk [vmem:[#allocation2 + $0x50] sm:$0xff] %vm6002, %v5879
        %6014 = vst.msk [vmem:[#allocation2 + $0x58] sm:$0xff] %vm6002, %v5881
        %6015 = vst.msk [vmem:[#allocation2 + $0x60] sm:$0xff] %vm6002, %v5883
        %6016 = vst.msk [vmem:[#allocation2 + $0x68] sm:$0xff] %vm6002, %v5885
        %6017 = vst.msk [vmem:[#allocation2 + $0x70] sm:$0xff] %vm6002, %v5887
        %6018 = vst.msk [vmem:[#allocation2 + $0x78] sm:$0xff] %vm6002, %v5889
        %6019 = vst.msk [vmem:[#allocation2 + $0x80] sm:$0xff] %vm6002, %v5891
        %6020 = vst.msk [vmem:[#allocation2 + $0x88] sm:$0xff] %vm6002, %v5893
        %6021 = vst.msk [vmem:[#allocation2 + $0x90] sm:$0xff] %vm6002, %v5895
        %6022 = vst.msk [vmem:[#allocation2 + $0x98] sm:$0xff] %vm6002, %v5897
        %6023 = vst.msk [vmem:[#allocation2 + $0xa0] sm:$0xff] %vm6002, %v5899
        %6024 = vst.msk [vmem:[#allocation2 + $0xa8] sm:$0xff] %vm6002, %v5901
        %6025 = vst.msk [vmem:[#allocation2 + $0xb0] sm:$0xff] %vm6002, %v5903
        %6026 = vst.msk [vmem:[#allocation2 + $0xb8] sm:$0xff] %vm6002, %v5905
        %6027 = vst.msk [vmem:[#allocation2 + $0xc0] sm:$0xff] %vm6002, %v5907
        %6028 = vst.msk [vmem:[#allocation2 + $0xc8] sm:$0xff] %vm6002, %v5909
        %6029 = vst.msk [vmem:[#allocation2 + $0xd0] sm:$0xff] %vm6002, %v5911
        %6030 = vst.msk [vmem:[#allocation2 + $0xd8] sm:$0xff] %vm6002, %v5913
        %6031 = vst.msk [vmem:[#allocation2 + $0xe0] sm:$0xff] %vm6002, %v5915
        %6032 = vst.msk [vmem:[#allocation2 + $0xe8] sm:$0xff] %vm6002, %v5917
        %6033 = vst.msk [vmem:[#allocation2 + $0xf0] sm:$0xff] %vm6002, %v5919
        %6034 = vst.msk [vmem:[#allocation2 + $0xf8] sm:$0xff] %vm6002, %v5921
        %6035 = vst.msk [vmem:[#allocation2 + $0x100] sm:$0xff] %vm6002, %v5923
        %6036 = vst.msk [vmem:[#allocation2 + $0x108] sm:$0xff] %vm6002, %v5925
        %6037 = vst.msk [vmem:[#allocation2 + $0x110] sm:$0xff] %vm6002, %v5927
        %6038 = vst.msk [vmem:[#allocation2 + $0x118] sm:$0xff] %vm6002, %v5929
        %6039 = vst.msk [vmem:[#allocation2 + $0x120] sm:$0xff] %vm6002, %v5931
        %6040 = vst.msk [vmem:[#allocation2 + $0x128] sm:$0xff] %vm6002, %v5933
        %6041 = vst.msk [vmem:[#allocation2 + $0x130] sm:$0xff] %vm6002, %v5935
        %6042 = vst.msk [vmem:[#allocation2 + $0x138] sm:$0xff] %vm6002, %v5937
        %6043 = vst.msk [vmem:[#allocation2 + $0x140] sm:$0xff] %vm6002, %v5939
        %6044 = vst.msk [vmem:[#allocation2 + $0x148] sm:$0xff] %vm6002, %v5941
        %6045 = vst.msk [vmem:[#allocation2 + $0x150] sm:$0xff] %vm6002, %v5943
        %6046 = vst.msk [vmem:[#allocation2 + $0x158] sm:$0xff] %vm6002, %v5945
        %6047 = vst.msk [vmem:[#allocation2 + $0x160] sm:$0xff] %vm6002, %v5947
        %6048 = vst.msk [vmem:[#allocation2 + $0x168] sm:$0xff] %vm6002, %v5949
        %6049 = vst.msk [vmem:[#allocation2 + $0x170] sm:$0xff] %vm6002, %v5951
        %6050 = vst.msk [vmem:[#allocation2 + $0x178] sm:$0xff] %vm6002, %v5953
        %s6051 = sadd.s32 16, %s5182
        %s6052 = scalar_lea.vmem %s155, %s6051
        %v6053 = vld [vmem:[%s6052] sm:$0xff]
        %v6054 = vld [vmem:[%s6052 + $0x10] sm:$0xff]
        %v6055 = vld [vmem:[%s6052 + $0x20] sm:$0xff]
        %v6056 = vld [vmem:[%s6052 + $0x30] sm:$0xff]
        %v6057 = vld [vmem:[%s6052 + $0x40] sm:$0xff]
        %v6058 = vld [vmem:[%s6052 + $0x50] sm:$0xff]
        %v6059 = vld [vmem:[%s6052 + $0x60] sm:$0xff]
        %v6060 = vld [vmem:[%s6052 + $0x70] sm:$0xff]
        %v6061 = vld [vmem:[%s6052 + $0xa0] sm:$0xff]
        %v6062 = vld [vmem:[%s6052 + $0xb0] sm:$0xff]
        %v6063 = vld [vmem:[%s6052 + $0xc0] sm:$0xff]
        %v6064 = vld [vmem:[%s6052 + $0xd0] sm:$0xff]
        %v6065 = vld [vmem:[%s6052 + $0xe0] sm:$0xff]
        %v6066 = vld [vmem:[%s6052 + $0xf0] sm:$0xff]
        %v6067 = vld [vmem:[%s6052 + $0x100] sm:$0xff]
        %v6068 = vld [vmem:[%s6052 + $0x110] sm:$0xff]
        %v6069 = vld [vmem:[%s6052 + $0x140] sm:$0xff]
        %v6070 = vld [vmem:[%s6052 + $0x150] sm:$0xff]
        %v6071 = vld [vmem:[%s6052 + $0x160] sm:$0xff]
        %v6072 = vld [vmem:[%s6052 + $0x170] sm:$0xff]
        %v6073 = vld [vmem:[%s6052 + $0x180] sm:$0xff]
        %v6074 = vld [vmem:[%s6052 + $0x190] sm:$0xff]
        %v6075 = vld [vmem:[%s6052 + $0x1a0] sm:$0xff]
        %v6076 = vld [vmem:[%s6052 + $0x1b0] sm:$0xff]
        %v6077 = vld [vmem:[%s6052 + $0x1e0] sm:$0xff]
        %v6078 = vld [vmem:[%s6052 + $0x1f0] sm:$0xff]
        %v6079 = vld [vmem:[%s6052 + $0x200] sm:$0xff]
        %v6080 = vld [vmem:[%s6052 + $0x210] sm:$0xff]
        %v6081 = vld [vmem:[%s6052 + $0x220] sm:$0xff]
        %v6082 = vld [vmem:[%s6052 + $0x230] sm:$0xff]
        %v6083 = vld [vmem:[%s6052 + $0x240] sm:$0xff]
        %v6084 = vld [vmem:[%s6052 + $0x250] sm:$0xff]
        %v6085 = vld [vmem:[%s6052 + $0x280] sm:$0xff]
        %v6086 = vld [vmem:[%s6052 + $0x290] sm:$0xff]
        %v6087 = vld [vmem:[%s6052 + $0x2a0] sm:$0xff]
        %v6088 = vld [vmem:[%s6052 + $0x2b0] sm:$0xff]
        %v6089 = vld [vmem:[%s6052 + $0x2c0] sm:$0xff]
        %v6090 = vld [vmem:[%s6052 + $0x2d0] sm:$0xff]
        %v6091 = vld [vmem:[%s6052 + $0x2e0] sm:$0xff]
        %v6092 = vld [vmem:[%s6052 + $0x2f0] sm:$0xff]
        %v6093 = vld [vmem:[%s6052 + $0x320] sm:$0xff]
        %v6094 = vld [vmem:[%s6052 + $0x330] sm:$0xff]
        %v6095 = vld [vmem:[%s6052 + $0x340] sm:$0xff]
        %v6096 = vld [vmem:[%s6052 + $0x350] sm:$0xff]
        %v6097 = vld [vmem:[%s6052 + $0x360] sm:$0xff]
        %v6098 = vld [vmem:[%s6052 + $0x370] sm:$0xff]
        %v6099 = vld [vmem:[%s6052 + $0x380] sm:$0xff]
        %v6100 = vld [vmem:[%s6052 + $0x390] sm:$0xff]
        %6149 = vrot.lane.b32.xlu0 %v6053, 84
        %v6150 = vpop.permute.xlu0 %6149
        %6151 = vrot.lane.b32.xlu0 %v6054, 84
        %v6152 = vpop.permute.xlu0 %6151
        %6153 = vrot.lane.b32.xlu0 %v6055, 84
        %v6154 = vpop.permute.xlu0 %6153
        %6155 = vrot.lane.b32.xlu0 %v6056, 84
        %v6156 = vpop.permute.xlu0 %6155
        %6157 = vrot.lane.b32.xlu0 %v6057, 84
        %v6158 = vpop.permute.xlu0 %6157
        %6159 = vrot.lane.b32.xlu0 %v6058, 84
        %v6160 = vpop.permute.xlu0 %6159
        %6161 = vrot.lane.b32.xlu0 %v6059, 84
        %v6162 = vpop.permute.xlu0 %6161
        %6163 = vrot.lane.b32.xlu0 %v6060, 84
        %v6164 = vpop.permute.xlu0 %6163
        %6165 = vrot.lane.b32.xlu0 %v6061, 84
        %v6166 = vpop.permute.xlu0 %6165
        %6167 = vrot.lane.b32.xlu0 %v6062, 84
        %v6168 = vpop.permute.xlu0 %6167
        %6169 = vrot.lane.b32.xlu0 %v6063, 84
        %v6170 = vpop.permute.xlu0 %6169
        %6171 = vrot.lane.b32.xlu0 %v6064, 84
        %v6172 = vpop.permute.xlu0 %6171
        %6173 = vrot.lane.b32.xlu0 %v6065, 84
        %v6174 = vpop.permute.xlu0 %6173
        %6175 = vrot.lane.b32.xlu0 %v6066, 84
        %v6176 = vpop.permute.xlu0 %6175
        %6177 = vrot.lane.b32.xlu0 %v6067, 84
        %v6178 = vpop.permute.xlu0 %6177
        %6179 = vrot.lane.b32.xlu0 %v6068, 84
        %v6180 = vpop.permute.xlu0 %6179
        %6181 = vrot.lane.b32.xlu0 %v6069, 84
        %v6182 = vpop.permute.xlu0 %6181
        %6183 = vrot.lane.b32.xlu0 %v6070, 84
        %v6184 = vpop.permute.xlu0 %6183
        %6185 = vrot.lane.b32.xlu0 %v6071, 84
        %v6186 = vpop.permute.xlu0 %6185
        %6187 = vrot.lane.b32.xlu0 %v6072, 84
        %v6188 = vpop.permute.xlu0 %6187
        %6189 = vrot.lane.b32.xlu0 %v6073, 84
        %v6190 = vpop.permute.xlu0 %6189
        %6191 = vrot.lane.b32.xlu0 %v6074, 84
        %v6192 = vpop.permute.xlu0 %6191
        %6193 = vrot.lane.b32.xlu0 %v6075, 84
        %v6194 = vpop.permute.xlu0 %6193
        %6195 = vrot.lane.b32.xlu0 %v6076, 84
        %v6196 = vpop.permute.xlu0 %6195
        %6197 = vrot.lane.b32.xlu0 %v6077, 84
        %v6198 = vpop.permute.xlu0 %6197
        %6199 = vrot.lane.b32.xlu0 %v6078, 84
        %v6200 = vpop.permute.xlu0 %6199
        %6201 = vrot.lane.b32.xlu0 %v6079, 84
        %v6202 = vpop.permute.xlu0 %6201
        %6203 = vrot.lane.b32.xlu0 %v6080, 84
        %v6204 = vpop.permute.xlu0 %6203
        %6205 = vrot.lane.b32.xlu0 %v6081, 84
        %v6206 = vpop.permute.xlu0 %6205
        %6207 = vrot.lane.b32.xlu0 %v6082, 84
        %v6208 = vpop.permute.xlu0 %6207
        %6209 = vrot.lane.b32.xlu0 %v6083, 84
        %v6210 = vpop.permute.xlu0 %6209
        %6211 = vrot.lane.b32.xlu0 %v6084, 84
        %v6212 = vpop.permute.xlu0 %6211
        %6213 = vrot.lane.b32.xlu0 %v6085, 84
        %v6214 = vpop.permute.xlu0 %6213
        %6215 = vrot.lane.b32.xlu0 %v6086, 84
        %v6216 = vpop.permute.xlu0 %6215
        %6217 = vrot.lane.b32.xlu0 %v6087, 84
        %v6218 = vpop.permute.xlu0 %6217
        %6219 = vrot.lane.b32.xlu0 %v6088, 84
        %v6220 = vpop.permute.xlu0 %6219
        %6221 = vrot.lane.b32.xlu0 %v6089, 84
        %v6222 = vpop.permute.xlu0 %6221
        %6223 = vrot.lane.b32.xlu0 %v6090, 84
        %v6224 = vpop.permute.xlu0 %6223
        %6225 = vrot.lane.b32.xlu0 %v6091, 84
        %v6226 = vpop.permute.xlu0 %6225
        %6227 = vrot.lane.b32.xlu0 %v6092, 84
        %v6228 = vpop.permute.xlu0 %6227
        %6229 = vrot.lane.b32.xlu0 %v6093, 84
        %v6230 = vpop.permute.xlu0 %6229
        %6231 = vrot.lane.b32.xlu0 %v6094, 84
        %v6232 = vpop.permute.xlu0 %6231
        %6233 = vrot.lane.b32.xlu0 %v6095, 84
        %v6234 = vpop.permute.xlu0 %6233
        %6235 = vrot.lane.b32.xlu0 %v6096, 84
        %v6236 = vpop.permute.xlu0 %6235
        %6237 = vrot.lane.b32.xlu0 %v6097, 84
        %v6238 = vpop.permute.xlu0 %6237
        %6239 = vrot.lane.b32.xlu0 %v6098, 84
        %v6240 = vpop.permute.xlu0 %6239
        %6241 = vrot.lane.b32.xlu0 %v6099, 84
        %v6242 = vpop.permute.xlu0 %6241
        %6243 = vrot.lane.b32.xlu0 %v6100, 84
        %v6244 = vpop.permute.xlu0 %6243
        %vm6293 = vcmask 720544
        %6294 = vst.msk [vmem:[#allocation2] sm:$0xff] %vm6293, %v6150
        %6295 = vst.msk [vmem:[#allocation2 + $0x8] sm:$0xff] %vm6293, %v6152
        %6296 = vst.msk [vmem:[#allocation2 + $0x10] sm:$0xff] %vm6293, %v6154
        %6297 = vst.msk [vmem:[#allocation2 + $0x18] sm:$0xff] %vm6293, %v6156
        %6298 = vst.msk [vmem:[#allocation2 + $0x20] sm:$0xff] %vm6293, %v6158
        %6299 = vst.msk [vmem:[#allocation2 + $0x28] sm:$0xff] %vm6293, %v6160
        %6300 = vst.msk [vmem:[#allocation2 + $0x30] sm:$0xff] %vm6293, %v6162
        %6301 = vst.msk [vmem:[#allocation2 + $0x38] sm:$0xff] %vm6293, %v6164
        %6302 = vst.msk [vmem:[#allocation2 + $0x40] sm:$0xff] %vm6293, %v6166
        %6303 = vst.msk [vmem:[#allocation2 + $0x48] sm:$0xff] %vm6293, %v6168
        %6304 = vst.msk [vmem:[#allocation2 + $0x50] sm:$0xff] %vm6293, %v6170
        %6305 = vst.msk [vmem:[#allocation2 + $0x58] sm:$0xff] %vm6293, %v6172
        %6306 = vst.msk [vmem:[#allocation2 + $0x60] sm:$0xff] %vm6293, %v6174
        %6307 = vst.msk [vmem:[#allocation2 + $0x68] sm:$0xff] %vm6293, %v6176
        %6308 = vst.msk [vmem:[#allocation2 + $0x70] sm:$0xff] %vm6293, %v6178
        %6309 = vst.msk [vmem:[#allocation2 + $0x78] sm:$0xff] %vm6293, %v6180
        %6310 = vst.msk [vmem:[#allocation2 + $0x80] sm:$0xff] %vm6293, %v6182
        %6311 = vst.msk [vmem:[#allocation2 + $0x88] sm:$0xff] %vm6293, %v6184
        %6312 = vst.msk [vmem:[#allocation2 + $0x90] sm:$0xff] %vm6293, %v6186
        %6313 = vst.msk [vmem:[#allocation2 + $0x98] sm:$0xff] %vm6293, %v6188
        %6314 = vst.msk [vmem:[#allocation2 + $0xa0] sm:$0xff] %vm6293, %v6190
        %6315 = vst.msk [vmem:[#allocation2 + $0xa8] sm:$0xff] %vm6293, %v6192
        %6316 = vst.msk [vmem:[#allocation2 + $0xb0] sm:$0xff] %vm6293, %v6194
        %6317 = vst.msk [vmem:[#allocation2 + $0xb8] sm:$0xff] %vm6293, %v6196
        %6318 = vst.msk [vmem:[#allocation2 + $0xc0] sm:$0xff] %vm6293, %v6198
        %6319 = vst.msk [vmem:[#allocation2 + $0xc8] sm:$0xff] %vm6293, %v6200
        %6320 = vst.msk [vmem:[#allocation2 + $0xd0] sm:$0xff] %vm6293, %v6202
        %6321 = vst.msk [vmem:[#allocation2 + $0xd8] sm:$0xff] %vm6293, %v6204
        %6322 = vst.msk [vmem:[#allocation2 + $0xe0] sm:$0xff] %vm6293, %v6206
        %6323 = vst.msk [vmem:[#allocation2 + $0xe8] sm:$0xff] %vm6293, %v6208
        %6324 = vst.msk [vmem:[#allocation2 + $0xf0] sm:$0xff] %vm6293, %v6210
        %6325 = vst.msk [vmem:[#allocation2 + $0xf8] sm:$0xff] %vm6293, %v6212
        %6326 = vst.msk [vmem:[#allocation2 + $0x100] sm:$0xff] %vm6293, %v6214
        %6327 = vst.msk [vmem:[#allocation2 + $0x108] sm:$0xff] %vm6293, %v6216
        %6328 = vst.msk [vmem:[#allocation2 + $0x110] sm:$0xff] %vm6293, %v6218
        %6329 = vst.msk [vmem:[#allocation2 + $0x118] sm:$0xff] %vm6293, %v6220
        %6330 = vst.msk [vmem:[#allocation2 + $0x120] sm:$0xff] %vm6293, %v6222
        %6331 = vst.msk [vmem:[#allocation2 + $0x128] sm:$0xff] %vm6293, %v6224
        %6332 = vst.msk [vmem:[#allocation2 + $0x130] sm:$0xff] %vm6293, %v6226
        %6333 = vst.msk [vmem:[#allocation2 + $0x138] sm:$0xff] %vm6293, %v6228
        %6334 = vst.msk [vmem:[#allocation2 + $0x140] sm:$0xff] %vm6293, %v6230
        %6335 = vst.msk [vmem:[#allocation2 + $0x148] sm:$0xff] %vm6293, %v6232
        %6336 = vst.msk [vmem:[#allocation2 + $0x150] sm:$0xff] %vm6293, %v6234
        %6337 = vst.msk [vmem:[#allocation2 + $0x158] sm:$0xff] %vm6293, %v6236
        %6338 = vst.msk [vmem:[#allocation2 + $0x160] sm:$0xff] %vm6293, %v6238
        %6339 = vst.msk [vmem:[#allocation2 + $0x168] sm:$0xff] %vm6293, %v6240
        %6340 = vst.msk [vmem:[#allocation2 + $0x170] sm:$0xff] %vm6293, %v6242
        %6341 = vst.msk [vmem:[#allocation2 + $0x178] sm:$0xff] %vm6293, %v6244
        %v6342 = vld [vmem:[%s6052 + $0x1] sm:$0xff]
        %v6343 = vld [vmem:[%s6052 + $0x11] sm:$0xff]
        %v6344 = vld [vmem:[%s6052 + $0x21] sm:$0xff]
        %v6345 = vld [vmem:[%s6052 + $0x31] sm:$0xff]
        %v6346 = vld [vmem:[%s6052 + $0x41] sm:$0xff]
        %v6347 = vld [vmem:[%s6052 + $0x51] sm:$0xff]
        %v6348 = vld [vmem:[%s6052 + $0x61] sm:$0xff]
        %v6349 = vld [vmem:[%s6052 + $0x71] sm:$0xff]
        %v6350 = vld [vmem:[%s6052 + $0xa1] sm:$0xff]
        %v6351 = vld [vmem:[%s6052 + $0xb1] sm:$0xff]
        %v6352 = vld [vmem:[%s6052 + $0xc1] sm:$0xff]
        %v6353 = vld [vmem:[%s6052 + $0xd1] sm:$0xff]
        %v6354 = vld [vmem:[%s6052 + $0xe1] sm:$0xff]
        %v6355 = vld [vmem:[%s6052 + $0xf1] sm:$0xff]
        %v6356 = vld [vmem:[%s6052 + $0x101] sm:$0xff]
        %v6357 = vld [vmem:[%s6052 + $0x111] sm:$0xff]
        %v6358 = vld [vmem:[%s6052 + $0x141] sm:$0xff]
        %v6359 = vld [vmem:[%s6052 + $0x151] sm:$0xff]
        %v6360 = vld [vmem:[%s6052 + $0x161] sm:$0xff]
        %v6361 = vld [vmem:[%s6052 + $0x171] sm:$0xff]
        %v6362 = vld [vmem:[%s6052 + $0x181] sm:$0xff]
        %v6363 = vld [vmem:[%s6052 + $0x191] sm:$0xff]
        %v6364 = vld [vmem:[%s6052 + $0x1a1] sm:$0xff]
        %v6365 = vld [vmem:[%s6052 + $0x1b1] sm:$0xff]
        %v6366 = vld [vmem:[%s6052 + $0x1e1] sm:$0xff]
        %v6367 = vld [vmem:[%s6052 + $0x1f1] sm:$0xff]
        %v6368 = vld [vmem:[%s6052 + $0x201] sm:$0xff]
        %v6369 = vld [vmem:[%s6052 + $0x211] sm:$0xff]
        %v6370 = vld [vmem:[%s6052 + $0x221] sm:$0xff]
        %v6371 = vld [vmem:[%s6052 + $0x231] sm:$0xff]
        %v6372 = vld [vmem:[%s6052 + $0x241] sm:$0xff]
        %v6373 = vld [vmem:[%s6052 + $0x251] sm:$0xff]
        %v6374 = vld [vmem:[%s6052 + $0x281] sm:$0xff]
        %v6375 = vld [vmem:[%s6052 + $0x291] sm:$0xff]
        %v6376 = vld [vmem:[%s6052 + $0x2a1] sm:$0xff]
        %v6377 = vld [vmem:[%s6052 + $0x2b1] sm:$0xff]
        %v6378 = vld [vmem:[%s6052 + $0x2c1] sm:$0xff]
        %v6379 = vld [vmem:[%s6052 + $0x2d1] sm:$0xff]
        %v6380 = vld [vmem:[%s6052 + $0x2e1] sm:$0xff]
        %v6381 = vld [vmem:[%s6052 + $0x2f1] sm:$0xff]
        %v6382 = vld [vmem:[%s6052 + $0x321] sm:$0xff]
        %v6383 = vld [vmem:[%s6052 + $0x331] sm:$0xff]
        %v6384 = vld [vmem:[%s6052 + $0x341] sm:$0xff]
        %v6385 = vld [vmem:[%s6052 + $0x351] sm:$0xff]
        %v6386 = vld [vmem:[%s6052 + $0x361] sm:$0xff]
        %v6387 = vld [vmem:[%s6052 + $0x371] sm:$0xff]
        %v6388 = vld [vmem:[%s6052 + $0x381] sm:$0xff]
        %v6389 = vld [vmem:[%s6052 + $0x391] sm:$0xff]
        %6438 = vrot.lane.b32.xlu0 %v6342, 88
        %v6439 = vpop.permute.xlu0 %6438
        %6440 = vrot.lane.b32.xlu0 %v6343, 88
        %v6441 = vpop.permute.xlu0 %6440
        %6442 = vrot.lane.b32.xlu0 %v6344, 88
        %v6443 = vpop.permute.xlu0 %6442
        %6444 = vrot.lane.b32.xlu0 %v6345, 88
        %v6445 = vpop.permute.xlu0 %6444
        %6446 = vrot.lane.b32.xlu0 %v6346, 88
        %v6447 = vpop.permute.xlu0 %6446
        %6448 = vrot.lane.b32.xlu0 %v6347, 88
        %v6449 = vpop.permute.xlu0 %6448
        %6450 = vrot.lane.b32.xlu0 %v6348, 88
        %v6451 = vpop.permute.xlu0 %6450
        %6452 = vrot.lane.b32.xlu0 %v6349, 88
        %v6453 = vpop.permute.xlu0 %6452
        %6454 = vrot.lane.b32.xlu0 %v6350, 88
        %v6455 = vpop.permute.xlu0 %6454
        %6456 = vrot.lane.b32.xlu0 %v6351, 88
        %v6457 = vpop.permute.xlu0 %6456
        %6458 = vrot.lane.b32.xlu0 %v6352, 88
        %v6459 = vpop.permute.xlu0 %6458
        %6460 = vrot.lane.b32.xlu0 %v6353, 88
        %v6461 = vpop.permute.xlu0 %6460
        %6462 = vrot.lane.b32.xlu0 %v6354, 88
        %v6463 = vpop.permute.xlu0 %6462
        %6464 = vrot.lane.b32.xlu0 %v6355, 88
        %v6465 = vpop.permute.xlu0 %6464
        %6466 = vrot.lane.b32.xlu0 %v6356, 88
        %v6467 = vpop.permute.xlu0 %6466
        %6468 = vrot.lane.b32.xlu0 %v6357, 88
        %v6469 = vpop.permute.xlu0 %6468
        %6470 = vrot.lane.b32.xlu0 %v6358, 88
        %v6471 = vpop.permute.xlu0 %6470
        %6472 = vrot.lane.b32.xlu0 %v6359, 88
        %v6473 = vpop.permute.xlu0 %6472
        %6474 = vrot.lane.b32.xlu0 %v6360, 88
        %v6475 = vpop.permute.xlu0 %6474
        %6476 = vrot.lane.b32.xlu0 %v6361, 88
        %v6477 = vpop.permute.xlu0 %6476
        %6478 = vrot.lane.b32.xlu0 %v6362, 88
        %v6479 = vpop.permute.xlu0 %6478
        %6480 = vrot.lane.b32.xlu0 %v6363, 88
        %v6481 = vpop.permute.xlu0 %6480
        %6482 = vrot.lane.b32.xlu0 %v6364, 88
        %v6483 = vpop.permute.xlu0 %6482
        %6484 = vrot.lane.b32.xlu0 %v6365, 88
        %v6485 = vpop.permute.xlu0 %6484
        %6486 = vrot.lane.b32.xlu0 %v6366, 88
        %v6487 = vpop.permute.xlu0 %6486
        %6488 = vrot.lane.b32.xlu0 %v6367, 88
        %v6489 = vpop.permute.xlu0 %6488
        %6490 = vrot.lane.b32.xlu0 %v6368, 88
        %v6491 = vpop.permute.xlu0 %6490
        %6492 = vrot.lane.b32.xlu0 %v6369, 88
        %v6493 = vpop.permute.xlu0 %6492
        %6494 = vrot.lane.b32.xlu0 %v6370, 88
        %v6495 = vpop.permute.xlu0 %6494
        %6496 = vrot.lane.b32.xlu0 %v6371, 88
        %v6497 = vpop.permute.xlu0 %6496
        %6498 = vrot.lane.b32.xlu0 %v6372, 88
        %v6499 = vpop.permute.xlu0 %6498
        %6500 = vrot.lane.b32.xlu0 %v6373, 88
        %v6501 = vpop.permute.xlu0 %6500
        %6502 = vrot.lane.b32.xlu0 %v6374, 88
        %v6503 = vpop.permute.xlu0 %6502
        %6504 = vrot.lane.b32.xlu0 %v6375, 88
        %v6505 = vpop.permute.xlu0 %6504
        %6506 = vrot.lane.b32.xlu0 %v6376, 88
        %v6507 = vpop.permute.xlu0 %6506
        %6508 = vrot.lane.b32.xlu0 %v6377, 88
        %v6509 = vpop.permute.xlu0 %6508
        %6510 = vrot.lane.b32.xlu0 %v6378, 88
        %v6511 = vpop.permute.xlu0 %6510
        %6512 = vrot.lane.b32.xlu0 %v6379, 88
        %v6513 = vpop.permute.xlu0 %6512
        %6514 = vrot.lane.b32.xlu0 %v6380, 88
        %v6515 = vpop.permute.xlu0 %6514
        %6516 = vrot.lane.b32.xlu0 %v6381, 88
        %v6517 = vpop.permute.xlu0 %6516
        %6518 = vrot.lane.b32.xlu0 %v6382, 88
        %v6519 = vpop.permute.xlu0 %6518
        %6520 = vrot.lane.b32.xlu0 %v6383, 88
        %v6521 = vpop.permute.xlu0 %6520
        %6522 = vrot.lane.b32.xlu0 %v6384, 88
        %v6523 = vpop.permute.xlu0 %6522
        %6524 = vrot.lane.b32.xlu0 %v6385, 88
        %v6525 = vpop.permute.xlu0 %6524
        %6526 = vrot.lane.b32.xlu0 %v6386, 88
        %v6527 = vpop.permute.xlu0 %6526
        %6528 = vrot.lane.b32.xlu0 %v6387, 88
        %v6529 = vpop.permute.xlu0 %6528
        %6530 = vrot.lane.b32.xlu0 %v6388, 88
        %v6531 = vpop.permute.xlu0 %6530
        %6532 = vrot.lane.b32.xlu0 %v6389, 88
        %v6533 = vpop.permute.xlu0 %6532
        %vm6582 = vcmask 753344
        %6583 = vst.msk [vmem:[#allocation2] sm:$0xff] %vm6582, %v6439
        %6584 = vst.msk [vmem:[#allocation2 + $0x8] sm:$0xff] %vm6582, %v6441
        %6585 = vst.msk [vmem:[#allocation2 + $0x10] sm:$0xff] %vm6582, %v6443
        %6586 = vst.msk [vmem:[#allocation2 + $0x18] sm:$0xff] %vm6582, %v6445
        %6587 = vst.msk [vmem:[#allocation2 + $0x20] sm:$0xff] %vm6582, %v6447
        %6588 = vst.msk [vmem:[#allocation2 + $0x28] sm:$0xff] %vm6582, %v6449
        %6589 = vst.msk [vmem:[#allocation2 + $0x30] sm:$0xff] %vm6582, %v6451
        %6590 = vst.msk [vmem:[#allocation2 + $0x38] sm:$0xff] %vm6582, %v6453
        %6591 = vst.msk [vmem:[#allocation2 + $0x40] sm:$0xff] %vm6582, %v6455
        %6592 = vst.msk [vmem:[#allocation2 + $0x48] sm:$0xff] %vm6582, %v6457
        %6593 = vst.msk [vmem:[#allocation2 + $0x50] sm:$0xff] %vm6582, %v6459
        %6594 = vst.msk [vmem:[#allocation2 + $0x58] sm:$0xff] %vm6582, %v6461
        %6595 = vst.msk [vmem:[#allocation2 + $0x60] sm:$0xff] %vm6582, %v6463
        %6596 = vst.msk [vmem:[#allocation2 + $0x68] sm:$0xff] %vm6582, %v6465
        %6597 = vst.msk [vmem:[#allocation2 + $0x70] sm:$0xff] %vm6582, %v6467
        %6598 = vst.msk [vmem:[#allocation2 + $0x78] sm:$0xff] %vm6582, %v6469
        %6599 = vst.msk [vmem:[#allocation2 + $0x80] sm:$0xff] %vm6582, %v6471
        %6600 = vst.msk [vmem:[#allocation2 + $0x88] sm:$0xff] %vm6582, %v6473
        %6601 = vst.msk [vmem:[#allocation2 + $0x90] sm:$0xff] %vm6582, %v6475
        %6602 = vst.msk [vmem:[#allocation2 + $0x98] sm:$0xff] %vm6582, %v6477
        %6603 = vst.msk [vmem:[#allocation2 + $0xa0] sm:$0xff] %vm6582, %v6479
        %6604 = vst.msk [vmem:[#allocation2 + $0xa8] sm:$0xff] %vm6582, %v6481
        %6605 = vst.msk [vmem:[#allocation2 + $0xb0] sm:$0xff] %vm6582, %v6483
        %6606 = vst.msk [vmem:[#allocation2 + $0xb8] sm:$0xff] %vm6582, %v6485
        %6607 = vst.msk [vmem:[#allocation2 + $0xc0] sm:$0xff] %vm6582, %v6487
        %6608 = vst.msk [vmem:[#allocation2 + $0xc8] sm:$0xff] %vm6582, %v6489
        %6609 = vst.msk [vmem:[#allocation2 + $0xd0] sm:$0xff] %vm6582, %v6491
        %6610 = vst.msk [vmem:[#allocation2 + $0xd8] sm:$0xff] %vm6582, %v6493
        %6611 = vst.msk [vmem:[#allocation2 + $0xe0] sm:$0xff] %vm6582, %v6495
        %6612 = vst.msk [vmem:[#allocation2 + $0xe8] sm:$0xff] %vm6582, %v6497
        %6613 = vst.msk [vmem:[#allocation2 + $0xf0] sm:$0xff] %vm6582, %v6499
        %6614 = vst.msk [vmem:[#allocation2 + $0xf8] sm:$0xff] %vm6582, %v6501
        %6615 = vst.msk [vmem:[#allocation2 + $0x100] sm:$0xff] %vm6582, %v6503
        %6616 = vst.msk [vmem:[#allocation2 + $0x108] sm:$0xff] %vm6582, %v6505
        %6617 = vst.msk [vmem:[#allocation2 + $0x110] sm:$0xff] %vm6582, %v6507
        %6618 = vst.msk [vmem:[#allocation2 + $0x118] sm:$0xff] %vm6582, %v6509
        %6619 = vst.msk [vmem:[#allocation2 + $0x120] sm:$0xff] %vm6582, %v6511
        %6620 = vst.msk [vmem:[#allocation2 + $0x128] sm:$0xff] %vm6582, %v6513
        %6621 = vst.msk [vmem:[#allocation2 + $0x130] sm:$0xff] %vm6582, %v6515
        %6622 = vst.msk [vmem:[#allocation2 + $0x138] sm:$0xff] %vm6582, %v6517
        %6623 = vst.msk [vmem:[#allocation2 + $0x140] sm:$0xff] %vm6582, %v6519
        %6624 = vst.msk [vmem:[#allocation2 + $0x148] sm:$0xff] %vm6582, %v6521
        %6625 = vst.msk [vmem:[#allocation2 + $0x150] sm:$0xff] %vm6582, %v6523
        %6626 = vst.msk [vmem:[#allocation2 + $0x158] sm:$0xff] %vm6582, %v6525
        %6627 = vst.msk [vmem:[#allocation2 + $0x160] sm:$0xff] %vm6582, %v6527
        %6628 = vst.msk [vmem:[#allocation2 + $0x168] sm:$0xff] %vm6582, %v6529
        %6629 = vst.msk [vmem:[#allocation2 + $0x170] sm:$0xff] %vm6582, %v6531
        %6630 = vst.msk [vmem:[#allocation2 + $0x178] sm:$0xff] %vm6582, %v6533
        %v6631 = vld [vmem:[%s6052 + $0x2] sm:$0xff]
        %v6632 = vld [vmem:[%s6052 + $0x12] sm:$0xff]
        %v6633 = vld [vmem:[%s6052 + $0x22] sm:$0xff]
        %v6634 = vld [vmem:[%s6052 + $0x32] sm:$0xff]
        %v6635 = vld [vmem:[%s6052 + $0x42] sm:$0xff]
        %v6636 = vld [vmem:[%s6052 + $0x52] sm:$0xff]
        %v6637 = vld [vmem:[%s6052 + $0x62] sm:$0xff]
        %v6638 = vld [vmem:[%s6052 + $0x72] sm:$0xff]
        %v6639 = vld [vmem:[%s6052 + $0xa2] sm:$0xff]
        %v6640 = vld [vmem:[%s6052 + $0xb2] sm:$0xff]
        %v6641 = vld [vmem:[%s6052 + $0xc2] sm:$0xff]
        %v6642 = vld [vmem:[%s6052 + $0xd2] sm:$0xff]
        %v6643 = vld [vmem:[%s6052 + $0xe2] sm:$0xff]
        %v6644 = vld [vmem:[%s6052 + $0xf2] sm:$0xff]
        %v6645 = vld [vmem:[%s6052 + $0x102] sm:$0xff]
        %v6646 = vld [vmem:[%s6052 + $0x112] sm:$0xff]
        %v6647 = vld [vmem:[%s6052 + $0x142] sm:$0xff]
        %v6648 = vld [vmem:[%s6052 + $0x152] sm:$0xff]
        %v6649 = vld [vmem:[%s6052 + $0x162] sm:$0xff]
        %v6650 = vld [vmem:[%s6052 + $0x172] sm:$0xff]
        %v6651 = vld [vmem:[%s6052 + $0x182] sm:$0xff]
        %v6652 = vld [vmem:[%s6052 + $0x192] sm:$0xff]
        %v6653 = vld [vmem:[%s6052 + $0x1a2] sm:$0xff]
        %v6654 = vld [vmem:[%s6052 + $0x1b2] sm:$0xff]
        %v6655 = vld [vmem:[%s6052 + $0x1e2] sm:$0xff]
        %v6656 = vld [vmem:[%s6052 + $0x1f2] sm:$0xff]
        %v6657 = vld [vmem:[%s6052 + $0x202] sm:$0xff]
        %v6658 = vld [vmem:[%s6052 + $0x212] sm:$0xff]
        %v6659 = vld [vmem:[%s6052 + $0x222] sm:$0xff]
        %v6660 = vld [vmem:[%s6052 + $0x232] sm:$0xff]
        %v6661 = vld [vmem:[%s6052 + $0x242] sm:$0xff]
        %v6662 = vld [vmem:[%s6052 + $0x252] sm:$0xff]
        %v6663 = vld [vmem:[%s6052 + $0x282] sm:$0xff]
        %v6664 = vld [vmem:[%s6052 + $0x292] sm:$0xff]
        %v6665 = vld [vmem:[%s6052 + $0x2a2] sm:$0xff]
        %v6666 = vld [vmem:[%s6052 + $0x2b2] sm:$0xff]
        %v6667 = vld [vmem:[%s6052 + $0x2c2] sm:$0xff]
        %v6668 = vld [vmem:[%s6052 + $0x2d2] sm:$0xff]
        %v6669 = vld [vmem:[%s6052 + $0x2e2] sm:$0xff]
        %v6670 = vld [vmem:[%s6052 + $0x2f2] sm:$0xff]
        %v6671 = vld [vmem:[%s6052 + $0x322] sm:$0xff]
        %v6672 = vld [vmem:[%s6052 + $0x332] sm:$0xff]
        %v6673 = vld [vmem:[%s6052 + $0x342] sm:$0xff]
        %v6674 = vld [vmem:[%s6052 + $0x352] sm:$0xff]
        %v6675 = vld [vmem:[%s6052 + $0x362] sm:$0xff]
        %v6676 = vld [vmem:[%s6052 + $0x372] sm:$0xff]
        %v6677 = vld [vmem:[%s6052 + $0x382] sm:$0xff]
        %v6678 = vld [vmem:[%s6052 + $0x392] sm:$0xff]
        %6727 = vrot.lane.b32.xlu0 %v6631, 92
        %v6728 = vpop.permute.xlu0 %6727
        %6729 = vrot.lane.b32.xlu0 %v6632, 92
        %v6730 = vpop.permute.xlu0 %6729
        %6731 = vrot.lane.b32.xlu0 %v6633, 92
        %v6732 = vpop.permute.xlu0 %6731
        %6733 = vrot.lane.b32.xlu0 %v6634, 92
        %v6734 = vpop.permute.xlu0 %6733
        %6735 = vrot.lane.b32.xlu0 %v6635, 92
        %v6736 = vpop.permute.xlu0 %6735
        %6737 = vrot.lane.b32.xlu0 %v6636, 92
        %v6738 = vpop.permute.xlu0 %6737
        %6739 = vrot.lane.b32.xlu0 %v6637, 92
        %v6740 = vpop.permute.xlu0 %6739
        %6741 = vrot.lane.b32.xlu0 %v6638, 92
        %v6742 = vpop.permute.xlu0 %6741
        %6743 = vrot.lane.b32.xlu0 %v6639, 92
        %v6744 = vpop.permute.xlu0 %6743
        %6745 = vrot.lane.b32.xlu0 %v6640, 92
        %v6746 = vpop.permute.xlu0 %6745
        %6747 = vrot.lane.b32.xlu0 %v6641, 92
        %v6748 = vpop.permute.xlu0 %6747
        %6749 = vrot.lane.b32.xlu0 %v6642, 92
        %v6750 = vpop.permute.xlu0 %6749
        %6751 = vrot.lane.b32.xlu0 %v6643, 92
        %v6752 = vpop.permute.xlu0 %6751
        %6753 = vrot.lane.b32.xlu0 %v6644, 92
        %v6754 = vpop.permute.xlu0 %6753
        %6755 = vrot.lane.b32.xlu0 %v6645, 92
        %v6756 = vpop.permute.xlu0 %6755
        %6757 = vrot.lane.b32.xlu0 %v6646, 92
        %v6758 = vpop.permute.xlu0 %6757
        %6759 = vrot.lane.b32.xlu0 %v6647, 92
        %v6760 = vpop.permute.xlu0 %6759
        %6761 = vrot.lane.b32.xlu0 %v6648, 92
        %v6762 = vpop.permute.xlu0 %6761
        %6763 = vrot.lane.b32.xlu0 %v6649, 92
        %v6764 = vpop.permute.xlu0 %6763
        %6765 = vrot.lane.b32.xlu0 %v6650, 92
        %v6766 = vpop.permute.xlu0 %6765
        %6767 = vrot.lane.b32.xlu0 %v6651, 92
        %v6768 = vpop.permute.xlu0 %6767
        %6769 = vrot.lane.b32.xlu0 %v6652, 92
        %v6770 = vpop.permute.xlu0 %6769
        %6771 = vrot.lane.b32.xlu0 %v6653, 92
        %v6772 = vpop.permute.xlu0 %6771
        %6773 = vrot.lane.b32.xlu0 %v6654, 92
        %v6774 = vpop.permute.xlu0 %6773
        %6775 = vrot.lane.b32.xlu0 %v6655, 92
        %v6776 = vpop.permute.xlu0 %6775
        %6777 = vrot.lane.b32.xlu0 %v6656, 92
        %v6778 = vpop.permute.xlu0 %6777
        %6779 = vrot.lane.b32.xlu0 %v6657, 92
        %v6780 = vpop.permute.xlu0 %6779
        %6781 = vrot.lane.b32.xlu0 %v6658, 92
        %v6782 = vpop.permute.xlu0 %6781
        %6783 = vrot.lane.b32.xlu0 %v6659, 92
        %v6784 = vpop.permute.xlu0 %6783
        %6785 = vrot.lane.b32.xlu0 %v6660, 92
        %v6786 = vpop.permute.xlu0 %6785
        %6787 = vrot.lane.b32.xlu0 %v6661, 92
        %v6788 = vpop.permute.xlu0 %6787
        %6789 = vrot.lane.b32.xlu0 %v6662, 92
        %v6790 = vpop.permute.xlu0 %6789
        %6791 = vrot.lane.b32.xlu0 %v6663, 92
        %v6792 = vpop.permute.xlu0 %6791
        %6793 = vrot.lane.b32.xlu0 %v6664, 92
        %v6794 = vpop.permute.xlu0 %6793
        %6795 = vrot.lane.b32.xlu0 %v6665, 92
        %v6796 = vpop.permute.xlu0 %6795
        %6797 = vrot.lane.b32.xlu0 %v6666, 92
        %v6798 = vpop.permute.xlu0 %6797
        %6799 = vrot.lane.b32.xlu0 %v6667, 92
        %v6800 = vpop.permute.xlu0 %6799
        %6801 = vrot.lane.b32.xlu0 %v6668, 92
        %v6802 = vpop.permute.xlu0 %6801
        %6803 = vrot.lane.b32.xlu0 %v6669, 92
        %v6804 = vpop.permute.xlu0 %6803
        %6805 = vrot.lane.b32.xlu0 %v6670, 92
        %v6806 = vpop.permute.xlu0 %6805
        %6807 = vrot.lane.b32.xlu0 %v6671, 92
        %v6808 = vpop.permute.xlu0 %6807
        %6809 = vrot.lane.b32.xlu0 %v6672, 92
        %v6810 = vpop.permute.xlu0 %6809
        %6811 = vrot.lane.b32.xlu0 %v6673, 92
        %v6812 = vpop.permute.xlu0 %6811
        %6813 = vrot.lane.b32.xlu0 %v6674, 92
        %v6814 = vpop.permute.xlu0 %6813
        %6815 = vrot.lane.b32.xlu0 %v6675, 92
        %v6816 = vpop.permute.xlu0 %6815
        %6817 = vrot.lane.b32.xlu0 %v6676, 92
        %v6818 = vpop.permute.xlu0 %6817
        %6819 = vrot.lane.b32.xlu0 %v6677, 92
        %v6820 = vpop.permute.xlu0 %6819
        %6821 = vrot.lane.b32.xlu0 %v6678, 92
        %v6822 = vpop.permute.xlu0 %6821
        %vm6871 = vcmask 786144
        %6872 = vst.msk [vmem:[#allocation2] sm:$0xff] %vm6871, %v6728
        %6873 = vst.msk [vmem:[#allocation2 + $0x8] sm:$0xff] %vm6871, %v6730
        %6874 = vst.msk [vmem:[#allocation2 + $0x10] sm:$0xff] %vm6871, %v6732
        %6875 = vst.msk [vmem:[#allocation2 + $0x18] sm:$0xff] %vm6871, %v6734
        %6876 = vst.msk [vmem:[#allocation2 + $0x20] sm:$0xff] %vm6871, %v6736
        %6877 = vst.msk [vmem:[#allocation2 + $0x28] sm:$0xff] %vm6871, %v6738
        %6878 = vst.msk [vmem:[#allocation2 + $0x30] sm:$0xff] %vm6871, %v6740
        %6879 = vst.msk [vmem:[#allocation2 + $0x38] sm:$0xff] %vm6871, %v6742
        %6880 = vst.msk [vmem:[#allocation2 + $0x40] sm:$0xff] %vm6871, %v6744
        %6881 = vst.msk [vmem:[#allocation2 + $0x48] sm:$0xff] %vm6871, %v6746
        %6882 = vst.msk [vmem:[#allocation2 + $0x50] sm:$0xff] %vm6871, %v6748
        %6883 = vst.msk [vmem:[#allocation2 + $0x58] sm:$0xff] %vm6871, %v6750
        %6884 = vst.msk [vmem:[#allocation2 + $0x60] sm:$0xff] %vm6871, %v6752
        %6885 = vst.msk [vmem:[#allocation2 + $0x68] sm:$0xff] %vm6871, %v6754
        %6886 = vst.msk [vmem:[#allocation2 + $0x70] sm:$0xff] %vm6871, %v6756
        %6887 = vst.msk [vmem:[#allocation2 + $0x78] sm:$0xff] %vm6871, %v6758
        %6888 = vst.msk [vmem:[#allocation2 + $0x80] sm:$0xff] %vm6871, %v6760
        %6889 = vst.msk [vmem:[#allocation2 + $0x88] sm:$0xff] %vm6871, %v6762
        %6890 = vst.msk [vmem:[#allocation2 + $0x90] sm:$0xff] %vm6871, %v6764
        %6891 = vst.msk [vmem:[#allocation2 + $0x98] sm:$0xff] %vm6871, %v6766
        %6892 = vst.msk [vmem:[#allocation2 + $0xa0] sm:$0xff] %vm6871, %v6768
        %6893 = vst.msk [vmem:[#allocation2 + $0xa8] sm:$0xff] %vm6871, %v6770
        %6894 = vst.msk [vmem:[#allocation2 + $0xb0] sm:$0xff] %vm6871, %v6772
        %6895 = vst.msk [vmem:[#allocation2 + $0xb8] sm:$0xff] %vm6871, %v6774
        %6896 = vst.msk [vmem:[#allocation2 + $0xc0] sm:$0xff] %vm6871, %v6776
        %6897 = vst.msk [vmem:[#allocation2 + $0xc8] sm:$0xff] %vm6871, %v6778
        %6898 = vst.msk [vmem:[#allocation2 + $0xd0] sm:$0xff] %vm6871, %v6780
        %6899 = vst.msk [vmem:[#allocation2 + $0xd8] sm:$0xff] %vm6871, %v6782
        %6900 = vst.msk [vmem:[#allocation2 + $0xe0] sm:$0xff] %vm6871, %v6784
        %6901 = vst.msk [vmem:[#allocation2 + $0xe8] sm:$0xff] %vm6871, %v6786
        %6902 = vst.msk [vmem:[#allocation2 + $0xf0] sm:$0xff] %vm6871, %v6788
        %6903 = vst.msk [vmem:[#allocation2 + $0xf8] sm:$0xff] %vm6871, %v6790
        %6904 = vst.msk [vmem:[#allocation2 + $0x100] sm:$0xff] %vm6871, %v6792
        %6905 = vst.msk [vmem:[#allocation2 + $0x108] sm:$0xff] %vm6871, %v6794
        %6906 = vst.msk [vmem:[#allocation2 + $0x110] sm:$0xff] %vm6871, %v6796
        %6907 = vst.msk [vmem:[#allocation2 + $0x118] sm:$0xff] %vm6871, %v6798
        %6908 = vst.msk [vmem:[#allocation2 + $0x120] sm:$0xff] %vm6871, %v6800
        %6909 = vst.msk [vmem:[#allocation2 + $0x128] sm:$0xff] %vm6871, %v6802
        %6910 = vst.msk [vmem:[#allocation2 + $0x130] sm:$0xff] %vm6871, %v6804
        %6911 = vst.msk [vmem:[#allocation2 + $0x138] sm:$0xff] %vm6871, %v6806
        %6912 = vst.msk [vmem:[#allocation2 + $0x140] sm:$0xff] %vm6871, %v6808
        %6913 = vst.msk [vmem:[#allocation2 + $0x148] sm:$0xff] %vm6871, %v6810
        %6914 = vst.msk [vmem:[#allocation2 + $0x150] sm:$0xff] %vm6871, %v6812
        %6915 = vst.msk [vmem:[#allocation2 + $0x158] sm:$0xff] %vm6871, %v6814
        %6916 = vst.msk [vmem:[#allocation2 + $0x160] sm:$0xff] %vm6871, %v6816
        %6917 = vst.msk [vmem:[#allocation2 + $0x168] sm:$0xff] %vm6871, %v6818
        %6918 = vst.msk [vmem:[#allocation2 + $0x170] sm:$0xff] %vm6871, %v6820
        %6919 = vst.msk [vmem:[#allocation2 + $0x178] sm:$0xff] %vm6871, %v6822
        %s6920 = sadd.s32 32, %s5182
        %s6921 = scalar_lea.vmem %s155, %s6920
        %v6922 = vld [vmem:[%s6921] sm:$0xff]
        %v6923 = vld [vmem:[%s6921 + $0x10] sm:$0xff]
        %v6924 = vld [vmem:[%s6921 + $0x20] sm:$0xff]
        %v6925 = vld [vmem:[%s6921 + $0x30] sm:$0xff]
        %v6926 = vld [vmem:[%s6921 + $0x40] sm:$0xff]
        %v6927 = vld [vmem:[%s6921 + $0x50] sm:$0xff]
        %v6928 = vld [vmem:[%s6921 + $0x60] sm:$0xff]
        %v6929 = vld [vmem:[%s6921 + $0x70] sm:$0xff]
        %v6930 = vld [vmem:[%s6921 + $0xa0] sm:$0xff]
        %v6931 = vld [vmem:[%s6921 + $0xb0] sm:$0xff]
        %v6932 = vld [vmem:[%s6921 + $0xc0] sm:$0xff]
        %v6933 = vld [vmem:[%s6921 + $0xd0] sm:$0xff]
        %v6934 = vld [vmem:[%s6921 + $0xe0] sm:$0xff]
        %v6935 = vld [vmem:[%s6921 + $0xf0] sm:$0xff]
        %v6936 = vld [vmem:[%s6921 + $0x100] sm:$0xff]
        %v6937 = vld [vmem:[%s6921 + $0x110] sm:$0xff]
        %v6938 = vld [vmem:[%s6921 + $0x140] sm:$0xff]
        %v6939 = vld [vmem:[%s6921 + $0x150] sm:$0xff]
        %v6940 = vld [vmem:[%s6921 + $0x160] sm:$0xff]
        %v6941 = vld [vmem:[%s6921 + $0x170] sm:$0xff]
        %v6942 = vld [vmem:[%s6921 + $0x180] sm:$0xff]
        %v6943 = vld [vmem:[%s6921 + $0x190] sm:$0xff]
        %v6944 = vld [vmem:[%s6921 + $0x1a0] sm:$0xff]
        %v6945 = vld [vmem:[%s6921 + $0x1b0] sm:$0xff]
        %v6946 = vld [vmem:[%s6921 + $0x1e0] sm:$0xff]
        %v6947 = vld [vmem:[%s6921 + $0x1f0] sm:$0xff]
        %v6948 = vld [vmem:[%s6921 + $0x200] sm:$0xff]
        %v6949 = vld [vmem:[%s6921 + $0x210] sm:$0xff]
        %v6950 = vld [vmem:[%s6921 + $0x220] sm:$0xff]
        %v6951 = vld [vmem:[%s6921 + $0x230] sm:$0xff]
        %v6952 = vld [vmem:[%s6921 + $0x240] sm:$0xff]
        %v6953 = vld [vmem:[%s6921 + $0x250] sm:$0xff]
        %v6954 = vld [vmem:[%s6921 + $0x280] sm:$0xff]
        %v6955 = vld [vmem:[%s6921 + $0x290] sm:$0xff]
        %v6956 = vld [vmem:[%s6921 + $0x2a0] sm:$0xff]
        %v6957 = vld [vmem:[%s6921 + $0x2b0] sm:$0xff]
        %v6958 = vld [vmem:[%s6921 + $0x2c0] sm:$0xff]
        %v6959 = vld [vmem:[%s6921 + $0x2d0] sm:$0xff]
        %v6960 = vld [vmem:[%s6921 + $0x2e0] sm:$0xff]
        %v6961 = vld [vmem:[%s6921 + $0x2f0] sm:$0xff]
        %v6962 = vld [vmem:[%s6921 + $0x320] sm:$0xff]
        %v6963 = vld [vmem:[%s6921 + $0x330] sm:$0xff]
        %v6964 = vld [vmem:[%s6921 + $0x340] sm:$0xff]
        %v6965 = vld [vmem:[%s6921 + $0x350] sm:$0xff]
        %v6966 = vld [vmem:[%s6921 + $0x360] sm:$0xff]
        %v6967 = vld [vmem:[%s6921 + $0x370] sm:$0xff]
        %v6968 = vld [vmem:[%s6921 + $0x380] sm:$0xff]
        %v6969 = vld [vmem:[%s6921 + $0x390] sm:$0xff]
        %7018 = vrot.lane.b32.xlu0 %v6922, 96
        %v7019 = vpop.permute.xlu0 %7018
        %7020 = vrot.lane.b32.xlu0 %v6923, 96
        %v7021 = vpop.permute.xlu0 %7020
        %7022 = vrot.lane.b32.xlu0 %v6924, 96
        %v7023 = vpop.permute.xlu0 %7022
        %7024 = vrot.lane.b32.xlu0 %v6925, 96
        %v7025 = vpop.permute.xlu0 %7024
        %7026 = vrot.lane.b32.xlu0 %v6926, 96
        %v7027 = vpop.permute.xlu0 %7026
        %7028 = vrot.lane.b32.xlu0 %v6927, 96
        %v7029 = vpop.permute.xlu0 %7028
        %7030 = vrot.lane.b32.xlu0 %v6928, 96
        %v7031 = vpop.permute.xlu0 %7030
        %7032 = vrot.lane.b32.xlu0 %v6929, 96
        %v7033 = vpop.permute.xlu0 %7032
        %7034 = vrot.lane.b32.xlu0 %v6930, 96
        %v7035 = vpop.permute.xlu0 %7034
        %7036 = vrot.lane.b32.xlu0 %v6931, 96
        %v7037 = vpop.permute.xlu0 %7036
        %7038 = vrot.lane.b32.xlu0 %v6932, 96
        %v7039 = vpop.permute.xlu0 %7038
        %7040 = vrot.lane.b32.xlu0 %v6933, 96
        %v7041 = vpop.permute.xlu0 %7040
        %7042 = vrot.lane.b32.xlu0 %v6934, 96
        %v7043 = vpop.permute.xlu0 %7042
        %7044 = vrot.lane.b32.xlu0 %v6935, 96
        %v7045 = vpop.permute.xlu0 %7044
        %7046 = vrot.lane.b32.xlu0 %v6936, 96
        %v7047 = vpop.permute.xlu0 %7046
        %7048 = vrot.lane.b32.xlu0 %v6937, 96
        %v7049 = vpop.permute.xlu0 %7048
        %7050 = vrot.lane.b32.xlu0 %v6938, 96
        %v7051 = vpop.permute.xlu0 %7050
        %7052 = vrot.lane.b32.xlu0 %v6939, 96
        %v7053 = vpop.permute.xlu0 %7052
        %7054 = vrot.lane.b32.xlu0 %v6940, 96
        %v7055 = vpop.permute.xlu0 %7054
        %7056 = vrot.lane.b32.xlu0 %v6941, 96
        %v7057 = vpop.permute.xlu0 %7056
        %7058 = vrot.lane.b32.xlu0 %v6942, 96
        %v7059 = vpop.permute.xlu0 %7058
        %7060 = vrot.lane.b32.xlu0 %v6943, 96
        %v7061 = vpop.permute.xlu0 %7060
        %7062 = vrot.lane.b32.xlu0 %v6944, 96
        %v7063 = vpop.permute.xlu0 %7062
        %7064 = vrot.lane.b32.xlu0 %v6945, 96
        %v7065 = vpop.permute.xlu0 %7064
        %7066 = vrot.lane.b32.xlu0 %v6946, 96
        %v7067 = vpop.permute.xlu0 %7066
        %7068 = vrot.lane.b32.xlu0 %v6947, 96
        %v7069 = vpop.permute.xlu0 %7068
        %7070 = vrot.lane.b32.xlu0 %v6948, 96
        %v7071 = vpop.permute.xlu0 %7070
        %7072 = vrot.lane.b32.xlu0 %v6949, 96
        %v7073 = vpop.permute.xlu0 %7072
        %7074 = vrot.lane.b32.xlu0 %v6950, 96
        %v7075 = vpop.permute.xlu0 %7074
        %7076 = vrot.lane.b32.xlu0 %v6951, 96
        %v7077 = vpop.permute.xlu0 %7076
        %7078 = vrot.lane.b32.xlu0 %v6952, 96
        %v7079 = vpop.permute.xlu0 %7078
        %7080 = vrot.lane.b32.xlu0 %v6953, 96
        %v7081 = vpop.permute.xlu0 %7080
        %7082 = vrot.lane.b32.xlu0 %v6954, 96
        %v7083 = vpop.permute.xlu0 %7082
        %7084 = vrot.lane.b32.xlu0 %v6955, 96
        %v7085 = vpop.permute.xlu0 %7084
        %7086 = vrot.lane.b32.xlu0 %v6956, 96
        %v7087 = vpop.permute.xlu0 %7086
        %7088 = vrot.lane.b32.xlu0 %v6957, 96
        %v7089 = vpop.permute.xlu0 %7088
        %7090 = vrot.lane.b32.xlu0 %v6958, 96
        %v7091 = vpop.permute.xlu0 %7090
        %7092 = vrot.lane.b32.xlu0 %v6959, 96
        %v7093 = vpop.permute.xlu0 %7092
        %7094 = vrot.lane.b32.xlu0 %v6960, 96
        %v7095 = vpop.permute.xlu0 %7094
        %7096 = vrot.lane.b32.xlu0 %v6961, 96
        %v7097 = vpop.permute.xlu0 %7096
        %7098 = vrot.lane.b32.xlu0 %v6962, 96
        %v7099 = vpop.permute.xlu0 %7098
        %7100 = vrot.lane.b32.xlu0 %v6963, 96
        %v7101 = vpop.permute.xlu0 %7100
        %7102 = vrot.lane.b32.xlu0 %v6964, 96
        %v7103 = vpop.permute.xlu0 %7102
        %7104 = vrot.lane.b32.xlu0 %v6965, 96
        %v7105 = vpop.permute.xlu0 %7104
        %7106 = vrot.lane.b32.xlu0 %v6966, 96
        %v7107 = vpop.permute.xlu0 %7106
        %7108 = vrot.lane.b32.xlu0 %v6967, 96
        %v7109 = vpop.permute.xlu0 %7108
        %7110 = vrot.lane.b32.xlu0 %v6968, 96
        %v7111 = vpop.permute.xlu0 %7110
        %7112 = vrot.lane.b32.xlu0 %v6969, 96
        %v7113 = vpop.permute.xlu0 %7112
        %vm7162 = vcmask 818944
        %7163 = vst.msk [vmem:[#allocation2] sm:$0xff] %vm7162, %v7019
        %7164 = vst.msk [vmem:[#allocation2 + $0x8] sm:$0xff] %vm7162, %v7021
        %7165 = vst.msk [vmem:[#allocation2 + $0x10] sm:$0xff] %vm7162, %v7023
        %7166 = vst.msk [vmem:[#allocation2 + $0x18] sm:$0xff] %vm7162, %v7025
        %7167 = vst.msk [vmem:[#allocation2 + $0x20] sm:$0xff] %vm7162, %v7027
        %7168 = vst.msk [vmem:[#allocation2 + $0x28] sm:$0xff] %vm7162, %v7029
        %7169 = vst.msk [vmem:[#allocation2 + $0x30] sm:$0xff] %vm7162, %v7031
        %7170 = vst.msk [vmem:[#allocation2 + $0x38] sm:$0xff] %vm7162, %v7033
        %7171 = vst.msk [vmem:[#allocation2 + $0x40] sm:$0xff] %vm7162, %v7035
        %7172 = vst.msk [vmem:[#allocation2 + $0x48] sm:$0xff] %vm7162, %v7037
        %7173 = vst.msk [vmem:[#allocation2 + $0x50] sm:$0xff] %vm7162, %v7039
        %7174 = vst.msk [vmem:[#allocation2 + $0x58] sm:$0xff] %vm7162, %v7041
        %7175 = vst.msk [vmem:[#allocation2 + $0x60] sm:$0xff] %vm7162, %v7043
        %7176 = vst.msk [vmem:[#allocation2 + $0x68] sm:$0xff] %vm7162, %v7045
        %7177 = vst.msk [vmem:[#allocation2 + $0x70] sm:$0xff] %vm7162, %v7047
        %7178 = vst.msk [vmem:[#allocation2 + $0x78] sm:$0xff] %vm7162, %v7049
        %7179 = vst.msk [vmem:[#allocation2 + $0x80] sm:$0xff] %vm7162, %v7051
        %7180 = vst.msk [vmem:[#allocation2 + $0x88] sm:$0xff] %vm7162, %v7053
        %7181 = vst.msk [vmem:[#allocation2 + $0x90] sm:$0xff] %vm7162, %v7055
        %7182 = vst.msk [vmem:[#allocation2 + $0x98] sm:$0xff] %vm7162, %v7057
        %7183 = vst.msk [vmem:[#allocation2 + $0xa0] sm:$0xff] %vm7162, %v7059
        %7184 = vst.msk [vmem:[#allocation2 + $0xa8] sm:$0xff] %vm7162, %v7061
        %7185 = vst.msk [vmem:[#allocation2 + $0xb0] sm:$0xff] %vm7162, %v7063
        %7186 = vst.msk [vmem:[#allocation2 + $0xb8] sm:$0xff] %vm7162, %v7065
        %7187 = vst.msk [vmem:[#allocation2 + $0xc0] sm:$0xff] %vm7162, %v7067
        %7188 = vst.msk [vmem:[#allocation2 + $0xc8] sm:$0xff] %vm7162, %v7069
        %7189 = vst.msk [vmem:[#allocation2 + $0xd0] sm:$0xff] %vm7162, %v7071
        %7190 = vst.msk [vmem:[#allocation2 + $0xd8] sm:$0xff] %vm7162, %v7073
        %7191 = vst.msk [vmem:[#allocation2 + $0xe0] sm:$0xff] %vm7162, %v7075
        %7192 = vst.msk [vmem:[#allocation2 + $0xe8] sm:$0xff] %vm7162, %v7077
        %7193 = vst.msk [vmem:[#allocation2 + $0xf0] sm:$0xff] %vm7162, %v7079
        %7194 = vst.msk [vmem:[#allocation2 + $0xf8] sm:$0xff] %vm7162, %v7081
        %7195 = vst.msk [vmem:[#allocation2 + $0x100] sm:$0xff] %vm7162, %v7083
        %7196 = vst.msk [vmem:[#allocation2 + $0x108] sm:$0xff] %vm7162, %v7085
        %7197 = vst.msk [vmem:[#allocation2 + $0x110] sm:$0xff] %vm7162, %v7087
        %7198 = vst.msk [vmem:[#allocation2 + $0x118] sm:$0xff] %vm7162, %v7089
        %7199 = vst.msk [vmem:[#allocation2 + $0x120] sm:$0xff] %vm7162, %v7091
        %7200 = vst.msk [vmem:[#allocation2 + $0x128] sm:$0xff] %vm7162, %v7093
        %7201 = vst.msk [vmem:[#allocation2 + $0x130] sm:$0xff] %vm7162, %v7095
        %7202 = vst.msk [vmem:[#allocation2 + $0x138] sm:$0xff] %vm7162, %v7097
        %7203 = vst.msk [vmem:[#allocation2 + $0x140] sm:$0xff] %vm7162, %v7099
        %7204 = vst.msk [vmem:[#allocation2 + $0x148] sm:$0xff] %vm7162, %v7101
        %7205 = vst.msk [vmem:[#allocation2 + $0x150] sm:$0xff] %vm7162, %v7103
        %7206 = vst.msk [vmem:[#allocation2 + $0x158] sm:$0xff] %vm7162, %v7105
        %7207 = vst.msk [vmem:[#allocation2 + $0x160] sm:$0xff] %vm7162, %v7107
        %7208 = vst.msk [vmem:[#allocation2 + $0x168] sm:$0xff] %vm7162, %v7109
        %7209 = vst.msk [vmem:[#allocation2 + $0x170] sm:$0xff] %vm7162, %v7111
        %7210 = vst.msk [vmem:[#allocation2 + $0x178] sm:$0xff] %vm7162, %v7113
        %v7211 = vld [vmem:[%s6921 + $0x1] sm:$0xff]
        %v7212 = vld [vmem:[%s6921 + $0x11] sm:$0xff]
        %v7213 = vld [vmem:[%s6921 + $0x21] sm:$0xff]
        %v7214 = vld [vmem:[%s6921 + $0x31] sm:$0xff]
        %v7215 = vld [vmem:[%s6921 + $0x41] sm:$0xff]
        %v7216 = vld [vmem:[%s6921 + $0x51] sm:$0xff]
        %v7217 = vld [vmem:[%s6921 + $0x61] sm:$0xff]
        %v7218 = vld [vmem:[%s6921 + $0x71] sm:$0xff]
        %v7219 = vld [vmem:[%s6921 + $0xa1] sm:$0xff]
        %v7220 = vld [vmem:[%s6921 + $0xb1] sm:$0xff]
        %v7221 = vld [vmem:[%s6921 + $0xc1] sm:$0xff]
        %v7222 = vld [vmem:[%s6921 + $0xd1] sm:$0xff]
        %v7223 = vld [vmem:[%s6921 + $0xe1] sm:$0xff]
        %v7224 = vld [vmem:[%s6921 + $0xf1] sm:$0xff]
        %v7225 = vld [vmem:[%s6921 + $0x101] sm:$0xff]
        %v7226 = vld [vmem:[%s6921 + $0x111] sm:$0xff]
        %v7227 = vld [vmem:[%s6921 + $0x141] sm:$0xff]
        %v7228 = vld [vmem:[%s6921 + $0x151] sm:$0xff]
        %v7229 = vld [vmem:[%s6921 + $0x161] sm:$0xff]
        %v7230 = vld [vmem:[%s6921 + $0x171] sm:$0xff]
        %v7231 = vld [vmem:[%s6921 + $0x181] sm:$0xff]
        %v7232 = vld [vmem:[%s6921 + $0x191] sm:$0xff]
        %v7233 = vld [vmem:[%s6921 + $0x1a1] sm:$0xff]
        %v7234 = vld [vmem:[%s6921 + $0x1b1] sm:$0xff]
        %v7235 = vld [vmem:[%s6921 + $0x1e1] sm:$0xff]
        %v7236 = vld [vmem:[%s6921 + $0x1f1] sm:$0xff]
        %v7237 = vld [vmem:[%s6921 + $0x201] sm:$0xff]
        %v7238 = vld [vmem:[%s6921 + $0x211] sm:$0xff]
        %v7239 = vld [vmem:[%s6921 + $0x221] sm:$0xff]
        %v7240 = vld [vmem:[%s6921 + $0x231] sm:$0xff]
        %v7241 = vld [vmem:[%s6921 + $0x241] sm:$0xff]
        %v7242 = vld [vmem:[%s6921 + $0x251] sm:$0xff]
        %v7243 = vld [vmem:[%s6921 + $0x281] sm:$0xff]
        %v7244 = vld [vmem:[%s6921 + $0x291] sm:$0xff]
        %v7245 = vld [vmem:[%s6921 + $0x2a1] sm:$0xff]
        %v7246 = vld [vmem:[%s6921 + $0x2b1] sm:$0xff]
        %v7247 = vld [vmem:[%s6921 + $0x2c1] sm:$0xff]
        %v7248 = vld [vmem:[%s6921 + $0x2d1] sm:$0xff]
        %v7249 = vld [vmem:[%s6921 + $0x2e1] sm:$0xff]
        %v7250 = vld [vmem:[%s6921 + $0x2f1] sm:$0xff]
        %v7251 = vld [vmem:[%s6921 + $0x321] sm:$0xff]
        %v7252 = vld [vmem:[%s6921 + $0x331] sm:$0xff]
        %v7253 = vld [vmem:[%s6921 + $0x341] sm:$0xff]
        %v7254 = vld [vmem:[%s6921 + $0x351] sm:$0xff]
        %v7255 = vld [vmem:[%s6921 + $0x361] sm:$0xff]
        %v7256 = vld [vmem:[%s6921 + $0x371] sm:$0xff]
        %v7257 = vld [vmem:[%s6921 + $0x381] sm:$0xff]
        %v7258 = vld [vmem:[%s6921 + $0x391] sm:$0xff]
        %7307 = vrot.lane.b32.xlu0 %v7211, 100
        %v7308 = vpop.permute.xlu0 %7307
        %7309 = vrot.lane.b32.xlu0 %v7212, 100
        %v7310 = vpop.permute.xlu0 %7309
        %7311 = vrot.lane.b32.xlu0 %v7213, 100
        %v7312 = vpop.permute.xlu0 %7311
        %7313 = vrot.lane.b32.xlu0 %v7214, 100
        %v7314 = vpop.permute.xlu0 %7313
        %7315 = vrot.lane.b32.xlu0 %v7215, 100
        %v7316 = vpop.permute.xlu0 %7315
        %7317 = vrot.lane.b32.xlu0 %v7216, 100
        %v7318 = vpop.permute.xlu0 %7317
        %7319 = vrot.lane.b32.xlu0 %v7217, 100
        %v7320 = vpop.permute.xlu0 %7319
        %7321 = vrot.lane.b32.xlu0 %v7218, 100
        %v7322 = vpop.permute.xlu0 %7321
        %7323 = vrot.lane.b32.xlu0 %v7219, 100
        %v7324 = vpop.permute.xlu0 %7323
        %7325 = vrot.lane.b32.xlu0 %v7220, 100
        %v7326 = vpop.permute.xlu0 %7325
        %7327 = vrot.lane.b32.xlu0 %v7221, 100
        %v7328 = vpop.permute.xlu0 %7327
        %7329 = vrot.lane.b32.xlu0 %v7222, 100
        %v7330 = vpop.permute.xlu0 %7329
        %7331 = vrot.lane.b32.xlu0 %v7223, 100
        %v7332 = vpop.permute.xlu0 %7331
        %7333 = vrot.lane.b32.xlu0 %v7224, 100
        %v7334 = vpop.permute.xlu0 %7333
        %7335 = vrot.lane.b32.xlu0 %v7225, 100
        %v7336 = vpop.permute.xlu0 %7335
        %7337 = vrot.lane.b32.xlu0 %v7226, 100
        %v7338 = vpop.permute.xlu0 %7337
        %7339 = vrot.lane.b32.xlu0 %v7227, 100
        %v7340 = vpop.permute.xlu0 %7339
        %7341 = vrot.lane.b32.xlu0 %v7228, 100
        %v7342 = vpop.permute.xlu0 %7341
        %7343 = vrot.lane.b32.xlu0 %v7229, 100
        %v7344 = vpop.permute.xlu0 %7343
        %7345 = vrot.lane.b32.xlu0 %v7230, 100
        %v7346 = vpop.permute.xlu0 %7345
        %7347 = vrot.lane.b32.xlu0 %v7231, 100
        %v7348 = vpop.permute.xlu0 %7347
        %7349 = vrot.lane.b32.xlu0 %v7232, 100
        %v7350 = vpop.permute.xlu0 %7349
        %7351 = vrot.lane.b32.xlu0 %v7233, 100
        %v7352 = vpop.permute.xlu0 %7351
        %7353 = vrot.lane.b32.xlu0 %v7234, 100
        %v7354 = vpop.permute.xlu0 %7353
        %7355 = vrot.lane.b32.xlu0 %v7235, 100
        %v7356 = vpop.permute.xlu0 %7355
        %7357 = vrot.lane.b32.xlu0 %v7236, 100
        %v7358 = vpop.permute.xlu0 %7357
        %7359 = vrot.lane.b32.xlu0 %v7237, 100
        %v7360 = vpop.permute.xlu0 %7359
        %7361 = vrot.lane.b32.xlu0 %v7238, 100
        %v7362 = vpop.permute.xlu0 %7361
        %7363 = vrot.lane.b32.xlu0 %v7239, 100
        %v7364 = vpop.permute.xlu0 %7363
        %7365 = vrot.lane.b32.xlu0 %v7240, 100
        %v7366 = vpop.permute.xlu0 %7365
        %7367 = vrot.lane.b32.xlu0 %v7241, 100
        %v7368 = vpop.permute.xlu0 %7367
        %7369 = vrot.lane.b32.xlu0 %v7242, 100
        %v7370 = vpop.permute.xlu0 %7369
        %7371 = vrot.lane.b32.xlu0 %v7243, 100
        %v7372 = vpop.permute.xlu0 %7371
        %7373 = vrot.lane.b32.xlu0 %v7244, 100
        %v7374 = vpop.permute.xlu0 %7373
        %7375 = vrot.lane.b32.xlu0 %v7245, 100
        %v7376 = vpop.permute.xlu0 %7375
        %7377 = vrot.lane.b32.xlu0 %v7246, 100
        %v7378 = vpop.permute.xlu0 %7377
        %7379 = vrot.lane.b32.xlu0 %v7247, 100
        %v7380 = vpop.permute.xlu0 %7379
        %7381 = vrot.lane.b32.xlu0 %v7248, 100
        %v7382 = vpop.permute.xlu0 %7381
        %7383 = vrot.lane.b32.xlu0 %v7249, 100
        %v7384 = vpop.permute.xlu0 %7383
        %7385 = vrot.lane.b32.xlu0 %v7250, 100
        %v7386 = vpop.permute.xlu0 %7385
        %7387 = vrot.lane.b32.xlu0 %v7251, 100
        %v7388 = vpop.permute.xlu0 %7387
        %7389 = vrot.lane.b32.xlu0 %v7252, 100
        %v7390 = vpop.permute.xlu0 %7389
        %7391 = vrot.lane.b32.xlu0 %v7253, 100
        %v7392 = vpop.permute.xlu0 %7391
        %7393 = vrot.lane.b32.xlu0 %v7254, 100
        %v7394 = vpop.permute.xlu0 %7393
        %7395 = vrot.lane.b32.xlu0 %v7255, 100
        %v7396 = vpop.permute.xlu0 %7395
        %7397 = vrot.lane.b32.xlu0 %v7256, 100
        %v7398 = vpop.permute.xlu0 %7397
        %7399 = vrot.lane.b32.xlu0 %v7257, 100
        %v7400 = vpop.permute.xlu0 %7399
        %7401 = vrot.lane.b32.xlu0 %v7258, 100
        %v7402 = vpop.permute.xlu0 %7401
        %vm7451 = vcmask 851744
        %7452 = vst.msk [vmem:[#allocation2] sm:$0xff] %vm7451, %v7308
        %7453 = vst.msk [vmem:[#allocation2 + $0x8] sm:$0xff] %vm7451, %v7310
        %7454 = vst.msk [vmem:[#allocation2 + $0x10] sm:$0xff] %vm7451, %v7312
        %7455 = vst.msk [vmem:[#allocation2 + $0x18] sm:$0xff] %vm7451, %v7314
        %7456 = vst.msk [vmem:[#allocation2 + $0x20] sm:$0xff] %vm7451, %v7316
        %7457 = vst.msk [vmem:[#allocation2 + $0x28] sm:$0xff] %vm7451, %v7318
        %7458 = vst.msk [vmem:[#allocation2 + $0x30] sm:$0xff] %vm7451, %v7320
        %7459 = vst.msk [vmem:[#allocation2 + $0x38] sm:$0xff] %vm7451, %v7322
        %7460 = vst.msk [vmem:[#allocation2 + $0x40] sm:$0xff] %vm7451, %v7324
        %7461 = vst.msk [vmem:[#allocation2 + $0x48] sm:$0xff] %vm7451, %v7326
        %7462 = vst.msk [vmem:[#allocation2 + $0x50] sm:$0xff] %vm7451, %v7328
        %7463 = vst.msk [vmem:[#allocation2 + $0x58] sm:$0xff] %vm7451, %v7330
        %7464 = vst.msk [vmem:[#allocation2 + $0x60] sm:$0xff] %vm7451, %v7332
        %7465 = vst.msk [vmem:[#allocation2 + $0x68] sm:$0xff] %vm7451, %v7334
        %7466 = vst.msk [vmem:[#allocation2 + $0x70] sm:$0xff] %vm7451, %v7336
        %7467 = vst.msk [vmem:[#allocation2 + $0x78] sm:$0xff] %vm7451, %v7338
        %7468 = vst.msk [vmem:[#allocation2 + $0x80] sm:$0xff] %vm7451, %v7340
        %7469 = vst.msk [vmem:[#allocation2 + $0x88] sm:$0xff] %vm7451, %v7342
        %7470 = vst.msk [vmem:[#allocation2 + $0x90] sm:$0xff] %vm7451, %v7344
        %7471 = vst.msk [vmem:[#allocation2 + $0x98] sm:$0xff] %vm7451, %v7346
        %7472 = vst.msk [vmem:[#allocation2 + $0xa0] sm:$0xff] %vm7451, %v7348
        %7473 = vst.msk [vmem:[#allocation2 + $0xa8] sm:$0xff] %vm7451, %v7350
        %7474 = vst.msk [vmem:[#allocation2 + $0xb0] sm:$0xff] %vm7451, %v7352
        %7475 = vst.msk [vmem:[#allocation2 + $0xb8] sm:$0xff] %vm7451, %v7354
        %7476 = vst.msk [vmem:[#allocation2 + $0xc0] sm:$0xff] %vm7451, %v7356
        %7477 = vst.msk [vmem:[#allocation2 + $0xc8] sm:$0xff] %vm7451, %v7358
        %7478 = vst.msk [vmem:[#allocation2 + $0xd0] sm:$0xff] %vm7451, %v7360
        %7479 = vst.msk [vmem:[#allocation2 + $0xd8] sm:$0xff] %vm7451, %v7362
        %7480 = vst.msk [vmem:[#allocation2 + $0xe0] sm:$0xff] %vm7451, %v7364
        %7481 = vst.msk [vmem:[#allocation2 + $0xe8] sm:$0xff] %vm7451, %v7366
        %7482 = vst.msk [vmem:[#allocation2 + $0xf0] sm:$0xff] %vm7451, %v7368
        %7483 = vst.msk [vmem:[#allocation2 + $0xf8] sm:$0xff] %vm7451, %v7370
        %7484 = vst.msk [vmem:[#allocation2 + $0x100] sm:$0xff] %vm7451, %v7372
        %7485 = vst.msk [vmem:[#allocation2 + $0x108] sm:$0xff] %vm7451, %v7374
        %7486 = vst.msk [vmem:[#allocation2 + $0x110] sm:$0xff] %vm7451, %v7376
        %7487 = vst.msk [vmem:[#allocation2 + $0x118] sm:$0xff] %vm7451, %v7378
        %7488 = vst.msk [vmem:[#allocation2 + $0x120] sm:$0xff] %vm7451, %v7380
        %7489 = vst.msk [vmem:[#allocation2 + $0x128] sm:$0xff] %vm7451, %v7382
        %7490 = vst.msk [vmem:[#allocation2 + $0x130] sm:$0xff] %vm7451, %v7384
        %7491 = vst.msk [vmem:[#allocation2 + $0x138] sm:$0xff] %vm7451, %v7386
        %7492 = vst.msk [vmem:[#allocation2 + $0x140] sm:$0xff] %vm7451, %v7388
        %7493 = vst.msk [vmem:[#allocation2 + $0x148] sm:$0xff] %vm7451, %v7390
        %7494 = vst.msk [vmem:[#allocation2 + $0x150] sm:$0xff] %vm7451, %v7392
        %7495 = vst.msk [vmem:[#allocation2 + $0x158] sm:$0xff] %vm7451, %v7394
        %7496 = vst.msk [vmem:[#allocation2 + $0x160] sm:$0xff] %vm7451, %v7396
        %7497 = vst.msk [vmem:[#allocation2 + $0x168] sm:$0xff] %vm7451, %v7398
        %7498 = vst.msk [vmem:[#allocation2 + $0x170] sm:$0xff] %vm7451, %v7400
        %7499 = vst.msk [vmem:[#allocation2 + $0x178] sm:$0xff] %vm7451, %v7402
        %v7500 = vld [vmem:[%s6921 + $0x2] sm:$0xff]
        %v7501 = vld [vmem:[%s6921 + $0x12] sm:$0xff]
        %v7502 = vld [vmem:[%s6921 + $0x22] sm:$0xff]
        %v7503 = vld [vmem:[%s6921 + $0x32] sm:$0xff]
        %v7504 = vld [vmem:[%s6921 + $0x42] sm:$0xff]
        %v7505 = vld [vmem:[%s6921 + $0x52] sm:$0xff]
        %v7506 = vld [vmem:[%s6921 + $0x62] sm:$0xff]
        %v7507 = vld [vmem:[%s6921 + $0x72] sm:$0xff]
        %v7508 = vld [vmem:[%s6921 + $0xa2] sm:$0xff]
        %v7509 = vld [vmem:[%s6921 + $0xb2] sm:$0xff]
        %v7510 = vld [vmem:[%s6921 + $0xc2] sm:$0xff]
        %v7511 = vld [vmem:[%s6921 + $0xd2] sm:$0xff]
        %v7512 = vld [vmem:[%s6921 + $0xe2] sm:$0xff]
        %v7513 = vld [vmem:[%s6921 + $0xf2] sm:$0xff]
        %v7514 = vld [vmem:[%s6921 + $0x102] sm:$0xff]
        %v7515 = vld [vmem:[%s6921 + $0x112] sm:$0xff]
        %v7516 = vld [vmem:[%s6921 + $0x142] sm:$0xff]
        %v7517 = vld [vmem:[%s6921 + $0x152] sm:$0xff]
        %v7518 = vld [vmem:[%s6921 + $0x162] sm:$0xff]
        %v7519 = vld [vmem:[%s6921 + $0x172] sm:$0xff]
        %v7520 = vld [vmem:[%s6921 + $0x182] sm:$0xff]
        %v7521 = vld [vmem:[%s6921 + $0x192] sm:$0xff]
        %v7522 = vld [vmem:[%s6921 + $0x1a2] sm:$0xff]
        %v7523 = vld [vmem:[%s6921 + $0x1b2] sm:$0xff]
        %v7524 = vld [vmem:[%s6921 + $0x1e2] sm:$0xff]
        %v7525 = vld [vmem:[%s6921 + $0x1f2] sm:$0xff]
        %v7526 = vld [vmem:[%s6921 + $0x202] sm:$0xff]
        %v7527 = vld [vmem:[%s6921 + $0x212] sm:$0xff]
        %v7528 = vld [vmem:[%s6921 + $0x222] sm:$0xff]
        %v7529 = vld [vmem:[%s6921 + $0x232] sm:$0xff]
        %v7530 = vld [vmem:[%s6921 + $0x242] sm:$0xff]
        %v7531 = vld [vmem:[%s6921 + $0x252] sm:$0xff]
        %v7532 = vld [vmem:[%s6921 + $0x282] sm:$0xff]
        %v7533 = vld [vmem:[%s6921 + $0x292] sm:$0xff]
        %v7534 = vld [vmem:[%s6921 + $0x2a2] sm:$0xff]
        %v7535 = vld [vmem:[%s6921 + $0x2b2] sm:$0xff]
        %v7536 = vld [vmem:[%s6921 + $0x2c2] sm:$0xff]
        %v7537 = vld [vmem:[%s6921 + $0x2d2] sm:$0xff]
        %v7538 = vld [vmem:[%s6921 + $0x2e2] sm:$0xff]
        %v7539 = vld [vmem:[%s6921 + $0x2f2] sm:$0xff]
        %v7540 = vld [vmem:[%s6921 + $0x322] sm:$0xff]
        %v7541 = vld [vmem:[%s6921 + $0x332] sm:$0xff]
        %v7542 = vld [vmem:[%s6921 + $0x342] sm:$0xff]
        %v7543 = vld [vmem:[%s6921 + $0x352] sm:$0xff]
        %v7544 = vld [vmem:[%s6921 + $0x362] sm:$0xff]
        %v7545 = vld [vmem:[%s6921 + $0x372] sm:$0xff]
        %v7546 = vld [vmem:[%s6921 + $0x382] sm:$0xff]
        %v7547 = vld [vmem:[%s6921 + $0x392] sm:$0xff]
        %7596 = vrot.lane.b32.xlu0 %v7500, 104
        %v7597 = vpop.permute.xlu0 %7596
        %7598 = vrot.lane.b32.xlu0 %v7501, 104
        %v7599 = vpop.permute.xlu0 %7598
        %7600 = vrot.lane.b32.xlu0 %v7502, 104
        %v7601 = vpop.permute.xlu0 %7600
        %7602 = vrot.lane.b32.xlu0 %v7503, 104
        %v7603 = vpop.permute.xlu0 %7602
        %7604 = vrot.lane.b32.xlu0 %v7504, 104
        %v7605 = vpop.permute.xlu0 %7604
        %7606 = vrot.lane.b32.xlu0 %v7505, 104
        %v7607 = vpop.permute.xlu0 %7606
        %7608 = vrot.lane.b32.xlu0 %v7506, 104
        %v7609 = vpop.permute.xlu0 %7608
        %7610 = vrot.lane.b32.xlu0 %v7507, 104
        %v7611 = vpop.permute.xlu0 %7610
        %7612 = vrot.lane.b32.xlu0 %v7508, 104
        %v7613 = vpop.permute.xlu0 %7612
        %7614 = vrot.lane.b32.xlu0 %v7509, 104
        %v7615 = vpop.permute.xlu0 %7614
        %7616 = vrot.lane.b32.xlu0 %v7510, 104
        %v7617 = vpop.permute.xlu0 %7616
        %7618 = vrot.lane.b32.xlu0 %v7511, 104
        %v7619 = vpop.permute.xlu0 %7618
        %7620 = vrot.lane.b32.xlu0 %v7512, 104
        %v7621 = vpop.permute.xlu0 %7620
        %7622 = vrot.lane.b32.xlu0 %v7513, 104
        %v7623 = vpop.permute.xlu0 %7622
        %7624 = vrot.lane.b32.xlu0 %v7514, 104
        %v7625 = vpop.permute.xlu0 %7624
        %7626 = vrot.lane.b32.xlu0 %v7515, 104
        %v7627 = vpop.permute.xlu0 %7626
        %7628 = vrot.lane.b32.xlu0 %v7516, 104
        %v7629 = vpop.permute.xlu0 %7628
        %7630 = vrot.lane.b32.xlu0 %v7517, 104
        %v7631 = vpop.permute.xlu0 %7630
        %7632 = vrot.lane.b32.xlu0 %v7518, 104
        %v7633 = vpop.permute.xlu0 %7632
        %7634 = vrot.lane.b32.xlu0 %v7519, 104
        %v7635 = vpop.permute.xlu0 %7634
        %7636 = vrot.lane.b32.xlu0 %v7520, 104
        %v7637 = vpop.permute.xlu0 %7636
        %7638 = vrot.lane.b32.xlu0 %v7521, 104
        %v7639 = vpop.permute.xlu0 %7638
        %7640 = vrot.lane.b32.xlu0 %v7522, 104
        %v7641 = vpop.permute.xlu0 %7640
        %7642 = vrot.lane.b32.xlu0 %v7523, 104
        %v7643 = vpop.permute.xlu0 %7642
        %7644 = vrot.lane.b32.xlu0 %v7524, 104
        %v7645 = vpop.permute.xlu0 %7644
        %7646 = vrot.lane.b32.xlu0 %v7525, 104
        %v7647 = vpop.permute.xlu0 %7646
        %7648 = vrot.lane.b32.xlu0 %v7526, 104
        %v7649 = vpop.permute.xlu0 %7648
        %7650 = vrot.lane.b32.xlu0 %v7527, 104
        %v7651 = vpop.permute.xlu0 %7650
        %7652 = vrot.lane.b32.xlu0 %v7528, 104
        %v7653 = vpop.permute.xlu0 %7652
        %7654 = vrot.lane.b32.xlu0 %v7529, 104
        %v7655 = vpop.permute.xlu0 %7654
        %7656 = vrot.lane.b32.xlu0 %v7530, 104
        %v7657 = vpop.permute.xlu0 %7656
        %7658 = vrot.lane.b32.xlu0 %v7531, 104
        %v7659 = vpop.permute.xlu0 %7658
        %7660 = vrot.lane.b32.xlu0 %v7532, 104
        %v7661 = vpop.permute.xlu0 %7660
        %7662 = vrot.lane.b32.xlu0 %v7533, 104
        %v7663 = vpop.permute.xlu0 %7662
        %7664 = vrot.lane.b32.xlu0 %v7534, 104
        %v7665 = vpop.permute.xlu0 %7664
        %7666 = vrot.lane.b32.xlu0 %v7535, 104
        %v7667 = vpop.permute.xlu0 %7666
        %7668 = vrot.lane.b32.xlu0 %v7536, 104
        %v7669 = vpop.permute.xlu0 %7668
        %7670 = vrot.lane.b32.xlu0 %v7537, 104
        %v7671 = vpop.permute.xlu0 %7670
        %7672 = vrot.lane.b32.xlu0 %v7538, 104
        %v7673 = vpop.permute.xlu0 %7672
        %7674 = vrot.lane.b32.xlu0 %v7539, 104
        %v7675 = vpop.permute.xlu0 %7674
        %7676 = vrot.lane.b32.xlu0 %v7540, 104
        %v7677 = vpop.permute.xlu0 %7676
        %7678 = vrot.lane.b32.xlu0 %v7541, 104
        %v7679 = vpop.permute.xlu0 %7678
        %7680 = vrot.lane.b32.xlu0 %v7542, 104
        %v7681 = vpop.permute.xlu0 %7680
        %7682 = vrot.lane.b32.xlu0 %v7543, 104
        %v7683 = vpop.permute.xlu0 %7682
        %7684 = vrot.lane.b32.xlu0 %v7544, 104
        %v7685 = vpop.permute.xlu0 %7684
        %7686 = vrot.lane.b32.xlu0 %v7545, 104
        %v7687 = vpop.permute.xlu0 %7686
        %7688 = vrot.lane.b32.xlu0 %v7546, 104
        %v7689 = vpop.permute.xlu0 %7688
        %7690 = vrot.lane.b32.xlu0 %v7547, 104
        %v7691 = vpop.permute.xlu0 %7690
        %vm7740 = vcmask 884544
        %7741 = vst.msk [vmem:[#allocation2] sm:$0xff] %vm7740, %v7597
        %7742 = vst.msk [vmem:[#allocation2 + $0x8] sm:$0xff] %vm7740, %v7599
        %7743 = vst.msk [vmem:[#allocation2 + $0x10] sm:$0xff] %vm7740, %v7601
        %7744 = vst.msk [vmem:[#allocation2 + $0x18] sm:$0xff] %vm7740, %v7603
        %7745 = vst.msk [vmem:[#allocation2 + $0x20] sm:$0xff] %vm7740, %v7605
        %7746 = vst.msk [vmem:[#allocation2 + $0x28] sm:$0xff] %vm7740, %v7607
        %7747 = vst.msk [vmem:[#allocation2 + $0x30] sm:$0xff] %vm7740, %v7609
        %7748 = vst.msk [vmem:[#allocation2 + $0x38] sm:$0xff] %vm7740, %v7611
        %7749 = vst.msk [vmem:[#allocation2 + $0x40] sm:$0xff] %vm7740, %v7613
        %7750 = vst.msk [vmem:[#allocation2 + $0x48] sm:$0xff] %vm7740, %v7615
        %7751 = vst.msk [vmem:[#allocation2 + $0x50] sm:$0xff] %vm7740, %v7617
        %7752 = vst.msk [vmem:[#allocation2 + $0x58] sm:$0xff] %vm7740, %v7619
        %7753 = vst.msk [vmem:[#allocation2 + $0x60] sm:$0xff] %vm7740, %v7621
        %7754 = vst.msk [vmem:[#allocation2 + $0x68] sm:$0xff] %vm7740, %v7623
        %7755 = vst.msk [vmem:[#allocation2 + $0x70] sm:$0xff] %vm7740, %v7625
        %7756 = vst.msk [vmem:[#allocation2 + $0x78] sm:$0xff] %vm7740, %v7627
        %7757 = vst.msk [vmem:[#allocation2 + $0x80] sm:$0xff] %vm7740, %v7629
        %7758 = vst.msk [vmem:[#allocation2 + $0x88] sm:$0xff] %vm7740, %v7631
        %7759 = vst.msk [vmem:[#allocation2 + $0x90] sm:$0xff] %vm7740, %v7633
        %7760 = vst.msk [vmem:[#allocation2 + $0x98] sm:$0xff] %vm7740, %v7635
        %7761 = vst.msk [vmem:[#allocation2 + $0xa0] sm:$0xff] %vm7740, %v7637
        %7762 = vst.msk [vmem:[#allocation2 + $0xa8] sm:$0xff] %vm7740, %v7639
        %7763 = vst.msk [vmem:[#allocation2 + $0xb0] sm:$0xff] %vm7740, %v7641
        %7764 = vst.msk [vmem:[#allocation2 + $0xb8] sm:$0xff] %vm7740, %v7643
        %7765 = vst.msk [vmem:[#allocation2 + $0xc0] sm:$0xff] %vm7740, %v7645
        %7766 = vst.msk [vmem:[#allocation2 + $0xc8] sm:$0xff] %vm7740, %v7647
        %7767 = vst.msk [vmem:[#allocation2 + $0xd0] sm:$0xff] %vm7740, %v7649
        %7768 = vst.msk [vmem:[#allocation2 + $0xd8] sm:$0xff] %vm7740, %v7651
        %7769 = vst.msk [vmem:[#allocation2 + $0xe0] sm:$0xff] %vm7740, %v7653
        %7770 = vst.msk [vmem:[#allocation2 + $0xe8] sm:$0xff] %vm7740, %v7655
        %7771 = vst.msk [vmem:[#allocation2 + $0xf0] sm:$0xff] %vm7740, %v7657
        %7772 = vst.msk [vmem:[#allocation2 + $0xf8] sm:$0xff] %vm7740, %v7659
        %7773 = vst.msk [vmem:[#allocation2 + $0x100] sm:$0xff] %vm7740, %v7661
        %7774 = vst.msk [vmem:[#allocation2 + $0x108] sm:$0xff] %vm7740, %v7663
        %7775 = vst.msk [vmem:[#allocation2 + $0x110] sm:$0xff] %vm7740, %v7665
        %7776 = vst.msk [vmem:[#allocation2 + $0x118] sm:$0xff] %vm7740, %v7667
        %7777 = vst.msk [vmem:[#allocation2 + $0x120] sm:$0xff] %vm7740, %v7669
        %7778 = vst.msk [vmem:[#allocation2 + $0x128] sm:$0xff] %vm7740, %v7671
        %7779 = vst.msk [vmem:[#allocation2 + $0x130] sm:$0xff] %vm7740, %v7673
        %7780 = vst.msk [vmem:[#allocation2 + $0x138] sm:$0xff] %vm7740, %v7675
        %7781 = vst.msk [vmem:[#allocation2 + $0x140] sm:$0xff] %vm7740, %v7677
        %7782 = vst.msk [vmem:[#allocation2 + $0x148] sm:$0xff] %vm7740, %v7679
        %7783 = vst.msk [vmem:[#allocation2 + $0x150] sm:$0xff] %vm7740, %v7681
        %7784 = vst.msk [vmem:[#allocation2 + $0x158] sm:$0xff] %vm7740, %v7683
        %7785 = vst.msk [vmem:[#allocation2 + $0x160] sm:$0xff] %vm7740, %v7685
        %7786 = vst.msk [vmem:[#allocation2 + $0x168] sm:$0xff] %vm7740, %v7687
        %7787 = vst.msk [vmem:[#allocation2 + $0x170] sm:$0xff] %vm7740, %v7689
        %7788 = vst.msk [vmem:[#allocation2 + $0x178] sm:$0xff] %vm7740, %v7691
        %v7789 = vld [vmem:[#allocation2] sm:$0xff]
        %v7790 = vld [vmem:[#allocation2 + $0x8] sm:$0xff]
        %v7791 = vld [vmem:[#allocation2 + $0x10] sm:$0xff]
        %v7792 = vld [vmem:[#allocation2 + $0x18] sm:$0xff]
        %v7793 = vld [vmem:[#allocation2 + $0x20] sm:$0xff]
        %v7794 = vld [vmem:[#allocation2 + $0x28] sm:$0xff]
        %v7795 = vld [vmem:[#allocation2 + $0x30] sm:$0xff]
        %v7796 = vld [vmem:[#allocation2 + $0x38] sm:$0xff]
        %v7797 = vld [vmem:[#allocation2 + $0x40] sm:$0xff]
        %v7798 = vld [vmem:[#allocation2 + $0x48] sm:$0xff]
        %v7799 = vld [vmem:[#allocation2 + $0x50] sm:$0xff]
        %v7800 = vld [vmem:[#allocation2 + $0x58] sm:$0xff]
        %v7801 = vld [vmem:[#allocation2 + $0x60] sm:$0xff]
        %v7802 = vld [vmem:[#allocation2 + $0x68] sm:$0xff]
        %v7803 = vld [vmem:[#allocation2 + $0x70] sm:$0xff]
        %v7804 = vld [vmem:[#allocation2 + $0x78] sm:$0xff]
        %v7805 = vld [vmem:[#allocation2 + $0x80] sm:$0xff]
        %v7806 = vld [vmem:[#allocation2 + $0x88] sm:$0xff]
        %v7807 = vld [vmem:[#allocation2 + $0x90] sm:$0xff]
        %v7808 = vld [vmem:[#allocation2 + $0x98] sm:$0xff]
        %v7809 = vld [vmem:[#allocation2 + $0xa0] sm:$0xff]
        %v7810 = vld [vmem:[#allocation2 + $0xa8] sm:$0xff]
        %v7811 = vld [vmem:[#allocation2 + $0xb0] sm:$0xff]
        %v7812 = vld [vmem:[#allocation2 + $0xb8] sm:$0xff]
        %v7813 = vld [vmem:[#allocation2 + $0xc0] sm:$0xff]
        %v7814 = vld [vmem:[#allocation2 + $0xc8] sm:$0xff]
        %v7815 = vld [vmem:[#allocation2 + $0xd0] sm:$0xff]
        %v7816 = vld [vmem:[#allocation2 + $0xd8] sm:$0xff]
        %v7817 = vld [vmem:[#allocation2 + $0xe0] sm:$0xff]
        %v7818 = vld [vmem:[#allocation2 + $0xe8] sm:$0xff]
        %v7819 = vld [vmem:[#allocation2 + $0xf0] sm:$0xff]
        %v7820 = vld [vmem:[#allocation2 + $0xf8] sm:$0xff]
        %v7821 = vld [vmem:[#allocation2 + $0x100] sm:$0xff]
        %v7822 = vld [vmem:[#allocation2 + $0x108] sm:$0xff]
        %v7823 = vld [vmem:[#allocation2 + $0x110] sm:$0xff]
        %v7824 = vld [vmem:[#allocation2 + $0x118] sm:$0xff]
        %v7825 = vld [vmem:[#allocation2 + $0x120] sm:$0xff]
        %v7826 = vld [vmem:[#allocation2 + $0x128] sm:$0xff]
        %v7827 = vld [vmem:[#allocation2 + $0x130] sm:$0xff]
        %v7828 = vld [vmem:[#allocation2 + $0x138] sm:$0xff]
        %v7829 = vld [vmem:[#allocation2 + $0x140] sm:$0xff]
        %v7830 = vld [vmem:[#allocation2 + $0x148] sm:$0xff]
        %v7831 = vld [vmem:[#allocation2 + $0x150] sm:$0xff]
        %v7832 = vld [vmem:[#allocation2 + $0x158] sm:$0xff]
        %v7833 = vld [vmem:[#allocation2 + $0x160] sm:$0xff]
        %v7834 = vld [vmem:[#allocation2 + $0x168] sm:$0xff]
        %v7835 = vld [vmem:[#allocation2 + $0x170] sm:$0xff]
        %v7836 = vld [vmem:[#allocation2 + $0x178] sm:$0xff]
        %v7837 = vld [vmem:[%s1] sm:$0xff]
        %v7838 = vld [vmem:[%s1 + $0x8] sm:$0xff]
        %v7839 = vld [vmem:[%s1 + $0x10] sm:$0xff]
        %v7840 = vld [vmem:[%s1 + $0x18] sm:$0xff]
        %v7841 = vld [vmem:[%s1 + $0x20] sm:$0xff]
        %v7842 = vld [vmem:[%s1 + $0x28] sm:$0xff]
        %v7843 = vld [vmem:[%s1 + $0x30] sm:$0xff]
        %v7844 = vld [vmem:[%s1 + $0x38] sm:$0xff]
        %v7845 = vld [vmem:[%s1 + $0x40] sm:$0xff]
        %v7846 = vld [vmem:[%s1 + $0x48] sm:$0xff]
        %v7847 = vld [vmem:[%s1 + $0x50] sm:$0xff]
        %v7848 = vld [vmem:[%s1 + $0x58] sm:$0xff]
        %v7849 = vld [vmem:[%s1 + $0x60] sm:$0xff]
        %v7850 = vld [vmem:[%s1 + $0x68] sm:$0xf]
        %vm7851 = vcmask 883712
        %v7853 = vsel %vm7851, %v7789, 0
        %v7856 = vsel %vm7851, %v7790, 0
        %v7859 = vsel %vm7851, %v7791, 0
        %v7862 = vsel %vm7851, %v7792, 0
        %v7865 = vsel %vm7851, %v7793, 0
        %v7868 = vsel %vm7851, %v7794, 0
        %v7871 = vsel %vm7851, %v7795, 0
        %v7874 = vsel %vm7851, %v7796, 0
        %v7877 = vsel %vm7851, %v7797, 0
        %v7880 = vsel %vm7851, %v7798, 0
        %v7883 = vsel %vm7851, %v7799, 0
        %v7886 = vsel %vm7851, %v7800, 0
        %v7889 = vsel %vm7851, %v7801, 0
        %v7892 = vsel %vm7851, %v7802, 0
        %v7895 = vsel %vm7851, %v7803, 0
        %v7898 = vsel %vm7851, %v7804, 0
        %v7901 = vsel %vm7851, %v7805, 0
        %v7904 = vsel %vm7851, %v7806, 0
        %v7907 = vsel %vm7851, %v7807, 0
        %v7910 = vsel %vm7851, %v7808, 0
        %v7913 = vsel %vm7851, %v7809, 0
        %v7916 = vsel %vm7851, %v7810, 0
        %v7919 = vsel %vm7851, %v7811, 0
        %v7922 = vsel %vm7851, %v7812, 0
        %v7925 = vsel %vm7851, %v7813, 0
        %v7928 = vsel %vm7851, %v7814, 0
        %v7931 = vsel %vm7851, %v7815, 0
        %v7934 = vsel %vm7851, %v7816, 0
        %v7937 = vsel %vm7851, %v7817, 0
        %v7940 = vsel %vm7851, %v7818, 0
        %v7943 = vsel %vm7851, %v7819, 0
        %v7946 = vsel %vm7851, %v7820, 0
        %v7949 = vsel %vm7851, %v7821, 0
        %v7952 = vsel %vm7851, %v7822, 0
        %v7955 = vsel %vm7851, %v7823, 0
        %v7958 = vsel %vm7851, %v7824, 0
        %v7961 = vsel %vm7851, %v7825, 0
        %v7964 = vsel %vm7851, %v7826, 0
        %v7967 = vsel %vm7851, %v7827, 0
        %v7970 = vsel %vm7851, %v7828, 0
        %v7973 = vsel %vm7851, %v7829, 0
        %v7976 = vsel %vm7851, %v7830, 0
        %v7979 = vsel %vm7851, %v7831, 0
        %v7982 = vsel %vm7851, %v7832, 0
        %v7985 = vsel %vm7851, %v7833, 0
        %v7988 = vsel %vm7851, %v7834, 0
        %v7991 = vsel %vm7851, %v7835, 0
        %v7994 = vsel %vm7851, %v7836, 0
        %vm7996 = vcmask 1043456
        %v7998 = vsel %vm7996, %v7850, 0
        %8000 = vmatprep.subr.mxu0 0.0
        %8001 = vmatpush1.msra.mxu0 0.0
        %8002 = vmatprep.subr.mxu0 0.0
        %8003 = vmatpush1.msra.mxu0 0.0
        %8004 = vmatprep.subr.mxu0 0.0
        %8005 = vmatpush1.msra.mxu0 %v7998
        %8006 = vmatprep.subr.mxu0 0.0
        %8007 = vmatpush1.msra.mxu0 %v7849
        %8008 = vmatprep.subr.mxu0 0.0
        %8009 = vmatpush1.msra.mxu0 %v7848
        %8010 = vmatprep.subr.mxu0 0.0
        %8011 = vmatpush1.msra.mxu0 %v7847
        %8012 = vmatprep.subr.mxu0 0.0
        %8013 = vmatpush1.msra.mxu0 %v7846
        %8014 = vmatprep.subr.mxu0 0.0
        %8015 = vmatpush1.msra.mxu0 %v7845
        %8016 = vmatprep.subr.mxu0 0.0
        %8017 = vmatpush1.msra.mxu0 %v7844
        %8018 = vmatprep.subr.mxu0 0.0
        %8019 = vmatpush1.msra.mxu0 %v7843
        %8020 = vmatprep.subr.mxu0 0.0
        %8021 = vmatpush1.msra.mxu0 %v7842
        %8022 = vmatprep.subr.mxu0 0.0
        %8023 = vmatpush1.msra.mxu0 %v7841
        %8024 = vmatprep.subr.mxu0 0.0
        %8025 = vmatpush1.msra.mxu0 %v7840
        %8026 = vmatprep.subr.mxu0 0.0
        %8027 = vmatpush1.msra.mxu0 %v7839
        %8028 = vmatprep.subr.mxu0 0.0
        %8029 = vmatpush1.msra.mxu0 %v7838
        %8030 = vmatprep.subr.mxu0 0.0
        %8031 = vmatpush1.msra.mxu0 %v7837
        %8032 = vmatprep.subr.mxu0 0.0
        %8033 = vmatpush2.msra.mxu0 0.0
        %8034 = vmatprep.subr.mxu0 0.0
        %8035 = vmatpush2.msra.mxu0 0.0
        %8036 = vmatprep.subr.mxu0 0.0
        %8037 = vmatpush2.msra.mxu0 0.0
        %8038 = vmatprep.subr.mxu0 0.0
        %8039 = vmatpush2.msra.mxu0 0.0
        %8040 = vmatprep.subr.mxu0 0.0
        %8041 = vmatpush2.msra.mxu0 0.0
        %8042 = vmatprep.subr.mxu0 0.0
        %8043 = vmatpush2.msra.mxu0 0.0
        %8044 = vmatprep.subr.mxu0 0.0
        %8045 = vmatpush2.msra.mxu0 0.0
        %8046 = vmatprep.subr.mxu0 0.0
        %8047 = vmatpush2.msra.mxu0 0.0
        %8048 = vmatprep.subr.mxu0 0.0
        %8049 = vmatpush2.msra.mxu0 0.0
        %8050 = vmatprep.subr.mxu0 0.0
        %8051 = vmatpush2.msra.mxu0 0.0
        %8052 = vmatprep.subr.mxu0 0.0
        %8053 = vmatpush2.msra.mxu0 0.0
        %8054 = vmatprep.subr.mxu0 0.0
        %8055 = vmatpush2.msra.mxu0 0.0
        %8056 = vmatprep.subr.mxu0 0.0
        %8057 = vmatpush2.msra.mxu0 0.0
        %8058 = vmatprep.subr.mxu0 0.0
        %8059 = vmatpush2.msra.mxu0 0.0
        %8060 = vmatprep.subr.mxu0 0.0
        %8061 = vmatpush2.msra.mxu0 0.0
        %8062 = vmatprep.subr.mxu0 0.0
        %8063 = vmatpush2.msra.mxu0 0.0
        %8064 = vmatprep.mubr.f32.mxu0 0.0
        %8065 = vmatmul.mubr.f32.gmra.mxu0 %v7853
        %v8066 = vpop.f32.mrf.mxu0
        %v8067 = vadd.f32 0.0, %v8066
        %v8068 = vpop.f32.mrf.mxu0
        %8069 = vmatprep.mubr.f32.mxu0 0.0
        %8070 = vmatmul.mubr.f32.gmra.mxu0 %v7856
        %v8071 = vpop.f32.mrf.mxu0
        %v8072 = vadd.f32 0.0, %v8071
        %v8073 = vpop.f32.mrf.mxu0
        %8074 = vmatprep.mubr.f32.mxu0 0.0
        %8075 = vmatmul.mubr.f32.gmra.mxu0 %v7859
        %v8076 = vpop.f32.mrf.mxu0
        %v8077 = vadd.f32 0.0, %v8076
        %v8078 = vpop.f32.mrf.mxu0
        %8079 = vmatprep.mubr.f32.mxu0 0.0
        %8080 = vmatmul.mubr.f32.gmra.mxu0 %v7862
        %v8081 = vpop.f32.mrf.mxu0
        %v8082 = vadd.f32 0.0, %v8081
        %v8083 = vpop.f32.mrf.mxu0
        %8084 = vmatprep.mubr.f32.mxu0 0.0
        %8085 = vmatmul.mubr.f32.gmra.mxu0 %v7865
        %v8086 = vpop.f32.mrf.mxu0
        %v8087 = vadd.f32 0.0, %v8086
        %v8088 = vpop.f32.mrf.mxu0
        %8089 = vmatprep.mubr.f32.mxu0 0.0
        %8090 = vmatmul.mubr.f32.gmra.mxu0 %v7868
        %v8091 = vpop.f32.mrf.mxu0
        %v8092 = vadd.f32 0.0, %v8091
        %v8093 = vpop.f32.mrf.mxu0
        %8094 = vmatprep.mubr.f32.mxu0 0.0
        %8095 = vmatmul.mubr.f32.gmra.mxu0 %v7871
        %v8096 = vpop.f32.mrf.mxu0
        %v8097 = vadd.f32 0.0, %v8096
        %v8098 = vpop.f32.mrf.mxu0
        %8099 = vmatprep.mubr.f32.mxu0 0.0
        %8100 = vmatmul.mubr.f32.gmra.mxu0 %v7874
        %v8101 = vpop.f32.mrf.mxu0
        %v8102 = vadd.f32 0.0, %v8101
        %v8103 = vpop.f32.mrf.mxu0
        %8104 = vmatprep.mubr.f32.mxu0 0.0
        %8105 = vmatmul.mubr.f32.gmra.mxu0 %v7877
        %v8106 = vpop.f32.mrf.mxu0
        %v8107 = vadd.f32 0.0, %v8106
        %v8108 = vpop.f32.mrf.mxu0
        %8109 = vmatprep.mubr.f32.mxu0 0.0
        %8110 = vmatmul.mubr.f32.gmra.mxu0 %v7880
        %v8111 = vpop.f32.mrf.mxu0
        %v8112 = vadd.f32 0.0, %v8111
        %v8113 = vpop.f32.mrf.mxu0
        %8114 = vmatprep.mubr.f32.mxu0 0.0
        %8115 = vmatmul.mubr.f32.gmra.mxu0 %v7883
        %v8116 = vpop.f32.mrf.mxu0
        %v8117 = vadd.f32 0.0, %v8116
        %v8118 = vpop.f32.mrf.mxu0
        %8119 = vmatprep.mubr.f32.mxu0 0.0
        %8120 = vmatmul.mubr.f32.gmra.mxu0 %v7886
        %v8121 = vpop.f32.mrf.mxu0
        %v8122 = vadd.f32 0.0, %v8121
        %v8123 = vpop.f32.mrf.mxu0
        %8124 = vmatprep.mubr.f32.mxu0 0.0
        %8125 = vmatmul.mubr.f32.gmra.mxu0 %v7889
        %v8126 = vpop.f32.mrf.mxu0
        %v8127 = vadd.f32 0.0, %v8126
        %v8128 = vpop.f32.mrf.mxu0
        %8129 = vmatprep.mubr.f32.mxu0 0.0
        %8130 = vmatmul.mubr.f32.gmra.mxu0 %v7892
        %v8131 = vpop.f32.mrf.mxu0
        %v8132 = vadd.f32 0.0, %v8131
        %v8133 = vpop.f32.mrf.mxu0
        %8134 = vmatprep.mubr.f32.mxu0 0.0
        %8135 = vmatmul.mubr.f32.gmra.mxu0 %v7895
        %v8136 = vpop.f32.mrf.mxu0
        %v8137 = vadd.f32 0.0, %v8136
        %v8138 = vpop.f32.mrf.mxu0
        %8139 = vmatprep.mubr.f32.mxu0 0.0
        %8140 = vmatmul.mubr.f32.gmra.mxu0 %v7898
        %v8141 = vpop.f32.mrf.mxu0
        %v8142 = vadd.f32 0.0, %v8141
        %v8143 = vpop.f32.mrf.mxu0
        %8144 = vmatprep.mubr.f32.mxu0 0.0
        %8145 = vmatmul.mubr.f32.gmra.mxu0 %v7901
        %v8146 = vpop.f32.mrf.mxu0
        %v8147 = vadd.f32 0.0, %v8146
        %v8148 = vpop.f32.mrf.mxu0
        %8149 = vmatprep.mubr.f32.mxu0 0.0
        %8150 = vmatmul.mubr.f32.gmra.mxu0 %v7904
        %v8151 = vpop.f32.mrf.mxu0
        %v8152 = vadd.f32 0.0, %v8151
        %v8153 = vpop.f32.mrf.mxu0
        %8154 = vmatprep.mubr.f32.mxu0 0.0
        %8155 = vmatmul.mubr.f32.gmra.mxu0 %v7907
        %v8156 = vpop.f32.mrf.mxu0
        %v8157 = vadd.f32 0.0, %v8156
        %v8158 = vpop.f32.mrf.mxu0
        %8159 = vmatprep.mubr.f32.mxu0 0.0
        %8160 = vmatmul.mubr.f32.gmra.mxu0 %v7910
        %v8161 = vpop.f32.mrf.mxu0
        %v8162 = vadd.f32 0.0, %v8161
        %v8163 = vpop.f32.mrf.mxu0
        %8164 = vmatprep.mubr.f32.mxu0 0.0
        %8165 = vmatmul.mubr.f32.gmra.mxu0 %v7913
        %v8166 = vpop.f32.mrf.mxu0
        %v8167 = vadd.f32 0.0, %v8166
        %v8168 = vpop.f32.mrf.mxu0
        %8169 = vmatprep.mubr.f32.mxu0 0.0
        %8170 = vmatmul.mubr.f32.gmra.mxu0 %v7916
        %v8171 = vpop.f32.mrf.mxu0
        %v8172 = vadd.f32 0.0, %v8171
        %v8173 = vpop.f32.mrf.mxu0
        %8174 = vmatprep.mubr.f32.mxu0 0.0
        %8175 = vmatmul.mubr.f32.gmra.mxu0 %v7919
        %v8176 = vpop.f32.mrf.mxu0
        %v8177 = vadd.f32 0.0, %v8176
        %v8178 = vpop.f32.mrf.mxu0
        %8179 = vmatprep.mubr.f32.mxu0 0.0
        %8180 = vmatmul.mubr.f32.gmra.mxu0 %v7922
        %v8181 = vpop.f32.mrf.mxu0
        %v8182 = vadd.f32 0.0, %v8181
        %v8183 = vpop.f32.mrf.mxu0
        %8184 = vmatprep.mubr.f32.mxu0 0.0
        %8185 = vmatmul.mubr.f32.gmra.mxu0 %v7925
        %v8186 = vpop.f32.mrf.mxu0
        %v8187 = vadd.f32 0.0, %v8186
        %v8188 = vpop.f32.mrf.mxu0
        %8189 = vmatprep.mubr.f32.mxu0 0.0
        %8190 = vmatmul.mubr.f32.gmra.mxu0 %v7928
        %v8191 = vpop.f32.mrf.mxu0
        %v8192 = vadd.f32 0.0, %v8191
        %v8193 = vpop.f32.mrf.mxu0
        %8194 = vmatprep.mubr.f32.mxu0 0.0
        %8195 = vmatmul.mubr.f32.gmra.mxu0 %v7931
        %v8196 = vpop.f32.mrf.mxu0
        %v8197 = vadd.f32 0.0, %v8196
        %v8198 = vpop.f32.mrf.mxu0
        %8199 = vmatprep.mubr.f32.mxu0 0.0
        %8200 = vmatmul.mubr.f32.gmra.mxu0 %v7934
        %v8201 = vpop.f32.mrf.mxu0
        %v8202 = vadd.f32 0.0, %v8201
        %v8203 = vpop.f32.mrf.mxu0
        %8204 = vmatprep.mubr.f32.mxu0 0.0
        %8205 = vmatmul.mubr.f32.gmra.mxu0 %v7937
        %v8206 = vpop.f32.mrf.mxu0
        %v8207 = vadd.f32 0.0, %v8206
        %v8208 = vpop.f32.mrf.mxu0
        %8209 = vmatprep.mubr.f32.mxu0 0.0
        %8210 = vmatmul.mubr.f32.gmra.mxu0 %v7940
        %v8211 = vpop.f32.mrf.mxu0
        %v8212 = vadd.f32 0.0, %v8211
        %v8213 = vpop.f32.mrf.mxu0
        %8214 = vmatprep.mubr.f32.mxu0 0.0
        %8215 = vmatmul.mubr.f32.gmra.mxu0 %v7943
        %v8216 = vpop.f32.mrf.mxu0
        %v8217 = vadd.f32 0.0, %v8216
        %v8218 = vpop.f32.mrf.mxu0
        %8219 = vmatprep.mubr.f32.mxu0 0.0
        %8220 = vmatmul.mubr.f32.gmra.mxu0 %v7946
        %v8221 = vpop.f32.mrf.mxu0
        %v8222 = vadd.f32 0.0, %v8221
        %v8223 = vpop.f32.mrf.mxu0
        %8224 = vmatprep.mubr.f32.mxu0 0.0
        %8225 = vmatmul.mubr.f32.gmra.mxu0 %v7949
        %v8226 = vpop.f32.mrf.mxu0
        %v8227 = vadd.f32 0.0, %v8226
        %v8228 = vpop.f32.mrf.mxu0
        %8229 = vmatprep.mubr.f32.mxu0 0.0
        %8230 = vmatmul.mubr.f32.gmra.mxu0 %v7952
        %v8231 = vpop.f32.mrf.mxu0
        %v8232 = vadd.f32 0.0, %v8231
        %v8233 = vpop.f32.mrf.mxu0
        %8234 = vmatprep.mubr.f32.mxu0 0.0
        %8235 = vmatmul.mubr.f32.gmra.mxu0 %v7955
        %v8236 = vpop.f32.mrf.mxu0
        %v8237 = vadd.f32 0.0, %v8236
        %v8238 = vpop.f32.mrf.mxu0
        %8239 = vmatprep.mubr.f32.mxu0 0.0
        %8240 = vmatmul.mubr.f32.gmra.mxu0 %v7958
        %v8241 = vpop.f32.mrf.mxu0
        %v8242 = vadd.f32 0.0, %v8241
        %v8243 = vpop.f32.mrf.mxu0
        %8244 = vmatprep.mubr.f32.mxu0 0.0
        %8245 = vmatmul.mubr.f32.gmra.mxu0 %v7961
        %v8246 = vpop.f32.mrf.mxu0
        %v8247 = vadd.f32 0.0, %v8246
        %v8248 = vpop.f32.mrf.mxu0
        %8249 = vmatprep.mubr.f32.mxu0 0.0
        %8250 = vmatmul.mubr.f32.gmra.mxu0 %v7964
        %v8251 = vpop.f32.mrf.mxu0
        %v8252 = vadd.f32 0.0, %v8251
        %v8253 = vpop.f32.mrf.mxu0
        %8254 = vmatprep.mubr.f32.mxu0 0.0
        %8255 = vmatmul.mubr.f32.gmra.mxu0 %v7967
        %v8256 = vpop.f32.mrf.mxu0
        %v8257 = vadd.f32 0.0, %v8256
        %v8258 = vpop.f32.mrf.mxu0
        %8259 = vmatprep.mubr.f32.mxu0 0.0
        %8260 = vmatmul.mubr.f32.gmra.mxu0 %v7970
        %v8261 = vpop.f32.mrf.mxu0
        %v8262 = vadd.f32 0.0, %v8261
        %v8263 = vpop.f32.mrf.mxu0
        %8264 = vmatprep.mubr.f32.mxu0 0.0
        %8265 = vmatmul.mubr.f32.gmra.mxu0 %v7973
        %v8266 = vpop.f32.mrf.mxu0
        %v8267 = vadd.f32 0.0, %v8266
        %v8268 = vpop.f32.mrf.mxu0
        %8269 = vmatprep.mubr.f32.mxu0 0.0
        %8270 = vmatmul.mubr.f32.gmra.mxu0 %v7976
        %v8271 = vpop.f32.mrf.mxu0
        %v8272 = vadd.f32 0.0, %v8271
        %v8273 = vpop.f32.mrf.mxu0
        %8274 = vmatprep.mubr.f32.mxu0 0.0
        %8275 = vmatmul.mubr.f32.gmra.mxu0 %v7979
        %v8276 = vpop.f32.mrf.mxu0
        %v8277 = vadd.f32 0.0, %v8276
        %v8278 = vpop.f32.mrf.mxu0
        %8279 = vmatprep.mubr.f32.mxu0 0.0
        %8280 = vmatmul.mubr.f32.gmra.mxu0 %v7982
        %v8281 = vpop.f32.mrf.mxu0
        %v8282 = vadd.f32 0.0, %v8281
        %v8283 = vpop.f32.mrf.mxu0
        %8284 = vmatprep.mubr.f32.mxu0 0.0
        %8285 = vmatmul.mubr.f32.gmra.mxu0 %v7985
        %v8286 = vpop.f32.mrf.mxu0
        %v8287 = vadd.f32 0.0, %v8286
        %v8288 = vpop.f32.mrf.mxu0
        %8289 = vmatprep.mubr.f32.mxu0 0.0
        %8290 = vmatmul.mubr.f32.gmra.mxu0 %v7988
        %v8291 = vpop.f32.mrf.mxu0
        %v8292 = vadd.f32 0.0, %v8291
        %v8293 = vpop.f32.mrf.mxu0
        %8294 = vmatprep.mubr.f32.mxu0 0.0
        %8295 = vmatmul.mubr.f32.gmra.mxu0 %v7991
        %v8296 = vpop.f32.mrf.mxu0
        %v8297 = vadd.f32 0.0, %v8296
        %v8298 = vpop.f32.mrf.mxu0
        %8299 = vmatprep.mubr.f32.mxu0 0.0
        %8300 = vmatmul.mubr.f32.gmra.mxu0 %v7994
        %v8301 = vpop.f32.mrf.mxu0
        %v8302 = vadd.f32 0.0, %v8301
        %v8303 = vpop.f32.mrf.mxu0
        %8304 = vdwg.mxu0
        %8305 = vst [vmem:[%s150] sm:$0xff] %v8067
        %8306 = vst [vmem:[%s150 + $0x8] sm:$0xff] %v8072
        %8307 = vst [vmem:[%s150 + $0x10] sm:$0xff] %v8077
        %8308 = vst [vmem:[%s150 + $0x18] sm:$0xff] %v8082
        %8309 = vst [vmem:[%s150 + $0x20] sm:$0xff] %v8087
        %8310 = vst [vmem:[%s150 + $0x28] sm:$0xff] %v8092
        %8311 = vst [vmem:[%s150 + $0x30] sm:$0xff] %v8097
        %8312 = vst [vmem:[%s150 + $0x38] sm:$0xff] %v8102
        %8313 = vst [vmem:[%s150 + $0x40] sm:$0xff] %v8107
        %8314 = vst [vmem:[%s150 + $0x48] sm:$0xff] %v8112
        %8315 = vst [vmem:[%s150 + $0x50] sm:$0xff] %v8117
        %8316 = vst [vmem:[%s150 + $0x58] sm:$0xff] %v8122
        %8317 = vst [vmem:[%s150 + $0x60] sm:$0xff] %v8127
        %8318 = vst [vmem:[%s150 + $0x68] sm:$0xff] %v8132
        %8319 = vst [vmem:[%s150 + $0x70] sm:$0xff] %v8137
        %8320 = vst [vmem:[%s150 + $0x78] sm:$0xff] %v8142
        %8321 = vst [vmem:[%s150 + $0x80] sm:$0xff] %v8147
        %8322 = vst [vmem:[%s150 + $0x88] sm:$0xff] %v8152
        %8323 = vst [vmem:[%s150 + $0x90] sm:$0xff] %v8157
        %8324 = vst [vmem:[%s150 + $0x98] sm:$0xff] %v8162
        %8325 = vst [vmem:[%s150 + $0xa0] sm:$0xff] %v8167
        %8326 = vst [vmem:[%s150 + $0xa8] sm:$0xff] %v8172
        %8327 = vst [vmem:[%s150 + $0xb0] sm:$0xff] %v8177
        %8328 = vst [vmem:[%s150 + $0xb8] sm:$0xff] %v8182
        %8329 = vst [vmem:[%s150 + $0xc0] sm:$0xff] %v8187
        %8330 = vst [vmem:[%s150 + $0xc8] sm:$0xff] %v8192
        %8331 = vst [vmem:[%s150 + $0xd0] sm:$0xff] %v8197
        %8332 = vst [vmem:[%s150 + $0xd8] sm:$0xff] %v8202
        %8333 = vst [vmem:[%s150 + $0xe0] sm:$0xff] %v8207
        %8334 = vst [vmem:[%s150 + $0xe8] sm:$0xff] %v8212
        %8335 = vst [vmem:[%s150 + $0xf0] sm:$0xff] %v8217
        %8336 = vst [vmem:[%s150 + $0xf8] sm:$0xff] %v8222
        %8337 = vst [vmem:[%s150 + $0x100] sm:$0xff] %v8227
        %8338 = vst [vmem:[%s150 + $0x108] sm:$0xff] %v8232
        %8339 = vst [vmem:[%s150 + $0x110] sm:$0xff] %v8237
        %8340 = vst [vmem:[%s150 + $0x118] sm:$0xff] %v8242
        %8341 = vst [vmem:[%s150 + $0x120] sm:$0xff] %v8247
        %8342 = vst [vmem:[%s150 + $0x128] sm:$0xff] %v8252
        %8343 = vst [vmem:[%s150 + $0x130] sm:$0xff] %v8257
        %8344 = vst [vmem:[%s150 + $0x138] sm:$0xff] %v8262
        %8345 = vst [vmem:[%s150 + $0x140] sm:$0xff] %v8267
        %8346 = vst [vmem:[%s150 + $0x148] sm:$0xff] %v8272
        %8347 = vst [vmem:[%s150 + $0x150] sm:$0xff] %v8277
        %8348 = vst [vmem:[%s150 + $0x158] sm:$0xff] %v8282
        %8349 = vst [vmem:[%s150 + $0x160] sm:$0xff] %v8287
        %8350 = vst [vmem:[%s150 + $0x168] sm:$0xff] %v8292
        %8351 = vst [vmem:[%s150 + $0x170] sm:$0xff] %v8297
        %8352 = vst [vmem:[%s150 + $0x178] sm:$0xff] %v8302
        %s8353 = sand.u32 %s85, 1
        %s8354 = scalar_lea.sflag [#allocation4], %s8353
        %s8355 = sand.u32 %s85, 1
        %s8356 = smul.addr %s8355, 384
        %s8357 = scalar_lea.vmem [#allocation3], %s8356
        // Predicated region
        $region29: #{tpu_custom_call.1} parent=27 // pred_check
          %p8358 = pneg %p95
        $region30: #{tpu_custom_call.1} parent=27 // pred_check_branch
          %8360 = sbr.rel (%p8358) target = $region32
        $region31: #{tpu_custom_call.1} parent=27 // pred_region
          %s8361 = smul.u32 48, %s21
          %s8363 = ssub.s32 6144, 6144
          %8364 = vsyncadd %s8354, %s8363
          %s8365 = smul.addr %s20, 48
          %s8366 = sadd.s32 %s8361, %s8365
          %s8367 = smul.addr %s8366, 128
          %s8368 = scalar_lea.hbm %s2, %s8367
          %s8369 = sshll.u32 %s8357, 4
          %s8370 = int_to_ptr.vmem [resolvable:$true] %s8369
          %8375 = dma.vmem_to_hbm [thread:$0]  %s8370, 6144, %s8368, %s8354, 128, 128, 8
        $region32: #{tpu_custom_call.1} parent=27 // pred_fallthru
          _
      $region28: #{tpu_custom_call.1} parent=5 // pred_fallthru
        _
      %p8376 = scmp.le.s32.totalorder 2, %s11
      // Predicated region
      $region33: #{tpu_custom_call.1} parent=5 // pred_check
        %p8377 = pneg %p8376
      $region34: #{tpu_custom_call.1} parent=5 // pred_check_branch
        %8379 = sbr.rel (%p8377) target = $region36
      $region35: #{tpu_custom_call.1} parent=5 // pred_region
        %s8380 = ssub.s32 %s11, 2
        // Predicated region
        $region37: #{tpu_custom_call.1} parent=35 // pred_check
          %p8381 = pneg %p101
        $region38: #{tpu_custom_call.1} parent=35 // pred_check_branch
          %8383 = sbr.rel (%p8381) target = $region40
        $region39: #{tpu_custom_call.1} parent=35 // pred_region
          %s8384 = sand.u32 %s86, 1
          %s8385 = scalar_lea.sflag [#allocation4], %s8384
          %s8386 = sand.u32 %s86, 1
          %s8387 = smul.addr %s8386, 384
          %s8388 = scalar_lea.vmem [#allocation3], %s8387
          %8389 = dma.done %s8385, 6144
        $region40: #{tpu_custom_call.1} parent=35 // pred_fallthru
          _
      $region36: #{tpu_custom_call.1} parent=5 // pred_fallthru
        _
    $region6: #{tpu_custom_call.1} parent=1 // loop_footer
      %s15 = sadd.s32 1, %s11
    $region7: #{tpu_custom_call.1} parent=1 // loop_footer_branch
      %10 = sbr.rel target = $region3
    $region8: #{tpu_custom_call.1} parent=1 // loop_exit
      _
    %8390 = vsyncpa [#allocation4], 1
    %s8391 = scalar_lea.sflag [#allocation4], 1
    %8392 = vsyncpa %s8391, 1

</llo_original>
